<compile_context>
chip_gen: v7x
topology: tpu7x:2x2x1
jax: 0.10.0
libtpu: 0.0.40
codegen_flags: <defaults>
</compile_context>

<pallas_src>
from functools import partial

import jax
import jax.numpy as jnp
from jax.experimental import pallas as pl
from jax.experimental.pallas import tpu as pltpu

EPS = 1e-5
EXPANSION = 1  # BasicBlock
LANE = 128


def _round_up(x, m):
    return (x + m - 1) // m * m


def _pick_tile_h(ho, max_th=32):
    """Output-row tile height: a divisor of ho, preferring multiples of 8 and
    >= 2 tiles so the row-tile grid axis has parallel work."""
    cands = [th for th in range(1, min(ho, max_th) + 1) if ho % th == 0]
    for pred in (lambda t: t % 8 == 0 and t < ho,
                 lambda t: t % 8 == 0,
                 lambda t: t < ho,
                 lambda t: True):
        sel = [t for t in cands if pred(t)]
        if sel:
            return max(sel)
    return ho


# ---------------------------------------------------------------------------
# Fused kernel body.
#   conv1 (3x3, stride s) + BN1 + ReLU  -> staged in VMEM scratch (with conv2's
#   zero halo) -> conv2 (3x3, stride 1) + BN2, accumulated in f32.
# One (image, output-row-tile) pair per grid step; a 1-row conv1 halo is
# recomputed per tile so tiles are independent.
# ---------------------------------------------------------------------------
def _conv_stack(xd_ref, w1_ref, b1_ref, w2_ref, b2_ref, out1_sc, *,
                th, wo, stride):
    s = stride
    th2 = th + 2                      # tile rows + 1-row halo each side
    cin = xd_ref.shape[-1]
    cmid = w1_ref.shape[-1]
    cout = w2_ref.shape[-1]
    t = pl.program_id(1)
    row0 = t * th
    if th % 8 == 0:
        row0 = pl.multiple_of(row0, 8)

    # ---- conv1: 9 contiguous tap loads from the stride-decimated input ----
    acc1 = jnp.zeros((th2 * wo, cmid), jnp.float32)
    for dy in range(3):
        for dx in range(3):
            plane = (dy % s) * s + (dx % s)
            win = xd_ref[0, plane,
                         pl.ds(row0 + dy // s, th2),
                         pl.ds(dx // s, wo), :]
            # Reshape merges dims above the (sublane, lane) tile: layout-trivial
            # (no VMEM relayout) because wo % 8 == 0 and cin % 128 == 0.
            acc1 += jnp.dot(win.reshape(th2 * wo, cin), w1_ref[dy * 3 + dx],
                            preferred_element_type=jnp.float32)
    out1 = jnp.maximum(acc1 + b1_ref[...], 0.0)
    out1 = out1.reshape(th2, wo, cmid).astype(out1_sc.dtype)

    # ---- stage out1 (bf16) in VMEM with conv2's spatial zero padding ----
    out1_sc[:, 1:wo + 1, :] = out1
    zcol = jnp.zeros((th2, 1, cmid), out1_sc.dtype)
    out1_sc[:, 0:1, :] = zcol
    out1_sc[:, wo + 1:wo + 2, :] = zcol

    @pl.when(t == 0)                        # top image border: zero halo row
    def _():
        out1_sc[0:1, :, :] = jnp.zeros((1, wo + 2, cmid), out1_sc.dtype)

    @pl.when(t == pl.num_programs(1) - 1)   # bottom image border
    def _():
        out1_sc[th2 - 1:th2, :, :] = jnp.zeros((1, wo + 2, cmid), out1_sc.dtype)

    # ---- conv2: 9 static-slice windows of the staged out1 ----
    acc2 = jnp.zeros((th * wo, cout), jnp.float32) + b2_ref[...]
    for dy in range(3):
        for dx in range(3):
            win = out1_sc[dy:dy + th, dx:dx + wo, :]
            acc2 += jnp.dot(win.reshape(th * wo, cmid), w2_ref[dy * 3 + dx],
                            preferred_element_type=jnp.float32)
    return acc2


def _block_kernel_identity(xd_ref, w1_ref, b1_ref, w2_ref, b2_ref, xs_ref,
                           o_ref, out1_sc, *, th, wo, stride):
    cout = o_ref.shape[-1]
    acc = _conv_stack(xd_ref, w1_ref, b1_ref, w2_ref, b2_ref, out1_sc,
                      th=th, wo=wo, stride=stride)
    acc += xs_ref[0].reshape(th * wo, cout).astype(jnp.float32)
    o_ref[0] = jnp.maximum(acc, 0.0).reshape(th, wo, cout).astype(o_ref.dtype)


def _block_kernel_scconv(xd_ref, w1_ref, b1_ref, w2_ref, b2_ref, xs_ref,
                         wsc_ref, bsc_ref, o_ref, out1_sc, *, th, wo, stride):
    cin = xs_ref.shape[-1]
    cout = o_ref.shape[-1]
    acc = _conv_stack(xd_ref, w1_ref, b1_ref, w2_ref, b2_ref, out1_sc,
                      th=th, wo=wo, stride=stride)
    xs = xs_ref[0].reshape(th * wo, cin)
    acc += jnp.dot(xs, wsc_ref[...], preferred_element_type=jnp.float32)
    acc += bsc_ref[...]
    o_ref[0] = jnp.maximum(acc, 0.0).reshape(th, wo, cout).astype(o_ref.dtype)


# ---------------------------------------------------------------------------
# Wrapper: channel-padded NHWC bf16 in -> channel-padded NHWC bf16 out.
# ---------------------------------------------------------------------------
def basicblock_apply(x_nhwc, params):
    s = params["stride"]
    N, H, W, cin_p = x_nhwc.shape
    assert cin_p == params["cin_p"]
    cmid_p, cp = params["cmid_p"], params["cp"]
    Ho = (H - 1) // s + 1             # 3x3, pad=1, stride s
    Wo = (W - 1) // s + 1
    th = _pick_tile_h(Ho)
    n_tiles = Ho // th
    if not params["has_shortcut_conv"]:
        assert s == 1 and cin_p == cp  # identity shortcut preconditions

    # Spatial zero pad (conv pad 1, plus an extra s-row top halo so the row
    # above the image resolves to in-range zeros), rounded to a multiple of s,
    # then split into s*s row/column-parity planes.  All in-kernel tap loads
    # become contiguous regardless of stride.
    Hd = Ho + 1 + -(-3 // s)          # decimated plane height
    Wd = -(-(W + 2) // s)             # decimated plane width
    pad_top = 1 + s
    pad_bot = Hd * s - pad_top - H
    pad_rgt = Wd * s - 1 - W
    xpad = jnp.pad(x_nhwc, ((0, 0), (pad_top, pad_bot), (1, pad_rgt), (0, 0)))
    xdec = (xpad.reshape(N, Hd, s, Wd, s, cin_p)
            .transpose(0, 2, 4, 1, 3, 5)
            .reshape(N, s * s, Hd, Wd, cin_p))

    in_specs = [
        # Whole decimated image per batch index; invariant over the row-tile
        # axis so it stays resident in VMEM across tiles of the same image.
        pl.BlockSpec((1, s * s, Hd, Wd, cin_p), lambda i, t: (i, 0, 0, 0, 0)),
        pl.BlockSpec((9, cin_p, cmid_p), lambda i, t: (0, 0, 0)),
        pl.BlockSpec((1, cmid_p), lambda i, t: (0, 0)),
        pl.BlockSpec((9, cmid_p, cp), lambda i, t: (0, 0, 0)),
        pl.BlockSpec((1, cp), lambda i, t: (0, 0)),
    ]
    if params["has_shortcut_conv"]:
        xs = x_nhwc[:, ::s, ::s, :]                      # (N, Ho, Wo, cin_p)
        kernel = partial(_block_kernel_scconv, th=th, wo=Wo, stride=s)
        in_specs += [
            pl.BlockSpec((1, th, Wo, cin_p), lambda i, t: (i, t, 0, 0)),
            pl.BlockSpec((cin_p, cp), lambda i, t: (0, 0)),
            pl.BlockSpec((1, cp), lambda i, t: (0, 0)),
        ]
        args = (xdec, params["w1k"], params["b1k"], params["w2k"], params["b2k"],
                xs, params["wsck"], params["bsck"])
    else:
        xs = x_nhwc                                      # identity shortcut
        kernel = partial(_block_kernel_identity, th=th, wo=Wo, stride=s)
        in_specs += [pl.BlockSpec((1, th, Wo, cp), lambda i, t: (i, t, 0, 0))]
        args = (xdec, params["w1k"], params["b1k"], params["w2k"], params["b2k"],
                xs)

    return pl.pallas_call(
        kernel,
        out_shape=jax.ShapeDtypeStruct((N, Ho, Wo, cp), jnp.bfloat16),
        grid=(N, n_tiles),
        in_specs=in_specs,
        out_specs=pl.BlockSpec((1, th, Wo, cp), lambda i, t: (i, t, 0, 0)),
        scratch_shapes=[pltpu.VMEM((th + 2, Wo + 2, cmid_p), jnp.bfloat16)],
        compiler_params=pltpu.CompilerParams(
            dimension_semantics=("parallel", "parallel"),
            vmem_limit_bytes=48 * 1024 * 1024),
    )(*args)


# ---------------------------------------------------------------------------
# Parameters (PyTorch-shaped raw weights + BN, plus packed kernel layouts).
# ---------------------------------------------------------------------------
def make_params(key, in_planes, planes, stride):
    ks = jax.random.split(key, 8)
    out_c = EXPANSION * planes

    def bn_fold(gamma, beta, mean, var):
        sc = gamma / jnp.sqrt(var + EPS)
        return sc, beta - mean * sc

    p = {"in_planes": in_planes, "planes": planes, "stride": stride}
    p["w1_raw"] = 0.1 * jax.random.normal(ks[0], (planes, in_planes, 3, 3), jnp.float32)
    p["w2_raw"] = 0.1 * jax.random.normal(ks[1], (planes, planes, 3, 3), jnp.float32)

    for i in (1, 2):
        c = planes
        gamma = 1.0 + 0.1 * jax.random.normal(ks[1 + i], (c,), jnp.float32)
        beta = 0.1 * jax.random.normal(ks[3 + i], (c,), jnp.float32)
        mean = jnp.zeros((c,), jnp.float32)
        var = jnp.ones((c,), jnp.float32)
        p[f"bn{i}"] = (gamma, beta, mean, var)
        p[f"s{i}"], p[f"b{i}"] = bn_fold(gamma, beta, mean, var)

    p["has_shortcut_conv"] = (stride != 1) or (in_planes != out_c)
    if p["has_shortcut_conv"]:
        p["wsc_raw"] = 0.1 * jax.random.normal(ks[6], (out_c, in_planes, 1, 1), jnp.float32)
        gamma = 1.0 + 0.1 * jax.random.normal(ks[7], (out_c,), jnp.float32)
        beta = jnp.zeros((out_c,), jnp.float32)
        mean = jnp.zeros((out_c,), jnp.float32)
        var = jnp.ones((out_c,), jnp.float32)
        p["bnsc"] = (gamma, beta, mean, var)
        p["ssc"], p["bsc"] = bn_fold(gamma, beta, mean, var)

    # Packed kernel layouts: BN scale folded into weights, channels zero-padded
    # to a lane multiple (128), bf16 for the MXU; biases stay f32.
    # TODO(synk): the toy Cin=4 stem wastes ~32x MXU work when padded to 128;
    # a 9-tap K-packing path would fix that for real stem layers.
    cin_p = _round_up(in_planes, LANE)
    cmid_p = _round_up(planes, LANE)
    cp = _round_up(out_c, LANE)
    p["cin_p"], p["cmid_p"], p["cp"] = cin_p, cmid_p, cp

    def pack_w3x3(w_oihw, scale, cin, cout, cin_pad, cout_pad):
        w = jnp.transpose(w_oihw, (2, 3, 1, 0)) * scale[None, None, None, :]
        w = jnp.pad(w, ((0, 0), (0, 0), (0, cin_pad - cin), (0, cout_pad - cout)))
        return w.reshape(9, cin_pad, cout_pad).astype(jnp.bfloat16)

    def pack_b(bias, cout, cout_pad):
        return jnp.pad(bias, (0, cout_pad - cout)).reshape(1, cout_pad).astype(jnp.float32)

    p["w1k"] = pack_w3x3(p["w1_raw"], p["s1"], in_planes, planes, cin_p, cmid_p)
    p["b1k"] = pack_b(p["b1"], planes, cmid_p)
    p["w2k"] = pack_w3x3(p["w2_raw"], p["s2"], planes, out_c, cmid_p, cp)
    p["b2k"] = pack_b(p["b2"], out_c, cp)
    if p["has_shortcut_conv"]:
        wsc = p["wsc_raw"][:, :, 0, 0].T * p["ssc"][None, :]        # (cin, out_c)
        wsc = jnp.pad(wsc, ((0, cin_p - in_planes), (0, cp - out_c)))
        p["wsck"] = wsc.astype(jnp.bfloat16)
        p["bsck"] = pack_b(p["bsc"], out_c, cp)
    return p


# ---------------------------------------------------------------------------
# Test-harness entry: NCHW f32 in / out (production code should chain blocks
# in channel-padded NHWC bf16 via basicblock_apply and skip this glue).
# ---------------------------------------------------------------------------
def basicblock_forward(x_nchw, params):
    N, Cin, H, W = x_nchw.shape
    cin_p = params["cin_p"]
    out_c = EXPANSION * params["planes"]
    x = jnp.transpose(x_nchw, (0, 2, 3, 1)).astype(jnp.bfloat16)
    x = jnp.pad(x, ((0, 0), (0, 0), (0, 0), (0, cin_p - Cin)))
    y = basicblock_apply(x, params)                     # (N, Ho, Wo, cp) bf16
    y = y[..., :out_c].astype(jnp.float32)
    return jnp.transpose(y, (0, 3, 1, 2))


# ---------------------------------------------------------------------------
# Pure-JAX f32 reference (NCHW, lax.conv) for correctness checking.
# ---------------------------------------------------------------------------
def reference_forward(x, params):
    stride = params["stride"]

    def conv(x, w, s=1, pad=0):
        return jax.lax.conv_general_dilated(
            x, w, (s, s), [(pad, pad), (pad, pad)],
            dimension_numbers=("NCHW", "OIHW", "NCHW"))

    def bn(x, bnp):
        gamma, beta, mean, var = bnp
        inv = gamma / jnp.sqrt(var + EPS)
        return x * inv[None, :, None, None] + (beta - mean * inv)[None, :, None, None]

    out = jax.nn.relu(bn(conv(x, params["w1_raw"], s=stride, pad=1), params["bn1"]))
    out = bn(conv(out, params["w2_raw"], s=1, pad=1), params["bn2"])
    if params["has_shortcut_conv"]:
        sc = bn(conv(x, params["wsc_raw"], s=stride), params["bnsc"])
    else:
        sc = x
    return jax.nn.relu(out + sc)


# ---------------------------------------------------------------------------
if __name__ == "__main__":
    key = jax.random.PRNGKey(0)

    configs = [
        # (in_planes, planes, stride, H, W)
        (4, 8, 1, 16, 16),    # 1x1-conv+BN shortcut, 2 row tiles
        (8, 8, 1, 16, 16),    # identity shortcut,    2 row tiles
        (8, 16, 2, 16, 16),   # stride-2 + conv shortcut, decimated planes
    ]
    for idx, (cin, planes, stride, H, W) in enumerate(configs):
        kx, kp = jax.random.split(jax.random.fold_in(key, idx))
        x = jax.random.normal(kx, (2, cin, H, W), jnp.float32)   # NCHW like PyTorch
        params = make_params(kp, in_planes=cin, planes=planes, stride=stride)
        out = jax.block_until_ready(basicblock_forward(x, params))
        ref = jax.block_until_ready(reference_forward(x, params))
        assert out.shape == ref.shape, (out.shape, ref.shape)
        err = float(jnp.max(jnp.abs(out - ref)))
        assert jnp.allclose(out, ref, rtol=5e-2, atol=5e-2), (idx, err)  # bf16 tol

    print("KERNEL_OK")
</pallas_src>

<mosaic_0001>
module attributes {stable_mosaic.version = 11 : i64} {
  func.func @_block_kernel_scconv(%arg0: i32, %arg1: i32, %arg2: memref<1x1x20x18x128xbf16, #tpu.memory_space<vmem>>, %arg3: memref<9x128x128xbf16, #tpu.memory_space<vmem>>, %arg4: memref<1x128xf32, #tpu.memory_space<vmem>>, %arg5: memref<9x128x128xbf16, #tpu.memory_space<vmem>>, %arg6: memref<1x128xf32, #tpu.memory_space<vmem>>, %arg7: memref<1x8x16x128xbf16, #tpu.memory_space<vmem>>, %arg8: memref<128x128xbf16, #tpu.memory_space<vmem>>, %arg9: memref<1x128xf32, #tpu.memory_space<vmem>>, %arg10: memref<1x8x16x128xbf16, #tpu.memory_space<vmem>>, %arg11: memref<10x18x128xbf16, #tpu.memory_space<vmem>>) attributes {dimension_semantics = [#tpu.dimension_semantics<parallel>, #tpu.dimension_semantics<parallel>], iteration_bounds = array<i64: 2, 2>, scalar_prefetch = 0 : i64, scratch_operands = 1 : i64, tpu.core_type = #tpu.core_type<tc>, window_params = [{transform_indices = @transform_0, window_bounds = array<i64: 1, 1, 20, 18, 128>}, {pipeline_mode = #tpu.pipeline_mode<synchronous>, transform_indices = @transform_1, window_bounds = array<i64: 9, 128, 128>}, {pipeline_mode = #tpu.pipeline_mode<synchronous>, transform_indices = @transform_2, window_bounds = array<i64: 1, 128>}, {pipeline_mode = #tpu.pipeline_mode<synchronous>, transform_indices = @transform_3, window_bounds = array<i64: 9, 128, 128>}, {pipeline_mode = #tpu.pipeline_mode<synchronous>, transform_indices = @transform_4, window_bounds = array<i64: 1, 128>}, {transform_indices = @transform_5, window_bounds = array<i64: 1, 8, 16, 128>}, {pipeline_mode = #tpu.pipeline_mode<synchronous>, transform_indices = @transform_6, window_bounds = array<i64: 128, 128>}, {pipeline_mode = #tpu.pipeline_mode<synchronous>, transform_indices = @transform_7, window_bounds = array<i64: 1, 128>}, {transform_indices = @transform_8, window_bounds = array<i64: 1, 8, 16, 128>}]} {
    %c8_i32 = arith.constant 8 : i32
    %0 = arith.muli %arg1, %c8_i32 : i32
    %1 = tpu.assume_multiple %0, 8 : i32
    %cst = arith.constant 0.000000e+00 : f32
    %2 = vector.broadcast %cst : f32 to vector<160x128xf32>
    %c0_i32 = arith.constant 0 : i32
    %3 = arith.addi %1, %c0_i32 : i32
    %c0 = arith.constant 0 : index
    %c0_0 = arith.constant 0 : index
    %4 = arith.index_cast %3 : i32 to index
    %c0_1 = arith.constant 0 : index
    %c0_2 = arith.constant 0 : index
    %5 = vector.load %arg2[%c0, %c0_0, %4, %c0_1, %c0_2] : memref<1x1x20x18x128xbf16, #tpu.memory_space<vmem>>, vector<1x1x10x16x128xbf16>
    %6 = vector.shape_cast %5 : vector<1x1x10x16x128xbf16> to vector<10x16x128xbf16>
    %7 = vector.shape_cast %6 : vector<10x16x128xbf16> to vector<160x128xbf16>
    %c0_3 = arith.constant 0 : index
    %c0_4 = arith.constant 0 : index
    %c0_5 = arith.constant 0 : index
    %8 = vector.load %arg3[%c0_3, %c0_4, %c0_5] : memref<9x128x128xbf16, #tpu.memory_space<vmem>>, vector<1x128x128xbf16>
    %9 = vector.shape_cast %8 : vector<1x128x128xbf16> to vector<128x128xbf16>
    %cst_6 = arith.constant dense<0.000000e+00> : vector<160x128xf32>
    %10 = tpu.matmul %7, %9, %cst_6 {dimension_numbers = #tpu.dot_dimension_numbers<[1], [0], [0], [1], [0, 0, 1, 1], [], []>} : vector<160x128xbf16>, vector<128x128xbf16>, vector<160x128xf32> -> vector<160x128xf32>
    %11 = arith.addf %2, %10 : vector<160x128xf32>
    %c0_i32_7 = arith.constant 0 : i32
    %12 = arith.addi %1, %c0_i32_7 : i32
    %c0_8 = arith.constant 0 : index
    %c0_9 = arith.constant 0 : index
    %13 = arith.index_cast %12 : i32 to index
    %c1 = arith.constant 1 : index
    %c0_10 = arith.constant 0 : index
    %14 = vector.load %arg2[%c0_8, %c0_9, %13, %c1, %c0_10] : memref<1x1x20x18x128xbf16, #tpu.memory_space<vmem>>, vector<1x1x10x16x128xbf16>
    %15 = vector.shape_cast %14 : vector<1x1x10x16x128xbf16> to vector<10x16x128xbf16>
    %16 = vector.shape_cast %15 : vector<10x16x128xbf16> to vector<160x128xbf16>
    %c1_11 = arith.constant 1 : index
    %c0_12 = arith.constant 0 : index
    %c0_13 = arith.constant 0 : index
    %17 = vector.load %arg3[%c1_11, %c0_12, %c0_13] : memref<9x128x128xbf16, #tpu.memory_space<vmem>>, vector<1x128x128xbf16>
    %18 = vector.shape_cast %17 : vector<1x128x128xbf16> to vector<128x128xbf16>
    %cst_14 = arith.constant dense<0.000000e+00> : vector<160x128xf32>
    %19 = tpu.matmul %16, %18, %cst_14 {dimension_numbers = #tpu.dot_dimension_numbers<[1], [0], [0], [1], [0, 0, 1, 1], [], []>} : vector<160x128xbf16>, vector<128x128xbf16>, vector<160x128xf32> -> vector<160x128xf32>
    %20 = arith.addf %11, %19 : vector<160x128xf32>
    %c0_i32_15 = arith.constant 0 : i32
    %21 = arith.addi %1, %c0_i32_15 : i32
    %c0_16 = arith.constant 0 : index
    %c0_17 = arith.constant 0 : index
    %22 = arith.index_cast %21 : i32 to index
    %c2 = arith.constant 2 : index
    %c0_18 = arith.constant 0 : index
    %23 = vector.load %arg2[%c0_16, %c0_17, %22, %c2, %c0_18] : memref<1x1x20x18x128xbf16, #tpu.memory_space<vmem>>, vector<1x1x10x16x128xbf16>
    %24 = vector.shape_cast %23 : vector<1x1x10x16x128xbf16> to vector<10x16x128xbf16>
    %25 = vector.shape_cast %24 : vector<10x16x128xbf16> to vector<160x128xbf16>
    %c2_19 = arith.constant 2 : index
    %c0_20 = arith.constant 0 : index
    %c0_21 = arith.constant 0 : index
    %26 = vector.load %arg3[%c2_19, %c0_20, %c0_21] : memref<9x128x128xbf16, #tpu.memory_space<vmem>>, vector<1x128x128xbf16>
    %27 = vector.shape_cast %26 : vector<1x128x128xbf16> to vector<128x128xbf16>
    %cst_22 = arith.constant dense<0.000000e+00> : vector<160x128xf32>
    %28 = tpu.matmul %25, %27, %cst_22 {dimension_numbers = #tpu.dot_dimension_numbers<[1], [0], [0], [1], [0, 0, 1, 1], [], []>} : vector<160x128xbf16>, vector<128x128xbf16>, vector<160x128xf32> -> vector<160x128xf32>
    %29 = arith.addf %20, %28 : vector<160x128xf32>
    %c1_i32 = arith.constant 1 : i32
    %30 = arith.addi %1, %c1_i32 : i32
    %c0_23 = arith.constant 0 : index
    %c0_24 = arith.constant 0 : index
    %31 = arith.index_cast %30 : i32 to index
    %c0_25 = arith.constant 0 : index
    %c0_26 = arith.constant 0 : index
    %32 = vector.load %arg2[%c0_23, %c0_24, %31, %c0_25, %c0_26] : memref<1x1x20x18x128xbf16, #tpu.memory_space<vmem>>, vector<1x1x10x16x128xbf16>
    %33 = vector.shape_cast %32 : vector<1x1x10x16x128xbf16> to vector<10x16x128xbf16>
    %34 = vector.shape_cast %33 : vector<10x16x128xbf16> to vector<160x128xbf16>
    %c3 = arith.constant 3 : index
    %c0_27 = arith.constant 0 : index
    %c0_28 = arith.constant 0 : index
    %35 = vector.load %arg3[%c3, %c0_27, %c0_28] : memref<9x128x128xbf16, #tpu.memory_space<vmem>>, vector<1x128x128xbf16>
    %36 = vector.shape_cast %35 : vector<1x128x128xbf16> to vector<128x128xbf16>
    %cst_29 = arith.constant dense<0.000000e+00> : vector<160x128xf32>
    %37 = tpu.matmul %34, %36, %cst_29 {dimension_numbers = #tpu.dot_dimension_numbers<[1], [0], [0], [1], [0, 0, 1, 1], [], []>} : vector<160x128xbf16>, vector<128x128xbf16>, vector<160x128xf32> -> vector<160x128xf32>
    %38 = arith.addf %29, %37 : vector<160x128xf32>
    %c1_i32_30 = arith.constant 1 : i32
    %39 = arith.addi %1, %c1_i32_30 : i32
    %c0_31 = arith.constant 0 : index
    %c0_32 = arith.constant 0 : index
    %40 = arith.index_cast %39 : i32 to index
    %c1_33 = arith.constant 1 : index
    %c0_34 = arith.constant 0 : index
    %41 = vector.load %arg2[%c0_31, %c0_32, %40, %c1_33, %c0_34] : memref<1x1x20x18x128xbf16, #tpu.memory_space<vmem>>, vector<1x1x10x16x128xbf16>
    %42 = vector.shape_cast %41 : vector<1x1x10x16x128xbf16> to vector<10x16x128xbf16>
    %43 = vector.shape_cast %42 : vector<10x16x128xbf16> to vector<160x128xbf16>
    %c4 = arith.constant 4 : index
    %c0_35 = arith.constant 0 : index
    %c0_36 = arith.constant 0 : index
    %44 = vector.load %arg3[%c4, %c0_35, %c0_36] : memref<9x128x128xbf16, #tpu.memory_space<vmem>>, vector<1x128x128xbf16>
    %45 = vector.shape_cast %44 : vector<1x128x128xbf16> to vector<128x128xbf16>
    %cst_37 = arith.constant dense<0.000000e+00> : vector<160x128xf32>
    %46 = tpu.matmul %43, %45, %cst_37 {dimension_numbers = #tpu.dot_dimension_numbers<[1], [0], [0], [1], [0, 0, 1, 1], [], []>} : vector<160x128xbf16>, vector<128x128xbf16>, vector<160x128xf32> -> vector<160x128xf32>
    %47 = arith.addf %38, %46 : vector<160x128xf32>
    %c1_i32_38 = arith.constant 1 : i32
    %48 = arith.addi %1, %c1_i32_38 : i32
    %c0_39 = arith.constant 0 : index
    %c0_40 = arith.constant 0 : index
    %49 = arith.index_cast %48 : i32 to index
    %c2_41 = arith.constant 2 : index
    %c0_42 = arith.constant 0 : index
    %50 = vector.load %arg2[%c0_39, %c0_40, %49, %c2_41, %c0_42] : memref<1x1x20x18x128xbf16, #tpu.memory_space<vmem>>, vector<1x1x10x16x128xbf16>
    %51 = vector.shape_cast %50 : vector<1x1x10x16x128xbf16> to vector<10x16x128xbf16>
    %52 = vector.shape_cast %51 : vector<10x16x128xbf16> to vector<160x128xbf16>
    %c5 = arith.constant 5 : index
    %c0_43 = arith.constant 0 : index
    %c0_44 = arith.constant 0 : index
    %53 = vector.load %arg3[%c5, %c0_43, %c0_44] : memref<9x128x128xbf16, #tpu.memory_space<vmem>>, vector<1x128x128xbf16>
    %54 = vector.shape_cast %53 : vector<1x128x128xbf16> to vector<128x128xbf16>
    %cst_45 = arith.constant dense<0.000000e+00> : vector<160x128xf32>
    %55 = tpu.matmul %52, %54, %cst_45 {dimension_numbers = #tpu.dot_dimension_numbers<[1], [0], [0], [1], [0, 0, 1, 1], [], []>} : vector<160x128xbf16>, vector<128x128xbf16>, vector<160x128xf32> -> vector<160x128xf32>
    %56 = arith.addf %47, %55 : vector<160x128xf32>
    %c2_i32 = arith.constant 2 : i32
    %57 = arith.addi %1, %c2_i32 : i32
    %c0_46 = arith.constant 0 : index
    %c0_47 = arith.constant 0 : index
    %58 = arith.index_cast %57 : i32 to index
    %c0_48 = arith.constant 0 : index
    %c0_49 = arith.constant 0 : index
    %59 = vector.load %arg2[%c0_46, %c0_47, %58, %c0_48, %c0_49] : memref<1x1x20x18x128xbf16, #tpu.memory_space<vmem>>, vector<1x1x10x16x128xbf16>
    %60 = vector.shape_cast %59 : vector<1x1x10x16x128xbf16> to vector<10x16x128xbf16>
    %61 = vector.shape_cast %60 : vector<10x16x128xbf16> to vector<160x128xbf16>
    %c6 = arith.constant 6 : index
    %c0_50 = arith.constant 0 : index
    %c0_51 = arith.constant 0 : index
    %62 = vector.load %arg3[%c6, %c0_50, %c0_51] : memref<9x128x128xbf16, #tpu.memory_space<vmem>>, vector<1x128x128xbf16>
    %63 = vector.shape_cast %62 : vector<1x128x128xbf16> to vector<128x128xbf16>
    %cst_52 = arith.constant dense<0.000000e+00> : vector<160x128xf32>
    %64 = tpu.matmul %61, %63, %cst_52 {dimension_numbers = #tpu.dot_dimension_numbers<[1], [0], [0], [1], [0, 0, 1, 1], [], []>} : vector<160x128xbf16>, vector<128x128xbf16>, vector<160x128xf32> -> vector<160x128xf32>
    %65 = arith.addf %56, %64 : vector<160x128xf32>
    %c2_i32_53 = arith.constant 2 : i32
    %66 = arith.addi %1, %c2_i32_53 : i32
    %c0_54 = arith.constant 0 : index
    %c0_55 = arith.constant 0 : index
    %67 = arith.index_cast %66 : i32 to index
    %c1_56 = arith.constant 1 : index
    %c0_57 = arith.constant 0 : index
    %68 = vector.load %arg2[%c0_54, %c0_55, %67, %c1_56, %c0_57] : memref<1x1x20x18x128xbf16, #tpu.memory_space<vmem>>, vector<1x1x10x16x128xbf16>
    %69 = vector.shape_cast %68 : vector<1x1x10x16x128xbf16> to vector<10x16x128xbf16>
    %70 = vector.shape_cast %69 : vector<10x16x128xbf16> to vector<160x128xbf16>
    %c7 = arith.constant 7 : index
    %c0_58 = arith.constant 0 : index
    %c0_59 = arith.constant 0 : index
    %71 = vector.load %arg3[%c7, %c0_58, %c0_59] : memref<9x128x128xbf16, #tpu.memory_space<vmem>>, vector<1x128x128xbf16>
    %72 = vector.shape_cast %71 : vector<1x128x128xbf16> to vector<128x128xbf16>
    %cst_60 = arith.constant dense<0.000000e+00> : vector<160x128xf32>
    %73 = tpu.matmul %70, %72, %cst_60 {dimension_numbers = #tpu.dot_dimension_numbers<[1], [0], [0], [1], [0, 0, 1, 1], [], []>} : vector<160x128xbf16>, vector<128x128xbf16>, vector<160x128xf32> -> vector<160x128xf32>
    %74 = arith.addf %65, %73 : vector<160x128xf32>
    %c2_i32_61 = arith.constant 2 : i32
    %75 = arith.addi %1, %c2_i32_61 : i32
    %c0_62 = arith.constant 0 : index
    %c0_63 = arith.constant 0 : index
    %76 = arith.index_cast %75 : i32 to index
    %c2_64 = arith.constant 2 : index
    %c0_65 = arith.constant 0 : index
    %77 = vector.load %arg2[%c0_62, %c0_63, %76, %c2_64, %c0_65] : memref<1x1x20x18x128xbf16, #tpu.memory_space<vmem>>, vector<1x1x10x16x128xbf16>
    %78 = vector.shape_cast %77 : vector<1x1x10x16x128xbf16> to vector<10x16x128xbf16>
    %79 = vector.shape_cast %78 : vector<10x16x128xbf16> to vector<160x128xbf16>
    %c8 = arith.constant 8 : index
    %c0_66 = arith.constant 0 : index
    %c0_67 = arith.constant 0 : index
    %80 = vector.load %arg3[%c8, %c0_66, %c0_67] : memref<9x128x128xbf16, #tpu.memory_space<vmem>>, vector<1x128x128xbf16>
    %81 = vector.shape_cast %80 : vector<1x128x128xbf16> to vector<128x128xbf16>
    %cst_68 = arith.constant dense<0.000000e+00> : vector<160x128xf32>
    %82 = tpu.matmul %79, %81, %cst_68 {dimension_numbers = #tpu.dot_dimension_numbers<[1], [0], [0], [1], [0, 0, 1, 1], [], []>} : vector<160x128xbf16>, vector<128x128xbf16>, vector<160x128xf32> -> vector<160x128xf32>
    %83 = arith.addf %74, %82 : vector<160x128xf32>
    %c0_69 = arith.constant 0 : index
    %c0_70 = arith.constant 0 : index
    %84 = vector.load %arg4[%c0_69, %c0_70] : memref<1x128xf32, #tpu.memory_space<vmem>>, vector<1x128xf32>
    %85 = vector.broadcast %84 : vector<1x128xf32> to vector<160x128xf32>
    %86 = arith.addf %83, %85 : vector<160x128xf32>
    %cst_71 = arith.constant 0.000000e+00 : f32
    %87 = vector.broadcast %cst_71 : f32 to vector<160x128xf32>
    %88 = arith.maximumf %86, %87 : vector<160x128xf32>
    %89 = vector.shape_cast %88 : vector<160x128xf32> to vector<10x16x128xf32>
    %90 = arith.truncf %89 : vector<10x16x128xf32> to vector<10x16x128xbf16>
    %c0_72 = arith.constant 0 : index
    %c1_73 = arith.constant 1 : index
    %c0_74 = arith.constant 0 : index
    %91 = vector.load %arg11[%c0_72, %c1_73, %c0_74] : memref<10x18x128xbf16, #tpu.memory_space<vmem>>, vector<10x16x128xbf16>
    tpu.vector_store %arg11[%c0_72, %c1_73, %c0_74], %90 {strides = array<i32>} : memref<10x18x128xbf16, #tpu.memory_space<vmem>>, vector<10x16x128xbf16>,
    %cst_75 = arith.constant 0.000000e+00 : bf16
    %92 = vector.broadcast %cst_75 : bf16 to vector<10x1x128xbf16>
    %c0_76 = arith.constant 0 : index
    %c0_77 = arith.constant 0 : index
    %c0_78 = arith.constant 0 : index
    %93 = vector.load %arg11[%c0_76, %c0_77, %c0_78] : memref<10x18x128xbf16, #tpu.memory_space<vmem>>, vector<10x1x128xbf16>
    tpu.vector_store %arg11[%c0_76, %c0_77, %c0_78], %92 {strides = array<i32>} : memref<10x18x128xbf16, #tpu.memory_space<vmem>>, vector<10x1x128xbf16>,
    %c0_79 = arith.constant 0 : index
    %c17 = arith.constant 17 : index
    %c0_80 = arith.constant 0 : index
    %94 = vector.load %arg11[%c0_79, %c17, %c0_80] : memref<10x18x128xbf16, #tpu.memory_space<vmem>>, vector<10x1x128xbf16>
    tpu.vector_store %arg11[%c0_79, %c17, %c0_80], %92 {strides = array<i32>} : memref<10x18x128xbf16, #tpu.memory_space<vmem>>, vector<10x1x128xbf16>,
    %c0_i32_81 = arith.constant 0 : i32
    %95 = arith.cmpi eq, %arg1, %c0_i32_81 : i32
    %96 = arith.extui %95 : i1 to i32
    %c0_i32_82 = arith.constant 0 : i32
    %97 = arith.cmpi ne, %96, %c0_i32_82 : i32
    scf.if %97 {
      %cst_165 = arith.constant 0.000000e+00 : bf16
      %175 = vector.broadcast %cst_165 : bf16 to vector<1x18x128xbf16>
      %c0_166 = arith.constant 0 : index
      %c0_167 = arith.constant 0 : index
      %c0_168 = arith.constant 0 : index
      %176 = vector.load %arg11[%c0_166, %c0_167, %c0_168] : memref<10x18x128xbf16, #tpu.memory_space<vmem>>, vector<1x18x128xbf16>
      tpu.vector_store %arg11[%c0_166, %c0_167, %c0_168], %175 {strides = array<i32>} : memref<10x18x128xbf16, #tpu.memory_space<vmem>>, vector<1x18x128xbf16>,
    } else {
    }
    %c1_i32_83 = arith.constant 1 : i32
    %98 = arith.cmpi eq, %arg1, %c1_i32_83 : i32
    %99 = arith.extui %98 : i1 to i32
    %c0_i32_84 = arith.constant 0 : i32
    %100 = arith.cmpi ne, %99, %c0_i32_84 : i32
    scf.if %100 {
      %cst_165 = arith.constant 0.000000e+00 : bf16
      %175 = vector.broadcast %cst_165 : bf16 to vector<1x18x128xbf16>
      %c9 = arith.constant 9 : index
      %c0_166 = arith.constant 0 : index
      %c0_167 = arith.constant 0 : index
      %176 = vector.load %arg11[%c9, %c0_166, %c0_167] : memref<10x18x128xbf16, #tpu.memory_space<vmem>>, vector<1x18x128xbf16>
      tpu.vector_store %arg11[%c9, %c0_166, %c0_167], %175 {strides = array<i32>} : memref<10x18x128xbf16, #tpu.memory_space<vmem>>, vector<1x18x128xbf16>,
    } else {
    }
    %cst_85 = arith.constant 0.000000e+00 : f32
    %101 = vector.broadcast %cst_85 : f32 to vector<128x128xf32>
    %c0_86 = arith.constant 0 : index
    %c0_87 = arith.constant 0 : index
    %102 = vector.load %arg6[%c0_86, %c0_87] : memref<1x128xf32, #tpu.memory_space<vmem>>, vector<1x128xf32>
    %103 = vector.broadcast %102 : vector<1x128xf32> to vector<128x128xf32>
    %104 = arith.addf %101, %103 : vector<128x128xf32>
    %c0_88 = arith.constant 0 : index
    %c0_89 = arith.constant 0 : index
    %c0_90 = arith.constant 0 : index
    %105 = vector.load %arg11[%c0_88, %c0_89, %c0_90] : memref<10x18x128xbf16, #tpu.memory_space<vmem>>, vector<8x16x128xbf16>
    %106 = vector.shape_cast %105 : vector<8x16x128xbf16> to vector<128x128xbf16>
    %c0_91 = arith.constant 0 : index
    %c0_92 = arith.constant 0 : index
    %c0_93 = arith.constant 0 : index
    %107 = vector.load %arg5[%c0_91, %c0_92, %c0_93] : memref<9x128x128xbf16, #tpu.memory_space<vmem>>, vector<1x128x128xbf16>
    %108 = vector.shape_cast %107 : vector<1x128x128xbf16> to vector<128x128xbf16>
    %cst_94 = arith.constant dense<0.000000e+00> : vector<128x128xf32>
    %109 = tpu.matmul %106, %108, %cst_94 {dimension_numbers = #tpu.dot_dimension_numbers<[1], [0], [0], [1], [0, 0, 1, 1], [], []>} : vector<128x128xbf16>, vector<128x128xbf16>, vector<128x128xf32> -> vector<128x128xf32>
    %110 = arith.addf %104, %109 : vector<128x128xf32>
    %c0_95 = arith.constant 0 : index
    %c1_96 = arith.constant 1 : index
    %c0_97 = arith.constant 0 : index
    %111 = vector.load %arg11[%c0_95, %c1_96, %c0_97] : memref<10x18x128xbf16, #tpu.memory_space<vmem>>, vector<8x16x128xbf16>
    %112 = vector.shape_cast %111 : vector<8x16x128xbf16> to vector<128x128xbf16>
    %c1_98 = arith.constant 1 : index
    %c0_99 = arith.constant 0 : index
    %c0_100 = arith.constant 0 : index
    %113 = vector.load %arg5[%c1_98, %c0_99, %c0_100] : memref<9x128x128xbf16, #tpu.memory_space<vmem>>, vector<1x128x128xbf16>
    %114 = vector.shape_cast %113 : vector<1x128x128xbf16> to vector<128x128xbf16>
    %cst_101 = arith.constant dense<0.000000e+00> : vector<128x128xf32>
    %115 = tpu.matmul %112, %114, %cst_101 {dimension_numbers = #tpu.dot_dimension_numbers<[1], [0], [0], [1], [0, 0, 1, 1], [], []>} : vector<128x128xbf16>, vector<128x128xbf16>, vector<128x128xf32> -> vector<128x128xf32>
    %116 = arith.addf %110, %115 : vector<128x128xf32>
    %c0_102 = arith.constant 0 : index
    %c2_103 = arith.constant 2 : index
    %c0_104 = arith.constant 0 : index
    %117 = vector.load %arg11[%c0_102, %c2_103, %c0_104] : memref<10x18x128xbf16, #tpu.memory_space<vmem>>, vector<8x16x128xbf16>
    %118 = vector.shape_cast %117 : vector<8x16x128xbf16> to vector<128x128xbf16>
    %c2_105 = arith.constant 2 : index
    %c0_106 = arith.constant 0 : index
    %c0_107 = arith.constant 0 : index
    %119 = vector.load %arg5[%c2_105, %c0_106, %c0_107] : memref<9x128x128xbf16, #tpu.memory_space<vmem>>, vector<1x128x128xbf16>
    %120 = vector.shape_cast %119 : vector<1x128x128xbf16> to vector<128x128xbf16>
    %cst_108 = arith.constant dense<0.000000e+00> : vector<128x128xf32>
    %121 = tpu.matmul %118, %120, %cst_108 {dimension_numbers = #tpu.dot_dimension_numbers<[1], [0], [0], [1], [0, 0, 1, 1], [], []>} : vector<128x128xbf16>, vector<128x128xbf16>, vector<128x128xf32> -> vector<128x128xf32>
    %122 = arith.addf %116, %121 : vector<128x128xf32>
    %c1_109 = arith.constant 1 : index
    %c0_110 = arith.constant 0 : index
    %c0_111 = arith.constant 0 : index
    %123 = vector.load %arg11[%c1_109, %c0_110, %c0_111] : memref<10x18x128xbf16, #tpu.memory_space<vmem>>, vector<8x16x128xbf16>
    %124 = vector.shape_cast %123 : vector<8x16x128xbf16> to vector<128x128xbf16>
    %c3_112 = arith.constant 3 : index
    %c0_113 = arith.constant 0 : index
    %c0_114 = arith.constant 0 : index
    %125 = vector.load %arg5[%c3_112, %c0_113, %c0_114] : memref<9x128x128xbf16, #tpu.memory_space<vmem>>, vector<1x128x128xbf16>
    %126 = vector.shape_cast %125 : vector<1x128x128xbf16> to vector<128x128xbf16>
    %cst_115 = arith.constant dense<0.000000e+00> : vector<128x128xf32>
    %127 = tpu.matmul %124, %126, %cst_115 {dimension_numbers = #tpu.dot_dimension_numbers<[1], [0], [0], [1], [0, 0, 1, 1], [], []>} : vector<128x128xbf16>, vector<128x128xbf16>, vector<128x128xf32> -> vector<128x128xf32>
    %128 = arith.addf %122, %127 : vector<128x128xf32>
    %c1_116 = arith.constant 1 : index
    %c1_117 = arith.constant 1 : index
    %c0_118 = arith.constant 0 : index
    %129 = vector.load %arg11[%c1_116, %c1_117, %c0_118] : memref<10x18x128xbf16, #tpu.memory_space<vmem>>, vector<8x16x128xbf16>
    %130 = vector.shape_cast %129 : vector<8x16x128xbf16> to vector<128x128xbf16>
    %c4_119 = arith.constant 4 : index
    %c0_120 = arith.constant 0 : index
    %c0_121 = arith.constant 0 : index
    %131 = vector.load %arg5[%c4_119, %c0_120, %c0_121] : memref<9x128x128xbf16, #tpu.memory_space<vmem>>, vector<1x128x128xbf16>
    %132 = vector.shape_cast %131 : vector<1x128x128xbf16> to vector<128x128xbf16>
    %cst_122 = arith.constant dense<0.000000e+00> : vector<128x128xf32>
    %133 = tpu.matmul %130, %132, %cst_122 {dimension_numbers = #tpu.dot_dimension_numbers<[1], [0], [0], [1], [0, 0, 1, 1], [], []>} : vector<128x128xbf16>, vector<128x128xbf16>, vector<128x128xf32> -> vector<128x128xf32>
    %134 = arith.addf %128, %133 : vector<128x128xf32>
    %c1_123 = arith.constant 1 : index
    %c2_124 = arith.constant 2 : index
    %c0_125 = arith.constant 0 : index
    %135 = vector.load %arg11[%c1_123, %c2_124, %c0_125] : memref<10x18x128xbf16, #tpu.memory_space<vmem>>, vector<8x16x128xbf16>
    %136 = vector.shape_cast %135 : vector<8x16x128xbf16> to vector<128x128xbf16>
    %c5_126 = arith.constant 5 : index
    %c0_127 = arith.constant 0 : index
    %c0_128 = arith.constant 0 : index
    %137 = vector.load %arg5[%c5_126, %c0_127, %c0_128] : memref<9x128x128xbf16, #tpu.memory_space<vmem>>, vector<1x128x128xbf16>
    %138 = vector.shape_cast %137 : vector<1x128x128xbf16> to vector<128x128xbf16>
    %cst_129 = arith.constant dense<0.000000e+00> : vector<128x128xf32>
    %139 = tpu.matmul %136, %138, %cst_129 {dimension_numbers = #tpu.dot_dimension_numbers<[1], [0], [0], [1], [0, 0, 1, 1], [], []>} : vector<128x128xbf16>, vector<128x128xbf16>, vector<128x128xf32> -> vector<128x128xf32>
    %140 = arith.addf %134, %139 : vector<128x128xf32>
    %c2_130 = arith.constant 2 : index
    %c0_131 = arith.constant 0 : index
    %c0_132 = arith.constant 0 : index
    %141 = vector.load %arg11[%c2_130, %c0_131, %c0_132] : memref<10x18x128xbf16, #tpu.memory_space<vmem>>, vector<8x16x128xbf16>
    %142 = vector.shape_cast %141 : vector<8x16x128xbf16> to vector<128x128xbf16>
    %c6_133 = arith.constant 6 : index
    %c0_134 = arith.constant 0 : index
    %c0_135 = arith.constant 0 : index
    %143 = vector.load %arg5[%c6_133, %c0_134, %c0_135] : memref<9x128x128xbf16, #tpu.memory_space<vmem>>, vector<1x128x128xbf16>
    %144 = vector.shape_cast %143 : vector<1x128x128xbf16> to vector<128x128xbf16>
    %cst_136 = arith.constant dense<0.000000e+00> : vector<128x128xf32>
    %145 = tpu.matmul %142, %144, %cst_136 {dimension_numbers = #tpu.dot_dimension_numbers<[1], [0], [0], [1], [0, 0, 1, 1], [], []>} : vector<128x128xbf16>, vector<128x128xbf16>, vector<128x128xf32> -> vector<128x128xf32>
    %146 = arith.addf %140, %145 : vector<128x128xf32>
    %c2_137 = arith.constant 2 : index
    %c1_138 = arith.constant 1 : index
    %c0_139 = arith.constant 0 : index
    %147 = vector.load %arg11[%c2_137, %c1_138, %c0_139] : memref<10x18x128xbf16, #tpu.memory_space<vmem>>, vector<8x16x128xbf16>
    %148 = vector.shape_cast %147 : vector<8x16x128xbf16> to vector<128x128xbf16>
    %c7_140 = arith.constant 7 : index
    %c0_141 = arith.constant 0 : index
    %c0_142 = arith.constant 0 : index
    %149 = vector.load %arg5[%c7_140, %c0_141, %c0_142] : memref<9x128x128xbf16, #tpu.memory_space<vmem>>, vector<1x128x128xbf16>
    %150 = vector.shape_cast %149 : vector<1x128x128xbf16> to vector<128x128xbf16>
    %cst_143 = arith.constant dense<0.000000e+00> : vector<128x128xf32>
    %151 = tpu.matmul %148, %150, %cst_143 {dimension_numbers = #tpu.dot_dimension_numbers<[1], [0], [0], [1], [0, 0, 1, 1], [], []>} : vector<128x128xbf16>, vector<128x128xbf16>, vector<128x128xf32> -> vector<128x128xf32>
    %152 = arith.addf %146, %151 : vector<128x128xf32>
    %c2_144 = arith.constant 2 : index
    %c2_145 = arith.constant 2 : index
    %c0_146 = arith.constant 0 : index
    %153 = vector.load %arg11[%c2_144, %c2_145, %c0_146] : memref<10x18x128xbf16, #tpu.memory_space<vmem>>, vector<8x16x128xbf16>
    %154 = vector.shape_cast %153 : vector<8x16x128xbf16> to vector<128x128xbf16>
    %c8_147 = arith.constant 8 : index
    %c0_148 = arith.constant 0 : index
    %c0_149 = arith.constant 0 : index
    %155 = vector.load %arg5[%c8_147, %c0_148, %c0_149] : memref<9x128x128xbf16, #tpu.memory_space<vmem>>, vector<1x128x128xbf16>
    %156 = vector.shape_cast %155 : vector<1x128x128xbf16> to vector<128x128xbf16>
    %cst_150 = arith.constant dense<0.000000e+00> : vector<128x128xf32>
    %157 = tpu.matmul %154, %156, %cst_150 {dimension_numbers = #tpu.dot_dimension_numbers<[1], [0], [0], [1], [0, 0, 1, 1], [], []>} : vector<128x128xbf16>, vector<128x128xbf16>, vector<128x128xf32> -> vector<128x128xf32>
    %158 = arith.addf %152, %157 : vector<128x128xf32>
    %c0_151 = arith.constant 0 : index
    %c0_152 = arith.constant 0 : index
    %c0_153 = arith.constant 0 : index
    %c0_154 = arith.constant 0 : index
    %159 = vector.load %arg7[%c0_151, %c0_152, %c0_153, %c0_154] : memref<1x8x16x128xbf16, #tpu.memory_space<vmem>>, vector<1x8x16x128xbf16>
    %160 = vector.shape_cast %159 : vector<1x8x16x128xbf16> to vector<8x16x128xbf16>
    %161 = vector.shape_cast %160 : vector<8x16x128xbf16> to vector<128x128xbf16>
    %c0_155 = arith.constant 0 : index
    %c0_156 = arith.constant 0 : index
    %162 = vector.load %arg8[%c0_155, %c0_156] : memref<128x128xbf16, #tpu.memory_space<vmem>>, vector<128x128xbf16>
    %cst_157 = arith.constant dense<0.000000e+00> : vector<128x128xf32>
    %163 = tpu.matmul %161, %162, %cst_157 {dimension_numbers = #tpu.dot_dimension_numbers<[1], [0], [0], [1], [0, 0, 1, 1], [], []>} : vector<128x128xbf16>, vector<128x128xbf16>, vector<128x128xf32> -> vector<128x128xf32>
    %164 = arith.addf %158, %163 : vector<128x128xf32>
    %c0_158 = arith.constant 0 : index
    %c0_159 = arith.constant 0 : index
    %165 = vector.load %arg9[%c0_158, %c0_159] : memref<1x128xf32, #tpu.memory_space<vmem>>, vector<1x128xf32>
    %166 = vector.broadcast %165 : vector<1x128xf32> to vector<128x128xf32>
    %167 = arith.addf %164, %166 : vector<128x128xf32>
    %cst_160 = arith.constant 0.000000e+00 : f32
    %168 = vector.broadcast %cst_160 : f32 to vector<128x128xf32>
    %169 = arith.maximumf %167, %168 : vector<128x128xf32>
    %170 = vector.shape_cast %169 : vector<128x128xf32> to vector<8x16x128xf32>
    %171 = arith.truncf %170 : vector<8x16x128xf32> to vector<8x16x128xbf16>
    %c0_161 = arith.constant 0 : index
    %c0_162 = arith.constant 0 : index
    %c0_163 = arith.constant 0 : index
    %c0_164 = arith.constant 0 : index
    %172 = vector.load %arg10[%c0_161, %c0_162, %c0_163, %c0_164] : memref<1x8x16x128xbf16, #tpu.memory_space<vmem>>, vector<1x8x16x128xbf16>
    %173 = vector.shape_cast %172 : vector<1x8x16x128xbf16> to vector<8x16x128xbf16>
    %174 = vector.shape_cast %171 : vector<8x16x128xbf16> to vector<1x8x16x128xbf16>
    tpu.vector_store %arg10[%c0_161, %c0_162, %c0_163, %c0_164], %174 {strides = array<i32>} : memref<1x8x16x128xbf16, #tpu.memory_space<vmem>>, vector<1x8x16x128xbf16>,
    return
  }
  func.func @transform_0(%arg0: i32, %arg1: i32) -> (i32, i32, i32, i32, i32) {
    %c0_i32 = arith.constant 0 : i32
    %c0_i32_0 = arith.constant 0 : i32
    %c0_i32_1 = arith.constant 0 : i32
    %c0_i32_2 = arith.constant 0 : i32
    %c0_i32_3 = arith.constant 0 : i32
    return %arg0, %c0_i32, %c0_i32_0, %c0_i32_1, %c0_i32_2 : i32, i32, i32, i32, i32
  }
  func.func @transform_1(%arg0: i32, %arg1: i32) -> (i32, i32, i32) {
    %c0_i32 = arith.constant 0 : i32
    %c0_i32_0 = arith.constant 0 : i32
    %c0_i32_1 = arith.constant 0 : i32
    %c0_i32_2 = arith.constant 0 : i32
    return %c0_i32, %c0_i32_0, %c0_i32_1 : i32, i32, i32
  }
  func.func @transform_2(%arg0: i32, %arg1: i32) -> (i32, i32) {
    %c0_i32 = arith.constant 0 : i32
    %c0_i32_0 = arith.constant 0 : i32
    %c0_i32_1 = arith.constant 0 : i32
    return %c0_i32, %c0_i32_0 : i32, i32
  }
  func.func @transform_3(%arg0: i32, %arg1: i32) -> (i32, i32, i32) {
    %c0_i32 = arith.constant 0 : i32
    %c0_i32_0 = arith.constant 0 : i32
    %c0_i32_1 = arith.constant 0 : i32
    %c0_i32_2 = arith.constant 0 : i32
    return %c0_i32, %c0_i32_0, %c0_i32_1 : i32, i32, i32
  }
  func.func @transform_4(%arg0: i32, %arg1: i32) -> (i32, i32) {
    %c0_i32 = arith.constant 0 : i32
    %c0_i32_0 = arith.constant 0 : i32
    %c0_i32_1 = arith.constant 0 : i32
    return %c0_i32, %c0_i32_0 : i32, i32
  }
  func.func @transform_5(%arg0: i32, %arg1: i32) -> (i32, i32, i32, i32) {
    %c0_i32 = arith.constant 0 : i32
    %c0_i32_0 = arith.constant 0 : i32
    %c0_i32_1 = arith.constant 0 : i32
    return %arg0, %arg1, %c0_i32, %c0_i32_0 : i32, i32, i32, i32
  }
  func.func @transform_6(%arg0: i32, %arg1: i32) -> (i32, i32) {
    %c0_i32 = arith.constant 0 : i32
    %c0_i32_0 = arith.constant 0 : i32
    %c0_i32_1 = arith.constant 0 : i32
    return %c0_i32, %c0_i32_0 : i32, i32
  }
  func.func @transform_7(%arg0: i32, %arg1: i32) -> (i32, i32) {
    %c0_i32 = arith.constant 0 : i32
    %c0_i32_0 = arith.constant 0 : i32
    %c0_i32_1 = arith.constant 0 : i32
    return %c0_i32, %c0_i32_0 : i32, i32
  }
  func.func @transform_8(%arg0: i32, %arg1: i32) -> (i32, i32, i32, i32) {
    %c0_i32 = arith.constant 0 : i32
    %c0_i32_0 = arith.constant 0 : i32
    %c0_i32_1 = arith.constant 0 : i32
    return %arg0, %arg1, %c0_i32, %c0_i32_0 : i32, i32, i32, i32
  }
}

</mosaic_0001>

<llo_original>
// kernel: tpu_custom_call.1
$region0: #{tpu_custom_call.1}
  #allocation0 [shape = 'u32[]', space=smem, size = 0x4, offset = 0x4, fixed_abs, tag = 'smem constant byte address 0x4 - core index']
  #allocation1 [shape = 'u32[144,128]{1,0:T(1,128)}', space=vmem, size = 0x12000, scoped, tag = 'internal scratch']
  #allocation2 [shape = 'bf16[10,18,128]{2,1,0:T(8,128)(2,1)}', space=vmem, size = 0xf000, scoped, tag = 'scratch operand']
  %s0 = inlined_call_operand.vmem [shape: bf16[2,1,20,18,128], index: 0, kind: input, shape index: {}]
  %s1 = inlined_call_operand.vmem [shape: bf16[9,128,128], index: 1, kind: input, shape index: {}]
  %s2 = inlined_call_operand.vmem [shape: f32[1,128], index: 2, kind: input, shape index: {}]
  %s3 = inlined_call_operand.hbm [shape: bf16[9,128,128], index: 3, kind: input, shape index: {}]
  %s4 = inlined_call_operand.vmem [shape: f32[1,128], index: 4, kind: input, shape index: {}]
  %s5 = inlined_call_operand.vmem [shape: bf16[2,16,16,128], index: 5, kind: input, shape index: {}]
  %s6 = inlined_call_operand.hbm [shape: bf16[128,128], index: 6, kind: input, shape index: {}]
  %s7 = inlined_call_operand.vmem [shape: f32[1,128], index: 7, kind: input, shape index: {}]
  %s8 = inlined_call_operand.hbm [shape: bf16[2,16,16,128], index: 8, kind: output, shape index: {}]
  %s9 = sld [smem:[#allocation0]]
  $region81: #{tpu_custom_call.1} parent=0
    _
  %s11 = ssub.s32 1, %s9
  %s12 = scalar_select 0, %s11, %s9
  $region1: #{tpu_custom_call.1} parent=0
    #allocation3 [shape = 'u8[294912]{0}', space=vmem, size = 0x48000, scoped, tag = 'input window, operand 3, single buffered']
    #allocation4 [shape = 's32[2]{0}', space=sflag, size = 0x8, scoped, tag = 'scoped memory for tpu_custom_call.1']
    #allocation5 [shape = 's32[2]{0}', space=sflag, size = 0x8, scoped, tag = 'scoped memory for tpu_custom_call.1']
    #allocation6 [shape = 'u8[32768]{0}', space=vmem, size = 0x8000, scoped, tag = 'input window, operand 6, single buffered']
    #allocation7 [shape = 's32[1]{0}', space=sflag, size = 0x4, scoped, tag = 'scoped memory for tpu_custom_call.1']
    #allocation8 [shape = 'u8[65536]{0}', space=vmem, size = 0x10000, scoped, tag = 'output window, operand 0']
    %13 = vsyncpa [#allocation4], 0
    %14 = vsyncpa [#allocation7], 0
    %15 = vsyncpa [#allocation5], 0
    %s16 = scalar_lea.sflag [#allocation5], 1
    %17 = vsyncpa %s16, 0
    loop: start=0, step=1, limit=6
    $region2: #{tpu_custom_call.1} parent=1 // loop_pre_header
      _
    $region3: #{tpu_custom_call.1} parent=1 // loop_header
      %s19 = sphi 0, %s23
      %p20 = scmp.ge.s32.totalorder %s19, 6
      %s26 = sphi 0, %s38
      %s27 = sphi 0, %s34
      %s28 = sphi 0, %s26
      %s29 = sphi 0, %s27
      %s30 = sphi 0, %s28
      %s31 = sphi 0, %s29
      %s41 = sphi 0, %s43
      %s44 = sphi 0, %s41
      %s45 = sphi 0, %s44
      %s61 = sphi 0, %s45
      %s65 = sphi 0, %s65
      %s67 = sphi 0, %s65
      %s68 = sphi 0, %s67
      %s82 = sphi 0, %s68
      %s86 = sphi 0, %s86
      %s88 = sphi 0, %s86
      %s89 = sphi 0, %s88
      %s103 = sphi 0, %s89
      %s107 = sphi 0, %s107
      %s109 = sphi 0, %s107
      %s110 = sphi 0, %s109
      %s124 = sphi 0, %s110
      %s128 = sphi 0, %s128
      %s130 = sphi 0, %s128
      %s131 = sphi 0, %s130
      %s145 = sphi 0, %s131
      %s153 = sphi 0, %s155
      %s156 = sphi 0, %s153
      %s157 = sphi 0, %s156
      %s173 = sphi 0, %s157
      %s177 = sphi 0, %s177
      %s179 = sphi 0, %s177
      %s180 = sphi 0, %s179
      %s194 = sphi 0, %s180
      %s198 = sphi 0, %s198
      %s200 = sphi 0, %s198
      %s201 = sphi 0, %s200
      %s215 = sphi 0, %s201
      %s223 = sphi 0, %s225
      %s226 = sphi 0, %s223
      %s227 = sphi 0, %s226
      %s243 = sphi 0, %s227
    $region4: #{tpu_custom_call.1} parent=1 // loop_header_branch
      %22 = sbr.rel (%p20) target = $region8
    $region5: #{tpu_custom_call.1} parent=1 // loop_body
      %s24 = ssub.s32 %s19, 1
      %s25 = ssub.s32 %s19, 2
      %s32 = sadd.s32 1, %s27
      %p33 = scmp.ge.s32.totalorder %s32, 2
      %s34 = scalar_select %p33, 0, %s32
      %s35 = sadd.s32 1, %s26
      %s36 = scalar_select %p33, %s35, %s26
      %p37 = scmp.ge.s32.totalorder %s36, 2
      %s38 = scalar_select %p37, 0, %s36
      %s39 = ssub.s32 %s26, %s38
      %p40 = scmp.eq.s32.totalorder %s39, 0
      %s42 = sadd.s32 %s41, 1
      %s43 = scalar_select %p40, %s41, %s42
      %p46 = pneg %p40
      %p47 = scmp.eq.s32.totalorder %s19, 3
      %p48 = por %p46, %p47
      %p49 = scmp.ne.s32.totalorder %s41, %s44
      %p50 = scmp.eq.s32.totalorder %s19, 0
      %p51 = por %p49, %p50
      %p52 = scmp.ne.s32.totalorder %s41, %s44
      %p53 = scmp.eq.s32.totalorder %s24, 3
      %p54 = por %p52, %p53
      %p55 = scmp.ne.s32.totalorder %s44, %s45
      %p56 = scmp.eq.s32.totalorder %s24, 0
      %p57 = por %p55, %p56
      %p58 = scmp.ne.s32.totalorder %s44, %s45
      %p59 = scmp.eq.s32.totalorder %s25, 3
      %p60 = por %p58, %p59
      %p62 = scmp.ne.s32.totalorder %s45, %s61
      %p63 = scmp.eq.s32.totalorder %s25, 0
      %p64 = por %p62, %p63
      %s66 = sadd.s32 %s65, 1
      %p69 = scmp.eq.s32.totalorder %s19, 3
      %p70 = scmp.ne.s32.totalorder %s65, %s67
      %p71 = scmp.eq.s32.totalorder %s19, 0
      %p72 = por %p70, %p71
      %p73 = scmp.ne.s32.totalorder %s65, %s67
      %p74 = scmp.eq.s32.totalorder %s24, 3
      %p75 = por %p73, %p74
      %p76 = scmp.ne.s32.totalorder %s67, %s68
      %p77 = scmp.eq.s32.totalorder %s24, 0
      %p78 = por %p76, %p77
      %p79 = scmp.ne.s32.totalorder %s67, %s68
      %p80 = scmp.eq.s32.totalorder %s25, 3
      %p81 = por %p79, %p80
      %p83 = scmp.ne.s32.totalorder %s68, %s82
      %p84 = scmp.eq.s32.totalorder %s25, 0
      %p85 = por %p83, %p84
      %s87 = sadd.s32 %s86, 1
      %p90 = scmp.eq.s32.totalorder %s19, 3
      %p91 = scmp.ne.s32.totalorder %s86, %s88
      %p92 = scmp.eq.s32.totalorder %s19, 0
      %p93 = por %p91, %p92
      %p94 = scmp.ne.s32.totalorder %s86, %s88
      %p95 = scmp.eq.s32.totalorder %s24, 3
      %p96 = por %p94, %p95
      %p97 = scmp.ne.s32.totalorder %s88, %s89
      %p98 = scmp.eq.s32.totalorder %s24, 0
      %p99 = por %p97, %p98
      %p100 = scmp.ne.s32.totalorder %s88, %s89
      %p101 = scmp.eq.s32.totalorder %s25, 3
      %p102 = por %p100, %p101
      %p104 = scmp.ne.s32.totalorder %s89, %s103
      %p105 = scmp.eq.s32.totalorder %s25, 0
      %p106 = por %p104, %p105
      %s108 = sadd.s32 %s107, 1
      %p111 = scmp.eq.s32.totalorder %s19, 3
      %p112 = scmp.ne.s32.totalorder %s107, %s109
      %p113 = scmp.eq.s32.totalorder %s19, 0
      %p114 = por %p112, %p113
      %p115 = scmp.ne.s32.totalorder %s107, %s109
      %p116 = scmp.eq.s32.totalorder %s24, 3
      %p117 = por %p115, %p116
      %p118 = scmp.ne.s32.totalorder %s109, %s110
      %p119 = scmp.eq.s32.totalorder %s24, 0
      %p120 = por %p118, %p119
      %p121 = scmp.ne.s32.totalorder %s109, %s110
      %p122 = scmp.eq.s32.totalorder %s25, 3
      %p123 = por %p121, %p122
      %p125 = scmp.ne.s32.totalorder %s110, %s124
      %p126 = scmp.eq.s32.totalorder %s25, 0
      %p127 = por %p125, %p126
      %s129 = sadd.s32 %s128, 1
      %p132 = scmp.eq.s32.totalorder %s19, 3
      %p133 = scmp.ne.s32.totalorder %s128, %s130
      %p134 = scmp.eq.s32.totalorder %s19, 0
      %p135 = por %p133, %p134
      %p136 = scmp.ne.s32.totalorder %s128, %s130
      %p137 = scmp.eq.s32.totalorder %s24, 3
      %p138 = por %p136, %p137
      %p139 = scmp.ne.s32.totalorder %s130, %s131
      %p140 = scmp.eq.s32.totalorder %s24, 0
      %p141 = por %p139, %p140
      %p142 = scmp.ne.s32.totalorder %s130, %s131
      %p143 = scmp.eq.s32.totalorder %s25, 3
      %p144 = por %p142, %p143
      %p146 = scmp.ne.s32.totalorder %s131, %s145
      %p147 = scmp.eq.s32.totalorder %s25, 0
      %p148 = por %p146, %p147
      %s149 = ssub.s32 %s26, %s38
      %s150 = ssub.s32 %s27, %s34
      %s151 = sor.u32 %s149, %s150
      %p152 = scmp.eq.s32.totalorder %s151, 0
      %s154 = sadd.s32 %s153, 1
      %s155 = scalar_select %p152, %s153, %s154
      %p158 = pneg %p152
      %p159 = scmp.eq.s32.totalorder %s19, 3
      %p160 = por %p158, %p159
      %p161 = scmp.ne.s32.totalorder %s153, %s156
      %p162 = scmp.eq.s32.totalorder %s19, 0
      %p163 = por %p161, %p162
      %p164 = scmp.ne.s32.totalorder %s153, %s156
      %p165 = scmp.eq.s32.totalorder %s24, 3
      %p166 = por %p164, %p165
      %p167 = scmp.ne.s32.totalorder %s156, %s157
      %p168 = scmp.eq.s32.totalorder %s24, 0
      %p169 = por %p167, %p168
      %p170 = scmp.ne.s32.totalorder %s156, %s157
      %p171 = scmp.eq.s32.totalorder %s25, 3
      %p172 = por %p170, %p171
      %p174 = scmp.ne.s32.totalorder %s157, %s173
      %p175 = scmp.eq.s32.totalorder %s25, 0
      %p176 = por %p174, %p175
      %s178 = sadd.s32 %s177, 1
      %p181 = scmp.eq.s32.totalorder %s19, 3
      %p182 = scmp.ne.s32.totalorder %s177, %s179
      %p183 = scmp.eq.s32.totalorder %s19, 0
      %p184 = por %p182, %p183
      %p185 = scmp.ne.s32.totalorder %s177, %s179
      %p186 = scmp.eq.s32.totalorder %s24, 3
      %p187 = por %p185, %p186
      %p188 = scmp.ne.s32.totalorder %s179, %s180
      %p189 = scmp.eq.s32.totalorder %s24, 0
      %p190 = por %p188, %p189
      %p191 = scmp.ne.s32.totalorder %s179, %s180
      %p192 = scmp.eq.s32.totalorder %s25, 3
      %p193 = por %p191, %p192
      %p195 = scmp.ne.s32.totalorder %s180, %s194
      %p196 = scmp.eq.s32.totalorder %s25, 0
      %p197 = por %p195, %p196
      %s199 = sadd.s32 %s198, 1
      %p202 = scmp.eq.s32.totalorder %s19, 3
      %p203 = scmp.ne.s32.totalorder %s198, %s200
      %p204 = scmp.eq.s32.totalorder %s19, 0
      %p205 = por %p203, %p204
      %p206 = scmp.ne.s32.totalorder %s198, %s200
      %p207 = scmp.eq.s32.totalorder %s24, 3
      %p208 = por %p206, %p207
      %p209 = scmp.ne.s32.totalorder %s200, %s201
      %p210 = scmp.eq.s32.totalorder %s24, 0
      %p211 = por %p209, %p210
      %p212 = scmp.ne.s32.totalorder %s200, %s201
      %p213 = scmp.eq.s32.totalorder %s25, 3
      %p214 = por %p212, %p213
      %p216 = scmp.ne.s32.totalorder %s201, %s215
      %p217 = scmp.eq.s32.totalorder %s25, 0
      %p218 = por %p216, %p217
      %s219 = ssub.s32 %s26, %s38
      %s220 = ssub.s32 %s27, %s34
      %s221 = sor.u32 %s219, %s220
      %p222 = scmp.eq.s32.totalorder %s221, 0
      %s224 = sadd.s32 %s223, 1
      %s225 = scalar_select %p222, %s223, %s224
      %p228 = pneg %p222
      %p229 = scmp.eq.s32.totalorder %s19, 3
      %p230 = por %p228, %p229
      %p231 = scmp.ne.s32.totalorder %s223, %s226
      %p232 = scmp.eq.s32.totalorder %s19, 0
      %p233 = por %p231, %p232
      %p234 = scmp.ne.s32.totalorder %s223, %s226
      %p235 = scmp.eq.s32.totalorder %s24, 3
      %p236 = por %p234, %p235
      %p237 = scmp.ne.s32.totalorder %s226, %s227
      %p238 = scmp.eq.s32.totalorder %s24, 0
      %p239 = por %p237, %p238
      %p240 = scmp.ne.s32.totalorder %s226, %s227
      %p241 = scmp.eq.s32.totalorder %s25, 3
      %p242 = por %p240, %p241
      %p244 = scmp.ne.s32.totalorder %s227, %s243
      %p245 = scmp.eq.s32.totalorder %s25, 0
      %p246 = por %p244, %p245
      %p247 = scmp.le.s32.totalorder 1, %s19
      %p248 = scmp.lt.s32.totalorder %s19, 5
      %p249 = pnand %p247, %p248
      %p250 = pneg %p249
      // Predicated region
      $region9: #{tpu_custom_call.1} parent=5 // pred_check
        _
      $region10: #{tpu_custom_call.1} parent=5 // pred_check_branch
        %252 = sbr.rel (%p249) target = $region12
      $region11: #{tpu_custom_call.1} parent=5 // pred_region
        %s253 = ssub.s32 %s19, 1
        // Predicated region
        $region13: #{tpu_custom_call.1} parent=11 // pred_check
          %p254 = pneg %p78
        $region14: #{tpu_custom_call.1} parent=11 // pred_check_branch
          %256 = sbr.rel (%p254) target = $region16
        $region15: #{tpu_custom_call.1} parent=11 // pred_region
          _
        $region16: #{tpu_custom_call.1} parent=11 // pred_fallthru
          _
        // Predicated region
        $region17: #{tpu_custom_call.1} parent=11 // pred_check
          %p257 = pneg %p99
        $region18: #{tpu_custom_call.1} parent=11 // pred_check_branch
          %259 = sbr.rel (%p257) target = $region20
        $region19: #{tpu_custom_call.1} parent=11 // pred_region
          _
        $region20: #{tpu_custom_call.1} parent=11 // pred_fallthru
          _
        // Predicated region
        $region21: #{tpu_custom_call.1} parent=11 // pred_check
          %p260 = pneg %p120
        $region22: #{tpu_custom_call.1} parent=11 // pred_check_branch
          %262 = sbr.rel (%p260) target = $region24
        $region23: #{tpu_custom_call.1} parent=11 // pred_region
          %s264 = ssub.s32 9216, 9216
          %265 = vsyncadd [#allocation4], %s264
          %s266 = sshll.u32 [#allocation3], 4
          %s267 = int_to_ptr.vmem [resolvable:$true] %s266
          %272 = dma.hbm_to_vmem [thread:$0]  %s3, 9216, %s267, [#allocation4], 64, 64, 4
        $region24: #{tpu_custom_call.1} parent=11 // pred_fallthru
          _
        // Predicated region
        $region25: #{tpu_custom_call.1} parent=11 // pred_check
          %p273 = pneg %p141
        $region26: #{tpu_custom_call.1} parent=11 // pred_check_branch
          %275 = sbr.rel (%p273) target = $region28
        $region27: #{tpu_custom_call.1} parent=11 // pred_region
          _
        $region28: #{tpu_custom_call.1} parent=11 // pred_fallthru
          _
        // Predicated region
        $region29: #{tpu_custom_call.1} parent=11 // pred_check
          %p276 = pneg %p190
        $region30: #{tpu_custom_call.1} parent=11 // pred_check_branch
          %278 = sbr.rel (%p276) target = $region32
        $region31: #{tpu_custom_call.1} parent=11 // pred_region
          %s280 = ssub.s32 1024, 1024
          %281 = vsyncadd [#allocation7], %s280
          %s282 = sshll.u32 [#allocation6], 4
          %s283 = int_to_ptr.vmem [resolvable:$true] %s282
          %288 = dma.hbm_to_vmem [thread:$0]  %s6, 1024, %s283, [#allocation7], 64, 64, 4
        $region32: #{tpu_custom_call.1} parent=11 // pred_fallthru
          _
        // Predicated region
        $region33: #{tpu_custom_call.1} parent=11 // pred_check
          %p289 = pneg %p211
        $region34: #{tpu_custom_call.1} parent=11 // pred_check_branch
          %291 = sbr.rel (%p289) target = $region36
        $region35: #{tpu_custom_call.1} parent=11 // pred_region
          _
        $region36: #{tpu_custom_call.1} parent=11 // pred_fallthru
          _
      $region12: #{tpu_custom_call.1} parent=5 // pred_fallthru
        _
      %p292 = scmp.lt.s32.totalorder %s19, 4
      // Predicated region
      $region37: #{tpu_custom_call.1} parent=5 // pred_check
        %p293 = pneg %p292
      $region38: #{tpu_custom_call.1} parent=5 // pred_check_branch
        %295 = sbr.rel (%p293) target = $region40
      $region39: #{tpu_custom_call.1} parent=5 // pred_region
        // Predicated region
        $region41: #{tpu_custom_call.1} parent=39 // pred_check
          %p296 = pneg %p51
        $region42: #{tpu_custom_call.1} parent=39 // pred_check_branch
          %298 = sbr.rel (%p296) target = $region44
        $region43: #{tpu_custom_call.1} parent=39 // pred_region
          %p299 = scmp.lt.s32.totalorder %s26, 1
          %s300 = scalar_select %p299, %s26, 1
          %s301 = smul.addr %s300, 60
          %s302 = smul.addr %s301, 4
          %s303 = scalar_lea.vmem %s0, %s302
        $region44: #{tpu_custom_call.1} parent=39 // pred_fallthru
          _
        // Predicated region
        $region45: #{tpu_custom_call.1} parent=39 // pred_check
          %p304 = pneg %p163
        $region46: #{tpu_custom_call.1} parent=39 // pred_check_branch
          %306 = sbr.rel (%p304) target = $region48
        $region47: #{tpu_custom_call.1} parent=39 // pred_region
          %s307 = smul.u32 8, %s27
          %p308 = scmp.lt.s32.totalorder %s26, 1
          %s309 = scalar_select %p308, %s26, 1
          %p310 = scmp.lt.s32.totalorder %s307, 15
          %s311 = scalar_select %p310, %s307, 15
          %s312 = smul.addr %s311, 2
          %s313 = smul.addr %s309, 32
          %s314 = sadd.s32 %s312, %s313
          %s315 = smul.addr %s314, 4
          %s316 = scalar_lea.vmem %s5, %s315
          %s317 = smul.u32 8, %s27
        $region48: #{tpu_custom_call.1} parent=39 // pred_fallthru
          _
      $region40: #{tpu_custom_call.1} parent=5 // pred_fallthru
        _
      %p318 = scmp.le.s32.totalorder 1, %s19
      %p319 = scmp.lt.s32.totalorder %s19, 5
      %p320 = pnand %p318, %p319
      %p321 = pneg %p320
      // Predicated region
      $region49: #{tpu_custom_call.1} parent=5 // pred_check
        _
      $region50: #{tpu_custom_call.1} parent=5 // pred_check_branch
        %323 = sbr.rel (%p320) target = $region52
      $region51: #{tpu_custom_call.1} parent=5 // pred_region
        %s324 = ssub.s32 %s19, 1
        // Predicated region
        $region53: #{tpu_custom_call.1} parent=51 // pred_check
          %p325 = pneg %p120
        $region54: #{tpu_custom_call.1} parent=51 // pred_check_branch
          %327 = sbr.rel (%p325) target = $region56
        $region55: #{tpu_custom_call.1} parent=51 // pred_region
          %328 = dma.done [#allocation4], 9216
        $region56: #{tpu_custom_call.1} parent=51 // pred_fallthru
          _
        // Predicated region
        $region57: #{tpu_custom_call.1} parent=51 // pred_check
          %p329 = pneg %p190
        $region58: #{tpu_custom_call.1} parent=51 // pred_check_branch
          %331 = sbr.rel (%p329) target = $region60
        $region59: #{tpu_custom_call.1} parent=51 // pred_region
          %332 = dma.done [#allocation7], 1024
        $region60: #{tpu_custom_call.1} parent=51 // pred_fallthru
          _
        %p333 = scmp.lt.s32.totalorder %s28, 1
        %s334 = scalar_select %p333, %s28, 1
        %s335 = smul.addr %s334, 60
        %s336 = smul.addr %s335, 4
        %s337 = scalar_lea.vmem %s0, %s336
        %p338 = pneg %p57
        %p339 = pneg %p54
        %p340 = pneg %p78
        %p341 = pneg %p75
        %p342 = pneg %p99
        %p343 = pneg %p96
        %p344 = pneg %p120
        %p345 = pneg %p117
        %p346 = pneg %p141
        %p347 = pneg %p138
        %s348 = smul.u32 8, %s29
        %p349 = scmp.lt.s32.totalorder %s28, 1
        %s350 = scalar_select %p349, %s28, 1
        %p351 = scmp.lt.s32.totalorder %s348, 15
        %s352 = scalar_select %p351, %s348, 15
        %s353 = smul.addr %s352, 2
        %s354 = smul.addr %s350, 32
        %s355 = sadd.s32 %s353, %s354
        %s356 = smul.addr %s355, 4
        %s357 = scalar_lea.vmem %s5, %s356
        %p358 = pneg %p169
        %p359 = pneg %p166
        %p360 = pneg %p190
        %p361 = pneg %p187
        %p362 = pneg %p211
        %p363 = pneg %p208
        %p364 = pneg %p239
        %p365 = pneg %p236
        %s366 = sand.u32 %s226, 1
        %s367 = scalar_lea.sflag [#allocation5], %s366
        %s368 = sand.u32 %s226, 1
        %s369 = smul.addr %s368, 64
        %s370 = scalar_lea.vmem [#allocation8], %s369
        %p371 = scmp.lt.s32.totalorder %s28, 1
        %s372 = scalar_select %p371, %s28, 1
        %s373 = smul.addr %s372, 60
        %s374 = smul.addr %s373, 4
        %s375 = scalar_lea.vmem %s0, %s374
        %s376 = smul.u32 8, %s29
        %p377 = scmp.lt.s32.totalorder %s28, 1
        %s378 = scalar_select %p377, %s28, 1
        %p379 = scmp.lt.s32.totalorder %s376, 15
        %s380 = scalar_select %p379, %s376, 15
        %s381 = smul.addr %s380, 2
        %s382 = smul.addr %s378, 32
        %s383 = sadd.s32 %s381, %s382
        %s384 = smul.addr %s383, 4
        %s385 = scalar_lea.vmem %s5, %s384
        %s386 = smul.u32 8, %s29
        %s387 = smul.u32 8, %s29
        %s389 = smul.u32 %s29, 8
        %s390 = smul.u32 %s389, 3
        %s391 = smul.addr %s390, 4
        %s392 = scalar_lea.vmem %s375, %s391
        %v393 = vld [vmem:[%s392] sm:$0xf]
        %v394 = vld [vmem:[%s392 + $0x4] sm:$0xf]
        %v395 = vld [vmem:[%s392 + $0xc] sm:$0xf]
        %v396 = vld [vmem:[%s392 + $0x10] sm:$0xf]
        %v397 = vld [vmem:[%s392 + $0x18] sm:$0xf]
        %v398 = vld [vmem:[%s392 + $0x1c] sm:$0xf]
        %v399 = vld [vmem:[%s392 + $0x24] sm:$0xf]
        %v400 = vld [vmem:[%s392 + $0x28] sm:$0xf]
        %v401 = vld [vmem:[%s392 + $0x30] sm:$0xf]
        %v402 = vld [vmem:[%s392 + $0x34] sm:$0xf]
        %v403 = vld [vmem:[%s392 + $0x3c] sm:$0xf]
        %v404 = vld [vmem:[%s392 + $0x40] sm:$0xf]
        %v405 = vld [vmem:[%s392 + $0x48] sm:$0xf]
        %v406 = vld [vmem:[%s392 + $0x4c] sm:$0xf]
        %v407 = vld [vmem:[%s392 + $0x54] sm:$0xf]
        %v408 = vld [vmem:[%s392 + $0x58] sm:$0xf]
        %v409 = vld [vmem:[%s392 + $0x60] sm:$0xf]
        %v410 = vld [vmem:[%s392 + $0x64] sm:$0xf]
        %v411 = vld [vmem:[%s392 + $0x6c] sm:$0xf]
        %v412 = vld [vmem:[%s392 + $0x70] sm:$0xf]
        %v413 = vld [vmem:[%s1] sm:$0xf]
        %v414 = vld [vmem:[%s1 + $0x4] sm:$0xf]
        %v415 = vld [vmem:[%s1 + $0x8] sm:$0xf]
        %v416 = vld [vmem:[%s1 + $0xc] sm:$0xf]
        %v417 = vld [vmem:[%s1 + $0x10] sm:$0xf]
        %v418 = vld [vmem:[%s1 + $0x14] sm:$0xf]
        %v419 = vld [vmem:[%s1 + $0x18] sm:$0xf]
        %v420 = vld [vmem:[%s1 + $0x1c] sm:$0xf]
        %v421 = vld [vmem:[%s1 + $0x20] sm:$0xf]
        %v422 = vld [vmem:[%s1 + $0x24] sm:$0xf]
        %v423 = vld [vmem:[%s1 + $0x28] sm:$0xf]
        %v424 = vld [vmem:[%s1 + $0x2c] sm:$0xf]
        %v425 = vld [vmem:[%s1 + $0x30] sm:$0xf]
        %v426 = vld [vmem:[%s1 + $0x34] sm:$0xf]
        %v427 = vld [vmem:[%s1 + $0x38] sm:$0xf]
        %v428 = vld [vmem:[%s1 + $0x3c] sm:$0xf]
        %v429 = vld [vmem:[%s392 + $0x8] sm:$0x1]
        %v430 = vld [vmem:[%s392 + $0x14] sm:$0x1]
        %v431 = vld [vmem:[%s392 + $0x20] sm:$0x1]
        %v432 = vld [vmem:[%s392 + $0x2c] sm:$0x1]
        %v433 = vld [vmem:[%s392 + $0x38] sm:$0x1]
        %v434 = vld [vmem:[%s392 + $0x44] sm:$0x1]
        %v435 = vld [vmem:[%s392 + $0x50] sm:$0x1]
        %v436 = vld [vmem:[%s392 + $0x5c] sm:$0x1]
        %v437 = vld [vmem:[%s392 + $0x68] sm:$0x1]
        %v438 = vld [vmem:[%s392 + $0x74] sm:$0x1]
        %vm439 = vsmask.f32 3328
        %vm440 = vsmask.f32 7440
        %vm441 = vmor %vm439, %vm440
        %v443 = vshrl.u32 %v393, 16
        %v445 = vrot.slane %v443, 4
        %v446 = vshll.u32 %v393, 16
        %v448 = vrot.slane %v446, 5
        %v449 = vor.u32 %v445, %v448
        %v450 = vrot.slane %v449, 4
        %v452 = vshll.u32 %v394, 16
        %v454 = vrot.slane %v452, 5
        %v455 = vsel %vm441, %v450, %v454
        %v456 = vshrl.u32 %v394, 16
        %v458 = vrot.slane %v456, 4
        %v459 = vor.u32 %v458, %v454
        %v460 = vrot.slane %v459, 4
        %v462 = vshll.u32 %v429, 16
        %v464 = vrot.slane %v462, 5
        %v465 = vsel %vm441, %v460, %v464
        %v467 = vshrl.u32 %v395, 16
        %v469 = vrot.slane %v467, 4
        %v470 = vshll.u32 %v395, 16
        %v472 = vrot.slane %v470, 5
        %v473 = vor.u32 %v469, %v472
        %v474 = vrot.slane %v473, 4
        %v476 = vshll.u32 %v396, 16
        %v478 = vrot.slane %v476, 5
        %v479 = vsel %vm441, %v474, %v478
        %v480 = vshrl.u32 %v396, 16
        %v482 = vrot.slane %v480, 4
        %v483 = vor.u32 %v482, %v478
        %v484 = vrot.slane %v483, 4
        %v486 = vshll.u32 %v430, 16
        %v488 = vrot.slane %v486, 5
        %v489 = vsel %vm441, %v484, %v488
        %v491 = vshrl.u32 %v397, 16
        %v493 = vrot.slane %v491, 4
        %v494 = vshll.u32 %v397, 16
        %v496 = vrot.slane %v494, 5
        %v497 = vor.u32 %v493, %v496
        %v498 = vrot.slane %v497, 4
        %v500 = vshll.u32 %v398, 16
        %v502 = vrot.slane %v500, 5
        %v503 = vsel %vm441, %v498, %v502
        %v504 = vshrl.u32 %v398, 16
        %v506 = vrot.slane %v504, 4
        %v507 = vor.u32 %v506, %v502
        %v508 = vrot.slane %v507, 4
        %v510 = vshll.u32 %v431, 16
        %v512 = vrot.slane %v510, 5
        %v513 = vsel %vm441, %v508, %v512
        %v515 = vshrl.u32 %v399, 16
        %v517 = vrot.slane %v515, 4
        %v518 = vshll.u32 %v399, 16
        %v520 = vrot.slane %v518, 5
        %v521 = vor.u32 %v517, %v520
        %v522 = vrot.slane %v521, 4
        %v524 = vshll.u32 %v400, 16
        %v526 = vrot.slane %v524, 5
        %v527 = vsel %vm441, %v522, %v526
        %v528 = vshrl.u32 %v400, 16
        %v530 = vrot.slane %v528, 4
        %v531 = vor.u32 %v530, %v526
        %v532 = vrot.slane %v531, 4
        %v534 = vshll.u32 %v432, 16
        %v536 = vrot.slane %v534, 5
        %v537 = vsel %vm441, %v532, %v536
        %v539 = vshrl.u32 %v401, 16
        %v541 = vrot.slane %v539, 4
        %v542 = vshll.u32 %v401, 16
        %v544 = vrot.slane %v542, 5
        %v545 = vor.u32 %v541, %v544
        %v546 = vrot.slane %v545, 4
        %v548 = vshll.u32 %v402, 16
        %v550 = vrot.slane %v548, 5
        %v551 = vsel %vm441, %v546, %v550
        %v552 = vshrl.u32 %v402, 16
        %v554 = vrot.slane %v552, 4
        %v555 = vor.u32 %v554, %v550
        %v556 = vrot.slane %v555, 4
        %v558 = vshll.u32 %v433, 16
        %v560 = vrot.slane %v558, 5
        %v561 = vsel %vm441, %v556, %v560
        %v563 = vshrl.u32 %v403, 16
        %v565 = vrot.slane %v563, 4
        %v566 = vshll.u32 %v403, 16
        %v568 = vrot.slane %v566, 5
        %v569 = vor.u32 %v565, %v568
        %v570 = vrot.slane %v569, 4
        %v572 = vshll.u32 %v404, 16
        %v574 = vrot.slane %v572, 5
        %v575 = vsel %vm441, %v570, %v574
        %v576 = vshrl.u32 %v404, 16
        %v578 = vrot.slane %v576, 4
        %v579 = vor.u32 %v578, %v574
        %v580 = vrot.slane %v579, 4
        %v582 = vshll.u32 %v434, 16
        %v584 = vrot.slane %v582, 5
        %v585 = vsel %vm441, %v580, %v584
        %v587 = vshrl.u32 %v405, 16
        %v589 = vrot.slane %v587, 4
        %v590 = vshll.u32 %v405, 16
        %v592 = vrot.slane %v590, 5
        %v593 = vor.u32 %v589, %v592
        %v594 = vrot.slane %v593, 4
        %v596 = vshll.u32 %v406, 16
        %v598 = vrot.slane %v596, 5
        %v599 = vsel %vm441, %v594, %v598
        %v600 = vshrl.u32 %v406, 16
        %v602 = vrot.slane %v600, 4
        %v603 = vor.u32 %v602, %v598
        %v604 = vrot.slane %v603, 4
        %v606 = vshll.u32 %v435, 16
        %v608 = vrot.slane %v606, 5
        %v609 = vsel %vm441, %v604, %v608
        %v611 = vshrl.u32 %v407, 16
        %v613 = vrot.slane %v611, 4
        %v614 = vshll.u32 %v407, 16
        %v616 = vrot.slane %v614, 5
        %v617 = vor.u32 %v613, %v616
        %v618 = vrot.slane %v617, 4
        %v620 = vshll.u32 %v408, 16
        %v622 = vrot.slane %v620, 5
        %v623 = vsel %vm441, %v618, %v622
        %v624 = vshrl.u32 %v408, 16
        %v626 = vrot.slane %v624, 4
        %v627 = vor.u32 %v626, %v622
        %v628 = vrot.slane %v627, 4
        %v630 = vshll.u32 %v436, 16
        %v632 = vrot.slane %v630, 5
        %v633 = vsel %vm441, %v628, %v632
        %v635 = vshrl.u32 %v409, 16
        %v637 = vrot.slane %v635, 4
        %v638 = vshll.u32 %v409, 16
        %v640 = vrot.slane %v638, 5
        %v641 = vor.u32 %v637, %v640
        %v642 = vrot.slane %v641, 4
        %v644 = vshll.u32 %v410, 16
        %v646 = vrot.slane %v644, 5
        %v647 = vsel %vm441, %v642, %v646
        %v648 = vshrl.u32 %v410, 16
        %v650 = vrot.slane %v648, 4
        %v651 = vor.u32 %v650, %v646
        %v652 = vrot.slane %v651, 4
        %v654 = vshll.u32 %v437, 16
        %v656 = vrot.slane %v654, 5
        %v657 = vsel %vm441, %v652, %v656
        %v659 = vshrl.u32 %v411, 16
        %v661 = vrot.slane %v659, 4
        %v662 = vshll.u32 %v411, 16
        %v664 = vrot.slane %v662, 5
        %v665 = vor.u32 %v661, %v664
        %v666 = vrot.slane %v665, 4
        %v668 = vshll.u32 %v412, 16
        %v670 = vrot.slane %v668, 5
        %v671 = vsel %vm441, %v666, %v670
        %v672 = vshrl.u32 %v412, 16
        %v674 = vrot.slane %v672, 4
        %v675 = vor.u32 %v674, %v670
        %v676 = vrot.slane %v675, 4
        %v678 = vshll.u32 %v438, 16
        %v680 = vrot.slane %v678, 5
        %v681 = vsel %vm441, %v676, %v680
        %s682 = scalar_lea.vmem %s1, 64
        %v683 = vld [vmem:[%s682] sm:$0xf]
        %v684 = vld [vmem:[%s682 + $0x4] sm:$0xf]
        %v685 = vld [vmem:[%s682 + $0x8] sm:$0xf]
        %v686 = vld [vmem:[%s682 + $0xc] sm:$0xf]
        %v687 = vld [vmem:[%s682 + $0x10] sm:$0xf]
        %v688 = vld [vmem:[%s682 + $0x14] sm:$0xf]
        %v689 = vld [vmem:[%s682 + $0x18] sm:$0xf]
        %v690 = vld [vmem:[%s682 + $0x1c] sm:$0xf]
        %v691 = vld [vmem:[%s682 + $0x20] sm:$0xf]
        %v692 = vld [vmem:[%s682 + $0x24] sm:$0xf]
        %v693 = vld [vmem:[%s682 + $0x28] sm:$0xf]
        %v694 = vld [vmem:[%s682 + $0x2c] sm:$0xf]
        %v695 = vld [vmem:[%s682 + $0x30] sm:$0xf]
        %v696 = vld [vmem:[%s682 + $0x34] sm:$0xf]
        %v697 = vld [vmem:[%s682 + $0x38] sm:$0xf]
        %v698 = vld [vmem:[%s682 + $0x3c] sm:$0xf]
        %v699 = vunpack.c.l.b16 %v455
        %v700 = vunpack.c.l.b16 %v465
        %v701 = vunpack.c.l.b16 %v479
        %v702 = vunpack.c.l.b16 %v489
        %v703 = vunpack.c.l.b16 %v503
        %v704 = vunpack.c.l.b16 %v513
        %v705 = vunpack.c.l.b16 %v527
        %v706 = vunpack.c.l.b16 %v537
        %v707 = vunpack.c.l.b16 %v551
        %v708 = vunpack.c.l.b16 %v561
        %v709 = vunpack.c.l.b16 %v575
        %v710 = vunpack.c.l.b16 %v585
        %v711 = vunpack.c.l.b16 %v599
        %v712 = vunpack.c.l.b16 %v609
        %v713 = vunpack.c.l.b16 %v623
        %v714 = vunpack.c.l.b16 %v633
        %v715 = vunpack.c.l.b16 %v647
        %v716 = vunpack.c.l.b16 %v657
        %v717 = vunpack.c.l.b16 %v671
        %v718 = vunpack.c.l.b16 %v681
        %v719 = vpack.c.b16 %v700, %v699
        %v720 = vpack.c.b16 %v702, %v701
        %v721 = vpack.c.b16 %v704, %v703
        %v722 = vpack.c.b16 %v706, %v705
        %v723 = vpack.c.b16 %v708, %v707
        %v724 = vpack.c.b16 %v710, %v709
        %v725 = vpack.c.b16 %v712, %v711
        %v726 = vpack.c.b16 %v714, %v713
        %v727 = vpack.c.b16 %v716, %v715
        %v728 = vpack.c.b16 %v718, %v717
        %v755 = vunpack.c.l.b16 %v683
        %v756 = vunpack.c.l.b16 %v684
        %v757 = vunpack.c.l.b16 %v685
        %v758 = vunpack.c.l.b16 %v686
        %v759 = vunpack.c.l.b16 %v687
        %v760 = vunpack.c.l.b16 %v688
        %v761 = vunpack.c.l.b16 %v689
        %v762 = vunpack.c.l.b16 %v690
        %v763 = vunpack.c.l.b16 %v691
        %v764 = vunpack.c.l.b16 %v692
        %v765 = vunpack.c.l.b16 %v693
        %v766 = vunpack.c.l.b16 %v694
        %v767 = vunpack.c.l.b16 %v695
        %v768 = vunpack.c.l.b16 %v696
        %v769 = vunpack.c.l.b16 %v697
        %v770 = vunpack.c.l.b16 %v698
        %v771 = vpack.c.b16 %v756, %v755
        %v772 = vpack.c.b16 %v758, %v757
        %v773 = vpack.c.b16 %v760, %v759
        %v774 = vpack.c.b16 %v762, %v761
        %v775 = vpack.c.b16 %v764, %v763
        %v776 = vpack.c.b16 %v766, %v765
        %v777 = vpack.c.b16 %v768, %v767
        %v778 = vpack.c.b16 %v770, %v769
        %787 = vmatprep.subr.bf16.mxu0 0
        %788 = vmatpush1.bf16.msra.mxu0 %v771
        %789 = vmatprep.subr.bf16.mxu0 0
        %790 = vmatpush1.bf16.msra.mxu0 %v772
        %791 = vmatprep.subr.bf16.mxu0 0
        %792 = vmatpush1.bf16.msra.mxu0 %v773
        %793 = vmatprep.subr.bf16.mxu0 0
        %794 = vmatpush1.bf16.msra.mxu0 %v774
        %795 = vmatprep.subr.bf16.mxu0 0
        %796 = vmatpush1.bf16.msra.mxu0 %v775
        %797 = vmatprep.subr.bf16.mxu0 0
        %798 = vmatpush1.bf16.msra.mxu0 %v776
        %799 = vmatprep.subr.bf16.mxu0 0
        %800 = vmatpush1.bf16.msra.mxu0 %v777
        %801 = vmatprep.subr.bf16.mxu0 0
        %802 = vmatpush1.bf16.msra.mxu0 %v778
        %803 = vmatprep.subr.bf16.mxu0 0
        %804 = vmatpush1.bf16.msra.mxu0 0
        %805 = vmatprep.subr.bf16.mxu0 0
        %806 = vmatpush1.bf16.msra.mxu0 0
        %807 = vmatprep.subr.bf16.mxu0 0
        %808 = vmatpush1.bf16.msra.mxu0 0
        %809 = vmatprep.subr.bf16.mxu0 0
        %810 = vmatpush1.bf16.msra.mxu0 0
        %811 = vmatprep.subr.bf16.mxu0 0
        %812 = vmatpush1.bf16.msra.mxu0 0
        %813 = vmatprep.subr.bf16.mxu0 0
        %814 = vmatpush1.bf16.msra.mxu0 0
        %815 = vmatprep.subr.bf16.mxu0 0
        %816 = vmatpush1.bf16.msra.mxu0 0
        %817 = vmatprep.subr.bf16.mxu0 0
        %818 = vmatpush1.bf16.msra.mxu0 0
        %819 = vmatprep.mubr.bf16.mxu0 0
        %820 = vmatmul.mubr.bf16.gmra.mrb[0].mxu0 %v719
        %v821 = vpop.f32.mrb[0].mxu0
        %v822 = vadd.f32 0.0, %v821
        %v823 = vpop.f32.mrb[0].mxu0
        %v824 = vpop.f32.mrb[0].mxu0
        %v825 = vadd.f32 0.0, %v824
        %v826 = vpop.f32.mrb[0].mxu0
        %827 = vmatprep.mubr.bf16.mxu0 0
        %828 = vmatmul.mubr.bf16.gmra.mrb[0].mxu0 %v720
        %v829 = vpop.f32.mrb[0].mxu0
        %v830 = vadd.f32 0.0, %v829
        %v831 = vpop.f32.mrb[0].mxu0
        %v832 = vpop.f32.mrb[0].mxu0
        %v833 = vadd.f32 0.0, %v832
        %v834 = vpop.f32.mrb[0].mxu0
        %835 = vmatprep.mubr.bf16.mxu0 0
        %836 = vmatmul.mubr.bf16.gmra.mrb[0].mxu0 %v721
        %v837 = vpop.f32.mrb[0].mxu0
        %v838 = vadd.f32 0.0, %v837
        %v839 = vpop.f32.mrb[0].mxu0
        %v840 = vpop.f32.mrb[0].mxu0
        %v841 = vadd.f32 0.0, %v840
        %v842 = vpop.f32.mrb[0].mxu0
        %843 = vmatprep.mubr.bf16.mxu0 0
        %844 = vmatmul.mubr.bf16.gmra.mrb[0].mxu0 %v722
        %v845 = vpop.f32.mrb[0].mxu0
        %v846 = vadd.f32 0.0, %v845
        %v847 = vpop.f32.mrb[0].mxu0
        %v848 = vpop.f32.mrb[0].mxu0
        %v849 = vadd.f32 0.0, %v848
        %v850 = vpop.f32.mrb[0].mxu0
        %851 = vmatprep.mubr.bf16.mxu0 0
        %852 = vmatmul.mubr.bf16.gmra.mrb[0].mxu0 %v723
        %v853 = vpop.f32.mrb[0].mxu0
        %v854 = vadd.f32 0.0, %v853
        %v855 = vpop.f32.mrb[0].mxu0
        %v856 = vpop.f32.mrb[0].mxu0
        %v857 = vadd.f32 0.0, %v856
        %v858 = vpop.f32.mrb[0].mxu0
        %859 = vmatprep.mubr.bf16.mxu0 0
        %860 = vmatmul.mubr.bf16.gmra.mrb[0].mxu0 %v724
        %v861 = vpop.f32.mrb[0].mxu0
        %v862 = vadd.f32 0.0, %v861
        %v863 = vpop.f32.mrb[0].mxu0
        %v864 = vpop.f32.mrb[0].mxu0
        %v865 = vadd.f32 0.0, %v864
        %v866 = vpop.f32.mrb[0].mxu0
        %867 = vmatprep.mubr.bf16.mxu0 0
        %868 = vmatmul.mubr.bf16.gmra.mrb[0].mxu0 %v725
        %v869 = vpop.f32.mrb[0].mxu0
        %v870 = vadd.f32 0.0, %v869
        %v871 = vpop.f32.mrb[0].mxu0
        %v872 = vpop.f32.mrb[0].mxu0
        %v873 = vadd.f32 0.0, %v872
        %v874 = vpop.f32.mrb[0].mxu0
        %875 = vmatprep.mubr.bf16.mxu0 0
        %876 = vmatmul.mubr.bf16.gmra.mrb[0].mxu0 %v726
        %v877 = vpop.f32.mrb[0].mxu0
        %v878 = vadd.f32 0.0, %v877
        %v879 = vpop.f32.mrb[0].mxu0
        %v880 = vpop.f32.mrb[0].mxu0
        %v881 = vadd.f32 0.0, %v880
        %v882 = vpop.f32.mrb[0].mxu0
        %883 = vmatprep.mubr.bf16.mxu0 0
        %884 = vmatmul.mubr.bf16.gmra.mrb[0].mxu0 %v727
        %v885 = vpop.f32.mrb[0].mxu0
        %v886 = vadd.f32 0.0, %v885
        %v887 = vpop.f32.mrb[0].mxu0
        %v888 = vpop.f32.mrb[0].mxu0
        %v889 = vadd.f32 0.0, %v888
        %v890 = vpop.f32.mrb[0].mxu0
        %891 = vmatprep.mubr.bf16.mxu0 0
        %892 = vmatmul.mubr.bf16.gmra.mrb[0].mxu0 %v728
        %v893 = vpop.f32.mrb[0].mxu0
        %v894 = vadd.f32 0.0, %v893
        %v895 = vpop.f32.mrb[0].mxu0
        %v896 = vpop.f32.mrb[0].mxu0
        %v897 = vadd.f32 0.0, %v896
        %v898 = vpop.f32.mrb[0].mxu0
        %899 = vdwg.mxu0
        %v920 = vunpack.c.l.b16 %v393
        %v921 = vunpack.c.l.b16 %v394
        %v922 = vunpack.c.l.b16 %v395
        %v923 = vunpack.c.l.b16 %v396
        %v924 = vunpack.c.l.b16 %v397
        %v925 = vunpack.c.l.b16 %v398
        %v926 = vunpack.c.l.b16 %v399
        %v927 = vunpack.c.l.b16 %v400
        %v928 = vunpack.c.l.b16 %v401
        %v929 = vunpack.c.l.b16 %v402
        %v930 = vunpack.c.l.b16 %v403
        %v931 = vunpack.c.l.b16 %v404
        %v932 = vunpack.c.l.b16 %v405
        %v933 = vunpack.c.l.b16 %v406
        %v934 = vunpack.c.l.b16 %v407
        %v935 = vunpack.c.l.b16 %v408
        %v936 = vunpack.c.l.b16 %v409
        %v937 = vunpack.c.l.b16 %v410
        %v938 = vunpack.c.l.b16 %v411
        %v939 = vunpack.c.l.b16 %v412
        %v940 = vpack.c.b16 %v921, %v920
        %v941 = vpack.c.b16 %v923, %v922
        %v942 = vpack.c.b16 %v925, %v924
        %v943 = vpack.c.b16 %v927, %v926
        %v944 = vpack.c.b16 %v929, %v928
        %v945 = vpack.c.b16 %v931, %v930
        %v946 = vpack.c.b16 %v933, %v932
        %v947 = vpack.c.b16 %v935, %v934
        %v948 = vpack.c.b16 %v937, %v936
        %v949 = vpack.c.b16 %v939, %v938
        %v976 = vunpack.c.l.b16 %v413
        %v977 = vunpack.c.l.b16 %v414
        %v978 = vunpack.c.l.b16 %v415
        %v979 = vunpack.c.l.b16 %v416
        %v980 = vunpack.c.l.b16 %v417
        %v981 = vunpack.c.l.b16 %v418
        %v982 = vunpack.c.l.b16 %v419
        %v983 = vunpack.c.l.b16 %v420
        %v984 = vunpack.c.l.b16 %v421
        %v985 = vunpack.c.l.b16 %v422
        %v986 = vunpack.c.l.b16 %v423
        %v987 = vunpack.c.l.b16 %v424
        %v988 = vunpack.c.l.b16 %v425
        %v989 = vunpack.c.l.b16 %v426
        %v990 = vunpack.c.l.b16 %v427
        %v991 = vunpack.c.l.b16 %v428
        %v992 = vpack.c.b16 %v977, %v976
        %v993 = vpack.c.b16 %v979, %v978
        %v994 = vpack.c.b16 %v981, %v980
        %v995 = vpack.c.b16 %v983, %v982
        %v996 = vpack.c.b16 %v985, %v984
        %v997 = vpack.c.b16 %v987, %v986
        %v998 = vpack.c.b16 %v989, %v988
        %v999 = vpack.c.b16 %v991, %v990
        %1008 = vmatprep.subr.bf16.mxu0 0
        %1009 = vmatpush1.bf16.msra.mxu0 %v992
        %1010 = vmatprep.subr.bf16.mxu0 0
        %1011 = vmatpush1.bf16.msra.mxu0 %v993
        %1012 = vmatprep.subr.bf16.mxu0 0
        %1013 = vmatpush1.bf16.msra.mxu0 %v994
        %1014 = vmatprep.subr.bf16.mxu0 0
        %1015 = vmatpush1.bf16.msra.mxu0 %v995
        %1016 = vmatprep.subr.bf16.mxu0 0
        %1017 = vmatpush1.bf16.msra.mxu0 %v996
        %1018 = vmatprep.subr.bf16.mxu0 0
        %1019 = vmatpush1.bf16.msra.mxu0 %v997
        %1020 = vmatprep.subr.bf16.mxu0 0
        %1021 = vmatpush1.bf16.msra.mxu0 %v998
        %1022 = vmatprep.subr.bf16.mxu0 0
        %1023 = vmatpush1.bf16.msra.mxu0 %v999
        %1024 = vmatprep.subr.bf16.mxu0 0
        %1025 = vmatpush1.bf16.msra.mxu0 0
        %1026 = vmatprep.subr.bf16.mxu0 0
        %1027 = vmatpush1.bf16.msra.mxu0 0
        %1028 = vmatprep.subr.bf16.mxu0 0
        %1029 = vmatpush1.bf16.msra.mxu0 0
        %1030 = vmatprep.subr.bf16.mxu0 0
        %1031 = vmatpush1.bf16.msra.mxu0 0
        %1032 = vmatprep.subr.bf16.mxu0 0
        %1033 = vmatpush1.bf16.msra.mxu0 0
        %1034 = vmatprep.subr.bf16.mxu0 0
        %1035 = vmatpush1.bf16.msra.mxu0 0
        %1036 = vmatprep.subr.bf16.mxu0 0
        %1037 = vmatpush1.bf16.msra.mxu0 0
        %1038 = vmatprep.subr.bf16.mxu0 0
        %1039 = vmatpush1.bf16.msra.mxu0 0
        %1040 = vmatprep.mubr.bf16.mxu0 0
        %1041 = vmatmul.mubr.bf16.gmra.mrb[0].mxu0 %v940
        %v1042 = vpop.f32.mrb[0].mxu0
        %v1043 = vadd.f32 %v822, %v1042
        %v1044 = vpop.f32.mrb[0].mxu0
        %v1045 = vpop.f32.mrb[0].mxu0
        %v1046 = vadd.f32 %v825, %v1045
        %v1047 = vpop.f32.mrb[0].mxu0
        %1048 = vmatprep.mubr.bf16.mxu0 0
        %1049 = vmatmul.mubr.bf16.gmra.mrb[0].mxu0 %v941
        %v1050 = vpop.f32.mrb[0].mxu0
        %v1051 = vadd.f32 %v830, %v1050
        %v1052 = vpop.f32.mrb[0].mxu0
        %v1053 = vpop.f32.mrb[0].mxu0
        %v1054 = vadd.f32 %v833, %v1053
        %v1055 = vpop.f32.mrb[0].mxu0
        %1056 = vmatprep.mubr.bf16.mxu0 0
        %1057 = vmatmul.mubr.bf16.gmra.mrb[0].mxu0 %v942
        %v1058 = vpop.f32.mrb[0].mxu0
        %v1059 = vadd.f32 %v838, %v1058
        %v1060 = vpop.f32.mrb[0].mxu0
        %v1061 = vpop.f32.mrb[0].mxu0
        %v1062 = vadd.f32 %v841, %v1061
        %v1063 = vpop.f32.mrb[0].mxu0
        %1064 = vmatprep.mubr.bf16.mxu0 0
        %1065 = vmatmul.mubr.bf16.gmra.mrb[0].mxu0 %v943
        %v1066 = vpop.f32.mrb[0].mxu0
        %v1067 = vadd.f32 %v846, %v1066
        %v1068 = vpop.f32.mrb[0].mxu0
        %v1069 = vpop.f32.mrb[0].mxu0
        %v1070 = vadd.f32 %v849, %v1069
        %v1071 = vpop.f32.mrb[0].mxu0
        %1072 = vmatprep.mubr.bf16.mxu0 0
        %1073 = vmatmul.mubr.bf16.gmra.mrb[0].mxu0 %v944
        %v1074 = vpop.f32.mrb[0].mxu0
        %v1075 = vadd.f32 %v854, %v1074
        %v1076 = vpop.f32.mrb[0].mxu0
        %v1077 = vpop.f32.mrb[0].mxu0
        %v1078 = vadd.f32 %v857, %v1077
        %v1079 = vpop.f32.mrb[0].mxu0
        %1080 = vmatprep.mubr.bf16.mxu0 0
        %1081 = vmatmul.mubr.bf16.gmra.mrb[0].mxu0 %v945
        %v1082 = vpop.f32.mrb[0].mxu0
        %v1083 = vadd.f32 %v862, %v1082
        %v1084 = vpop.f32.mrb[0].mxu0
        %v1085 = vpop.f32.mrb[0].mxu0
        %v1086 = vadd.f32 %v865, %v1085
        %v1087 = vpop.f32.mrb[0].mxu0
        %1088 = vmatprep.mubr.bf16.mxu0 0
        %1089 = vmatmul.mubr.bf16.gmra.mrb[0].mxu0 %v946
        %v1090 = vpop.f32.mrb[0].mxu0
        %v1091 = vadd.f32 %v870, %v1090
        %v1092 = vpop.f32.mrb[0].mxu0
        %v1093 = vpop.f32.mrb[0].mxu0
        %v1094 = vadd.f32 %v873, %v1093
        %v1095 = vpop.f32.mrb[0].mxu0
        %1096 = vmatprep.mubr.bf16.mxu0 0
        %1097 = vmatmul.mubr.bf16.gmra.mrb[0].mxu0 %v947
        %v1098 = vpop.f32.mrb[0].mxu0
        %v1099 = vadd.f32 %v878, %v1098
        %v1100 = vpop.f32.mrb[0].mxu0
        %v1101 = vpop.f32.mrb[0].mxu0
        %v1102 = vadd.f32 %v881, %v1101
        %v1103 = vpop.f32.mrb[0].mxu0
        %1104 = vmatprep.mubr.bf16.mxu0 0
        %1105 = vmatmul.mubr.bf16.gmra.mrb[0].mxu0 %v948
        %v1106 = vpop.f32.mrb[0].mxu0
        %v1107 = vadd.f32 %v886, %v1106
        %v1108 = vpop.f32.mrb[0].mxu0
        %v1109 = vpop.f32.mrb[0].mxu0
        %v1110 = vadd.f32 %v889, %v1109
        %v1111 = vpop.f32.mrb[0].mxu0
        %1112 = vmatprep.mubr.bf16.mxu0 0
        %1113 = vmatmul.mubr.bf16.gmra.mrb[0].mxu0 %v949
        %v1114 = vpop.f32.mrb[0].mxu0
        %v1115 = vadd.f32 %v894, %v1114
        %v1116 = vpop.f32.mrb[0].mxu0
        %v1117 = vpop.f32.mrb[0].mxu0
        %v1118 = vadd.f32 %v897, %v1117
        %v1119 = vpop.f32.mrb[0].mxu0
        %1120 = vdwg.mxu0
        %v1121 = vld [vmem:[%s392] sm:$0xe]
        %v1122 = vld [vmem:[%s392 + $0xc] sm:$0xe]
        %v1123 = vld [vmem:[%s392 + $0x18] sm:$0xe]
        %v1124 = vld [vmem:[%s392 + $0x24] sm:$0xe]
        %v1125 = vld [vmem:[%s392 + $0x30] sm:$0xe]
        %v1126 = vld [vmem:[%s392 + $0x3c] sm:$0xe]
        %v1127 = vld [vmem:[%s392 + $0x48] sm:$0xe]
        %v1128 = vld [vmem:[%s392 + $0x54] sm:$0xe]
        %v1129 = vld [vmem:[%s392 + $0x60] sm:$0xe]
        %v1130 = vld [vmem:[%s392 + $0x6c] sm:$0xe]
        %vm1151 = vcmask 1042432
        %vm1152 = vcmask 1046532
        %vm1153 = vmor %vm1151, %vm1152
        %v1154 = vrot.slane %v1121, 5
        %v1155 = vrot.slane %v1154, 4
        %v1156 = vrot.slane %v394, 5
        %v1157 = vsel %vm1153, %v1155, %v1156
        %v1158 = vrot.slane %v1156, 4
        %v1159 = vrot.slane %v429, 5
        %v1160 = vsel %vm1153, %v1158, %v1159
        %v1161 = vrot.slane %v1122, 5
        %v1162 = vrot.slane %v1161, 4
        %v1163 = vrot.slane %v396, 5
        %v1164 = vsel %vm1153, %v1162, %v1163
        %v1165 = vrot.slane %v1163, 4
        %v1166 = vrot.slane %v430, 5
        %v1167 = vsel %vm1153, %v1165, %v1166
        %v1168 = vrot.slane %v1123, 5
        %v1169 = vrot.slane %v1168, 4
        %v1170 = vrot.slane %v398, 5
        %v1171 = vsel %vm1153, %v1169, %v1170
        %v1172 = vrot.slane %v1170, 4
        %v1173 = vrot.slane %v431, 5
        %v1174 = vsel %vm1153, %v1172, %v1173
        %v1175 = vrot.slane %v1124, 5
        %v1176 = vrot.slane %v1175, 4
        %v1177 = vrot.slane %v400, 5
        %v1178 = vsel %vm1153, %v1176, %v1177
        %v1179 = vrot.slane %v1177, 4
        %v1180 = vrot.slane %v432, 5
        %v1181 = vsel %vm1153, %v1179, %v1180
        %v1182 = vrot.slane %v1125, 5
        %v1183 = vrot.slane %v1182, 4
        %v1184 = vrot.slane %v402, 5
        %v1185 = vsel %vm1153, %v1183, %v1184
        %v1186 = vrot.slane %v1184, 4
        %v1187 = vrot.slane %v433, 5
        %v1188 = vsel %vm1153, %v1186, %v1187
        %v1189 = vrot.slane %v1126, 5
        %v1190 = vrot.slane %v1189, 4
        %v1191 = vrot.slane %v404, 5
        %v1192 = vsel %vm1153, %v1190, %v1191
        %v1193 = vrot.slane %v1191, 4
        %v1194 = vrot.slane %v434, 5
        %v1195 = vsel %vm1153, %v1193, %v1194
        %v1196 = vrot.slane %v1127, 5
        %v1197 = vrot.slane %v1196, 4
        %v1198 = vrot.slane %v406, 5
        %v1199 = vsel %vm1153, %v1197, %v1198
        %v1200 = vrot.slane %v1198, 4
        %v1201 = vrot.slane %v435, 5
        %v1202 = vsel %vm1153, %v1200, %v1201
        %v1203 = vrot.slane %v1128, 5
        %v1204 = vrot.slane %v1203, 4
        %v1205 = vrot.slane %v408, 5
        %v1206 = vsel %vm1153, %v1204, %v1205
        %v1207 = vrot.slane %v1205, 4
        %v1208 = vrot.slane %v436, 5
        %v1209 = vsel %vm1153, %v1207, %v1208
        %v1210 = vrot.slane %v1129, 5
        %v1211 = vrot.slane %v1210, 4
        %v1212 = vrot.slane %v410, 5
        %v1213 = vsel %vm1153, %v1211, %v1212
        %v1214 = vrot.slane %v1212, 4
        %v1215 = vrot.slane %v437, 5
        %v1216 = vsel %vm1153, %v1214, %v1215
        %v1217 = vrot.slane %v1130, 5
        %v1218 = vrot.slane %v1217, 4
        %v1219 = vrot.slane %v412, 5
        %v1220 = vsel %vm1153, %v1218, %v1219
        %v1221 = vrot.slane %v1219, 4
        %v1222 = vrot.slane %v438, 5
        %v1223 = vsel %vm1153, %v1221, %v1222
        %s1224 = scalar_lea.vmem %s1, 128
        %v1225 = vld [vmem:[%s1224] sm:$0xf]
        %v1226 = vld [vmem:[%s1224 + $0x4] sm:$0xf]
        %v1227 = vld [vmem:[%s1224 + $0x8] sm:$0xf]
        %v1228 = vld [vmem:[%s1224 + $0xc] sm:$0xf]
        %v1229 = vld [vmem:[%s1224 + $0x10] sm:$0xf]
        %v1230 = vld [vmem:[%s1224 + $0x14] sm:$0xf]
        %v1231 = vld [vmem:[%s1224 + $0x18] sm:$0xf]
        %v1232 = vld [vmem:[%s1224 + $0x1c] sm:$0xf]
        %v1233 = vld [vmem:[%s1224 + $0x20] sm:$0xf]
        %v1234 = vld [vmem:[%s1224 + $0x24] sm:$0xf]
        %v1235 = vld [vmem:[%s1224 + $0x28] sm:$0xf]
        %v1236 = vld [vmem:[%s1224 + $0x2c] sm:$0xf]
        %v1237 = vld [vmem:[%s1224 + $0x30] sm:$0xf]
        %v1238 = vld [vmem:[%s1224 + $0x34] sm:$0xf]
        %v1239 = vld [vmem:[%s1224 + $0x38] sm:$0xf]
        %v1240 = vld [vmem:[%s1224 + $0x3c] sm:$0xf]
        %v1241 = vunpack.c.l.b16 %v1157
        %v1242 = vunpack.c.l.b16 %v1160
        %v1243 = vunpack.c.l.b16 %v1164
        %v1244 = vunpack.c.l.b16 %v1167
        %v1245 = vunpack.c.l.b16 %v1171
        %v1246 = vunpack.c.l.b16 %v1174
        %v1247 = vunpack.c.l.b16 %v1178
        %v1248 = vunpack.c.l.b16 %v1181
        %v1249 = vunpack.c.l.b16 %v1185
        %v1250 = vunpack.c.l.b16 %v1188
        %v1251 = vunpack.c.l.b16 %v1192
        %v1252 = vunpack.c.l.b16 %v1195
        %v1253 = vunpack.c.l.b16 %v1199
        %v1254 = vunpack.c.l.b16 %v1202
        %v1255 = vunpack.c.l.b16 %v1206
        %v1256 = vunpack.c.l.b16 %v1209
        %v1257 = vunpack.c.l.b16 %v1213
        %v1258 = vunpack.c.l.b16 %v1216
        %v1259 = vunpack.c.l.b16 %v1220
        %v1260 = vunpack.c.l.b16 %v1223
        %v1261 = vpack.c.b16 %v1242, %v1241
        %v1262 = vpack.c.b16 %v1244, %v1243
        %v1263 = vpack.c.b16 %v1246, %v1245
        %v1264 = vpack.c.b16 %v1248, %v1247
        %v1265 = vpack.c.b16 %v1250, %v1249
        %v1266 = vpack.c.b16 %v1252, %v1251
        %v1267 = vpack.c.b16 %v1254, %v1253
        %v1268 = vpack.c.b16 %v1256, %v1255
        %v1269 = vpack.c.b16 %v1258, %v1257
        %v1270 = vpack.c.b16 %v1260, %v1259
        %v1297 = vunpack.c.l.b16 %v1225
        %v1298 = vunpack.c.l.b16 %v1226
        %v1299 = vunpack.c.l.b16 %v1227
        %v1300 = vunpack.c.l.b16 %v1228
        %v1301 = vunpack.c.l.b16 %v1229
        %v1302 = vunpack.c.l.b16 %v1230
        %v1303 = vunpack.c.l.b16 %v1231
        %v1304 = vunpack.c.l.b16 %v1232
        %v1305 = vunpack.c.l.b16 %v1233
        %v1306 = vunpack.c.l.b16 %v1234
        %v1307 = vunpack.c.l.b16 %v1235
        %v1308 = vunpack.c.l.b16 %v1236
        %v1309 = vunpack.c.l.b16 %v1237
        %v1310 = vunpack.c.l.b16 %v1238
        %v1311 = vunpack.c.l.b16 %v1239
        %v1312 = vunpack.c.l.b16 %v1240
        %v1313 = vpack.c.b16 %v1298, %v1297
        %v1314 = vpack.c.b16 %v1300, %v1299
        %v1315 = vpack.c.b16 %v1302, %v1301
        %v1316 = vpack.c.b16 %v1304, %v1303
        %v1317 = vpack.c.b16 %v1306, %v1305
        %v1318 = vpack.c.b16 %v1308, %v1307
        %v1319 = vpack.c.b16 %v1310, %v1309
        %v1320 = vpack.c.b16 %v1312, %v1311
        %1329 = vmatprep.subr.bf16.mxu0 0
        %1330 = vmatpush1.bf16.msra.mxu0 %v1313
        %1331 = vmatprep.subr.bf16.mxu0 0
        %1332 = vmatpush1.bf16.msra.mxu0 %v1314
        %1333 = vmatprep.subr.bf16.mxu0 0
        %1334 = vmatpush1.bf16.msra.mxu0 %v1315
        %1335 = vmatprep.subr.bf16.mxu0 0
        %1336 = vmatpush1.bf16.msra.mxu0 %v1316
        %1337 = vmatprep.subr.bf16.mxu0 0
        %1338 = vmatpush1.bf16.msra.mxu0 %v1317
        %1339 = vmatprep.subr.bf16.mxu0 0
        %1340 = vmatpush1.bf16.msra.mxu0 %v1318
        %1341 = vmatprep.subr.bf16.mxu0 0
        %1342 = vmatpush1.bf16.msra.mxu0 %v1319
        %1343 = vmatprep.subr.bf16.mxu0 0
        %1344 = vmatpush1.bf16.msra.mxu0 %v1320
        %1345 = vmatprep.subr.bf16.mxu0 0
        %1346 = vmatpush1.bf16.msra.mxu0 0
        %1347 = vmatprep.subr.bf16.mxu0 0
        %1348 = vmatpush1.bf16.msra.mxu0 0
        %1349 = vmatprep.subr.bf16.mxu0 0
        %1350 = vmatpush1.bf16.msra.mxu0 0
        %1351 = vmatprep.subr.bf16.mxu0 0
        %1352 = vmatpush1.bf16.msra.mxu0 0
        %1353 = vmatprep.subr.bf16.mxu0 0
        %1354 = vmatpush1.bf16.msra.mxu0 0
        %1355 = vmatprep.subr.bf16.mxu0 0
        %1356 = vmatpush1.bf16.msra.mxu0 0
        %1357 = vmatprep.subr.bf16.mxu0 0
        %1358 = vmatpush1.bf16.msra.mxu0 0
        %1359 = vmatprep.subr.bf16.mxu0 0
        %1360 = vmatpush1.bf16.msra.mxu0 0
        %1361 = vmatprep.mubr.bf16.mxu0 0
        %1362 = vmatmul.mubr.bf16.gmra.mrb[0].mxu0 %v1261
        %v1363 = vpop.f32.mrb[0].mxu0
        %v1364 = vadd.f32 0.0, %v1363
        %v1365 = vpop.f32.mrb[0].mxu0
        %v1366 = vpop.f32.mrb[0].mxu0
        %v1367 = vadd.f32 0.0, %v1366
        %v1368 = vpop.f32.mrb[0].mxu0
        %1369 = vmatprep.mubr.bf16.mxu0 0
        %1370 = vmatmul.mubr.bf16.gmra.mrb[0].mxu0 %v1262
        %v1371 = vpop.f32.mrb[0].mxu0
        %v1372 = vadd.f32 0.0, %v1371
        %v1373 = vpop.f32.mrb[0].mxu0
        %v1374 = vpop.f32.mrb[0].mxu0
        %v1375 = vadd.f32 0.0, %v1374
        %v1376 = vpop.f32.mrb[0].mxu0
        %1377 = vmatprep.mubr.bf16.mxu0 0
        %1378 = vmatmul.mubr.bf16.gmra.mrb[0].mxu0 %v1263
        %v1379 = vpop.f32.mrb[0].mxu0
        %v1380 = vadd.f32 0.0, %v1379
        %v1381 = vpop.f32.mrb[0].mxu0
        %v1382 = vpop.f32.mrb[0].mxu0
        %v1383 = vadd.f32 0.0, %v1382
        %v1384 = vpop.f32.mrb[0].mxu0
        %1385 = vmatprep.mubr.bf16.mxu0 0
        %1386 = vmatmul.mubr.bf16.gmra.mrb[0].mxu0 %v1264
        %v1387 = vpop.f32.mrb[0].mxu0
        %v1388 = vadd.f32 0.0, %v1387
        %v1389 = vpop.f32.mrb[0].mxu0
        %v1390 = vpop.f32.mrb[0].mxu0
        %v1391 = vadd.f32 0.0, %v1390
        %v1392 = vpop.f32.mrb[0].mxu0
        %1393 = vmatprep.mubr.bf16.mxu0 0
        %1394 = vmatmul.mubr.bf16.gmra.mrb[0].mxu0 %v1265
        %v1395 = vpop.f32.mrb[0].mxu0
        %v1396 = vadd.f32 0.0, %v1395
        %v1397 = vpop.f32.mrb[0].mxu0
        %v1398 = vpop.f32.mrb[0].mxu0
        %v1399 = vadd.f32 0.0, %v1398
        %v1400 = vpop.f32.mrb[0].mxu0
        %1401 = vmatprep.mubr.bf16.mxu0 0
        %1402 = vmatmul.mubr.bf16.gmra.mrb[0].mxu0 %v1266
        %v1403 = vpop.f32.mrb[0].mxu0
        %v1404 = vadd.f32 0.0, %v1403
        %v1405 = vpop.f32.mrb[0].mxu0
        %v1406 = vpop.f32.mrb[0].mxu0
        %v1407 = vadd.f32 0.0, %v1406
        %v1408 = vpop.f32.mrb[0].mxu0
        %1409 = vmatprep.mubr.bf16.mxu0 0
        %1410 = vmatmul.mubr.bf16.gmra.mrb[0].mxu0 %v1267
        %v1411 = vpop.f32.mrb[0].mxu0
        %v1412 = vadd.f32 0.0, %v1411
        %v1413 = vpop.f32.mrb[0].mxu0
        %v1414 = vpop.f32.mrb[0].mxu0
        %v1415 = vadd.f32 0.0, %v1414
        %v1416 = vpop.f32.mrb[0].mxu0
        %1417 = vmatprep.mubr.bf16.mxu0 0
        %1418 = vmatmul.mubr.bf16.gmra.mrb[0].mxu0 %v1268
        %v1419 = vpop.f32.mrb[0].mxu0
        %v1420 = vadd.f32 0.0, %v1419
        %v1421 = vpop.f32.mrb[0].mxu0
        %v1422 = vpop.f32.mrb[0].mxu0
        %v1423 = vadd.f32 0.0, %v1422
        %v1424 = vpop.f32.mrb[0].mxu0
        %1425 = vmatprep.mubr.bf16.mxu0 0
        %1426 = vmatmul.mubr.bf16.gmra.mrb[0].mxu0 %v1269
        %v1427 = vpop.f32.mrb[0].mxu0
        %v1428 = vadd.f32 0.0, %v1427
        %v1429 = vpop.f32.mrb[0].mxu0
        %v1430 = vpop.f32.mrb[0].mxu0
        %v1431 = vadd.f32 0.0, %v1430
        %v1432 = vpop.f32.mrb[0].mxu0
        %1433 = vmatprep.mubr.bf16.mxu0 0
        %1434 = vmatmul.mubr.bf16.gmra.mrb[0].mxu0 %v1270
        %v1435 = vpop.f32.mrb[0].mxu0
        %v1436 = vadd.f32 0.0, %v1435
        %v1437 = vpop.f32.mrb[0].mxu0
        %v1438 = vpop.f32.mrb[0].mxu0
        %v1439 = vadd.f32 0.0, %v1438
        %v1440 = vpop.f32.mrb[0].mxu0
        %1441 = vdwg.mxu0
        %v1442 = vadd.f32 %v1043, %v1364
        %v1443 = vadd.f32 %v1046, %v1367
        %v1444 = vadd.f32 %v1051, %v1372
        %v1445 = vadd.f32 %v1054, %v1375
        %v1446 = vadd.f32 %v1059, %v1380
        %v1447 = vadd.f32 %v1062, %v1383
        %v1448 = vadd.f32 %v1067, %v1388
        %v1449 = vadd.f32 %v1070, %v1391
        %v1450 = vadd.f32 %v1075, %v1396
        %v1451 = vadd.f32 %v1078, %v1399
        %v1452 = vadd.f32 %v1083, %v1404
        %v1453 = vadd.f32 %v1086, %v1407
        %v1454 = vadd.f32 %v1091, %v1412
        %v1455 = vadd.f32 %v1094, %v1415
        %v1456 = vadd.f32 %v1099, %v1420
        %v1457 = vadd.f32 %v1102, %v1423
        %v1458 = vadd.f32 %v1107, %v1428
        %v1459 = vadd.f32 %v1110, %v1431
        %v1460 = vadd.f32 %v1115, %v1436
        %v1461 = vadd.f32 %v1118, %v1439
        %s1462 = sadd.s32 %s389, 1
        %s1463 = smul.u32 %s1462, 3
        %s1464 = smul.addr %s1463, 4
        %s1465 = scalar_lea.vmem %s375, %s1464
        %v1466 = vld [vmem:[%s1465] sm:$0xf]
        %v1467 = vld [vmem:[%s1465 + $0x4] sm:$0xf]
        %v1468 = vld [vmem:[%s1465 + $0xc] sm:$0xf]
        %v1469 = vld [vmem:[%s1465 + $0x10] sm:$0xf]
        %v1470 = vld [vmem:[%s1465 + $0x18] sm:$0xf]
        %v1471 = vld [vmem:[%s1465 + $0x1c] sm:$0xf]
        %v1472 = vld [vmem:[%s1465 + $0x24] sm:$0xf]
        %v1473 = vld [vmem:[%s1465 + $0x28] sm:$0xf]
        %v1474 = vld [vmem:[%s1465 + $0x30] sm:$0xf]
        %v1475 = vld [vmem:[%s1465 + $0x34] sm:$0xf]
        %v1476 = vld [vmem:[%s1465 + $0x3c] sm:$0xf]
        %v1477 = vld [vmem:[%s1465 + $0x40] sm:$0xf]
        %v1478 = vld [vmem:[%s1465 + $0x48] sm:$0xf]
        %v1479 = vld [vmem:[%s1465 + $0x4c] sm:$0xf]
        %v1480 = vld [vmem:[%s1465 + $0x54] sm:$0xf]
        %v1481 = vld [vmem:[%s1465 + $0x58] sm:$0xf]
        %v1482 = vld [vmem:[%s1465 + $0x60] sm:$0xf]
        %v1483 = vld [vmem:[%s1465 + $0x64] sm:$0xf]
        %v1484 = vld [vmem:[%s1465 + $0x6c] sm:$0xf]
        %v1485 = vld [vmem:[%s1465 + $0x70] sm:$0xf]
        %s1486 = scalar_lea.vmem %s1, 192
        %v1487 = vld [vmem:[%s1486] sm:$0xf]
        %v1488 = vld [vmem:[%s1486 + $0x4] sm:$0xf]
        %v1489 = vld [vmem:[%s1486 + $0x8] sm:$0xf]
        %v1490 = vld [vmem:[%s1486 + $0xc] sm:$0xf]
        %v1491 = vld [vmem:[%s1486 + $0x10] sm:$0xf]
        %v1492 = vld [vmem:[%s1486 + $0x14] sm:$0xf]
        %v1493 = vld [vmem:[%s1486 + $0x18] sm:$0xf]
        %v1494 = vld [vmem:[%s1486 + $0x1c] sm:$0xf]
        %v1495 = vld [vmem:[%s1486 + $0x20] sm:$0xf]
        %v1496 = vld [vmem:[%s1486 + $0x24] sm:$0xf]
        %v1497 = vld [vmem:[%s1486 + $0x28] sm:$0xf]
        %v1498 = vld [vmem:[%s1486 + $0x2c] sm:$0xf]
        %v1499 = vld [vmem:[%s1486 + $0x30] sm:$0xf]
        %v1500 = vld [vmem:[%s1486 + $0x34] sm:$0xf]
        %v1501 = vld [vmem:[%s1486 + $0x38] sm:$0xf]
        %v1502 = vld [vmem:[%s1486 + $0x3c] sm:$0xf]
        %v1523 = vunpack.c.l.b16 %v1466
        %v1524 = vunpack.c.l.b16 %v1467
        %v1525 = vunpack.c.l.b16 %v1468
        %v1526 = vunpack.c.l.b16 %v1469
        %v1527 = vunpack.c.l.b16 %v1470
        %v1528 = vunpack.c.l.b16 %v1471
        %v1529 = vunpack.c.l.b16 %v1472
        %v1530 = vunpack.c.l.b16 %v1473
        %v1531 = vunpack.c.l.b16 %v1474
        %v1532 = vunpack.c.l.b16 %v1475
        %v1533 = vunpack.c.l.b16 %v1476
        %v1534 = vunpack.c.l.b16 %v1477
        %v1535 = vunpack.c.l.b16 %v1478
        %v1536 = vunpack.c.l.b16 %v1479
        %v1537 = vunpack.c.l.b16 %v1480
        %v1538 = vunpack.c.l.b16 %v1481
        %v1539 = vunpack.c.l.b16 %v1482
        %v1540 = vunpack.c.l.b16 %v1483
        %v1541 = vunpack.c.l.b16 %v1484
        %v1542 = vunpack.c.l.b16 %v1485
        %v1543 = vpack.c.b16 %v1524, %v1523
        %v1544 = vpack.c.b16 %v1526, %v1525
        %v1545 = vpack.c.b16 %v1528, %v1527
        %v1546 = vpack.c.b16 %v1530, %v1529
        %v1547 = vpack.c.b16 %v1532, %v1531
        %v1548 = vpack.c.b16 %v1534, %v1533
        %v1549 = vpack.c.b16 %v1536, %v1535
        %v1550 = vpack.c.b16 %v1538, %v1537
        %v1551 = vpack.c.b16 %v1540, %v1539
        %v1552 = vpack.c.b16 %v1542, %v1541
        %v1579 = vunpack.c.l.b16 %v1487
        %v1580 = vunpack.c.l.b16 %v1488
        %v1581 = vunpack.c.l.b16 %v1489
        %v1582 = vunpack.c.l.b16 %v1490
        %v1583 = vunpack.c.l.b16 %v1491
        %v1584 = vunpack.c.l.b16 %v1492
        %v1585 = vunpack.c.l.b16 %v1493
        %v1586 = vunpack.c.l.b16 %v1494
        %v1587 = vunpack.c.l.b16 %v1495
        %v1588 = vunpack.c.l.b16 %v1496
        %v1589 = vunpack.c.l.b16 %v1497
        %v1590 = vunpack.c.l.b16 %v1498
        %v1591 = vunpack.c.l.b16 %v1499
        %v1592 = vunpack.c.l.b16 %v1500
        %v1593 = vunpack.c.l.b16 %v1501
        %v1594 = vunpack.c.l.b16 %v1502
        %v1595 = vpack.c.b16 %v1580, %v1579
        %v1596 = vpack.c.b16 %v1582, %v1581
        %v1597 = vpack.c.b16 %v1584, %v1583
        %v1598 = vpack.c.b16 %v1586, %v1585
        %v1599 = vpack.c.b16 %v1588, %v1587
        %v1600 = vpack.c.b16 %v1590, %v1589
        %v1601 = vpack.c.b16 %v1592, %v1591
        %v1602 = vpack.c.b16 %v1594, %v1593
        %1611 = vmatprep.subr.bf16.mxu0 0
        %1612 = vmatpush1.bf16.msra.mxu0 %v1595
        %1613 = vmatprep.subr.bf16.mxu0 0
        %1614 = vmatpush1.bf16.msra.mxu0 %v1596
        %1615 = vmatprep.subr.bf16.mxu0 0
        %1616 = vmatpush1.bf16.msra.mxu0 %v1597
        %1617 = vmatprep.subr.bf16.mxu0 0
        %1618 = vmatpush1.bf16.msra.mxu0 %v1598
        %1619 = vmatprep.subr.bf16.mxu0 0
        %1620 = vmatpush1.bf16.msra.mxu0 %v1599
        %1621 = vmatprep.subr.bf16.mxu0 0
        %1622 = vmatpush1.bf16.msra.mxu0 %v1600
        %1623 = vmatprep.subr.bf16.mxu0 0
        %1624 = vmatpush1.bf16.msra.mxu0 %v1601
        %1625 = vmatprep.subr.bf16.mxu0 0
        %1626 = vmatpush1.bf16.msra.mxu0 %v1602
        %1627 = vmatprep.subr.bf16.mxu0 0
        %1628 = vmatpush1.bf16.msra.mxu0 0
        %1629 = vmatprep.subr.bf16.mxu0 0
        %1630 = vmatpush1.bf16.msra.mxu0 0
        %1631 = vmatprep.subr.bf16.mxu0 0
        %1632 = vmatpush1.bf16.msra.mxu0 0
        %1633 = vmatprep.subr.bf16.mxu0 0
        %1634 = vmatpush1.bf16.msra.mxu0 0
        %1635 = vmatprep.subr.bf16.mxu0 0
        %1636 = vmatpush1.bf16.msra.mxu0 0
        %1637 = vmatprep.subr.bf16.mxu0 0
        %1638 = vmatpush1.bf16.msra.mxu0 0
        %1639 = vmatprep.subr.bf16.mxu0 0
        %1640 = vmatpush1.bf16.msra.mxu0 0
        %1641 = vmatprep.subr.bf16.mxu0 0
        %1642 = vmatpush1.bf16.msra.mxu0 0
        %1643 = vmatprep.mubr.bf16.mxu0 0
        %1644 = vmatmul.mubr.bf16.gmra.mrb[0].mxu0 %v1543
        %v1645 = vpop.f32.mrb[0].mxu0
        %v1646 = vadd.f32 0.0, %v1645
        %v1647 = vpop.f32.mrb[0].mxu0
        %v1648 = vpop.f32.mrb[0].mxu0
        %v1649 = vadd.f32 0.0, %v1648
        %v1650 = vpop.f32.mrb[0].mxu0
        %1651 = vmatprep.mubr.bf16.mxu0 0
        %1652 = vmatmul.mubr.bf16.gmra.mrb[0].mxu0 %v1544
        %v1653 = vpop.f32.mrb[0].mxu0
        %v1654 = vadd.f32 0.0, %v1653
        %v1655 = vpop.f32.mrb[0].mxu0
        %v1656 = vpop.f32.mrb[0].mxu0
        %v1657 = vadd.f32 0.0, %v1656
        %v1658 = vpop.f32.mrb[0].mxu0
        %1659 = vmatprep.mubr.bf16.mxu0 0
        %1660 = vmatmul.mubr.bf16.gmra.mrb[0].mxu0 %v1545
        %v1661 = vpop.f32.mrb[0].mxu0
        %v1662 = vadd.f32 0.0, %v1661
        %v1663 = vpop.f32.mrb[0].mxu0
        %v1664 = vpop.f32.mrb[0].mxu0
        %v1665 = vadd.f32 0.0, %v1664
        %v1666 = vpop.f32.mrb[0].mxu0
        %1667 = vmatprep.mubr.bf16.mxu0 0
        %1668 = vmatmul.mubr.bf16.gmra.mrb[0].mxu0 %v1546
        %v1669 = vpop.f32.mrb[0].mxu0
        %v1670 = vadd.f32 0.0, %v1669
        %v1671 = vpop.f32.mrb[0].mxu0
        %v1672 = vpop.f32.mrb[0].mxu0
        %v1673 = vadd.f32 0.0, %v1672
        %v1674 = vpop.f32.mrb[0].mxu0
        %1675 = vmatprep.mubr.bf16.mxu0 0
        %1676 = vmatmul.mubr.bf16.gmra.mrb[0].mxu0 %v1547
        %v1677 = vpop.f32.mrb[0].mxu0
        %v1678 = vadd.f32 0.0, %v1677
        %v1679 = vpop.f32.mrb[0].mxu0
        %v1680 = vpop.f32.mrb[0].mxu0
        %v1681 = vadd.f32 0.0, %v1680
        %v1682 = vpop.f32.mrb[0].mxu0
        %1683 = vmatprep.mubr.bf16.mxu0 0
        %1684 = vmatmul.mubr.bf16.gmra.mrb[0].mxu0 %v1548
        %v1685 = vpop.f32.mrb[0].mxu0
        %v1686 = vadd.f32 0.0, %v1685
        %v1687 = vpop.f32.mrb[0].mxu0
        %v1688 = vpop.f32.mrb[0].mxu0
        %v1689 = vadd.f32 0.0, %v1688
        %v1690 = vpop.f32.mrb[0].mxu0
        %1691 = vmatprep.mubr.bf16.mxu0 0
        %1692 = vmatmul.mubr.bf16.gmra.mrb[0].mxu0 %v1549
        %v1693 = vpop.f32.mrb[0].mxu0
        %v1694 = vadd.f32 0.0, %v1693
        %v1695 = vpop.f32.mrb[0].mxu0
        %v1696 = vpop.f32.mrb[0].mxu0
        %v1697 = vadd.f32 0.0, %v1696
        %v1698 = vpop.f32.mrb[0].mxu0
        %1699 = vmatprep.mubr.bf16.mxu0 0
        %1700 = vmatmul.mubr.bf16.gmra.mrb[0].mxu0 %v1550
        %v1701 = vpop.f32.mrb[0].mxu0
        %v1702 = vadd.f32 0.0, %v1701
        %v1703 = vpop.f32.mrb[0].mxu0
        %v1704 = vpop.f32.mrb[0].mxu0
        %v1705 = vadd.f32 0.0, %v1704
        %v1706 = vpop.f32.mrb[0].mxu0
        %1707 = vmatprep.mubr.bf16.mxu0 0
        %1708 = vmatmul.mubr.bf16.gmra.mrb[0].mxu0 %v1551
        %v1709 = vpop.f32.mrb[0].mxu0
        %v1710 = vadd.f32 0.0, %v1709
        %v1711 = vpop.f32.mrb[0].mxu0
        %v1712 = vpop.f32.mrb[0].mxu0
        %v1713 = vadd.f32 0.0, %v1712
        %v1714 = vpop.f32.mrb[0].mxu0
        %1715 = vmatprep.mubr.bf16.mxu0 0
        %1716 = vmatmul.mubr.bf16.gmra.mrb[0].mxu0 %v1552
        %v1717 = vpop.f32.mrb[0].mxu0
        %v1718 = vadd.f32 0.0, %v1717
        %v1719 = vpop.f32.mrb[0].mxu0
        %v1720 = vpop.f32.mrb[0].mxu0
        %v1721 = vadd.f32 0.0, %v1720
        %v1722 = vpop.f32.mrb[0].mxu0
        %1723 = vdwg.mxu0
        %v1724 = vadd.f32 %v1442, %v1646
        %v1725 = vadd.f32 %v1443, %v1649
        %v1726 = vadd.f32 %v1444, %v1654
        %v1727 = vadd.f32 %v1445, %v1657
        %v1728 = vadd.f32 %v1446, %v1662
        %v1729 = vadd.f32 %v1447, %v1665
        %v1730 = vadd.f32 %v1448, %v1670
        %v1731 = vadd.f32 %v1449, %v1673
        %v1732 = vadd.f32 %v1450, %v1678
        %v1733 = vadd.f32 %v1451, %v1681
        %v1734 = vadd.f32 %v1452, %v1686
        %v1735 = vadd.f32 %v1453, %v1689
        %v1736 = vadd.f32 %v1454, %v1694
        %v1737 = vadd.f32 %v1455, %v1697
        %v1738 = vadd.f32 %v1456, %v1702
        %v1739 = vadd.f32 %v1457, %v1705
        %v1740 = vadd.f32 %v1458, %v1710
        %v1741 = vadd.f32 %v1459, %v1713
        %v1742 = vadd.f32 %v1460, %v1718
        %v1743 = vadd.f32 %v1461, %v1721
        %v1744 = vld [vmem:[%s1465] sm:$0xf]
        %v1745 = vld [vmem:[%s1465 + $0x4] sm:$0xf]
        %v1746 = vld [vmem:[%s1465 + $0x8] sm:$0x1]
        %v1747 = vld [vmem:[%s1465 + $0xc] sm:$0xf]
        %v1748 = vld [vmem:[%s1465 + $0x10] sm:$0xf]
        %v1749 = vld [vmem:[%s1465 + $0x14] sm:$0x1]
        %v1750 = vld [vmem:[%s1465 + $0x18] sm:$0xf]
        %v1751 = vld [vmem:[%s1465 + $0x1c] sm:$0xf]
        %v1752 = vld [vmem:[%s1465 + $0x20] sm:$0x1]
        %v1753 = vld [vmem:[%s1465 + $0x24] sm:$0xf]
        %v1754 = vld [vmem:[%s1465 + $0x28] sm:$0xf]
        %v1755 = vld [vmem:[%s1465 + $0x2c] sm:$0x1]
        %v1756 = vld [vmem:[%s1465 + $0x30] sm:$0xf]
        %v1757 = vld [vmem:[%s1465 + $0x34] sm:$0xf]
        %v1758 = vld [vmem:[%s1465 + $0x38] sm:$0x1]
        %v1759 = vld [vmem:[%s1465 + $0x3c] sm:$0xf]
        %v1760 = vld [vmem:[%s1465 + $0x40] sm:$0xf]
        %v1761 = vld [vmem:[%s1465 + $0x44] sm:$0x1]
        %v1762 = vld [vmem:[%s1465 + $0x48] sm:$0xf]
        %v1763 = vld [vmem:[%s1465 + $0x4c] sm:$0xf]
        %v1764 = vld [vmem:[%s1465 + $0x50] sm:$0x1]
        %v1765 = vld [vmem:[%s1465 + $0x54] sm:$0xf]
        %v1766 = vld [vmem:[%s1465 + $0x58] sm:$0xf]
        %v1767 = vld [vmem:[%s1465 + $0x5c] sm:$0x1]
        %v1768 = vld [vmem:[%s1465 + $0x60] sm:$0xf]
        %v1769 = vld [vmem:[%s1465 + $0x64] sm:$0xf]
        %v1770 = vld [vmem:[%s1465 + $0x68] sm:$0x1]
        %v1771 = vld [vmem:[%s1465 + $0x6c] sm:$0xf]
        %v1772 = vld [vmem:[%s1465 + $0x70] sm:$0xf]
        %v1773 = vld [vmem:[%s1465 + $0x74] sm:$0x1]
        %v1775 = vshrl.u32 %v1744, 16
        %v1777 = vrot.slane %v1775, 4
        %v1778 = vshll.u32 %v1744, 16
        %v1780 = vrot.slane %v1778, 5
        %v1781 = vor.u32 %v1777, %v1780
        %v1782 = vrot.slane %v1781, 4
        %v1784 = vshll.u32 %v1745, 16
        %v1786 = vrot.slane %v1784, 5
        %v1787 = vsel %vm441, %v1782, %v1786
        %v1788 = vshrl.u32 %v1745, 16
        %v1790 = vrot.slane %v1788, 4
        %v1791 = vor.u32 %v1790, %v1786
        %v1792 = vrot.slane %v1791, 4
        %v1794 = vshll.u32 %v1746, 16
        %v1796 = vrot.slane %v1794, 5
        %v1797 = vsel %vm441, %v1792, %v1796
        %v1799 = vshrl.u32 %v1747, 16
        %v1801 = vrot.slane %v1799, 4
        %v1802 = vshll.u32 %v1747, 16
        %v1804 = vrot.slane %v1802, 5
        %v1805 = vor.u32 %v1801, %v1804
        %v1806 = vrot.slane %v1805, 4
        %v1808 = vshll.u32 %v1748, 16
        %v1810 = vrot.slane %v1808, 5
        %v1811 = vsel %vm441, %v1806, %v1810
        %v1812 = vshrl.u32 %v1748, 16
        %v1814 = vrot.slane %v1812, 4
        %v1815 = vor.u32 %v1814, %v1810
        %v1816 = vrot.slane %v1815, 4
        %v1818 = vshll.u32 %v1749, 16
        %v1820 = vrot.slane %v1818, 5
        %v1821 = vsel %vm441, %v1816, %v1820
        %v1823 = vshrl.u32 %v1750, 16
        %v1825 = vrot.slane %v1823, 4
        %v1826 = vshll.u32 %v1750, 16
        %v1828 = vrot.slane %v1826, 5
        %v1829 = vor.u32 %v1825, %v1828
        %v1830 = vrot.slane %v1829, 4
        %v1832 = vshll.u32 %v1751, 16
        %v1834 = vrot.slane %v1832, 5
        %v1835 = vsel %vm441, %v1830, %v1834
        %v1836 = vshrl.u32 %v1751, 16
        %v1838 = vrot.slane %v1836, 4
        %v1839 = vor.u32 %v1838, %v1834
        %v1840 = vrot.slane %v1839, 4
        %v1842 = vshll.u32 %v1752, 16
        %v1844 = vrot.slane %v1842, 5
        %v1845 = vsel %vm441, %v1840, %v1844
        %v1847 = vshrl.u32 %v1753, 16
        %v1849 = vrot.slane %v1847, 4
        %v1850 = vshll.u32 %v1753, 16
        %v1852 = vrot.slane %v1850, 5
        %v1853 = vor.u32 %v1849, %v1852
        %v1854 = vrot.slane %v1853, 4
        %v1856 = vshll.u32 %v1754, 16
        %v1858 = vrot.slane %v1856, 5
        %v1859 = vsel %vm441, %v1854, %v1858
        %v1860 = vshrl.u32 %v1754, 16
        %v1862 = vrot.slane %v1860, 4
        %v1863 = vor.u32 %v1862, %v1858
        %v1864 = vrot.slane %v1863, 4
        %v1866 = vshll.u32 %v1755, 16
        %v1868 = vrot.slane %v1866, 5
        %v1869 = vsel %vm441, %v1864, %v1868
        %v1871 = vshrl.u32 %v1756, 16
        %v1873 = vrot.slane %v1871, 4
        %v1874 = vshll.u32 %v1756, 16
        %v1876 = vrot.slane %v1874, 5
        %v1877 = vor.u32 %v1873, %v1876
        %v1878 = vrot.slane %v1877, 4
        %v1880 = vshll.u32 %v1757, 16
        %v1882 = vrot.slane %v1880, 5
        %v1883 = vsel %vm441, %v1878, %v1882
        %v1884 = vshrl.u32 %v1757, 16
        %v1886 = vrot.slane %v1884, 4
        %v1887 = vor.u32 %v1886, %v1882
        %v1888 = vrot.slane %v1887, 4
        %v1890 = vshll.u32 %v1758, 16
        %v1892 = vrot.slane %v1890, 5
        %v1893 = vsel %vm441, %v1888, %v1892
        %v1895 = vshrl.u32 %v1759, 16
        %v1897 = vrot.slane %v1895, 4
        %v1898 = vshll.u32 %v1759, 16
        %v1900 = vrot.slane %v1898, 5
        %v1901 = vor.u32 %v1897, %v1900
        %v1902 = vrot.slane %v1901, 4
        %v1904 = vshll.u32 %v1760, 16
        %v1906 = vrot.slane %v1904, 5
        %v1907 = vsel %vm441, %v1902, %v1906
        %v1908 = vshrl.u32 %v1760, 16
        %v1910 = vrot.slane %v1908, 4
        %v1911 = vor.u32 %v1910, %v1906
        %v1912 = vrot.slane %v1911, 4
        %v1914 = vshll.u32 %v1761, 16
        %v1916 = vrot.slane %v1914, 5
        %v1917 = vsel %vm441, %v1912, %v1916
        %v1919 = vshrl.u32 %v1762, 16
        %v1921 = vrot.slane %v1919, 4
        %v1922 = vshll.u32 %v1762, 16
        %v1924 = vrot.slane %v1922, 5
        %v1925 = vor.u32 %v1921, %v1924
        %v1926 = vrot.slane %v1925, 4
        %v1928 = vshll.u32 %v1763, 16
        %v1930 = vrot.slane %v1928, 5
        %v1931 = vsel %vm441, %v1926, %v1930
        %v1932 = vshrl.u32 %v1763, 16
        %v1934 = vrot.slane %v1932, 4
        %v1935 = vor.u32 %v1934, %v1930
        %v1936 = vrot.slane %v1935, 4
        %v1938 = vshll.u32 %v1764, 16
        %v1940 = vrot.slane %v1938, 5
        %v1941 = vsel %vm441, %v1936, %v1940
        %v1943 = vshrl.u32 %v1765, 16
        %v1945 = vrot.slane %v1943, 4
        %v1946 = vshll.u32 %v1765, 16
        %v1948 = vrot.slane %v1946, 5
        %v1949 = vor.u32 %v1945, %v1948
        %v1950 = vrot.slane %v1949, 4
        %v1952 = vshll.u32 %v1766, 16
        %v1954 = vrot.slane %v1952, 5
        %v1955 = vsel %vm441, %v1950, %v1954
        %v1956 = vshrl.u32 %v1766, 16
        %v1958 = vrot.slane %v1956, 4
        %v1959 = vor.u32 %v1958, %v1954
        %v1960 = vrot.slane %v1959, 4
        %v1962 = vshll.u32 %v1767, 16
        %v1964 = vrot.slane %v1962, 5
        %v1965 = vsel %vm441, %v1960, %v1964
        %v1967 = vshrl.u32 %v1768, 16
        %v1969 = vrot.slane %v1967, 4
        %v1970 = vshll.u32 %v1768, 16
        %v1972 = vrot.slane %v1970, 5
        %v1973 = vor.u32 %v1969, %v1972
        %v1974 = vrot.slane %v1973, 4
        %v1976 = vshll.u32 %v1769, 16
        %v1978 = vrot.slane %v1976, 5
        %v1979 = vsel %vm441, %v1974, %v1978
        %v1980 = vshrl.u32 %v1769, 16
        %v1982 = vrot.slane %v1980, 4
        %v1983 = vor.u32 %v1982, %v1978
        %v1984 = vrot.slane %v1983, 4
        %v1986 = vshll.u32 %v1770, 16
        %v1988 = vrot.slane %v1986, 5
        %v1989 = vsel %vm441, %v1984, %v1988
        %v1991 = vshrl.u32 %v1771, 16
        %v1993 = vrot.slane %v1991, 4
        %v1994 = vshll.u32 %v1771, 16
        %v1996 = vrot.slane %v1994, 5
        %v1997 = vor.u32 %v1993, %v1996
        %v1998 = vrot.slane %v1997, 4
        %v2000 = vshll.u32 %v1772, 16
        %v2002 = vrot.slane %v2000, 5
        %v2003 = vsel %vm441, %v1998, %v2002
        %v2004 = vshrl.u32 %v1772, 16
        %v2006 = vrot.slane %v2004, 4
        %v2007 = vor.u32 %v2006, %v2002
        %v2008 = vrot.slane %v2007, 4
        %v2010 = vshll.u32 %v1773, 16
        %v2012 = vrot.slane %v2010, 5
        %v2013 = vsel %vm441, %v2008, %v2012
        %s2014 = scalar_lea.vmem %s1, 256
        %v2015 = vld [vmem:[%s2014] sm:$0xf]
        %v2016 = vld [vmem:[%s2014 + $0x4] sm:$0xf]
        %v2017 = vld [vmem:[%s2014 + $0x8] sm:$0xf]
        %v2018 = vld [vmem:[%s2014 + $0xc] sm:$0xf]
        %v2019 = vld [vmem:[%s2014 + $0x10] sm:$0xf]
        %v2020 = vld [vmem:[%s2014 + $0x14] sm:$0xf]
        %v2021 = vld [vmem:[%s2014 + $0x18] sm:$0xf]
        %v2022 = vld [vmem:[%s2014 + $0x1c] sm:$0xf]
        %v2023 = vld [vmem:[%s2014 + $0x20] sm:$0xf]
        %v2024 = vld [vmem:[%s2014 + $0x24] sm:$0xf]
        %v2025 = vld [vmem:[%s2014 + $0x28] sm:$0xf]
        %v2026 = vld [vmem:[%s2014 + $0x2c] sm:$0xf]
        %v2027 = vld [vmem:[%s2014 + $0x30] sm:$0xf]
        %v2028 = vld [vmem:[%s2014 + $0x34] sm:$0xf]
        %v2029 = vld [vmem:[%s2014 + $0x38] sm:$0xf]
        %v2030 = vld [vmem:[%s2014 + $0x3c] sm:$0xf]
        %v2031 = vunpack.c.l.b16 %v1787
        %v2032 = vunpack.c.l.b16 %v1797
        %v2033 = vunpack.c.l.b16 %v1811
        %v2034 = vunpack.c.l.b16 %v1821
        %v2035 = vunpack.c.l.b16 %v1835
        %v2036 = vunpack.c.l.b16 %v1845
        %v2037 = vunpack.c.l.b16 %v1859
        %v2038 = vunpack.c.l.b16 %v1869
        %v2039 = vunpack.c.l.b16 %v1883
        %v2040 = vunpack.c.l.b16 %v1893
        %v2041 = vunpack.c.l.b16 %v1907
        %v2042 = vunpack.c.l.b16 %v1917
        %v2043 = vunpack.c.l.b16 %v1931
        %v2044 = vunpack.c.l.b16 %v1941
        %v2045 = vunpack.c.l.b16 %v1955
        %v2046 = vunpack.c.l.b16 %v1965
        %v2047 = vunpack.c.l.b16 %v1979
        %v2048 = vunpack.c.l.b16 %v1989
        %v2049 = vunpack.c.l.b16 %v2003
        %v2050 = vunpack.c.l.b16 %v2013
        %v2051 = vpack.c.b16 %v2032, %v2031
        %v2052 = vpack.c.b16 %v2034, %v2033
        %v2053 = vpack.c.b16 %v2036, %v2035
        %v2054 = vpack.c.b16 %v2038, %v2037
        %v2055 = vpack.c.b16 %v2040, %v2039
        %v2056 = vpack.c.b16 %v2042, %v2041
        %v2057 = vpack.c.b16 %v2044, %v2043
        %v2058 = vpack.c.b16 %v2046, %v2045
        %v2059 = vpack.c.b16 %v2048, %v2047
        %v2060 = vpack.c.b16 %v2050, %v2049
        %v2087 = vunpack.c.l.b16 %v2015
        %v2088 = vunpack.c.l.b16 %v2016
        %v2089 = vunpack.c.l.b16 %v2017
        %v2090 = vunpack.c.l.b16 %v2018
        %v2091 = vunpack.c.l.b16 %v2019
        %v2092 = vunpack.c.l.b16 %v2020
        %v2093 = vunpack.c.l.b16 %v2021
        %v2094 = vunpack.c.l.b16 %v2022
        %v2095 = vunpack.c.l.b16 %v2023
        %v2096 = vunpack.c.l.b16 %v2024
        %v2097 = vunpack.c.l.b16 %v2025
        %v2098 = vunpack.c.l.b16 %v2026
        %v2099 = vunpack.c.l.b16 %v2027
        %v2100 = vunpack.c.l.b16 %v2028
        %v2101 = vunpack.c.l.b16 %v2029
        %v2102 = vunpack.c.l.b16 %v2030
        %v2103 = vpack.c.b16 %v2088, %v2087
        %v2104 = vpack.c.b16 %v2090, %v2089
        %v2105 = vpack.c.b16 %v2092, %v2091
        %v2106 = vpack.c.b16 %v2094, %v2093
        %v2107 = vpack.c.b16 %v2096, %v2095
        %v2108 = vpack.c.b16 %v2098, %v2097
        %v2109 = vpack.c.b16 %v2100, %v2099
        %v2110 = vpack.c.b16 %v2102, %v2101
        %2119 = vmatprep.subr.bf16.mxu0 0
        %2120 = vmatpush1.bf16.msra.mxu0 %v2103
        %2121 = vmatprep.subr.bf16.mxu0 0
        %2122 = vmatpush1.bf16.msra.mxu0 %v2104
        %2123 = vmatprep.subr.bf16.mxu0 0
        %2124 = vmatpush1.bf16.msra.mxu0 %v2105
        %2125 = vmatprep.subr.bf16.mxu0 0
        %2126 = vmatpush1.bf16.msra.mxu0 %v2106
        %2127 = vmatprep.subr.bf16.mxu0 0
        %2128 = vmatpush1.bf16.msra.mxu0 %v2107
        %2129 = vmatprep.subr.bf16.mxu0 0
        %2130 = vmatpush1.bf16.msra.mxu0 %v2108
        %2131 = vmatprep.subr.bf16.mxu0 0
        %2132 = vmatpush1.bf16.msra.mxu0 %v2109
        %2133 = vmatprep.subr.bf16.mxu0 0
        %2134 = vmatpush1.bf16.msra.mxu0 %v2110
        %2135 = vmatprep.subr.bf16.mxu0 0
        %2136 = vmatpush1.bf16.msra.mxu0 0
        %2137 = vmatprep.subr.bf16.mxu0 0
        %2138 = vmatpush1.bf16.msra.mxu0 0
        %2139 = vmatprep.subr.bf16.mxu0 0
        %2140 = vmatpush1.bf16.msra.mxu0 0
        %2141 = vmatprep.subr.bf16.mxu0 0
        %2142 = vmatpush1.bf16.msra.mxu0 0
        %2143 = vmatprep.subr.bf16.mxu0 0
        %2144 = vmatpush1.bf16.msra.mxu0 0
        %2145 = vmatprep.subr.bf16.mxu0 0
        %2146 = vmatpush1.bf16.msra.mxu0 0
        %2147 = vmatprep.subr.bf16.mxu0 0
        %2148 = vmatpush1.bf16.msra.mxu0 0
        %2149 = vmatprep.subr.bf16.mxu0 0
        %2150 = vmatpush1.bf16.msra.mxu0 0
        %2151 = vmatprep.mubr.bf16.mxu0 0
        %2152 = vmatmul.mubr.bf16.gmra.mrb[0].mxu0 %v2051
        %v2153 = vpop.f32.mrb[0].mxu0
        %v2154 = vadd.f32 0.0, %v2153
        %v2155 = vpop.f32.mrb[0].mxu0
        %v2156 = vpop.f32.mrb[0].mxu0
        %v2157 = vadd.f32 0.0, %v2156
        %v2158 = vpop.f32.mrb[0].mxu0
        %2159 = vmatprep.mubr.bf16.mxu0 0
        %2160 = vmatmul.mubr.bf16.gmra.mrb[0].mxu0 %v2052
        %v2161 = vpop.f32.mrb[0].mxu0
        %v2162 = vadd.f32 0.0, %v2161
        %v2163 = vpop.f32.mrb[0].mxu0
        %v2164 = vpop.f32.mrb[0].mxu0
        %v2165 = vadd.f32 0.0, %v2164
        %v2166 = vpop.f32.mrb[0].mxu0
        %2167 = vmatprep.mubr.bf16.mxu0 0
        %2168 = vmatmul.mubr.bf16.gmra.mrb[0].mxu0 %v2053
        %v2169 = vpop.f32.mrb[0].mxu0
        %v2170 = vadd.f32 0.0, %v2169
        %v2171 = vpop.f32.mrb[0].mxu0
        %v2172 = vpop.f32.mrb[0].mxu0
        %v2173 = vadd.f32 0.0, %v2172
        %v2174 = vpop.f32.mrb[0].mxu0
        %2175 = vmatprep.mubr.bf16.mxu0 0
        %2176 = vmatmul.mubr.bf16.gmra.mrb[0].mxu0 %v2054
        %v2177 = vpop.f32.mrb[0].mxu0
        %v2178 = vadd.f32 0.0, %v2177
        %v2179 = vpop.f32.mrb[0].mxu0
        %v2180 = vpop.f32.mrb[0].mxu0
        %v2181 = vadd.f32 0.0, %v2180
        %v2182 = vpop.f32.mrb[0].mxu0
        %2183 = vmatprep.mubr.bf16.mxu0 0
        %2184 = vmatmul.mubr.bf16.gmra.mrb[0].mxu0 %v2055
        %v2185 = vpop.f32.mrb[0].mxu0
        %v2186 = vadd.f32 0.0, %v2185
        %v2187 = vpop.f32.mrb[0].mxu0
        %v2188 = vpop.f32.mrb[0].mxu0
        %v2189 = vadd.f32 0.0, %v2188
        %v2190 = vpop.f32.mrb[0].mxu0
        %2191 = vmatprep.mubr.bf16.mxu0 0
        %2192 = vmatmul.mubr.bf16.gmra.mrb[0].mxu0 %v2056
        %v2193 = vpop.f32.mrb[0].mxu0
        %v2194 = vadd.f32 0.0, %v2193
        %v2195 = vpop.f32.mrb[0].mxu0
        %v2196 = vpop.f32.mrb[0].mxu0
        %v2197 = vadd.f32 0.0, %v2196
        %v2198 = vpop.f32.mrb[0].mxu0
        %2199 = vmatprep.mubr.bf16.mxu0 0
        %2200 = vmatmul.mubr.bf16.gmra.mrb[0].mxu0 %v2057
        %v2201 = vpop.f32.mrb[0].mxu0
        %v2202 = vadd.f32 0.0, %v2201
        %v2203 = vpop.f32.mrb[0].mxu0
        %v2204 = vpop.f32.mrb[0].mxu0
        %v2205 = vadd.f32 0.0, %v2204
        %v2206 = vpop.f32.mrb[0].mxu0
        %2207 = vmatprep.mubr.bf16.mxu0 0
        %2208 = vmatmul.mubr.bf16.gmra.mrb[0].mxu0 %v2058
        %v2209 = vpop.f32.mrb[0].mxu0
        %v2210 = vadd.f32 0.0, %v2209
        %v2211 = vpop.f32.mrb[0].mxu0
        %v2212 = vpop.f32.mrb[0].mxu0
        %v2213 = vadd.f32 0.0, %v2212
        %v2214 = vpop.f32.mrb[0].mxu0
        %2215 = vmatprep.mubr.bf16.mxu0 0
        %2216 = vmatmul.mubr.bf16.gmra.mrb[0].mxu0 %v2059
        %v2217 = vpop.f32.mrb[0].mxu0
        %v2218 = vadd.f32 0.0, %v2217
        %v2219 = vpop.f32.mrb[0].mxu0
        %v2220 = vpop.f32.mrb[0].mxu0
        %v2221 = vadd.f32 0.0, %v2220
        %v2222 = vpop.f32.mrb[0].mxu0
        %2223 = vmatprep.mubr.bf16.mxu0 0
        %2224 = vmatmul.mubr.bf16.gmra.mrb[0].mxu0 %v2060
        %v2225 = vpop.f32.mrb[0].mxu0
        %v2226 = vadd.f32 0.0, %v2225
        %v2227 = vpop.f32.mrb[0].mxu0
        %v2228 = vpop.f32.mrb[0].mxu0
        %v2229 = vadd.f32 0.0, %v2228
        %v2230 = vpop.f32.mrb[0].mxu0
        %2231 = vdwg.mxu0
        %v2232 = vadd.f32 %v1724, %v2154
        %v2233 = vadd.f32 %v1725, %v2157
        %v2234 = vadd.f32 %v1726, %v2162
        %v2235 = vadd.f32 %v1727, %v2165
        %v2236 = vadd.f32 %v1728, %v2170
        %v2237 = vadd.f32 %v1729, %v2173
        %v2238 = vadd.f32 %v1730, %v2178
        %v2239 = vadd.f32 %v1731, %v2181
        %v2240 = vadd.f32 %v1732, %v2186
        %v2241 = vadd.f32 %v1733, %v2189
        %v2242 = vadd.f32 %v1734, %v2194
        %v2243 = vadd.f32 %v1735, %v2197
        %v2244 = vadd.f32 %v1736, %v2202
        %v2245 = vadd.f32 %v1737, %v2205
        %v2246 = vadd.f32 %v1738, %v2210
        %v2247 = vadd.f32 %v1739, %v2213
        %v2248 = vadd.f32 %v1740, %v2218
        %v2249 = vadd.f32 %v1741, %v2221
        %v2250 = vadd.f32 %v1742, %v2226
        %v2251 = vadd.f32 %v1743, %v2229
        %v2252 = vld [vmem:[%s1465] sm:$0xe]
        %v2253 = vld [vmem:[%s1465 + $0xc] sm:$0xe]
        %v2254 = vld [vmem:[%s1465 + $0x18] sm:$0xe]
        %v2255 = vld [vmem:[%s1465 + $0x24] sm:$0xe]
        %v2256 = vld [vmem:[%s1465 + $0x30] sm:$0xe]
        %v2257 = vld [vmem:[%s1465 + $0x3c] sm:$0xe]
        %v2258 = vld [vmem:[%s1465 + $0x48] sm:$0xe]
        %v2259 = vld [vmem:[%s1465 + $0x54] sm:$0xe]
        %v2260 = vld [vmem:[%s1465 + $0x60] sm:$0xe]
        %v2261 = vld [vmem:[%s1465 + $0x6c] sm:$0xe]
        %v2292 = vrot.slane %v2252, 5
        %v2293 = vrot.slane %v2292, 4
        %v2294 = vrot.slane %v1745, 5
        %v2295 = vsel %vm1153, %v2293, %v2294
        %v2296 = vrot.slane %v2294, 4
        %v2297 = vrot.slane %v1746, 5
        %v2298 = vsel %vm1153, %v2296, %v2297
        %v2299 = vrot.slane %v2253, 5
        %v2300 = vrot.slane %v2299, 4
        %v2301 = vrot.slane %v1748, 5
        %v2302 = vsel %vm1153, %v2300, %v2301
        %v2303 = vrot.slane %v2301, 4
        %v2304 = vrot.slane %v1749, 5
        %v2305 = vsel %vm1153, %v2303, %v2304
        %v2306 = vrot.slane %v2254, 5
        %v2307 = vrot.slane %v2306, 4
        %v2308 = vrot.slane %v1751, 5
        %v2309 = vsel %vm1153, %v2307, %v2308
        %v2310 = vrot.slane %v2308, 4
        %v2311 = vrot.slane %v1752, 5
        %v2312 = vsel %vm1153, %v2310, %v2311
        %v2313 = vrot.slane %v2255, 5
        %v2314 = vrot.slane %v2313, 4
        %v2315 = vrot.slane %v1754, 5
        %v2316 = vsel %vm1153, %v2314, %v2315
        %v2317 = vrot.slane %v2315, 4
        %v2318 = vrot.slane %v1755, 5
        %v2319 = vsel %vm1153, %v2317, %v2318
        %v2320 = vrot.slane %v2256, 5
        %v2321 = vrot.slane %v2320, 4
        %v2322 = vrot.slane %v1757, 5
        %v2323 = vsel %vm1153, %v2321, %v2322
        %v2324 = vrot.slane %v2322, 4
        %v2325 = vrot.slane %v1758, 5
        %v2326 = vsel %vm1153, %v2324, %v2325
        %v2327 = vrot.slane %v2257, 5
        %v2328 = vrot.slane %v2327, 4
        %v2329 = vrot.slane %v1760, 5
        %v2330 = vsel %vm1153, %v2328, %v2329
        %v2331 = vrot.slane %v2329, 4
        %v2332 = vrot.slane %v1761, 5
        %v2333 = vsel %vm1153, %v2331, %v2332
        %v2334 = vrot.slane %v2258, 5
        %v2335 = vrot.slane %v2334, 4
        %v2336 = vrot.slane %v1763, 5
        %v2337 = vsel %vm1153, %v2335, %v2336
        %v2338 = vrot.slane %v2336, 4
        %v2339 = vrot.slane %v1764, 5
        %v2340 = vsel %vm1153, %v2338, %v2339
        %v2341 = vrot.slane %v2259, 5
        %v2342 = vrot.slane %v2341, 4
        %v2343 = vrot.slane %v1766, 5
        %v2344 = vsel %vm1153, %v2342, %v2343
        %v2345 = vrot.slane %v2343, 4
        %v2346 = vrot.slane %v1767, 5
        %v2347 = vsel %vm1153, %v2345, %v2346
        %v2348 = vrot.slane %v2260, 5
        %v2349 = vrot.slane %v2348, 4
        %v2350 = vrot.slane %v1769, 5
        %v2351 = vsel %vm1153, %v2349, %v2350
        %v2352 = vrot.slane %v2350, 4
        %v2353 = vrot.slane %v1770, 5
        %v2354 = vsel %vm1153, %v2352, %v2353
        %v2355 = vrot.slane %v2261, 5
        %v2356 = vrot.slane %v2355, 4
        %v2357 = vrot.slane %v1772, 5
        %v2358 = vsel %vm1153, %v2356, %v2357
        %v2359 = vrot.slane %v2357, 4
        %v2360 = vrot.slane %v1773, 5
        %v2361 = vsel %vm1153, %v2359, %v2360
        %s2362 = scalar_lea.vmem %s1, 320
        %v2363 = vld [vmem:[%s2362] sm:$0xf]
        %v2364 = vld [vmem:[%s2362 + $0x4] sm:$0xf]
        %v2365 = vld [vmem:[%s2362 + $0x8] sm:$0xf]
        %v2366 = vld [vmem:[%s2362 + $0xc] sm:$0xf]
        %v2367 = vld [vmem:[%s2362 + $0x10] sm:$0xf]
        %v2368 = vld [vmem:[%s2362 + $0x14] sm:$0xf]
        %v2369 = vld [vmem:[%s2362 + $0x18] sm:$0xf]
        %v2370 = vld [vmem:[%s2362 + $0x1c] sm:$0xf]
        %v2371 = vld [vmem:[%s2362 + $0x20] sm:$0xf]
        %v2372 = vld [vmem:[%s2362 + $0x24] sm:$0xf]
        %v2373 = vld [vmem:[%s2362 + $0x28] sm:$0xf]
        %v2374 = vld [vmem:[%s2362 + $0x2c] sm:$0xf]
        %v2375 = vld [vmem:[%s2362 + $0x30] sm:$0xf]
        %v2376 = vld [vmem:[%s2362 + $0x34] sm:$0xf]
        %v2377 = vld [vmem:[%s2362 + $0x38] sm:$0xf]
        %v2378 = vld [vmem:[%s2362 + $0x3c] sm:$0xf]
        %v2379 = vunpack.c.l.b16 %v2295
        %v2380 = vunpack.c.l.b16 %v2298
        %v2381 = vunpack.c.l.b16 %v2302
        %v2382 = vunpack.c.l.b16 %v2305
        %v2383 = vunpack.c.l.b16 %v2309
        %v2384 = vunpack.c.l.b16 %v2312
        %v2385 = vunpack.c.l.b16 %v2316
        %v2386 = vunpack.c.l.b16 %v2319
        %v2387 = vunpack.c.l.b16 %v2323
        %v2388 = vunpack.c.l.b16 %v2326
        %v2389 = vunpack.c.l.b16 %v2330
        %v2390 = vunpack.c.l.b16 %v2333
        %v2391 = vunpack.c.l.b16 %v2337
        %v2392 = vunpack.c.l.b16 %v2340
        %v2393 = vunpack.c.l.b16 %v2344
        %v2394 = vunpack.c.l.b16 %v2347
        %v2395 = vunpack.c.l.b16 %v2351
        %v2396 = vunpack.c.l.b16 %v2354
        %v2397 = vunpack.c.l.b16 %v2358
        %v2398 = vunpack.c.l.b16 %v2361
        %v2399 = vpack.c.b16 %v2380, %v2379
        %v2400 = vpack.c.b16 %v2382, %v2381
        %v2401 = vpack.c.b16 %v2384, %v2383
        %v2402 = vpack.c.b16 %v2386, %v2385
        %v2403 = vpack.c.b16 %v2388, %v2387
        %v2404 = vpack.c.b16 %v2390, %v2389
        %v2405 = vpack.c.b16 %v2392, %v2391
        %v2406 = vpack.c.b16 %v2394, %v2393
        %v2407 = vpack.c.b16 %v2396, %v2395
        %v2408 = vpack.c.b16 %v2398, %v2397
        %v2435 = vunpack.c.l.b16 %v2363
        %v2436 = vunpack.c.l.b16 %v2364
        %v2437 = vunpack.c.l.b16 %v2365
        %v2438 = vunpack.c.l.b16 %v2366
        %v2439 = vunpack.c.l.b16 %v2367
        %v2440 = vunpack.c.l.b16 %v2368
        %v2441 = vunpack.c.l.b16 %v2369
        %v2442 = vunpack.c.l.b16 %v2370
        %v2443 = vunpack.c.l.b16 %v2371
        %v2444 = vunpack.c.l.b16 %v2372
        %v2445 = vunpack.c.l.b16 %v2373
        %v2446 = vunpack.c.l.b16 %v2374
        %v2447 = vunpack.c.l.b16 %v2375
        %v2448 = vunpack.c.l.b16 %v2376
        %v2449 = vunpack.c.l.b16 %v2377
        %v2450 = vunpack.c.l.b16 %v2378
        %v2451 = vpack.c.b16 %v2436, %v2435
        %v2452 = vpack.c.b16 %v2438, %v2437
        %v2453 = vpack.c.b16 %v2440, %v2439
        %v2454 = vpack.c.b16 %v2442, %v2441
        %v2455 = vpack.c.b16 %v2444, %v2443
        %v2456 = vpack.c.b16 %v2446, %v2445
        %v2457 = vpack.c.b16 %v2448, %v2447
        %v2458 = vpack.c.b16 %v2450, %v2449
        %2467 = vmatprep.subr.bf16.mxu0 0
        %2468 = vmatpush1.bf16.msra.mxu0 %v2451
        %2469 = vmatprep.subr.bf16.mxu0 0
        %2470 = vmatpush1.bf16.msra.mxu0 %v2452
        %2471 = vmatprep.subr.bf16.mxu0 0
        %2472 = vmatpush1.bf16.msra.mxu0 %v2453
        %2473 = vmatprep.subr.bf16.mxu0 0
        %2474 = vmatpush1.bf16.msra.mxu0 %v2454
        %2475 = vmatprep.subr.bf16.mxu0 0
        %2476 = vmatpush1.bf16.msra.mxu0 %v2455
        %2477 = vmatprep.subr.bf16.mxu0 0
        %2478 = vmatpush1.bf16.msra.mxu0 %v2456
        %2479 = vmatprep.subr.bf16.mxu0 0
        %2480 = vmatpush1.bf16.msra.mxu0 %v2457
        %2481 = vmatprep.subr.bf16.mxu0 0
        %2482 = vmatpush1.bf16.msra.mxu0 %v2458
        %2483 = vmatprep.subr.bf16.mxu0 0
        %2484 = vmatpush1.bf16.msra.mxu0 0
        %2485 = vmatprep.subr.bf16.mxu0 0
        %2486 = vmatpush1.bf16.msra.mxu0 0
        %2487 = vmatprep.subr.bf16.mxu0 0
        %2488 = vmatpush1.bf16.msra.mxu0 0
        %2489 = vmatprep.subr.bf16.mxu0 0
        %2490 = vmatpush1.bf16.msra.mxu0 0
        %2491 = vmatprep.subr.bf16.mxu0 0
        %2492 = vmatpush1.bf16.msra.mxu0 0
        %2493 = vmatprep.subr.bf16.mxu0 0
        %2494 = vmatpush1.bf16.msra.mxu0 0
        %2495 = vmatprep.subr.bf16.mxu0 0
        %2496 = vmatpush1.bf16.msra.mxu0 0
        %2497 = vmatprep.subr.bf16.mxu0 0
        %2498 = vmatpush1.bf16.msra.mxu0 0
        %2499 = vmatprep.mubr.bf16.mxu0 0
        %2500 = vmatmul.mubr.bf16.gmra.mrb[0].mxu0 %v2399
        %v2501 = vpop.f32.mrb[0].mxu0
        %v2502 = vadd.f32 0.0, %v2501
        %v2503 = vpop.f32.mrb[0].mxu0
        %v2504 = vpop.f32.mrb[0].mxu0
        %v2505 = vadd.f32 0.0, %v2504
        %v2506 = vpop.f32.mrb[0].mxu0
        %2507 = vmatprep.mubr.bf16.mxu0 0
        %2508 = vmatmul.mubr.bf16.gmra.mrb[0].mxu0 %v2400
        %v2509 = vpop.f32.mrb[0].mxu0
        %v2510 = vadd.f32 0.0, %v2509
        %v2511 = vpop.f32.mrb[0].mxu0
        %v2512 = vpop.f32.mrb[0].mxu0
        %v2513 = vadd.f32 0.0, %v2512
        %v2514 = vpop.f32.mrb[0].mxu0
        %2515 = vmatprep.mubr.bf16.mxu0 0
        %2516 = vmatmul.mubr.bf16.gmra.mrb[0].mxu0 %v2401
        %v2517 = vpop.f32.mrb[0].mxu0
        %v2518 = vadd.f32 0.0, %v2517
        %v2519 = vpop.f32.mrb[0].mxu0
        %v2520 = vpop.f32.mrb[0].mxu0
        %v2521 = vadd.f32 0.0, %v2520
        %v2522 = vpop.f32.mrb[0].mxu0
        %2523 = vmatprep.mubr.bf16.mxu0 0
        %2524 = vmatmul.mubr.bf16.gmra.mrb[0].mxu0 %v2402
        %v2525 = vpop.f32.mrb[0].mxu0
        %v2526 = vadd.f32 0.0, %v2525
        %v2527 = vpop.f32.mrb[0].mxu0
        %v2528 = vpop.f32.mrb[0].mxu0
        %v2529 = vadd.f32 0.0, %v2528
        %v2530 = vpop.f32.mrb[0].mxu0
        %2531 = vmatprep.mubr.bf16.mxu0 0
        %2532 = vmatmul.mubr.bf16.gmra.mrb[0].mxu0 %v2403
        %v2533 = vpop.f32.mrb[0].mxu0
        %v2534 = vadd.f32 0.0, %v2533
        %v2535 = vpop.f32.mrb[0].mxu0
        %v2536 = vpop.f32.mrb[0].mxu0
        %v2537 = vadd.f32 0.0, %v2536
        %v2538 = vpop.f32.mrb[0].mxu0
        %2539 = vmatprep.mubr.bf16.mxu0 0
        %2540 = vmatmul.mubr.bf16.gmra.mrb[0].mxu0 %v2404
        %v2541 = vpop.f32.mrb[0].mxu0
        %v2542 = vadd.f32 0.0, %v2541
        %v2543 = vpop.f32.mrb[0].mxu0
        %v2544 = vpop.f32.mrb[0].mxu0
        %v2545 = vadd.f32 0.0, %v2544
        %v2546 = vpop.f32.mrb[0].mxu0
        %2547 = vmatprep.mubr.bf16.mxu0 0
        %2548 = vmatmul.mubr.bf16.gmra.mrb[0].mxu0 %v2405
        %v2549 = vpop.f32.mrb[0].mxu0
        %v2550 = vadd.f32 0.0, %v2549
        %v2551 = vpop.f32.mrb[0].mxu0
        %v2552 = vpop.f32.mrb[0].mxu0
        %v2553 = vadd.f32 0.0, %v2552
        %v2554 = vpop.f32.mrb[0].mxu0
        %2555 = vmatprep.mubr.bf16.mxu0 0
        %2556 = vmatmul.mubr.bf16.gmra.mrb[0].mxu0 %v2406
        %v2557 = vpop.f32.mrb[0].mxu0
        %v2558 = vadd.f32 0.0, %v2557
        %v2559 = vpop.f32.mrb[0].mxu0
        %v2560 = vpop.f32.mrb[0].mxu0
        %v2561 = vadd.f32 0.0, %v2560
        %v2562 = vpop.f32.mrb[0].mxu0
        %2563 = vmatprep.mubr.bf16.mxu0 0
        %2564 = vmatmul.mubr.bf16.gmra.mrb[0].mxu0 %v2407
        %v2565 = vpop.f32.mrb[0].mxu0
        %v2566 = vadd.f32 0.0, %v2565
        %v2567 = vpop.f32.mrb[0].mxu0
        %v2568 = vpop.f32.mrb[0].mxu0
        %v2569 = vadd.f32 0.0, %v2568
        %v2570 = vpop.f32.mrb[0].mxu0
        %2571 = vmatprep.mubr.bf16.mxu0 0
        %2572 = vmatmul.mubr.bf16.gmra.mrb[0].mxu0 %v2408
        %v2573 = vpop.f32.mrb[0].mxu0
        %v2574 = vadd.f32 0.0, %v2573
        %v2575 = vpop.f32.mrb[0].mxu0
        %v2576 = vpop.f32.mrb[0].mxu0
        %v2577 = vadd.f32 0.0, %v2576
        %v2578 = vpop.f32.mrb[0].mxu0
        %2579 = vdwg.mxu0
        %v2580 = vadd.f32 %v2232, %v2502
        %v2581 = vadd.f32 %v2233, %v2505
        %v2582 = vadd.f32 %v2234, %v2510
        %v2583 = vadd.f32 %v2235, %v2513
        %v2584 = vadd.f32 %v2236, %v2518
        %v2585 = vadd.f32 %v2237, %v2521
        %v2586 = vadd.f32 %v2238, %v2526
        %v2587 = vadd.f32 %v2239, %v2529
        %v2588 = vadd.f32 %v2240, %v2534
        %v2589 = vadd.f32 %v2241, %v2537
        %v2590 = vadd.f32 %v2242, %v2542
        %v2591 = vadd.f32 %v2243, %v2545
        %v2592 = vadd.f32 %v2244, %v2550
        %v2593 = vadd.f32 %v2245, %v2553
        %v2594 = vadd.f32 %v2246, %v2558
        %v2595 = vadd.f32 %v2247, %v2561
        %v2596 = vadd.f32 %v2248, %v2566
        %v2597 = vadd.f32 %v2249, %v2569
        %v2598 = vadd.f32 %v2250, %v2574
        %v2599 = vadd.f32 %v2251, %v2577
        %s2600 = sadd.s32 %s389, 2
        %s2601 = smul.u32 %s2600, 3
        %s2602 = smul.addr %s2601, 4
        %s2603 = scalar_lea.vmem %s375, %s2602
        %v2604 = vld [vmem:[%s2603] sm:$0xf]
        %v2605 = vld [vmem:[%s2603 + $0x4] sm:$0xf]
        %v2606 = vld [vmem:[%s2603 + $0xc] sm:$0xf]
        %v2607 = vld [vmem:[%s2603 + $0x10] sm:$0xf]
        %v2608 = vld [vmem:[%s2603 + $0x18] sm:$0xf]
        %v2609 = vld [vmem:[%s2603 + $0x1c] sm:$0xf]
        %v2610 = vld [vmem:[%s2603 + $0x24] sm:$0xf]
        %v2611 = vld [vmem:[%s2603 + $0x28] sm:$0xf]
        %v2612 = vld [vmem:[%s2603 + $0x30] sm:$0xf]
        %v2613 = vld [vmem:[%s2603 + $0x34] sm:$0xf]
        %v2614 = vld [vmem:[%s2603 + $0x3c] sm:$0xf]
        %v2615 = vld [vmem:[%s2603 + $0x40] sm:$0xf]
        %v2616 = vld [vmem:[%s2603 + $0x48] sm:$0xf]
        %v2617 = vld [vmem:[%s2603 + $0x4c] sm:$0xf]
        %v2618 = vld [vmem:[%s2603 + $0x54] sm:$0xf]
        %v2619 = vld [vmem:[%s2603 + $0x58] sm:$0xf]
        %v2620 = vld [vmem:[%s2603 + $0x60] sm:$0xf]
        %v2621 = vld [vmem:[%s2603 + $0x64] sm:$0xf]
        %v2622 = vld [vmem:[%s2603 + $0x6c] sm:$0xf]
        %v2623 = vld [vmem:[%s2603 + $0x70] sm:$0xf]
        %s2624 = scalar_lea.vmem %s1, 384
        %v2625 = vld [vmem:[%s2624] sm:$0xf]
        %v2626 = vld [vmem:[%s2624 + $0x4] sm:$0xf]
        %v2627 = vld [vmem:[%s2624 + $0x8] sm:$0xf]
        %v2628 = vld [vmem:[%s2624 + $0xc] sm:$0xf]
        %v2629 = vld [vmem:[%s2624 + $0x10] sm:$0xf]
        %v2630 = vld [vmem:[%s2624 + $0x14] sm:$0xf]
        %v2631 = vld [vmem:[%s2624 + $0x18] sm:$0xf]
        %v2632 = vld [vmem:[%s2624 + $0x1c] sm:$0xf]
        %v2633 = vld [vmem:[%s2624 + $0x20] sm:$0xf]
        %v2634 = vld [vmem:[%s2624 + $0x24] sm:$0xf]
        %v2635 = vld [vmem:[%s2624 + $0x28] sm:$0xf]
        %v2636 = vld [vmem:[%s2624 + $0x2c] sm:$0xf]
        %v2637 = vld [vmem:[%s2624 + $0x30] sm:$0xf]
        %v2638 = vld [vmem:[%s2624 + $0x34] sm:$0xf]
        %v2639 = vld [vmem:[%s2624 + $0x38] sm:$0xf]
        %v2640 = vld [vmem:[%s2624 + $0x3c] sm:$0xf]
        %v2661 = vunpack.c.l.b16 %v2604
        %v2662 = vunpack.c.l.b16 %v2605
        %v2663 = vunpack.c.l.b16 %v2606
        %v2664 = vunpack.c.l.b16 %v2607
        %v2665 = vunpack.c.l.b16 %v2608
        %v2666 = vunpack.c.l.b16 %v2609
        %v2667 = vunpack.c.l.b16 %v2610
        %v2668 = vunpack.c.l.b16 %v2611
        %v2669 = vunpack.c.l.b16 %v2612
        %v2670 = vunpack.c.l.b16 %v2613
        %v2671 = vunpack.c.l.b16 %v2614
        %v2672 = vunpack.c.l.b16 %v2615
        %v2673 = vunpack.c.l.b16 %v2616
        %v2674 = vunpack.c.l.b16 %v2617
        %v2675 = vunpack.c.l.b16 %v2618
        %v2676 = vunpack.c.l.b16 %v2619
        %v2677 = vunpack.c.l.b16 %v2620
        %v2678 = vunpack.c.l.b16 %v2621
        %v2679 = vunpack.c.l.b16 %v2622
        %v2680 = vunpack.c.l.b16 %v2623
        %v2681 = vpack.c.b16 %v2662, %v2661
        %v2682 = vpack.c.b16 %v2664, %v2663
        %v2683 = vpack.c.b16 %v2666, %v2665
        %v2684 = vpack.c.b16 %v2668, %v2667
        %v2685 = vpack.c.b16 %v2670, %v2669
        %v2686 = vpack.c.b16 %v2672, %v2671
        %v2687 = vpack.c.b16 %v2674, %v2673
        %v2688 = vpack.c.b16 %v2676, %v2675
        %v2689 = vpack.c.b16 %v2678, %v2677
        %v2690 = vpack.c.b16 %v2680, %v2679
        %v2717 = vunpack.c.l.b16 %v2625
        %v2718 = vunpack.c.l.b16 %v2626
        %v2719 = vunpack.c.l.b16 %v2627
        %v2720 = vunpack.c.l.b16 %v2628
        %v2721 = vunpack.c.l.b16 %v2629
        %v2722 = vunpack.c.l.b16 %v2630
        %v2723 = vunpack.c.l.b16 %v2631
        %v2724 = vunpack.c.l.b16 %v2632
        %v2725 = vunpack.c.l.b16 %v2633
        %v2726 = vunpack.c.l.b16 %v2634
        %v2727 = vunpack.c.l.b16 %v2635
        %v2728 = vunpack.c.l.b16 %v2636
        %v2729 = vunpack.c.l.b16 %v2637
        %v2730 = vunpack.c.l.b16 %v2638
        %v2731 = vunpack.c.l.b16 %v2639
        %v2732 = vunpack.c.l.b16 %v2640
        %v2733 = vpack.c.b16 %v2718, %v2717
        %v2734 = vpack.c.b16 %v2720, %v2719
        %v2735 = vpack.c.b16 %v2722, %v2721
        %v2736 = vpack.c.b16 %v2724, %v2723
        %v2737 = vpack.c.b16 %v2726, %v2725
        %v2738 = vpack.c.b16 %v2728, %v2727
        %v2739 = vpack.c.b16 %v2730, %v2729
        %v2740 = vpack.c.b16 %v2732, %v2731
        %2749 = vmatprep.subr.bf16.mxu0 0
        %2750 = vmatpush1.bf16.msra.mxu0 %v2733
        %2751 = vmatprep.subr.bf16.mxu0 0
        %2752 = vmatpush1.bf16.msra.mxu0 %v2734
        %2753 = vmatprep.subr.bf16.mxu0 0
        %2754 = vmatpush1.bf16.msra.mxu0 %v2735
        %2755 = vmatprep.subr.bf16.mxu0 0
        %2756 = vmatpush1.bf16.msra.mxu0 %v2736
        %2757 = vmatprep.subr.bf16.mxu0 0
        %2758 = vmatpush1.bf16.msra.mxu0 %v2737
        %2759 = vmatprep.subr.bf16.mxu0 0
        %2760 = vmatpush1.bf16.msra.mxu0 %v2738
        %2761 = vmatprep.subr.bf16.mxu0 0
        %2762 = vmatpush1.bf16.msra.mxu0 %v2739
        %2763 = vmatprep.subr.bf16.mxu0 0
        %2764 = vmatpush1.bf16.msra.mxu0 %v2740
        %2765 = vmatprep.subr.bf16.mxu0 0
        %2766 = vmatpush1.bf16.msra.mxu0 0
        %2767 = vmatprep.subr.bf16.mxu0 0
        %2768 = vmatpush1.bf16.msra.mxu0 0
        %2769 = vmatprep.subr.bf16.mxu0 0
        %2770 = vmatpush1.bf16.msra.mxu0 0
        %2771 = vmatprep.subr.bf16.mxu0 0
        %2772 = vmatpush1.bf16.msra.mxu0 0
        %2773 = vmatprep.subr.bf16.mxu0 0
        %2774 = vmatpush1.bf16.msra.mxu0 0
        %2775 = vmatprep.subr.bf16.mxu0 0
        %2776 = vmatpush1.bf16.msra.mxu0 0
        %2777 = vmatprep.subr.bf16.mxu0 0
        %2778 = vmatpush1.bf16.msra.mxu0 0
        %2779 = vmatprep.subr.bf16.mxu0 0
        %2780 = vmatpush1.bf16.msra.mxu0 0
        %2781 = vmatprep.mubr.bf16.mxu0 0
        %2782 = vmatmul.mubr.bf16.gmra.mrb[0].mxu0 %v2681
        %v2783 = vpop.f32.mrb[0].mxu0
        %v2784 = vadd.f32 0.0, %v2783
        %v2785 = vpop.f32.mrb[0].mxu0
        %v2786 = vpop.f32.mrb[0].mxu0
        %v2787 = vadd.f32 0.0, %v2786
        %v2788 = vpop.f32.mrb[0].mxu0
        %2789 = vmatprep.mubr.bf16.mxu0 0
        %2790 = vmatmul.mubr.bf16.gmra.mrb[0].mxu0 %v2682
        %v2791 = vpop.f32.mrb[0].mxu0
        %v2792 = vadd.f32 0.0, %v2791
        %v2793 = vpop.f32.mrb[0].mxu0
        %v2794 = vpop.f32.mrb[0].mxu0
        %v2795 = vadd.f32 0.0, %v2794
        %v2796 = vpop.f32.mrb[0].mxu0
        %2797 = vmatprep.mubr.bf16.mxu0 0
        %2798 = vmatmul.mubr.bf16.gmra.mrb[0].mxu0 %v2683
        %v2799 = vpop.f32.mrb[0].mxu0
        %v2800 = vadd.f32 0.0, %v2799
        %v2801 = vpop.f32.mrb[0].mxu0
        %v2802 = vpop.f32.mrb[0].mxu0
        %v2803 = vadd.f32 0.0, %v2802
        %v2804 = vpop.f32.mrb[0].mxu0
        %2805 = vmatprep.mubr.bf16.mxu0 0
        %2806 = vmatmul.mubr.bf16.gmra.mrb[0].mxu0 %v2684
        %v2807 = vpop.f32.mrb[0].mxu0
        %v2808 = vadd.f32 0.0, %v2807
        %v2809 = vpop.f32.mrb[0].mxu0
        %v2810 = vpop.f32.mrb[0].mxu0
        %v2811 = vadd.f32 0.0, %v2810
        %v2812 = vpop.f32.mrb[0].mxu0
        %2813 = vmatprep.mubr.bf16.mxu0 0
        %2814 = vmatmul.mubr.bf16.gmra.mrb[0].mxu0 %v2685
        %v2815 = vpop.f32.mrb[0].mxu0
        %v2816 = vadd.f32 0.0, %v2815
        %v2817 = vpop.f32.mrb[0].mxu0
        %v2818 = vpop.f32.mrb[0].mxu0
        %v2819 = vadd.f32 0.0, %v2818
        %v2820 = vpop.f32.mrb[0].mxu0
        %2821 = vmatprep.mubr.bf16.mxu0 0
        %2822 = vmatmul.mubr.bf16.gmra.mrb[0].mxu0 %v2686
        %v2823 = vpop.f32.mrb[0].mxu0
        %v2824 = vadd.f32 0.0, %v2823
        %v2825 = vpop.f32.mrb[0].mxu0
        %v2826 = vpop.f32.mrb[0].mxu0
        %v2827 = vadd.f32 0.0, %v2826
        %v2828 = vpop.f32.mrb[0].mxu0
        %2829 = vmatprep.mubr.bf16.mxu0 0
        %2830 = vmatmul.mubr.bf16.gmra.mrb[0].mxu0 %v2687
        %v2831 = vpop.f32.mrb[0].mxu0
        %v2832 = vadd.f32 0.0, %v2831
        %v2833 = vpop.f32.mrb[0].mxu0
        %v2834 = vpop.f32.mrb[0].mxu0
        %v2835 = vadd.f32 0.0, %v2834
        %v2836 = vpop.f32.mrb[0].mxu0
        %2837 = vmatprep.mubr.bf16.mxu0 0
        %2838 = vmatmul.mubr.bf16.gmra.mrb[0].mxu0 %v2688
        %v2839 = vpop.f32.mrb[0].mxu0
        %v2840 = vadd.f32 0.0, %v2839
        %v2841 = vpop.f32.mrb[0].mxu0
        %v2842 = vpop.f32.mrb[0].mxu0
        %v2843 = vadd.f32 0.0, %v2842
        %v2844 = vpop.f32.mrb[0].mxu0
        %2845 = vmatprep.mubr.bf16.mxu0 0
        %2846 = vmatmul.mubr.bf16.gmra.mrb[0].mxu0 %v2689
        %v2847 = vpop.f32.mrb[0].mxu0
        %v2848 = vadd.f32 0.0, %v2847
        %v2849 = vpop.f32.mrb[0].mxu0
        %v2850 = vpop.f32.mrb[0].mxu0
        %v2851 = vadd.f32 0.0, %v2850
        %v2852 = vpop.f32.mrb[0].mxu0
        %2853 = vmatprep.mubr.bf16.mxu0 0
        %2854 = vmatmul.mubr.bf16.gmra.mrb[0].mxu0 %v2690
        %v2855 = vpop.f32.mrb[0].mxu0
        %v2856 = vadd.f32 0.0, %v2855
        %v2857 = vpop.f32.mrb[0].mxu0
        %v2858 = vpop.f32.mrb[0].mxu0
        %v2859 = vadd.f32 0.0, %v2858
        %v2860 = vpop.f32.mrb[0].mxu0
        %2861 = vdwg.mxu0
        %v2862 = vadd.f32 %v2580, %v2784
        %v2863 = vadd.f32 %v2581, %v2787
        %v2864 = vadd.f32 %v2582, %v2792
        %v2865 = vadd.f32 %v2583, %v2795
        %v2866 = vadd.f32 %v2584, %v2800
        %v2867 = vadd.f32 %v2585, %v2803
        %v2868 = vadd.f32 %v2586, %v2808
        %v2869 = vadd.f32 %v2587, %v2811
        %v2870 = vadd.f32 %v2588, %v2816
        %v2871 = vadd.f32 %v2589, %v2819
        %v2872 = vadd.f32 %v2590, %v2824
        %v2873 = vadd.f32 %v2591, %v2827
        %v2874 = vadd.f32 %v2592, %v2832
        %v2875 = vadd.f32 %v2593, %v2835
        %v2876 = vadd.f32 %v2594, %v2840
        %v2877 = vadd.f32 %v2595, %v2843
        %v2878 = vadd.f32 %v2596, %v2848
        %v2879 = vadd.f32 %v2597, %v2851
        %v2880 = vadd.f32 %v2598, %v2856
        %v2881 = vadd.f32 %v2599, %v2859
        %v2882 = vld [vmem:[%s2603] sm:$0xf]
        %v2883 = vld [vmem:[%s2603 + $0x4] sm:$0xf]
        %v2884 = vld [vmem:[%s2603 + $0x8] sm:$0x1]
        %v2885 = vld [vmem:[%s2603 + $0xc] sm:$0xf]
        %v2886 = vld [vmem:[%s2603 + $0x10] sm:$0xf]
        %v2887 = vld [vmem:[%s2603 + $0x14] sm:$0x1]
        %v2888 = vld [vmem:[%s2603 + $0x18] sm:$0xf]
        %v2889 = vld [vmem:[%s2603 + $0x1c] sm:$0xf]
        %v2890 = vld [vmem:[%s2603 + $0x20] sm:$0x1]
        %v2891 = vld [vmem:[%s2603 + $0x24] sm:$0xf]
        %v2892 = vld [vmem:[%s2603 + $0x28] sm:$0xf]
        %v2893 = vld [vmem:[%s2603 + $0x2c] sm:$0x1]
        %v2894 = vld [vmem:[%s2603 + $0x30] sm:$0xf]
        %v2895 = vld [vmem:[%s2603 + $0x34] sm:$0xf]
        %v2896 = vld [vmem:[%s2603 + $0x38] sm:$0x1]
        %v2897 = vld [vmem:[%s2603 + $0x3c] sm:$0xf]
        %v2898 = vld [vmem:[%s2603 + $0x40] sm:$0xf]
        %v2899 = vld [vmem:[%s2603 + $0x44] sm:$0x1]
        %v2900 = vld [vmem:[%s2603 + $0x48] sm:$0xf]
        %v2901 = vld [vmem:[%s2603 + $0x4c] sm:$0xf]
        %v2902 = vld [vmem:[%s2603 + $0x50] sm:$0x1]
        %v2903 = vld [vmem:[%s2603 + $0x54] sm:$0xf]
        %v2904 = vld [vmem:[%s2603 + $0x58] sm:$0xf]
        %v2905 = vld [vmem:[%s2603 + $0x5c] sm:$0x1]
        %v2906 = vld [vmem:[%s2603 + $0x60] sm:$0xf]
        %v2907 = vld [vmem:[%s2603 + $0x64] sm:$0xf]
        %v2908 = vld [vmem:[%s2603 + $0x68] sm:$0x1]
        %v2909 = vld [vmem:[%s2603 + $0x6c] sm:$0xf]
        %v2910 = vld [vmem:[%s2603 + $0x70] sm:$0xf]
        %v2911 = vld [vmem:[%s2603 + $0x74] sm:$0x1]
        %v2913 = vshrl.u32 %v2882, 16
        %v2915 = vrot.slane %v2913, 4
        %v2916 = vshll.u32 %v2882, 16
        %v2918 = vrot.slane %v2916, 5
        %v2919 = vor.u32 %v2915, %v2918
        %v2920 = vrot.slane %v2919, 4
        %v2922 = vshll.u32 %v2883, 16
        %v2924 = vrot.slane %v2922, 5
        %v2925 = vsel %vm441, %v2920, %v2924
        %v2926 = vshrl.u32 %v2883, 16
        %v2928 = vrot.slane %v2926, 4
        %v2929 = vor.u32 %v2928, %v2924
        %v2930 = vrot.slane %v2929, 4
        %v2932 = vshll.u32 %v2884, 16
        %v2934 = vrot.slane %v2932, 5
        %v2935 = vsel %vm441, %v2930, %v2934
        %v2937 = vshrl.u32 %v2885, 16
        %v2939 = vrot.slane %v2937, 4
        %v2940 = vshll.u32 %v2885, 16
        %v2942 = vrot.slane %v2940, 5
        %v2943 = vor.u32 %v2939, %v2942
        %v2944 = vrot.slane %v2943, 4
        %v2946 = vshll.u32 %v2886, 16
        %v2948 = vrot.slane %v2946, 5
        %v2949 = vsel %vm441, %v2944, %v2948
        %v2950 = vshrl.u32 %v2886, 16
        %v2952 = vrot.slane %v2950, 4
        %v2953 = vor.u32 %v2952, %v2948
        %v2954 = vrot.slane %v2953, 4
        %v2956 = vshll.u32 %v2887, 16
        %v2958 = vrot.slane %v2956, 5
        %v2959 = vsel %vm441, %v2954, %v2958
        %v2961 = vshrl.u32 %v2888, 16
        %v2963 = vrot.slane %v2961, 4
        %v2964 = vshll.u32 %v2888, 16
        %v2966 = vrot.slane %v2964, 5
        %v2967 = vor.u32 %v2963, %v2966
        %v2968 = vrot.slane %v2967, 4
        %v2970 = vshll.u32 %v2889, 16
        %v2972 = vrot.slane %v2970, 5
        %v2973 = vsel %vm441, %v2968, %v2972
        %v2974 = vshrl.u32 %v2889, 16
        %v2976 = vrot.slane %v2974, 4
        %v2977 = vor.u32 %v2976, %v2972
        %v2978 = vrot.slane %v2977, 4
        %v2980 = vshll.u32 %v2890, 16
        %v2982 = vrot.slane %v2980, 5
        %v2983 = vsel %vm441, %v2978, %v2982
        %v2985 = vshrl.u32 %v2891, 16
        %v2987 = vrot.slane %v2985, 4
        %v2988 = vshll.u32 %v2891, 16
        %v2990 = vrot.slane %v2988, 5
        %v2991 = vor.u32 %v2987, %v2990
        %v2992 = vrot.slane %v2991, 4
        %v2994 = vshll.u32 %v2892, 16
        %v2996 = vrot.slane %v2994, 5
        %v2997 = vsel %vm441, %v2992, %v2996
        %v2998 = vshrl.u32 %v2892, 16
        %v3000 = vrot.slane %v2998, 4
        %v3001 = vor.u32 %v3000, %v2996
        %v3002 = vrot.slane %v3001, 4
        %v3004 = vshll.u32 %v2893, 16
        %v3006 = vrot.slane %v3004, 5
        %v3007 = vsel %vm441, %v3002, %v3006
        %v3009 = vshrl.u32 %v2894, 16
        %v3011 = vrot.slane %v3009, 4
        %v3012 = vshll.u32 %v2894, 16
        %v3014 = vrot.slane %v3012, 5
        %v3015 = vor.u32 %v3011, %v3014
        %v3016 = vrot.slane %v3015, 4
        %v3018 = vshll.u32 %v2895, 16
        %v3020 = vrot.slane %v3018, 5
        %v3021 = vsel %vm441, %v3016, %v3020
        %v3022 = vshrl.u32 %v2895, 16
        %v3024 = vrot.slane %v3022, 4
        %v3025 = vor.u32 %v3024, %v3020
        %v3026 = vrot.slane %v3025, 4
        %v3028 = vshll.u32 %v2896, 16
        %v3030 = vrot.slane %v3028, 5
        %v3031 = vsel %vm441, %v3026, %v3030
        %v3033 = vshrl.u32 %v2897, 16
        %v3035 = vrot.slane %v3033, 4
        %v3036 = vshll.u32 %v2897, 16
        %v3038 = vrot.slane %v3036, 5
        %v3039 = vor.u32 %v3035, %v3038
        %v3040 = vrot.slane %v3039, 4
        %v3042 = vshll.u32 %v2898, 16
        %v3044 = vrot.slane %v3042, 5
        %v3045 = vsel %vm441, %v3040, %v3044
        %v3046 = vshrl.u32 %v2898, 16
        %v3048 = vrot.slane %v3046, 4
        %v3049 = vor.u32 %v3048, %v3044
        %v3050 = vrot.slane %v3049, 4
        %v3052 = vshll.u32 %v2899, 16
        %v3054 = vrot.slane %v3052, 5
        %v3055 = vsel %vm441, %v3050, %v3054
        %v3057 = vshrl.u32 %v2900, 16
        %v3059 = vrot.slane %v3057, 4
        %v3060 = vshll.u32 %v2900, 16
        %v3062 = vrot.slane %v3060, 5
        %v3063 = vor.u32 %v3059, %v3062
        %v3064 = vrot.slane %v3063, 4
        %v3066 = vshll.u32 %v2901, 16
        %v3068 = vrot.slane %v3066, 5
        %v3069 = vsel %vm441, %v3064, %v3068
        %v3070 = vshrl.u32 %v2901, 16
        %v3072 = vrot.slane %v3070, 4
        %v3073 = vor.u32 %v3072, %v3068
        %v3074 = vrot.slane %v3073, 4
        %v3076 = vshll.u32 %v2902, 16
        %v3078 = vrot.slane %v3076, 5
        %v3079 = vsel %vm441, %v3074, %v3078
        %v3081 = vshrl.u32 %v2903, 16
        %v3083 = vrot.slane %v3081, 4
        %v3084 = vshll.u32 %v2903, 16
        %v3086 = vrot.slane %v3084, 5
        %v3087 = vor.u32 %v3083, %v3086
        %v3088 = vrot.slane %v3087, 4
        %v3090 = vshll.u32 %v2904, 16
        %v3092 = vrot.slane %v3090, 5
        %v3093 = vsel %vm441, %v3088, %v3092
        %v3094 = vshrl.u32 %v2904, 16
        %v3096 = vrot.slane %v3094, 4
        %v3097 = vor.u32 %v3096, %v3092
        %v3098 = vrot.slane %v3097, 4
        %v3100 = vshll.u32 %v2905, 16
        %v3102 = vrot.slane %v3100, 5
        %v3103 = vsel %vm441, %v3098, %v3102
        %v3105 = vshrl.u32 %v2906, 16
        %v3107 = vrot.slane %v3105, 4
        %v3108 = vshll.u32 %v2906, 16
        %v3110 = vrot.slane %v3108, 5
        %v3111 = vor.u32 %v3107, %v3110
        %v3112 = vrot.slane %v3111, 4
        %v3114 = vshll.u32 %v2907, 16
        %v3116 = vrot.slane %v3114, 5
        %v3117 = vsel %vm441, %v3112, %v3116
        %v3118 = vshrl.u32 %v2907, 16
        %v3120 = vrot.slane %v3118, 4
        %v3121 = vor.u32 %v3120, %v3116
        %v3122 = vrot.slane %v3121, 4
        %v3124 = vshll.u32 %v2908, 16
        %v3126 = vrot.slane %v3124, 5
        %v3127 = vsel %vm441, %v3122, %v3126
        %v3129 = vshrl.u32 %v2909, 16
        %v3131 = vrot.slane %v3129, 4
        %v3132 = vshll.u32 %v2909, 16
        %v3134 = vrot.slane %v3132, 5
        %v3135 = vor.u32 %v3131, %v3134
        %v3136 = vrot.slane %v3135, 4
        %v3138 = vshll.u32 %v2910, 16
        %v3140 = vrot.slane %v3138, 5
        %v3141 = vsel %vm441, %v3136, %v3140
        %v3142 = vshrl.u32 %v2910, 16
        %v3144 = vrot.slane %v3142, 4
        %v3145 = vor.u32 %v3144, %v3140
        %v3146 = vrot.slane %v3145, 4
        %v3148 = vshll.u32 %v2911, 16
        %v3150 = vrot.slane %v3148, 5
        %v3151 = vsel %vm441, %v3146, %v3150
        %s3152 = scalar_lea.vmem %s1, 448
        %v3153 = vld [vmem:[%s3152] sm:$0xf]
        %v3154 = vld [vmem:[%s3152 + $0x4] sm:$0xf]
        %v3155 = vld [vmem:[%s3152 + $0x8] sm:$0xf]
        %v3156 = vld [vmem:[%s3152 + $0xc] sm:$0xf]
        %v3157 = vld [vmem:[%s3152 + $0x10] sm:$0xf]
        %v3158 = vld [vmem:[%s3152 + $0x14] sm:$0xf]
        %v3159 = vld [vmem:[%s3152 + $0x18] sm:$0xf]
        %v3160 = vld [vmem:[%s3152 + $0x1c] sm:$0xf]
        %v3161 = vld [vmem:[%s3152 + $0x20] sm:$0xf]
        %v3162 = vld [vmem:[%s3152 + $0x24] sm:$0xf]
        %v3163 = vld [vmem:[%s3152 + $0x28] sm:$0xf]
        %v3164 = vld [vmem:[%s3152 + $0x2c] sm:$0xf]
        %v3165 = vld [vmem:[%s3152 + $0x30] sm:$0xf]
        %v3166 = vld [vmem:[%s3152 + $0x34] sm:$0xf]
        %v3167 = vld [vmem:[%s3152 + $0x38] sm:$0xf]
        %v3168 = vld [vmem:[%s3152 + $0x3c] sm:$0xf]
        %v3169 = vunpack.c.l.b16 %v2925
        %v3170 = vunpack.c.l.b16 %v2935
        %v3171 = vunpack.c.l.b16 %v2949
        %v3172 = vunpack.c.l.b16 %v2959
        %v3173 = vunpack.c.l.b16 %v2973
        %v3174 = vunpack.c.l.b16 %v2983
        %v3175 = vunpack.c.l.b16 %v2997
        %v3176 = vunpack.c.l.b16 %v3007
        %v3177 = vunpack.c.l.b16 %v3021
        %v3178 = vunpack.c.l.b16 %v3031
        %v3179 = vunpack.c.l.b16 %v3045
        %v3180 = vunpack.c.l.b16 %v3055
        %v3181 = vunpack.c.l.b16 %v3069
        %v3182 = vunpack.c.l.b16 %v3079
        %v3183 = vunpack.c.l.b16 %v3093
        %v3184 = vunpack.c.l.b16 %v3103
        %v3185 = vunpack.c.l.b16 %v3117
        %v3186 = vunpack.c.l.b16 %v3127
        %v3187 = vunpack.c.l.b16 %v3141
        %v3188 = vunpack.c.l.b16 %v3151
        %v3189 = vpack.c.b16 %v3170, %v3169
        %v3190 = vpack.c.b16 %v3172, %v3171
        %v3191 = vpack.c.b16 %v3174, %v3173
        %v3192 = vpack.c.b16 %v3176, %v3175
        %v3193 = vpack.c.b16 %v3178, %v3177
        %v3194 = vpack.c.b16 %v3180, %v3179
        %v3195 = vpack.c.b16 %v3182, %v3181
        %v3196 = vpack.c.b16 %v3184, %v3183
        %v3197 = vpack.c.b16 %v3186, %v3185
        %v3198 = vpack.c.b16 %v3188, %v3187
        %v3225 = vunpack.c.l.b16 %v3153
        %v3226 = vunpack.c.l.b16 %v3154
        %v3227 = vunpack.c.l.b16 %v3155
        %v3228 = vunpack.c.l.b16 %v3156
        %v3229 = vunpack.c.l.b16 %v3157
        %v3230 = vunpack.c.l.b16 %v3158
        %v3231 = vunpack.c.l.b16 %v3159
        %v3232 = vunpack.c.l.b16 %v3160
        %v3233 = vunpack.c.l.b16 %v3161
        %v3234 = vunpack.c.l.b16 %v3162
        %v3235 = vunpack.c.l.b16 %v3163
        %v3236 = vunpack.c.l.b16 %v3164
        %v3237 = vunpack.c.l.b16 %v3165
        %v3238 = vunpack.c.l.b16 %v3166
        %v3239 = vunpack.c.l.b16 %v3167
        %v3240 = vunpack.c.l.b16 %v3168
        %v3241 = vpack.c.b16 %v3226, %v3225
        %v3242 = vpack.c.b16 %v3228, %v3227
        %v3243 = vpack.c.b16 %v3230, %v3229
        %v3244 = vpack.c.b16 %v3232, %v3231
        %v3245 = vpack.c.b16 %v3234, %v3233
        %v3246 = vpack.c.b16 %v3236, %v3235
        %v3247 = vpack.c.b16 %v3238, %v3237
        %v3248 = vpack.c.b16 %v3240, %v3239
        %3257 = vmatprep.subr.bf16.mxu0 0
        %3258 = vmatpush1.bf16.msra.mxu0 %v3241
        %3259 = vmatprep.subr.bf16.mxu0 0
        %3260 = vmatpush1.bf16.msra.mxu0 %v3242
        %3261 = vmatprep.subr.bf16.mxu0 0
        %3262 = vmatpush1.bf16.msra.mxu0 %v3243
        %3263 = vmatprep.subr.bf16.mxu0 0
        %3264 = vmatpush1.bf16.msra.mxu0 %v3244
        %3265 = vmatprep.subr.bf16.mxu0 0
        %3266 = vmatpush1.bf16.msra.mxu0 %v3245
        %3267 = vmatprep.subr.bf16.mxu0 0
        %3268 = vmatpush1.bf16.msra.mxu0 %v3246
        %3269 = vmatprep.subr.bf16.mxu0 0
        %3270 = vmatpush1.bf16.msra.mxu0 %v3247
        %3271 = vmatprep.subr.bf16.mxu0 0
        %3272 = vmatpush1.bf16.msra.mxu0 %v3248
        %3273 = vmatprep.subr.bf16.mxu0 0
        %3274 = vmatpush1.bf16.msra.mxu0 0
        %3275 = vmatprep.subr.bf16.mxu0 0
        %3276 = vmatpush1.bf16.msra.mxu0 0
        %3277 = vmatprep.subr.bf16.mxu0 0
        %3278 = vmatpush1.bf16.msra.mxu0 0
        %3279 = vmatprep.subr.bf16.mxu0 0
        %3280 = vmatpush1.bf16.msra.mxu0 0
        %3281 = vmatprep.subr.bf16.mxu0 0
        %3282 = vmatpush1.bf16.msra.mxu0 0
        %3283 = vmatprep.subr.bf16.mxu0 0
        %3284 = vmatpush1.bf16.msra.mxu0 0
        %3285 = vmatprep.subr.bf16.mxu0 0
        %3286 = vmatpush1.bf16.msra.mxu0 0
        %3287 = vmatprep.subr.bf16.mxu0 0
        %3288 = vmatpush1.bf16.msra.mxu0 0
        %3289 = vmatprep.mubr.bf16.mxu0 0
        %3290 = vmatmul.mubr.bf16.gmra.mrb[0].mxu0 %v3189
        %v3291 = vpop.f32.mrb[0].mxu0
        %v3292 = vadd.f32 0.0, %v3291
        %v3293 = vpop.f32.mrb[0].mxu0
        %v3294 = vpop.f32.mrb[0].mxu0
        %v3295 = vadd.f32 0.0, %v3294
        %v3296 = vpop.f32.mrb[0].mxu0
        %3297 = vmatprep.mubr.bf16.mxu0 0
        %3298 = vmatmul.mubr.bf16.gmra.mrb[0].mxu0 %v3190
        %v3299 = vpop.f32.mrb[0].mxu0
        %v3300 = vadd.f32 0.0, %v3299
        %v3301 = vpop.f32.mrb[0].mxu0
        %v3302 = vpop.f32.mrb[0].mxu0
        %v3303 = vadd.f32 0.0, %v3302
        %v3304 = vpop.f32.mrb[0].mxu0
        %3305 = vmatprep.mubr.bf16.mxu0 0
        %3306 = vmatmul.mubr.bf16.gmra.mrb[0].mxu0 %v3191
        %v3307 = vpop.f32.mrb[0].mxu0
        %v3308 = vadd.f32 0.0, %v3307
        %v3309 = vpop.f32.mrb[0].mxu0
        %v3310 = vpop.f32.mrb[0].mxu0
        %v3311 = vadd.f32 0.0, %v3310
        %v3312 = vpop.f32.mrb[0].mxu0
        %3313 = vmatprep.mubr.bf16.mxu0 0
        %3314 = vmatmul.mubr.bf16.gmra.mrb[0].mxu0 %v3192
        %v3315 = vpop.f32.mrb[0].mxu0
        %v3316 = vadd.f32 0.0, %v3315
        %v3317 = vpop.f32.mrb[0].mxu0
        %v3318 = vpop.f32.mrb[0].mxu0
        %v3319 = vadd.f32 0.0, %v3318
        %v3320 = vpop.f32.mrb[0].mxu0
        %3321 = vmatprep.mubr.bf16.mxu0 0
        %3322 = vmatmul.mubr.bf16.gmra.mrb[0].mxu0 %v3193
        %v3323 = vpop.f32.mrb[0].mxu0
        %v3324 = vadd.f32 0.0, %v3323
        %v3325 = vpop.f32.mrb[0].mxu0
        %v3326 = vpop.f32.mrb[0].mxu0
        %v3327 = vadd.f32 0.0, %v3326
        %v3328 = vpop.f32.mrb[0].mxu0
        %3329 = vmatprep.mubr.bf16.mxu0 0
        %3330 = vmatmul.mubr.bf16.gmra.mrb[0].mxu0 %v3194
        %v3331 = vpop.f32.mrb[0].mxu0
        %v3332 = vadd.f32 0.0, %v3331
        %v3333 = vpop.f32.mrb[0].mxu0
        %v3334 = vpop.f32.mrb[0].mxu0
        %v3335 = vadd.f32 0.0, %v3334
        %v3336 = vpop.f32.mrb[0].mxu0
        %3337 = vmatprep.mubr.bf16.mxu0 0
        %3338 = vmatmul.mubr.bf16.gmra.mrb[0].mxu0 %v3195
        %v3339 = vpop.f32.mrb[0].mxu0
        %v3340 = vadd.f32 0.0, %v3339
        %v3341 = vpop.f32.mrb[0].mxu0
        %v3342 = vpop.f32.mrb[0].mxu0
        %v3343 = vadd.f32 0.0, %v3342
        %v3344 = vpop.f32.mrb[0].mxu0
        %3345 = vmatprep.mubr.bf16.mxu0 0
        %3346 = vmatmul.mubr.bf16.gmra.mrb[0].mxu0 %v3196
        %v3347 = vpop.f32.mrb[0].mxu0
        %v3348 = vadd.f32 0.0, %v3347
        %v3349 = vpop.f32.mrb[0].mxu0
        %v3350 = vpop.f32.mrb[0].mxu0
        %v3351 = vadd.f32 0.0, %v3350
        %v3352 = vpop.f32.mrb[0].mxu0
        %3353 = vmatprep.mubr.bf16.mxu0 0
        %3354 = vmatmul.mubr.bf16.gmra.mrb[0].mxu0 %v3197
        %v3355 = vpop.f32.mrb[0].mxu0
        %v3356 = vadd.f32 0.0, %v3355
        %v3357 = vpop.f32.mrb[0].mxu0
        %v3358 = vpop.f32.mrb[0].mxu0
        %v3359 = vadd.f32 0.0, %v3358
        %v3360 = vpop.f32.mrb[0].mxu0
        %3361 = vmatprep.mubr.bf16.mxu0 0
        %3362 = vmatmul.mubr.bf16.gmra.mrb[0].mxu0 %v3198
        %v3363 = vpop.f32.mrb[0].mxu0
        %v3364 = vadd.f32 0.0, %v3363
        %v3365 = vpop.f32.mrb[0].mxu0
        %v3366 = vpop.f32.mrb[0].mxu0
        %v3367 = vadd.f32 0.0, %v3366
        %v3368 = vpop.f32.mrb[0].mxu0
        %3369 = vdwg.mxu0
        %v3370 = vadd.f32 %v2862, %v3292
        %v3371 = vadd.f32 %v2863, %v3295
        %v3372 = vadd.f32 %v2864, %v3300
        %v3373 = vadd.f32 %v2865, %v3303
        %v3374 = vadd.f32 %v2866, %v3308
        %v3375 = vadd.f32 %v2867, %v3311
        %v3376 = vadd.f32 %v2868, %v3316
        %v3377 = vadd.f32 %v2869, %v3319
        %v3378 = vadd.f32 %v2870, %v3324
        %v3379 = vadd.f32 %v2871, %v3327
        %v3380 = vadd.f32 %v2872, %v3332
        %v3381 = vadd.f32 %v2873, %v3335
        %v3382 = vadd.f32 %v2874, %v3340
        %v3383 = vadd.f32 %v2875, %v3343
        %v3384 = vadd.f32 %v2876, %v3348
        %v3385 = vadd.f32 %v2877, %v3351
        %v3386 = vadd.f32 %v2878, %v3356
        %v3387 = vadd.f32 %v2879, %v3359
        %v3388 = vadd.f32 %v2880, %v3364
        %v3389 = vadd.f32 %v2881, %v3367
        %v3390 = vld [vmem:[%s2603] sm:$0xe]
        %v3391 = vld [vmem:[%s2603 + $0xc] sm:$0xe]
        %v3392 = vld [vmem:[%s2603 + $0x18] sm:$0xe]
        %v3393 = vld [vmem:[%s2603 + $0x24] sm:$0xe]
        %v3394 = vld [vmem:[%s2603 + $0x30] sm:$0xe]
        %v3395 = vld [vmem:[%s2603 + $0x3c] sm:$0xe]
        %v3396 = vld [vmem:[%s2603 + $0x48] sm:$0xe]
        %v3397 = vld [vmem:[%s2603 + $0x54] sm:$0xe]
        %v3398 = vld [vmem:[%s2603 + $0x60] sm:$0xe]
        %v3399 = vld [vmem:[%s2603 + $0x6c] sm:$0xe]
        %v3430 = vrot.slane %v3390, 5
        %v3431 = vrot.slane %v3430, 4
        %v3432 = vrot.slane %v2883, 5
        %v3433 = vsel %vm1153, %v3431, %v3432
        %v3434 = vrot.slane %v3432, 4
        %v3435 = vrot.slane %v2884, 5
        %v3436 = vsel %vm1153, %v3434, %v3435
        %v3437 = vrot.slane %v3391, 5
        %v3438 = vrot.slane %v3437, 4
        %v3439 = vrot.slane %v2886, 5
        %v3440 = vsel %vm1153, %v3438, %v3439
        %v3441 = vrot.slane %v3439, 4
        %v3442 = vrot.slane %v2887, 5
        %v3443 = vsel %vm1153, %v3441, %v3442
        %v3444 = vrot.slane %v3392, 5
        %v3445 = vrot.slane %v3444, 4
        %v3446 = vrot.slane %v2889, 5
        %v3447 = vsel %vm1153, %v3445, %v3446
        %v3448 = vrot.slane %v3446, 4
        %v3449 = vrot.slane %v2890, 5
        %v3450 = vsel %vm1153, %v3448, %v3449
        %v3451 = vrot.slane %v3393, 5
        %v3452 = vrot.slane %v3451, 4
        %v3453 = vrot.slane %v2892, 5
        %v3454 = vsel %vm1153, %v3452, %v3453
        %v3455 = vrot.slane %v3453, 4
        %v3456 = vrot.slane %v2893, 5
        %v3457 = vsel %vm1153, %v3455, %v3456
        %v3458 = vrot.slane %v3394, 5
        %v3459 = vrot.slane %v3458, 4
        %v3460 = vrot.slane %v2895, 5
        %v3461 = vsel %vm1153, %v3459, %v3460
        %v3462 = vrot.slane %v3460, 4
        %v3463 = vrot.slane %v2896, 5
        %v3464 = vsel %vm1153, %v3462, %v3463
        %v3465 = vrot.slane %v3395, 5
        %v3466 = vrot.slane %v3465, 4
        %v3467 = vrot.slane %v2898, 5
        %v3468 = vsel %vm1153, %v3466, %v3467
        %v3469 = vrot.slane %v3467, 4
        %v3470 = vrot.slane %v2899, 5
        %v3471 = vsel %vm1153, %v3469, %v3470
        %v3472 = vrot.slane %v3396, 5
        %v3473 = vrot.slane %v3472, 4
        %v3474 = vrot.slane %v2901, 5
        %v3475 = vsel %vm1153, %v3473, %v3474
        %v3476 = vrot.slane %v3474, 4
        %v3477 = vrot.slane %v2902, 5
        %v3478 = vsel %vm1153, %v3476, %v3477
        %v3479 = vrot.slane %v3397, 5
        %v3480 = vrot.slane %v3479, 4
        %v3481 = vrot.slane %v2904, 5
        %v3482 = vsel %vm1153, %v3480, %v3481
        %v3483 = vrot.slane %v3481, 4
        %v3484 = vrot.slane %v2905, 5
        %v3485 = vsel %vm1153, %v3483, %v3484
        %v3486 = vrot.slane %v3398, 5
        %v3487 = vrot.slane %v3486, 4
        %v3488 = vrot.slane %v2907, 5
        %v3489 = vsel %vm1153, %v3487, %v3488
        %v3490 = vrot.slane %v3488, 4
        %v3491 = vrot.slane %v2908, 5
        %v3492 = vsel %vm1153, %v3490, %v3491
        %v3493 = vrot.slane %v3399, 5
        %v3494 = vrot.slane %v3493, 4
        %v3495 = vrot.slane %v2910, 5
        %v3496 = vsel %vm1153, %v3494, %v3495
        %v3497 = vrot.slane %v3495, 4
        %v3498 = vrot.slane %v2911, 5
        %v3499 = vsel %vm1153, %v3497, %v3498
        %s3500 = scalar_lea.vmem %s1, 512
        %v3501 = vld [vmem:[%s3500] sm:$0xf]
        %v3502 = vld [vmem:[%s3500 + $0x4] sm:$0xf]
        %v3503 = vld [vmem:[%s3500 + $0x8] sm:$0xf]
        %v3504 = vld [vmem:[%s3500 + $0xc] sm:$0xf]
        %v3505 = vld [vmem:[%s3500 + $0x10] sm:$0xf]
        %v3506 = vld [vmem:[%s3500 + $0x14] sm:$0xf]
        %v3507 = vld [vmem:[%s3500 + $0x18] sm:$0xf]
        %v3508 = vld [vmem:[%s3500 + $0x1c] sm:$0xf]
        %v3509 = vld [vmem:[%s3500 + $0x20] sm:$0xf]
        %v3510 = vld [vmem:[%s3500 + $0x24] sm:$0xf]
        %v3511 = vld [vmem:[%s3500 + $0x28] sm:$0xf]
        %v3512 = vld [vmem:[%s3500 + $0x2c] sm:$0xf]
        %v3513 = vld [vmem:[%s3500 + $0x30] sm:$0xf]
        %v3514 = vld [vmem:[%s3500 + $0x34] sm:$0xf]
        %v3515 = vld [vmem:[%s3500 + $0x38] sm:$0xf]
        %v3516 = vld [vmem:[%s3500 + $0x3c] sm:$0xf]
        %v3517 = vunpack.c.l.b16 %v3433
        %v3518 = vunpack.c.l.b16 %v3436
        %v3519 = vunpack.c.l.b16 %v3440
        %v3520 = vunpack.c.l.b16 %v3443
        %v3521 = vunpack.c.l.b16 %v3447
        %v3522 = vunpack.c.l.b16 %v3450
        %v3523 = vunpack.c.l.b16 %v3454
        %v3524 = vunpack.c.l.b16 %v3457
        %v3525 = vunpack.c.l.b16 %v3461
        %v3526 = vunpack.c.l.b16 %v3464
        %v3527 = vunpack.c.l.b16 %v3468
        %v3528 = vunpack.c.l.b16 %v3471
        %v3529 = vunpack.c.l.b16 %v3475
        %v3530 = vunpack.c.l.b16 %v3478
        %v3531 = vunpack.c.l.b16 %v3482
        %v3532 = vunpack.c.l.b16 %v3485
        %v3533 = vunpack.c.l.b16 %v3489
        %v3534 = vunpack.c.l.b16 %v3492
        %v3535 = vunpack.c.l.b16 %v3496
        %v3536 = vunpack.c.l.b16 %v3499
        %v3537 = vpack.c.b16 %v3518, %v3517
        %v3538 = vpack.c.b16 %v3520, %v3519
        %v3539 = vpack.c.b16 %v3522, %v3521
        %v3540 = vpack.c.b16 %v3524, %v3523
        %v3541 = vpack.c.b16 %v3526, %v3525
        %v3542 = vpack.c.b16 %v3528, %v3527
        %v3543 = vpack.c.b16 %v3530, %v3529
        %v3544 = vpack.c.b16 %v3532, %v3531
        %v3545 = vpack.c.b16 %v3534, %v3533
        %v3546 = vpack.c.b16 %v3536, %v3535
        %v3573 = vunpack.c.l.b16 %v3501
        %v3574 = vunpack.c.l.b16 %v3502
        %v3575 = vunpack.c.l.b16 %v3503
        %v3576 = vunpack.c.l.b16 %v3504
        %v3577 = vunpack.c.l.b16 %v3505
        %v3578 = vunpack.c.l.b16 %v3506
        %v3579 = vunpack.c.l.b16 %v3507
        %v3580 = vunpack.c.l.b16 %v3508
        %v3581 = vunpack.c.l.b16 %v3509
        %v3582 = vunpack.c.l.b16 %v3510
        %v3583 = vunpack.c.l.b16 %v3511
        %v3584 = vunpack.c.l.b16 %v3512
        %v3585 = vunpack.c.l.b16 %v3513
        %v3586 = vunpack.c.l.b16 %v3514
        %v3587 = vunpack.c.l.b16 %v3515
        %v3588 = vunpack.c.l.b16 %v3516
        %v3589 = vpack.c.b16 %v3574, %v3573
        %v3590 = vpack.c.b16 %v3576, %v3575
        %v3591 = vpack.c.b16 %v3578, %v3577
        %v3592 = vpack.c.b16 %v3580, %v3579
        %v3593 = vpack.c.b16 %v3582, %v3581
        %v3594 = vpack.c.b16 %v3584, %v3583
        %v3595 = vpack.c.b16 %v3586, %v3585
        %v3596 = vpack.c.b16 %v3588, %v3587
        %3605 = vmatprep.subr.bf16.mxu0 0
        %3606 = vmatpush1.bf16.msra.mxu0 %v3589
        %3607 = vmatprep.subr.bf16.mxu0 0
        %3608 = vmatpush1.bf16.msra.mxu0 %v3590
        %3609 = vmatprep.subr.bf16.mxu0 0
        %3610 = vmatpush1.bf16.msra.mxu0 %v3591
        %3611 = vmatprep.subr.bf16.mxu0 0
        %3612 = vmatpush1.bf16.msra.mxu0 %v3592
        %3613 = vmatprep.subr.bf16.mxu0 0
        %3614 = vmatpush1.bf16.msra.mxu0 %v3593
        %3615 = vmatprep.subr.bf16.mxu0 0
        %3616 = vmatpush1.bf16.msra.mxu0 %v3594
        %3617 = vmatprep.subr.bf16.mxu0 0
        %3618 = vmatpush1.bf16.msra.mxu0 %v3595
        %3619 = vmatprep.subr.bf16.mxu0 0
        %3620 = vmatpush1.bf16.msra.mxu0 %v3596
        %3621 = vmatprep.subr.bf16.mxu0 0
        %3622 = vmatpush1.bf16.msra.mxu0 0
        %3623 = vmatprep.subr.bf16.mxu0 0
        %3624 = vmatpush1.bf16.msra.mxu0 0
        %3625 = vmatprep.subr.bf16.mxu0 0
        %3626 = vmatpush1.bf16.msra.mxu0 0
        %3627 = vmatprep.subr.bf16.mxu0 0
        %3628 = vmatpush1.bf16.msra.mxu0 0
        %3629 = vmatprep.subr.bf16.mxu0 0
        %3630 = vmatpush1.bf16.msra.mxu0 0
        %3631 = vmatprep.subr.bf16.mxu0 0
        %3632 = vmatpush1.bf16.msra.mxu0 0
        %3633 = vmatprep.subr.bf16.mxu0 0
        %3634 = vmatpush1.bf16.msra.mxu0 0
        %3635 = vmatprep.subr.bf16.mxu0 0
        %3636 = vmatpush1.bf16.msra.mxu0 0
        %3637 = vmatprep.mubr.bf16.mxu0 0
        %3638 = vmatmul.mubr.bf16.gmra.mrb[0].mxu0 %v3537
        %v3639 = vpop.f32.mrb[0].mxu0
        %v3640 = vadd.f32 0.0, %v3639
        %v3641 = vpop.f32.mrb[0].mxu0
        %v3642 = vpop.f32.mrb[0].mxu0
        %v3643 = vadd.f32 0.0, %v3642
        %v3644 = vpop.f32.mrb[0].mxu0
        %3645 = vmatprep.mubr.bf16.mxu0 0
        %3646 = vmatmul.mubr.bf16.gmra.mrb[0].mxu0 %v3538
        %v3647 = vpop.f32.mrb[0].mxu0
        %v3648 = vadd.f32 0.0, %v3647
        %v3649 = vpop.f32.mrb[0].mxu0
        %v3650 = vpop.f32.mrb[0].mxu0
        %v3651 = vadd.f32 0.0, %v3650
        %v3652 = vpop.f32.mrb[0].mxu0
        %3653 = vmatprep.mubr.bf16.mxu0 0
        %3654 = vmatmul.mubr.bf16.gmra.mrb[0].mxu0 %v3539
        %v3655 = vpop.f32.mrb[0].mxu0
        %v3656 = vadd.f32 0.0, %v3655
        %v3657 = vpop.f32.mrb[0].mxu0
        %v3658 = vpop.f32.mrb[0].mxu0
        %v3659 = vadd.f32 0.0, %v3658
        %v3660 = vpop.f32.mrb[0].mxu0
        %3661 = vmatprep.mubr.bf16.mxu0 0
        %3662 = vmatmul.mubr.bf16.gmra.mrb[0].mxu0 %v3540
        %v3663 = vpop.f32.mrb[0].mxu0
        %v3664 = vadd.f32 0.0, %v3663
        %v3665 = vpop.f32.mrb[0].mxu0
        %v3666 = vpop.f32.mrb[0].mxu0
        %v3667 = vadd.f32 0.0, %v3666
        %v3668 = vpop.f32.mrb[0].mxu0
        %3669 = vmatprep.mubr.bf16.mxu0 0
        %3670 = vmatmul.mubr.bf16.gmra.mrb[0].mxu0 %v3541
        %v3671 = vpop.f32.mrb[0].mxu0
        %v3672 = vadd.f32 0.0, %v3671
        %v3673 = vpop.f32.mrb[0].mxu0
        %v3674 = vpop.f32.mrb[0].mxu0
        %v3675 = vadd.f32 0.0, %v3674
        %v3676 = vpop.f32.mrb[0].mxu0
        %3677 = vmatprep.mubr.bf16.mxu0 0
        %3678 = vmatmul.mubr.bf16.gmra.mrb[0].mxu0 %v3542
        %v3679 = vpop.f32.mrb[0].mxu0
        %v3680 = vadd.f32 0.0, %v3679
        %v3681 = vpop.f32.mrb[0].mxu0
        %v3682 = vpop.f32.mrb[0].mxu0
        %v3683 = vadd.f32 0.0, %v3682
        %v3684 = vpop.f32.mrb[0].mxu0
        %3685 = vmatprep.mubr.bf16.mxu0 0
        %3686 = vmatmul.mubr.bf16.gmra.mrb[0].mxu0 %v3543
        %v3687 = vpop.f32.mrb[0].mxu0
        %v3688 = vadd.f32 0.0, %v3687
        %v3689 = vpop.f32.mrb[0].mxu0
        %v3690 = vpop.f32.mrb[0].mxu0
        %v3691 = vadd.f32 0.0, %v3690
        %v3692 = vpop.f32.mrb[0].mxu0
        %3693 = vmatprep.mubr.bf16.mxu0 0
        %3694 = vmatmul.mubr.bf16.gmra.mrb[0].mxu0 %v3544
        %v3695 = vpop.f32.mrb[0].mxu0
        %v3696 = vadd.f32 0.0, %v3695
        %v3697 = vpop.f32.mrb[0].mxu0
        %v3698 = vpop.f32.mrb[0].mxu0
        %v3699 = vadd.f32 0.0, %v3698
        %v3700 = vpop.f32.mrb[0].mxu0
        %3701 = vmatprep.mubr.bf16.mxu0 0
        %3702 = vmatmul.mubr.bf16.gmra.mrb[0].mxu0 %v3545
        %v3703 = vpop.f32.mrb[0].mxu0
        %v3704 = vadd.f32 0.0, %v3703
        %v3705 = vpop.f32.mrb[0].mxu0
        %v3706 = vpop.f32.mrb[0].mxu0
        %v3707 = vadd.f32 0.0, %v3706
        %v3708 = vpop.f32.mrb[0].mxu0
        %3709 = vmatprep.mubr.bf16.mxu0 0
        %3710 = vmatmul.mubr.bf16.gmra.mrb[0].mxu0 %v3546
        %v3711 = vpop.f32.mrb[0].mxu0
        %v3712 = vadd.f32 0.0, %v3711
        %v3713 = vpop.f32.mrb[0].mxu0
        %v3714 = vpop.f32.mrb[0].mxu0
        %v3715 = vadd.f32 0.0, %v3714
        %v3716 = vpop.f32.mrb[0].mxu0
        %3717 = vdwg.mxu0
        %v3718 = vadd.f32 %v3370, %v3640
        %v3719 = vadd.f32 %v3371, %v3643
        %v3720 = vadd.f32 %v3372, %v3648
        %v3721 = vadd.f32 %v3373, %v3651
        %v3722 = vadd.f32 %v3374, %v3656
        %v3723 = vadd.f32 %v3375, %v3659
        %v3724 = vadd.f32 %v3376, %v3664
        %v3725 = vadd.f32 %v3377, %v3667
        %v3726 = vadd.f32 %v3378, %v3672
        %v3727 = vadd.f32 %v3379, %v3675
        %v3728 = vadd.f32 %v3380, %v3680
        %v3729 = vadd.f32 %v3381, %v3683
        %v3730 = vadd.f32 %v3382, %v3688
        %v3731 = vadd.f32 %v3383, %v3691
        %v3732 = vadd.f32 %v3384, %v3696
        %v3733 = vadd.f32 %v3385, %v3699
        %v3734 = vadd.f32 %v3386, %v3704
        %v3735 = vadd.f32 %v3387, %v3707
        %v3736 = vadd.f32 %v3388, %v3712
        %v3737 = vadd.f32 %v3389, %v3715
        %v3738 = vld [vmem:[%s2] sm:$0x1]
        %v3740 = vlaneseq
        %v3741 = vshrl.u32 %v3740, 7
        %v3742 = vsub.s32 0, %v3741
        %v3743 = vrot.slane %v3738, %v3742
        %v3745 = vadd.f32 %v3718, %v3743
        %v3746 = vadd.f32 %v3719, %v3743
        %v3747 = vadd.f32 %v3720, %v3743
        %v3748 = vadd.f32 %v3721, %v3743
        %v3749 = vadd.f32 %v3722, %v3743
        %v3750 = vadd.f32 %v3723, %v3743
        %v3751 = vadd.f32 %v3724, %v3743
        %v3752 = vadd.f32 %v3725, %v3743
        %v3753 = vadd.f32 %v3726, %v3743
        %v3754 = vadd.f32 %v3727, %v3743
        %v3755 = vadd.f32 %v3728, %v3743
        %v3756 = vadd.f32 %v3729, %v3743
        %v3757 = vadd.f32 %v3730, %v3743
        %v3758 = vadd.f32 %v3731, %v3743
        %v3759 = vadd.f32 %v3732, %v3743
        %v3760 = vadd.f32 %v3733, %v3743
        %v3761 = vadd.f32 %v3734, %v3743
        %v3762 = vadd.f32 %v3735, %v3743
        %v3763 = vadd.f32 %v3736, %v3743
        %v3764 = vadd.f32 %v3737, %v3743
        %v3765 = vmax.f32 %v3745, 0.0
        %v3766 = vmax.f32 %v3746, 0.0
        %v3767 = vmax.f32 %v3747, 0.0
        %v3768 = vmax.f32 %v3748, 0.0
        %v3769 = vmax.f32 %v3749, 0.0
        %v3770 = vmax.f32 %v3750, 0.0
        %v3771 = vmax.f32 %v3751, 0.0
        %v3772 = vmax.f32 %v3752, 0.0
        %v3773 = vmax.f32 %v3753, 0.0
        %v3774 = vmax.f32 %v3754, 0.0
        %v3775 = vmax.f32 %v3755, 0.0
        %v3776 = vmax.f32 %v3756, 0.0
        %v3777 = vmax.f32 %v3757, 0.0
        %v3778 = vmax.f32 %v3758, 0.0
        %v3779 = vmax.f32 %v3759, 0.0
        %v3780 = vmax.f32 %v3760, 0.0
        %v3781 = vmax.f32 %v3761, 0.0
        %v3782 = vmax.f32 %v3762, 0.0
        %v3783 = vmax.f32 %v3763, 0.0
        %v3784 = vmax.f32 %v3764, 0.0
        %v3785 = vpack.c.bf16 %v3766, %v3765
        %v3786 = vpack.c.bf16 %v3768, %v3767
        %v3787 = vpack.c.bf16 %v3770, %v3769
        %v3788 = vpack.c.bf16 %v3772, %v3771
        %v3789 = vpack.c.bf16 %v3774, %v3773
        %v3790 = vpack.c.bf16 %v3776, %v3775
        %v3791 = vpack.c.bf16 %v3778, %v3777
        %v3792 = vpack.c.bf16 %v3780, %v3779
        %v3793 = vpack.c.bf16 %v3782, %v3781
        %v3794 = vpack.c.bf16 %v3784, %v3783
        %v3805 = vunpack.c.l.b16 %v3785
        %v3806 = vunpack.c.h.b16 %v3785
        %v3807 = vunpack.c.l.b16 %v3786
        %v3808 = vunpack.c.h.b16 %v3786
        %v3809 = vunpack.c.l.b16 %v3787
        %v3810 = vunpack.c.h.b16 %v3787
        %v3811 = vunpack.c.l.b16 %v3788
        %v3812 = vunpack.c.h.b16 %v3788
        %v3813 = vunpack.c.l.b16 %v3789
        %v3814 = vunpack.c.h.b16 %v3789
        %v3815 = vunpack.c.l.b16 %v3790
        %v3816 = vunpack.c.h.b16 %v3790
        %v3817 = vunpack.c.l.b16 %v3791
        %v3818 = vunpack.c.h.b16 %v3791
        %v3819 = vunpack.c.l.b16 %v3792
        %v3820 = vunpack.c.h.b16 %v3792
        %v3821 = vunpack.c.l.b16 %v3793
        %v3822 = vunpack.c.h.b16 %v3793
        %v3823 = vunpack.c.l.b16 %v3794
        %v3824 = vunpack.c.h.b16 %v3794
        %v3825 = vpack.c.b16 %v3805, %v3805
        %v3826 = vpack.c.b16 %v3806, %v3806
        %v3827 = vpack.c.b16 %v3807, %v3807
        %v3828 = vpack.c.b16 %v3808, %v3808
        %v3829 = vpack.c.b16 %v3809, %v3809
        %v3830 = vpack.c.b16 %v3810, %v3810
        %v3831 = vpack.c.b16 %v3811, %v3811
        %v3832 = vpack.c.b16 %v3812, %v3812
        %v3833 = vpack.c.b16 %v3813, %v3813
        %v3834 = vpack.c.b16 %v3814, %v3814
        %v3835 = vpack.c.b16 %v3815, %v3815
        %v3836 = vpack.c.b16 %v3816, %v3816
        %v3837 = vpack.c.b16 %v3817, %v3817
        %v3838 = vpack.c.b16 %v3818, %v3818
        %v3839 = vpack.c.b16 %v3819, %v3819
        %v3840 = vpack.c.b16 %v3820, %v3820
        %v3841 = vpack.c.b16 %v3821, %v3821
        %v3842 = vpack.c.b16 %v3822, %v3822
        %v3843 = vpack.c.b16 %v3823, %v3823
        %v3844 = vpack.c.b16 %v3824, %v3824
        %vm3845 = vsmask.f32 256
        %vm3846 = vsmask.f32 4368
        %vm3847 = vmor %vm3845, %vm3846
        %v3849 = vshrl.u32 %v3825, 16
        %v3851 = vrot.slane %v3849, 7
        %v3852 = vshll.u32 %v3825, 16
        %v3854 = vor.u32 %v3851, %v3852
        %v3855 = vrot.slane %v3851, 4
        %v3857 = vshrl.u32 %v3826, 16
        %v3859 = vrot.slane %v3857, 7
        %v3860 = vshll.u32 %v3826, 16
        %v3862 = vor.u32 %v3859, %v3860
        %v3863 = vsel %vm3847, %v3855, %v3862
        %v3864 = vrot.slane %v3859, 4
        %v3866 = vshrl.u32 %v3827, 16
        %v3868 = vrot.slane %v3866, 7
        %v3869 = vshll.u32 %v3827, 16
        %v3871 = vor.u32 %v3868, %v3869
        %v3872 = vrot.slane %v3868, 4
        %v3874 = vshrl.u32 %v3828, 16
        %v3876 = vrot.slane %v3874, 7
        %v3877 = vshll.u32 %v3828, 16
        %v3879 = vor.u32 %v3876, %v3877
        %v3880 = vsel %vm3847, %v3872, %v3879
        %v3881 = vrot.slane %v3876, 4
        %v3883 = vshrl.u32 %v3829, 16
        %v3885 = vrot.slane %v3883, 7
        %v3886 = vshll.u32 %v3829, 16
        %v3888 = vor.u32 %v3885, %v3886
        %v3889 = vrot.slane %v3885, 4
        %v3891 = vshrl.u32 %v3830, 16
        %v3893 = vrot.slane %v3891, 7
        %v3894 = vshll.u32 %v3830, 16
        %v3896 = vor.u32 %v3893, %v3894
        %v3897 = vsel %vm3847, %v3889, %v3896
        %v3898 = vrot.slane %v3893, 4
        %v3900 = vshrl.u32 %v3831, 16
        %v3902 = vrot.slane %v3900, 7
        %v3903 = vshll.u32 %v3831, 16
        %v3905 = vor.u32 %v3902, %v3903
        %v3906 = vrot.slane %v3902, 4
        %v3908 = vshrl.u32 %v3832, 16
        %v3910 = vrot.slane %v3908, 7
        %v3911 = vshll.u32 %v3832, 16
        %v3913 = vor.u32 %v3910, %v3911
        %v3914 = vsel %vm3847, %v3906, %v3913
        %v3915 = vrot.slane %v3910, 4
        %v3917 = vshrl.u32 %v3833, 16
        %v3919 = vrot.slane %v3917, 7
        %v3920 = vshll.u32 %v3833, 16
        %v3922 = vor.u32 %v3919, %v3920
        %v3923 = vrot.slane %v3919, 4
        %v3925 = vshrl.u32 %v3834, 16
        %v3927 = vrot.slane %v3925, 7
        %v3928 = vshll.u32 %v3834, 16
        %v3930 = vor.u32 %v3927, %v3928
        %v3931 = vsel %vm3847, %v3923, %v3930
        %v3932 = vrot.slane %v3927, 4
        %v3934 = vshrl.u32 %v3835, 16
        %v3936 = vrot.slane %v3934, 7
        %v3937 = vshll.u32 %v3835, 16
        %v3939 = vor.u32 %v3936, %v3937
        %v3940 = vrot.slane %v3936, 4
        %v3942 = vshrl.u32 %v3836, 16
        %v3944 = vrot.slane %v3942, 7
        %v3945 = vshll.u32 %v3836, 16
        %v3947 = vor.u32 %v3944, %v3945
        %v3948 = vsel %vm3847, %v3940, %v3947
        %v3949 = vrot.slane %v3944, 4
        %v3951 = vshrl.u32 %v3837, 16
        %v3953 = vrot.slane %v3951, 7
        %v3954 = vshll.u32 %v3837, 16
        %v3956 = vor.u32 %v3953, %v3954
        %v3957 = vrot.slane %v3953, 4
        %v3959 = vshrl.u32 %v3838, 16
        %v3961 = vrot.slane %v3959, 7
        %v3962 = vshll.u32 %v3838, 16
        %v3964 = vor.u32 %v3961, %v3962
        %v3965 = vsel %vm3847, %v3957, %v3964
        %v3966 = vrot.slane %v3961, 4
        %v3968 = vshrl.u32 %v3839, 16
        %v3970 = vrot.slane %v3968, 7
        %v3971 = vshll.u32 %v3839, 16
        %v3973 = vor.u32 %v3970, %v3971
        %v3974 = vrot.slane %v3970, 4
        %v3976 = vshrl.u32 %v3840, 16
        %v3978 = vrot.slane %v3976, 7
        %v3979 = vshll.u32 %v3840, 16
        %v3981 = vor.u32 %v3978, %v3979
        %v3982 = vsel %vm3847, %v3974, %v3981
        %v3983 = vrot.slane %v3978, 4
        %v3985 = vshrl.u32 %v3841, 16
        %v3987 = vrot.slane %v3985, 7
        %v3988 = vshll.u32 %v3841, 16
        %v3990 = vor.u32 %v3987, %v3988
        %v3991 = vrot.slane %v3987, 4
        %v3993 = vshrl.u32 %v3842, 16
        %v3995 = vrot.slane %v3993, 7
        %v3996 = vshll.u32 %v3842, 16
        %v3998 = vor.u32 %v3995, %v3996
        %v3999 = vsel %vm3847, %v3991, %v3998
        %v4000 = vrot.slane %v3995, 4
        %v4002 = vshrl.u32 %v3843, 16
        %v4004 = vrot.slane %v4002, 7
        %v4005 = vshll.u32 %v3843, 16
        %v4007 = vor.u32 %v4004, %v4005
        %v4008 = vrot.slane %v4004, 4
        %v4010 = vshrl.u32 %v3844, 16
        %v4012 = vrot.slane %v4010, 7
        %v4013 = vshll.u32 %v3844, 16
        %v4015 = vor.u32 %v4012, %v4013
        %v4016 = vsel %vm3847, %v4008, %v4015
        %v4017 = vrot.slane %v4012, 4
        %vm4048 = vcmask 1043456
        %vm4049 = vsmask.f32 7938
        %vm4050 = vmand %vm4048, %vm4049
        %v4051 = vld [vmem:[#allocation2] sm:$0xf]
        %v4052 = vsel %vm4050, %v3854, %v4051
        %4053 = vst [vmem:[#allocation2] sm:$0xf] %v4052
        %4054 = vst [vmem:[#allocation2 + $0x4] sm:$0xf] %v3863
        %vm4055 = vcmask 1040384
        %vm4056 = vmand %vm4055, %vm3845
        %v4057 = vld [vmem:[#allocation2 + $0x8] sm:$0x1]
        %v4058 = vsel %vm4056, %v3864, %v4057
        %4059 = vst [vmem:[#allocation2 + $0x8] sm:$0x1] %v4058
        %v4060 = vld [vmem:[#allocation2 + $0xc] sm:$0xf]
        %v4061 = vsel %vm4050, %v3871, %v4060
        %4062 = vst [vmem:[#allocation2 + $0xc] sm:$0xf] %v4061
        %4063 = vst [vmem:[#allocation2 + $0x10] sm:$0xf] %v3880
        %v4064 = vld [vmem:[#allocation2 + $0x14] sm:$0x1]
        %v4065 = vsel %vm4056, %v3881, %v4064
        %4066 = vst [vmem:[#allocation2 + $0x14] sm:$0x1] %v4065
        %v4067 = vld [vmem:[#allocation2 + $0x18] sm:$0xf]
        %v4068 = vsel %vm4050, %v3888, %v4067
        %4069 = vst [vmem:[#allocation2 + $0x18] sm:$0xf] %v4068
        %4070 = vst [vmem:[#allocation2 + $0x1c] sm:$0xf] %v3897
        %v4071 = vld [vmem:[#allocation2 + $0x20] sm:$0x1]
        %v4072 = vsel %vm4056, %v3898, %v4071
        %4073 = vst [vmem:[#allocation2 + $0x20] sm:$0x1] %v4072
        %v4074 = vld [vmem:[#allocation2 + $0x24] sm:$0xf]
        %v4075 = vsel %vm4050, %v3905, %v4074
        %4076 = vst [vmem:[#allocation2 + $0x24] sm:$0xf] %v4075
        %4077 = vst [vmem:[#allocation2 + $0x28] sm:$0xf] %v3914
        %v4078 = vld [vmem:[#allocation2 + $0x2c] sm:$0x1]
        %v4079 = vsel %vm4056, %v3915, %v4078
        %4080 = vst [vmem:[#allocation2 + $0x2c] sm:$0x1] %v4079
        %v4081 = vld [vmem:[#allocation2 + $0x30] sm:$0xf]
        %v4082 = vsel %vm4050, %v3922, %v4081
        %4083 = vst [vmem:[#allocation2 + $0x30] sm:$0xf] %v4082
        %4084 = vst [vmem:[#allocation2 + $0x34] sm:$0xf] %v3931
        %v4085 = vld [vmem:[#allocation2 + $0x38] sm:$0x1]
        %v4086 = vsel %vm4056, %v3932, %v4085
        %4087 = vst [vmem:[#allocation2 + $0x38] sm:$0x1] %v4086
        %v4088 = vld [vmem:[#allocation2 + $0x3c] sm:$0xf]
        %v4089 = vsel %vm4050, %v3939, %v4088
        %4090 = vst [vmem:[#allocation2 + $0x3c] sm:$0xf] %v4089
        %4091 = vst [vmem:[#allocation2 + $0x40] sm:$0xf] %v3948
        %v4092 = vld [vmem:[#allocation2 + $0x44] sm:$0x1]
        %v4093 = vsel %vm4056, %v3949, %v4092
        %4094 = vst [vmem:[#allocation2 + $0x44] sm:$0x1] %v4093
        %v4095 = vld [vmem:[#allocation2 + $0x48] sm:$0xf]
        %v4096 = vsel %vm4050, %v3956, %v4095
        %4097 = vst [vmem:[#allocation2 + $0x48] sm:$0xf] %v4096
        %4098 = vst [vmem:[#allocation2 + $0x4c] sm:$0xf] %v3965
        %v4099 = vld [vmem:[#allocation2 + $0x50] sm:$0x1]
        %v4100 = vsel %vm4056, %v3966, %v4099
        %4101 = vst [vmem:[#allocation2 + $0x50] sm:$0x1] %v4100
        %v4102 = vld [vmem:[#allocation2 + $0x54] sm:$0xf]
        %v4103 = vsel %vm4050, %v3973, %v4102
        %4104 = vst [vmem:[#allocation2 + $0x54] sm:$0xf] %v4103
        %4105 = vst [vmem:[#allocation2 + $0x58] sm:$0xf] %v3982
        %v4106 = vld [vmem:[#allocation2 + $0x5c] sm:$0x1]
        %v4107 = vsel %vm4056, %v3983, %v4106
        %4108 = vst [vmem:[#allocation2 + $0x5c] sm:$0x1] %v4107
        %v4109 = vld [vmem:[#allocation2 + $0x60] sm:$0xf]
        %v4110 = vsel %vm4050, %v3990, %v4109
        %4111 = vst [vmem:[#allocation2 + $0x60] sm:$0xf] %v4110
        %4112 = vst [vmem:[#allocation2 + $0x64] sm:$0xf] %v3999
        %v4113 = vld [vmem:[#allocation2 + $0x68] sm:$0x1]
        %v4114 = vsel %vm4056, %v4000, %v4113
        %4115 = vst [vmem:[#allocation2 + $0x68] sm:$0x1] %v4114
        %v4116 = vld [vmem:[#allocation2 + $0x6c] sm:$0xf]
        %v4117 = vsel %vm4050, %v4007, %v4116
        %4118 = vst [vmem:[#allocation2 + $0x6c] sm:$0xf] %v4117
        %4119 = vst [vmem:[#allocation2 + $0x70] sm:$0xf] %v4016
        %v4120 = vld [vmem:[#allocation2 + $0x74] sm:$0x1]
        %v4121 = vsel %vm4056, %v4017, %v4120
        %4122 = vst [vmem:[#allocation2 + $0x74] sm:$0x1] %v4121
        %v4123 = vld [vmem:[#allocation2] sm:$0x1]
        %v4124 = vsel %vm4056, 0, %v4123
        %4125 = vst [vmem:[#allocation2] sm:$0x1] %v4124
        %v4126 = vld [vmem:[#allocation2 + $0xc] sm:$0x1]
        %v4127 = vsel %vm4056, 0, %v4126
        %4128 = vst [vmem:[#allocation2 + $0xc] sm:$0x1] %v4127
        %v4129 = vld [vmem:[#allocation2 + $0x18] sm:$0x1]
        %v4130 = vsel %vm4056, 0, %v4129
        %4131 = vst [vmem:[#allocation2 + $0x18] sm:$0x1] %v4130
        %v4132 = vld [vmem:[#allocation2 + $0x24] sm:$0x1]
        %v4133 = vsel %vm4056, 0, %v4132
        %4134 = vst [vmem:[#allocation2 + $0x24] sm:$0x1] %v4133
        %v4135 = vld [vmem:[#allocation2 + $0x30] sm:$0x1]
        %v4136 = vsel %vm4056, 0, %v4135
        %4137 = vst [vmem:[#allocation2 + $0x30] sm:$0x1] %v4136
        %v4138 = vld [vmem:[#allocation2 + $0x3c] sm:$0x1]
        %v4139 = vsel %vm4056, 0, %v4138
        %4140 = vst [vmem:[#allocation2 + $0x3c] sm:$0x1] %v4139
        %v4141 = vld [vmem:[#allocation2 + $0x48] sm:$0x1]
        %v4142 = vsel %vm4056, 0, %v4141
        %4143 = vst [vmem:[#allocation2 + $0x48] sm:$0x1] %v4142
        %v4144 = vld [vmem:[#allocation2 + $0x54] sm:$0x1]
        %v4145 = vsel %vm4056, 0, %v4144
        %4146 = vst [vmem:[#allocation2 + $0x54] sm:$0x1] %v4145
        %v4147 = vld [vmem:[#allocation2 + $0x60] sm:$0x1]
        %v4148 = vsel %vm4056, 0, %v4147
        %4149 = vst [vmem:[#allocation2 + $0x60] sm:$0x1] %v4148
        %v4150 = vld [vmem:[#allocation2 + $0x6c] sm:$0x1]
        %v4151 = vsel %vm4056, 0, %v4150
        %4152 = vst [vmem:[#allocation2 + $0x6c] sm:$0x1] %v4151
        %vm4153 = vmand %vm4055, %vm4049
        %v4154 = vld [vmem:[#allocation2 + $0x8] sm:$0x1]
        %v4155 = vsel %vm4153, 0, %v4154
        %4156 = vst [vmem:[#allocation2 + $0x8] sm:$0x1] %v4155
        %v4157 = vld [vmem:[#allocation2 + $0x14] sm:$0x1]
        %v4158 = vsel %vm4153, 0, %v4157
        %4159 = vst [vmem:[#allocation2 + $0x14] sm:$0x1] %v4158
        %v4160 = vld [vmem:[#allocation2 + $0x20] sm:$0x1]
        %v4161 = vsel %vm4153, 0, %v4160
        %4162 = vst [vmem:[#allocation2 + $0x20] sm:$0x1] %v4161
        %v4163 = vld [vmem:[#allocation2 + $0x2c] sm:$0x1]
        %v4164 = vsel %vm4153, 0, %v4163
        %4165 = vst [vmem:[#allocation2 + $0x2c] sm:$0x1] %v4164
        %v4166 = vld [vmem:[#allocation2 + $0x38] sm:$0x1]
        %v4167 = vsel %vm4153, 0, %v4166
        %4168 = vst [vmem:[#allocation2 + $0x38] sm:$0x1] %v4167
        %v4169 = vld [vmem:[#allocation2 + $0x44] sm:$0x1]
        %v4170 = vsel %vm4153, 0, %v4169
        %4171 = vst [vmem:[#allocation2 + $0x44] sm:$0x1] %v4170
        %v4172 = vld [vmem:[#allocation2 + $0x50] sm:$0x1]
        %v4173 = vsel %vm4153, 0, %v4172
        %4174 = vst [vmem:[#allocation2 + $0x50] sm:$0x1] %v4173
        %v4175 = vld [vmem:[#allocation2 + $0x5c] sm:$0x1]
        %v4176 = vsel %vm4153, 0, %v4175
        %4177 = vst [vmem:[#allocation2 + $0x5c] sm:$0x1] %v4176
        %v4178 = vld [vmem:[#allocation2 + $0x68] sm:$0x1]
        %v4179 = vsel %vm4153, 0, %v4178
        %4180 = vst [vmem:[#allocation2 + $0x68] sm:$0x1] %v4179
        %v4181 = vld [vmem:[#allocation2 + $0x74] sm:$0x1]
        %v4182 = vsel %vm4153, 0, %v4181
        %4183 = vst [vmem:[#allocation2 + $0x74] sm:$0x1] %v4182
        %p4184 = scmp.eq.s32.totalorder %s29, 0
        // Predicated region
        $region61: #{tpu_custom_call.1} parent=51 // pred_check
          %p4185 = pneg %p4184
        $region62: #{tpu_custom_call.1} parent=51 // pred_check_branch
          %4187 = sbr.rel (%p4185) target = $region64
        $region63: #{tpu_custom_call.1} parent=51 // pred_region
          %4188 = vst [vmem:[#allocation2] sm:$0xf] 0
          %4189 = vst [vmem:[#allocation2 + $0x4] sm:$0xf] 0
          %4190 = vst [vmem:[#allocation2 + $0x8] sm:$0x1] 0
        $region64: #{tpu_custom_call.1} parent=51 // pred_fallthru
          _
        %p4191 = scmp.eq.s32.totalorder %s29, 1
        // Predicated region
        $region65: #{tpu_custom_call.1} parent=51 // pred_check
          %p4192 = pneg %p4191
        $region66: #{tpu_custom_call.1} parent=51 // pred_check_branch
          %4194 = sbr.rel (%p4192) target = $region68
        $region67: #{tpu_custom_call.1} parent=51 // pred_region
          %s4195 = scalar_lea.vmem [#allocation2], 108
          %4196 = vst [vmem:[%s4195] sm:$0xf] 0
          %4197 = vst [vmem:[%s4195 + $0x4] sm:$0xf] 0
          %4198 = vst [vmem:[%s4195 + $0x8] sm:$0x1] 0
        $region68: #{tpu_custom_call.1} parent=51 // pred_fallthru
          _
        %v4199 = vld [vmem:[%s4] sm:$0x1]
        %v4201 = vlaneseq
        %v4202 = vshrl.u32 %v4201, 7
        %v4203 = vsub.s32 0, %v4202
        %v4204 = vrot.slane %v4199, %v4203
        %v4206 = vadd.f32 %v4204, 0.0
        %v4207 = vld [vmem:[#allocation2] sm:$0xf]
        %v4208 = vld [vmem:[#allocation2 + $0x4] sm:$0xf]
        %v4209 = vld [vmem:[#allocation2 + $0xc] sm:$0xf]
        %v4210 = vld [vmem:[#allocation2 + $0x10] sm:$0xf]
        %v4211 = vld [vmem:[#allocation2 + $0x18] sm:$0xf]
        %v4212 = vld [vmem:[#allocation2 + $0x1c] sm:$0xf]
        %v4213 = vld [vmem:[#allocation2 + $0x24] sm:$0xf]
        %v4214 = vld [vmem:[#allocation2 + $0x28] sm:$0xf]
        %v4215 = vld [vmem:[#allocation2 + $0x30] sm:$0xf]
        %v4216 = vld [vmem:[#allocation2 + $0x34] sm:$0xf]
        %v4217 = vld [vmem:[#allocation2 + $0x3c] sm:$0xf]
        %v4218 = vld [vmem:[#allocation2 + $0x40] sm:$0xf]
        %v4219 = vld [vmem:[#allocation2 + $0x48] sm:$0xf]
        %v4220 = vld [vmem:[#allocation2 + $0x4c] sm:$0xf]
        %v4221 = vld [vmem:[#allocation2 + $0x54] sm:$0xf]
        %v4222 = vld [vmem:[#allocation2 + $0x58] sm:$0xf]
        %v4223 = vld [vmem:[#allocation3] sm:$0xf]
        %v4224 = vld [vmem:[#allocation3 + $0x4] sm:$0xf]
        %v4225 = vld [vmem:[#allocation3 + $0x8] sm:$0xf]
        %v4226 = vld [vmem:[#allocation3 + $0xc] sm:$0xf]
        %v4227 = vld [vmem:[#allocation3 + $0x10] sm:$0xf]
        %v4228 = vld [vmem:[#allocation3 + $0x14] sm:$0xf]
        %v4229 = vld [vmem:[#allocation3 + $0x18] sm:$0xf]
        %v4230 = vld [vmem:[#allocation3 + $0x1c] sm:$0xf]
        %v4231 = vld [vmem:[#allocation3 + $0x20] sm:$0xf]
        %v4232 = vld [vmem:[#allocation3 + $0x24] sm:$0xf]
        %v4233 = vld [vmem:[#allocation3 + $0x28] sm:$0xf]
        %v4234 = vld [vmem:[#allocation3 + $0x2c] sm:$0xf]
        %v4235 = vld [vmem:[#allocation3 + $0x30] sm:$0xf]
        %v4236 = vld [vmem:[#allocation3 + $0x34] sm:$0xf]
        %v4237 = vld [vmem:[#allocation3 + $0x38] sm:$0xf]
        %v4238 = vld [vmem:[#allocation3 + $0x3c] sm:$0xf]
        %v4255 = vunpack.c.l.b16 %v4207
        %v4256 = vunpack.c.l.b16 %v4208
        %v4257 = vunpack.c.l.b16 %v4209
        %v4258 = vunpack.c.l.b16 %v4210
        %v4259 = vunpack.c.l.b16 %v4211
        %v4260 = vunpack.c.l.b16 %v4212
        %v4261 = vunpack.c.l.b16 %v4213
        %v4262 = vunpack.c.l.b16 %v4214
        %v4263 = vunpack.c.l.b16 %v4215
        %v4264 = vunpack.c.l.b16 %v4216
        %v4265 = vunpack.c.l.b16 %v4217
        %v4266 = vunpack.c.l.b16 %v4218
        %v4267 = vunpack.c.l.b16 %v4219
        %v4268 = vunpack.c.l.b16 %v4220
        %v4269 = vunpack.c.l.b16 %v4221
        %v4270 = vunpack.c.l.b16 %v4222
        %v4271 = vpack.c.b16 %v4256, %v4255
        %v4272 = vpack.c.b16 %v4258, %v4257
        %v4273 = vpack.c.b16 %v4260, %v4259
        %v4274 = vpack.c.b16 %v4262, %v4261
        %v4275 = vpack.c.b16 %v4264, %v4263
        %v4276 = vpack.c.b16 %v4266, %v4265
        %v4277 = vpack.c.b16 %v4268, %v4267
        %v4278 = vpack.c.b16 %v4270, %v4269
        %v4303 = vunpack.c.l.b16 %v4223
        %v4304 = vunpack.c.l.b16 %v4224
        %v4305 = vunpack.c.l.b16 %v4225
        %v4306 = vunpack.c.l.b16 %v4226
        %v4307 = vunpack.c.l.b16 %v4227
        %v4308 = vunpack.c.l.b16 %v4228
        %v4309 = vunpack.c.l.b16 %v4229
        %v4310 = vunpack.c.l.b16 %v4230
        %v4311 = vunpack.c.l.b16 %v4231
        %v4312 = vunpack.c.l.b16 %v4232
        %v4313 = vunpack.c.l.b16 %v4233
        %v4314 = vunpack.c.l.b16 %v4234
        %v4315 = vunpack.c.l.b16 %v4235
        %v4316 = vunpack.c.l.b16 %v4236
        %v4317 = vunpack.c.l.b16 %v4237
        %v4318 = vunpack.c.l.b16 %v4238
        %v4319 = vpack.c.b16 %v4304, %v4303
        %v4320 = vpack.c.b16 %v4306, %v4305
        %v4321 = vpack.c.b16 %v4308, %v4307
        %v4322 = vpack.c.b16 %v4310, %v4309
        %v4323 = vpack.c.b16 %v4312, %v4311
        %v4324 = vpack.c.b16 %v4314, %v4313
        %v4325 = vpack.c.b16 %v4316, %v4315
        %v4326 = vpack.c.b16 %v4318, %v4317
        %4335 = vmatprep.subr.bf16.mxu0 0
        %4336 = vmatpush1.bf16.msra.mxu0 %v4319
        %4337 = vmatprep.subr.bf16.mxu0 0
        %4338 = vmatpush1.bf16.msra.mxu0 %v4320
        %4339 = vmatprep.subr.bf16.mxu0 0
        %4340 = vmatpush1.bf16.msra.mxu0 %v4321
        %4341 = vmatprep.subr.bf16.mxu0 0
        %4342 = vmatpush1.bf16.msra.mxu0 %v4322
        %4343 = vmatprep.subr.bf16.mxu0 0
        %4344 = vmatpush1.bf16.msra.mxu0 %v4323
        %4345 = vmatprep.subr.bf16.mxu0 0
        %4346 = vmatpush1.bf16.msra.mxu0 %v4324
        %4347 = vmatprep.subr.bf16.mxu0 0
        %4348 = vmatpush1.bf16.msra.mxu0 %v4325
        %4349 = vmatprep.subr.bf16.mxu0 0
        %4350 = vmatpush1.bf16.msra.mxu0 %v4326
        %4351 = vmatprep.subr.bf16.mxu0 0
        %4352 = vmatpush1.bf16.msra.mxu0 0
        %4353 = vmatprep.subr.bf16.mxu0 0
        %4354 = vmatpush1.bf16.msra.mxu0 0
        %4355 = vmatprep.subr.bf16.mxu0 0
        %4356 = vmatpush1.bf16.msra.mxu0 0
        %4357 = vmatprep.subr.bf16.mxu0 0
        %4358 = vmatpush1.bf16.msra.mxu0 0
        %4359 = vmatprep.subr.bf16.mxu0 0
        %4360 = vmatpush1.bf16.msra.mxu0 0
        %4361 = vmatprep.subr.bf16.mxu0 0
        %4362 = vmatpush1.bf16.msra.mxu0 0
        %4363 = vmatprep.subr.bf16.mxu0 0
        %4364 = vmatpush1.bf16.msra.mxu0 0
        %4365 = vmatprep.subr.bf16.mxu0 0
        %4366 = vmatpush1.bf16.msra.mxu0 0
        %4367 = vmatprep.mubr.bf16.mxu0 0
        %4368 = vmatmul.mubr.bf16.gmra.mrb[0].mxu0 %v4271
        %v4369 = vpop.f32.mrb[0].mxu0
        %v4370 = vadd.f32 0.0, %v4369
        %v4371 = vpop.f32.mrb[0].mxu0
        %v4372 = vpop.f32.mrb[0].mxu0
        %v4373 = vadd.f32 0.0, %v4372
        %v4374 = vpop.f32.mrb[0].mxu0
        %4375 = vmatprep.mubr.bf16.mxu0 0
        %4376 = vmatmul.mubr.bf16.gmra.mrb[0].mxu0 %v4272
        %v4377 = vpop.f32.mrb[0].mxu0
        %v4378 = vadd.f32 0.0, %v4377
        %v4379 = vpop.f32.mrb[0].mxu0
        %v4380 = vpop.f32.mrb[0].mxu0
        %v4381 = vadd.f32 0.0, %v4380
        %v4382 = vpop.f32.mrb[0].mxu0
        %4383 = vmatprep.mubr.bf16.mxu0 0
        %4384 = vmatmul.mubr.bf16.gmra.mrb[0].mxu0 %v4273
        %v4385 = vpop.f32.mrb[0].mxu0
        %v4386 = vadd.f32 0.0, %v4385
        %v4387 = vpop.f32.mrb[0].mxu0
        %v4388 = vpop.f32.mrb[0].mxu0
        %v4389 = vadd.f32 0.0, %v4388
        %v4390 = vpop.f32.mrb[0].mxu0
        %4391 = vmatprep.mubr.bf16.mxu0 0
        %4392 = vmatmul.mubr.bf16.gmra.mrb[0].mxu0 %v4274
        %v4393 = vpop.f32.mrb[0].mxu0
        %v4394 = vadd.f32 0.0, %v4393
        %v4395 = vpop.f32.mrb[0].mxu0
        %v4396 = vpop.f32.mrb[0].mxu0
        %v4397 = vadd.f32 0.0, %v4396
        %v4398 = vpop.f32.mrb[0].mxu0
        %4399 = vmatprep.mubr.bf16.mxu0 0
        %4400 = vmatmul.mubr.bf16.gmra.mrb[0].mxu0 %v4275
        %v4401 = vpop.f32.mrb[0].mxu0
        %v4402 = vadd.f32 0.0, %v4401
        %v4403 = vpop.f32.mrb[0].mxu0
        %v4404 = vpop.f32.mrb[0].mxu0
        %v4405 = vadd.f32 0.0, %v4404
        %v4406 = vpop.f32.mrb[0].mxu0
        %4407 = vmatprep.mubr.bf16.mxu0 0
        %4408 = vmatmul.mubr.bf16.gmra.mrb[0].mxu0 %v4276
        %v4409 = vpop.f32.mrb[0].mxu0
        %v4410 = vadd.f32 0.0, %v4409
        %v4411 = vpop.f32.mrb[0].mxu0
        %v4412 = vpop.f32.mrb[0].mxu0
        %v4413 = vadd.f32 0.0, %v4412
        %v4414 = vpop.f32.mrb[0].mxu0
        %4415 = vmatprep.mubr.bf16.mxu0 0
        %4416 = vmatmul.mubr.bf16.gmra.mrb[0].mxu0 %v4277
        %v4417 = vpop.f32.mrb[0].mxu0
        %v4418 = vadd.f32 0.0, %v4417
        %v4419 = vpop.f32.mrb[0].mxu0
        %v4420 = vpop.f32.mrb[0].mxu0
        %v4421 = vadd.f32 0.0, %v4420
        %v4422 = vpop.f32.mrb[0].mxu0
        %4423 = vmatprep.mubr.bf16.mxu0 0
        %4424 = vmatmul.mubr.bf16.gmra.mrb[0].mxu0 %v4278
        %v4425 = vpop.f32.mrb[0].mxu0
        %v4426 = vadd.f32 0.0, %v4425
        %v4427 = vpop.f32.mrb[0].mxu0
        %v4428 = vpop.f32.mrb[0].mxu0
        %v4429 = vadd.f32 0.0, %v4428
        %v4430 = vpop.f32.mrb[0].mxu0
        %4431 = vdwg.mxu0
        %v4432 = vadd.f32 %v4206, %v4370
        %v4433 = vadd.f32 %v4206, %v4373
        %v4434 = vadd.f32 %v4206, %v4378
        %v4435 = vadd.f32 %v4206, %v4381
        %v4436 = vadd.f32 %v4206, %v4386
        %v4437 = vadd.f32 %v4206, %v4389
        %v4438 = vadd.f32 %v4206, %v4394
        %v4439 = vadd.f32 %v4206, %v4397
        %v4440 = vadd.f32 %v4206, %v4402
        %v4441 = vadd.f32 %v4206, %v4405
        %v4442 = vadd.f32 %v4206, %v4410
        %v4443 = vadd.f32 %v4206, %v4413
        %v4444 = vadd.f32 %v4206, %v4418
        %v4445 = vadd.f32 %v4206, %v4421
        %v4446 = vadd.f32 %v4206, %v4426
        %v4447 = vadd.f32 %v4206, %v4429
        %v4448 = vld [vmem:[#allocation2] sm:$0xf]
        %v4449 = vld [vmem:[#allocation2 + $0x4] sm:$0xf]
        %v4450 = vld [vmem:[#allocation2 + $0x8] sm:$0x1]
        %v4451 = vld [vmem:[#allocation2 + $0xc] sm:$0xf]
        %v4452 = vld [vmem:[#allocation2 + $0x10] sm:$0xf]
        %v4453 = vld [vmem:[#allocation2 + $0x14] sm:$0x1]
        %v4454 = vld [vmem:[#allocation2 + $0x18] sm:$0xf]
        %v4455 = vld [vmem:[#allocation2 + $0x1c] sm:$0xf]
        %v4456 = vld [vmem:[#allocation2 + $0x20] sm:$0x1]
        %v4457 = vld [vmem:[#allocation2 + $0x24] sm:$0xf]
        %v4458 = vld [vmem:[#allocation2 + $0x28] sm:$0xf]
        %v4459 = vld [vmem:[#allocation2 + $0x2c] sm:$0x1]
        %v4460 = vld [vmem:[#allocation2 + $0x30] sm:$0xf]
        %v4461 = vld [vmem:[#allocation2 + $0x34] sm:$0xf]
        %v4462 = vld [vmem:[#allocation2 + $0x38] sm:$0x1]
        %v4463 = vld [vmem:[#allocation2 + $0x3c] sm:$0xf]
        %v4464 = vld [vmem:[#allocation2 + $0x40] sm:$0xf]
        %v4465 = vld [vmem:[#allocation2 + $0x44] sm:$0x1]
        %v4466 = vld [vmem:[#allocation2 + $0x48] sm:$0xf]
        %v4467 = vld [vmem:[#allocation2 + $0x4c] sm:$0xf]
        %v4468 = vld [vmem:[#allocation2 + $0x50] sm:$0x1]
        %v4469 = vld [vmem:[#allocation2 + $0x54] sm:$0xf]
        %v4470 = vld [vmem:[#allocation2 + $0x58] sm:$0xf]
        %v4471 = vld [vmem:[#allocation2 + $0x5c] sm:$0x1]
        %v4473 = vshrl.u32 %v4448, 16
        %v4475 = vrot.slane %v4473, 4
        %v4476 = vshll.u32 %v4448, 16
        %v4478 = vrot.slane %v4476, 5
        %v4479 = vor.u32 %v4475, %v4478
        %v4480 = vrot.slane %v4479, 4
        %v4482 = vshll.u32 %v4449, 16
        %v4484 = vrot.slane %v4482, 5
        %v4485 = vsel %vm441, %v4480, %v4484
        %v4486 = vshrl.u32 %v4449, 16
        %v4488 = vrot.slane %v4486, 4
        %v4489 = vor.u32 %v4488, %v4484
        %v4490 = vrot.slane %v4489, 4
        %v4492 = vshll.u32 %v4450, 16
        %v4494 = vrot.slane %v4492, 5
        %v4495 = vsel %vm441, %v4490, %v4494
        %v4497 = vshrl.u32 %v4451, 16
        %v4499 = vrot.slane %v4497, 4
        %v4500 = vshll.u32 %v4451, 16
        %v4502 = vrot.slane %v4500, 5
        %v4503 = vor.u32 %v4499, %v4502
        %v4504 = vrot.slane %v4503, 4
        %v4506 = vshll.u32 %v4452, 16
        %v4508 = vrot.slane %v4506, 5
        %v4509 = vsel %vm441, %v4504, %v4508
        %v4510 = vshrl.u32 %v4452, 16
        %v4512 = vrot.slane %v4510, 4
        %v4513 = vor.u32 %v4512, %v4508
        %v4514 = vrot.slane %v4513, 4
        %v4516 = vshll.u32 %v4453, 16
        %v4518 = vrot.slane %v4516, 5
        %v4519 = vsel %vm441, %v4514, %v4518
        %v4521 = vshrl.u32 %v4454, 16
        %v4523 = vrot.slane %v4521, 4
        %v4524 = vshll.u32 %v4454, 16
        %v4526 = vrot.slane %v4524, 5
        %v4527 = vor.u32 %v4523, %v4526
        %v4528 = vrot.slane %v4527, 4
        %v4530 = vshll.u32 %v4455, 16
        %v4532 = vrot.slane %v4530, 5
        %v4533 = vsel %vm441, %v4528, %v4532
        %v4534 = vshrl.u32 %v4455, 16
        %v4536 = vrot.slane %v4534, 4
        %v4537 = vor.u32 %v4536, %v4532
        %v4538 = vrot.slane %v4537, 4
        %v4540 = vshll.u32 %v4456, 16
        %v4542 = vrot.slane %v4540, 5
        %v4543 = vsel %vm441, %v4538, %v4542
        %v4545 = vshrl.u32 %v4457, 16
        %v4547 = vrot.slane %v4545, 4
        %v4548 = vshll.u32 %v4457, 16
        %v4550 = vrot.slane %v4548, 5
        %v4551 = vor.u32 %v4547, %v4550
        %v4552 = vrot.slane %v4551, 4
        %v4554 = vshll.u32 %v4458, 16
        %v4556 = vrot.slane %v4554, 5
        %v4557 = vsel %vm441, %v4552, %v4556
        %v4558 = vshrl.u32 %v4458, 16
        %v4560 = vrot.slane %v4558, 4
        %v4561 = vor.u32 %v4560, %v4556
        %v4562 = vrot.slane %v4561, 4
        %v4564 = vshll.u32 %v4459, 16
        %v4566 = vrot.slane %v4564, 5
        %v4567 = vsel %vm441, %v4562, %v4566
        %v4569 = vshrl.u32 %v4460, 16
        %v4571 = vrot.slane %v4569, 4
        %v4572 = vshll.u32 %v4460, 16
        %v4574 = vrot.slane %v4572, 5
        %v4575 = vor.u32 %v4571, %v4574
        %v4576 = vrot.slane %v4575, 4
        %v4578 = vshll.u32 %v4461, 16
        %v4580 = vrot.slane %v4578, 5
        %v4581 = vsel %vm441, %v4576, %v4580
        %v4582 = vshrl.u32 %v4461, 16
        %v4584 = vrot.slane %v4582, 4
        %v4585 = vor.u32 %v4584, %v4580
        %v4586 = vrot.slane %v4585, 4
        %v4588 = vshll.u32 %v4462, 16
        %v4590 = vrot.slane %v4588, 5
        %v4591 = vsel %vm441, %v4586, %v4590
        %v4593 = vshrl.u32 %v4463, 16
        %v4595 = vrot.slane %v4593, 4
        %v4596 = vshll.u32 %v4463, 16
        %v4598 = vrot.slane %v4596, 5
        %v4599 = vor.u32 %v4595, %v4598
        %v4600 = vrot.slane %v4599, 4
        %v4602 = vshll.u32 %v4464, 16
        %v4604 = vrot.slane %v4602, 5
        %v4605 = vsel %vm441, %v4600, %v4604
        %v4606 = vshrl.u32 %v4464, 16
        %v4608 = vrot.slane %v4606, 4
        %v4609 = vor.u32 %v4608, %v4604
        %v4610 = vrot.slane %v4609, 4
        %v4612 = vshll.u32 %v4465, 16
        %v4614 = vrot.slane %v4612, 5
        %v4615 = vsel %vm441, %v4610, %v4614
        %v4617 = vshrl.u32 %v4466, 16
        %v4619 = vrot.slane %v4617, 4
        %v4620 = vshll.u32 %v4466, 16
        %v4622 = vrot.slane %v4620, 5
        %v4623 = vor.u32 %v4619, %v4622
        %v4624 = vrot.slane %v4623, 4
        %v4626 = vshll.u32 %v4467, 16
        %v4628 = vrot.slane %v4626, 5
        %v4629 = vsel %vm441, %v4624, %v4628
        %v4630 = vshrl.u32 %v4467, 16
        %v4632 = vrot.slane %v4630, 4
        %v4633 = vor.u32 %v4632, %v4628
        %v4634 = vrot.slane %v4633, 4
        %v4636 = vshll.u32 %v4468, 16
        %v4638 = vrot.slane %v4636, 5
        %v4639 = vsel %vm441, %v4634, %v4638
        %v4641 = vshrl.u32 %v4469, 16
        %v4643 = vrot.slane %v4641, 4
        %v4644 = vshll.u32 %v4469, 16
        %v4646 = vrot.slane %v4644, 5
        %v4647 = vor.u32 %v4643, %v4646
        %v4648 = vrot.slane %v4647, 4
        %v4650 = vshll.u32 %v4470, 16
        %v4652 = vrot.slane %v4650, 5
        %v4653 = vsel %vm441, %v4648, %v4652
        %v4654 = vshrl.u32 %v4470, 16
        %v4656 = vrot.slane %v4654, 4
        %v4657 = vor.u32 %v4656, %v4652
        %v4658 = vrot.slane %v4657, 4
        %v4660 = vshll.u32 %v4471, 16
        %v4662 = vrot.slane %v4660, 5
        %v4663 = vsel %vm441, %v4658, %v4662
        %s4664 = scalar_lea.vmem [#allocation3], 64
        %v4665 = vld [vmem:[%s4664] sm:$0xf]
        %v4666 = vld [vmem:[%s4664 + $0x4] sm:$0xf]
        %v4667 = vld [vmem:[%s4664 + $0x8] sm:$0xf]
        %v4668 = vld [vmem:[%s4664 + $0xc] sm:$0xf]
        %v4669 = vld [vmem:[%s4664 + $0x10] sm:$0xf]
        %v4670 = vld [vmem:[%s4664 + $0x14] sm:$0xf]
        %v4671 = vld [vmem:[%s4664 + $0x18] sm:$0xf]
        %v4672 = vld [vmem:[%s4664 + $0x1c] sm:$0xf]
        %v4673 = vld [vmem:[%s4664 + $0x20] sm:$0xf]
        %v4674 = vld [vmem:[%s4664 + $0x24] sm:$0xf]
        %v4675 = vld [vmem:[%s4664 + $0x28] sm:$0xf]
        %v4676 = vld [vmem:[%s4664 + $0x2c] sm:$0xf]
        %v4677 = vld [vmem:[%s4664 + $0x30] sm:$0xf]
        %v4678 = vld [vmem:[%s4664 + $0x34] sm:$0xf]
        %v4679 = vld [vmem:[%s4664 + $0x38] sm:$0xf]
        %v4680 = vld [vmem:[%s4664 + $0x3c] sm:$0xf]
        %v4681 = vunpack.c.l.b16 %v4485
        %v4682 = vunpack.c.l.b16 %v4495
        %v4683 = vunpack.c.l.b16 %v4509
        %v4684 = vunpack.c.l.b16 %v4519
        %v4685 = vunpack.c.l.b16 %v4533
        %v4686 = vunpack.c.l.b16 %v4543
        %v4687 = vunpack.c.l.b16 %v4557
        %v4688 = vunpack.c.l.b16 %v4567
        %v4689 = vunpack.c.l.b16 %v4581
        %v4690 = vunpack.c.l.b16 %v4591
        %v4691 = vunpack.c.l.b16 %v4605
        %v4692 = vunpack.c.l.b16 %v4615
        %v4693 = vunpack.c.l.b16 %v4629
        %v4694 = vunpack.c.l.b16 %v4639
        %v4695 = vunpack.c.l.b16 %v4653
        %v4696 = vunpack.c.l.b16 %v4663
        %v4697 = vpack.c.b16 %v4682, %v4681
        %v4698 = vpack.c.b16 %v4684, %v4683
        %v4699 = vpack.c.b16 %v4686, %v4685
        %v4700 = vpack.c.b16 %v4688, %v4687
        %v4701 = vpack.c.b16 %v4690, %v4689
        %v4702 = vpack.c.b16 %v4692, %v4691
        %v4703 = vpack.c.b16 %v4694, %v4693
        %v4704 = vpack.c.b16 %v4696, %v4695
        %v4729 = vunpack.c.l.b16 %v4665
        %v4730 = vunpack.c.l.b16 %v4666
        %v4731 = vunpack.c.l.b16 %v4667
        %v4732 = vunpack.c.l.b16 %v4668
        %v4733 = vunpack.c.l.b16 %v4669
        %v4734 = vunpack.c.l.b16 %v4670
        %v4735 = vunpack.c.l.b16 %v4671
        %v4736 = vunpack.c.l.b16 %v4672
        %v4737 = vunpack.c.l.b16 %v4673
        %v4738 = vunpack.c.l.b16 %v4674
        %v4739 = vunpack.c.l.b16 %v4675
        %v4740 = vunpack.c.l.b16 %v4676
        %v4741 = vunpack.c.l.b16 %v4677
        %v4742 = vunpack.c.l.b16 %v4678
        %v4743 = vunpack.c.l.b16 %v4679
        %v4744 = vunpack.c.l.b16 %v4680
        %v4745 = vpack.c.b16 %v4730, %v4729
        %v4746 = vpack.c.b16 %v4732, %v4731
        %v4747 = vpack.c.b16 %v4734, %v4733
        %v4748 = vpack.c.b16 %v4736, %v4735
        %v4749 = vpack.c.b16 %v4738, %v4737
        %v4750 = vpack.c.b16 %v4740, %v4739
        %v4751 = vpack.c.b16 %v4742, %v4741
        %v4752 = vpack.c.b16 %v4744, %v4743
        %4761 = vmatprep.subr.bf16.mxu0 0
        %4762 = vmatpush1.bf16.msra.mxu0 %v4745
        %4763 = vmatprep.subr.bf16.mxu0 0
        %4764 = vmatpush1.bf16.msra.mxu0 %v4746
        %4765 = vmatprep.subr.bf16.mxu0 0
        %4766 = vmatpush1.bf16.msra.mxu0 %v4747
        %4767 = vmatprep.subr.bf16.mxu0 0
        %4768 = vmatpush1.bf16.msra.mxu0 %v4748
        %4769 = vmatprep.subr.bf16.mxu0 0
        %4770 = vmatpush1.bf16.msra.mxu0 %v4749
        %4771 = vmatprep.subr.bf16.mxu0 0
        %4772 = vmatpush1.bf16.msra.mxu0 %v4750
        %4773 = vmatprep.subr.bf16.mxu0 0
        %4774 = vmatpush1.bf16.msra.mxu0 %v4751
        %4775 = vmatprep.subr.bf16.mxu0 0
        %4776 = vmatpush1.bf16.msra.mxu0 %v4752
        %4777 = vmatprep.subr.bf16.mxu0 0
        %4778 = vmatpush1.bf16.msra.mxu0 0
        %4779 = vmatprep.subr.bf16.mxu0 0
        %4780 = vmatpush1.bf16.msra.mxu0 0
        %4781 = vmatprep.subr.bf16.mxu0 0
        %4782 = vmatpush1.bf16.msra.mxu0 0
        %4783 = vmatprep.subr.bf16.mxu0 0
        %4784 = vmatpush1.bf16.msra.mxu0 0
        %4785 = vmatprep.subr.bf16.mxu0 0
        %4786 = vmatpush1.bf16.msra.mxu0 0
        %4787 = vmatprep.subr.bf16.mxu0 0
        %4788 = vmatpush1.bf16.msra.mxu0 0
        %4789 = vmatprep.subr.bf16.mxu0 0
        %4790 = vmatpush1.bf16.msra.mxu0 0
        %4791 = vmatprep.subr.bf16.mxu0 0
        %4792 = vmatpush1.bf16.msra.mxu0 0
        %4793 = vmatprep.mubr.bf16.mxu0 0
        %4794 = vmatmul.mubr.bf16.gmra.mrb[0].mxu0 %v4697
        %v4795 = vpop.f32.mrb[0].mxu0
        %v4796 = vadd.f32 0.0, %v4795
        %v4797 = vpop.f32.mrb[0].mxu0
        %v4798 = vpop.f32.mrb[0].mxu0
        %v4799 = vadd.f32 0.0, %v4798
        %v4800 = vpop.f32.mrb[0].mxu0
        %4801 = vmatprep.mubr.bf16.mxu0 0
        %4802 = vmatmul.mubr.bf16.gmra.mrb[0].mxu0 %v4698
        %v4803 = vpop.f32.mrb[0].mxu0
        %v4804 = vadd.f32 0.0, %v4803
        %v4805 = vpop.f32.mrb[0].mxu0
        %v4806 = vpop.f32.mrb[0].mxu0
        %v4807 = vadd.f32 0.0, %v4806
        %v4808 = vpop.f32.mrb[0].mxu0
        %4809 = vmatprep.mubr.bf16.mxu0 0
        %4810 = vmatmul.mubr.bf16.gmra.mrb[0].mxu0 %v4699
        %v4811 = vpop.f32.mrb[0].mxu0
        %v4812 = vadd.f32 0.0, %v4811
        %v4813 = vpop.f32.mrb[0].mxu0
        %v4814 = vpop.f32.mrb[0].mxu0
        %v4815 = vadd.f32 0.0, %v4814
        %v4816 = vpop.f32.mrb[0].mxu0
        %4817 = vmatprep.mubr.bf16.mxu0 0
        %4818 = vmatmul.mubr.bf16.gmra.mrb[0].mxu0 %v4700
        %v4819 = vpop.f32.mrb[0].mxu0
        %v4820 = vadd.f32 0.0, %v4819
        %v4821 = vpop.f32.mrb[0].mxu0
        %v4822 = vpop.f32.mrb[0].mxu0
        %v4823 = vadd.f32 0.0, %v4822
        %v4824 = vpop.f32.mrb[0].mxu0
        %4825 = vmatprep.mubr.bf16.mxu0 0
        %4826 = vmatmul.mubr.bf16.gmra.mrb[0].mxu0 %v4701
        %v4827 = vpop.f32.mrb[0].mxu0
        %v4828 = vadd.f32 0.0, %v4827
        %v4829 = vpop.f32.mrb[0].mxu0
        %v4830 = vpop.f32.mrb[0].mxu0
        %v4831 = vadd.f32 0.0, %v4830
        %v4832 = vpop.f32.mrb[0].mxu0
        %4833 = vmatprep.mubr.bf16.mxu0 0
        %4834 = vmatmul.mubr.bf16.gmra.mrb[0].mxu0 %v4702
        %v4835 = vpop.f32.mrb[0].mxu0
        %v4836 = vadd.f32 0.0, %v4835
        %v4837 = vpop.f32.mrb[0].mxu0
        %v4838 = vpop.f32.mrb[0].mxu0
        %v4839 = vadd.f32 0.0, %v4838
        %v4840 = vpop.f32.mrb[0].mxu0
        %4841 = vmatprep.mubr.bf16.mxu0 0
        %4842 = vmatmul.mubr.bf16.gmra.mrb[0].mxu0 %v4703
        %v4843 = vpop.f32.mrb[0].mxu0
        %v4844 = vadd.f32 0.0, %v4843
        %v4845 = vpop.f32.mrb[0].mxu0
        %v4846 = vpop.f32.mrb[0].mxu0
        %v4847 = vadd.f32 0.0, %v4846
        %v4848 = vpop.f32.mrb[0].mxu0
        %4849 = vmatprep.mubr.bf16.mxu0 0
        %4850 = vmatmul.mubr.bf16.gmra.mrb[0].mxu0 %v4704
        %v4851 = vpop.f32.mrb[0].mxu0
        %v4852 = vadd.f32 0.0, %v4851
        %v4853 = vpop.f32.mrb[0].mxu0
        %v4854 = vpop.f32.mrb[0].mxu0
        %v4855 = vadd.f32 0.0, %v4854
        %v4856 = vpop.f32.mrb[0].mxu0
        %4857 = vdwg.mxu0
        %v4858 = vadd.f32 %v4432, %v4796
        %v4859 = vadd.f32 %v4433, %v4799
        %v4860 = vadd.f32 %v4434, %v4804
        %v4861 = vadd.f32 %v4435, %v4807
        %v4862 = vadd.f32 %v4436, %v4812
        %v4863 = vadd.f32 %v4437, %v4815
        %v4864 = vadd.f32 %v4438, %v4820
        %v4865 = vadd.f32 %v4439, %v4823
        %v4866 = vadd.f32 %v4440, %v4828
        %v4867 = vadd.f32 %v4441, %v4831
        %v4868 = vadd.f32 %v4442, %v4836
        %v4869 = vadd.f32 %v4443, %v4839
        %v4870 = vadd.f32 %v4444, %v4844
        %v4871 = vadd.f32 %v4445, %v4847
        %v4872 = vadd.f32 %v4446, %v4852
        %v4873 = vadd.f32 %v4447, %v4855
        %v4874 = vld [vmem:[#allocation2] sm:$0xe]
        %v4875 = vld [vmem:[#allocation2 + $0xc] sm:$0xe]
        %v4876 = vld [vmem:[#allocation2 + $0x18] sm:$0xe]
        %v4877 = vld [vmem:[#allocation2 + $0x24] sm:$0xe]
        %v4878 = vld [vmem:[#allocation2 + $0x30] sm:$0xe]
        %v4879 = vld [vmem:[#allocation2 + $0x3c] sm:$0xe]
        %v4880 = vld [vmem:[#allocation2 + $0x48] sm:$0xe]
        %v4881 = vld [vmem:[#allocation2 + $0x54] sm:$0xe]
        %v4906 = vrot.slane %v4874, 5
        %v4907 = vrot.slane %v4906, 4
        %v4908 = vrot.slane %v4449, 5
        %v4909 = vsel %vm1153, %v4907, %v4908
        %v4910 = vrot.slane %v4908, 4
        %v4911 = vrot.slane %v4450, 5
        %v4912 = vsel %vm1153, %v4910, %v4911
        %v4913 = vrot.slane %v4875, 5
        %v4914 = vrot.slane %v4913, 4
        %v4915 = vrot.slane %v4452, 5
        %v4916 = vsel %vm1153, %v4914, %v4915
        %v4917 = vrot.slane %v4915, 4
        %v4918 = vrot.slane %v4453, 5
        %v4919 = vsel %vm1153, %v4917, %v4918
        %v4920 = vrot.slane %v4876, 5
        %v4921 = vrot.slane %v4920, 4
        %v4922 = vrot.slane %v4455, 5
        %v4923 = vsel %vm1153, %v4921, %v4922
        %v4924 = vrot.slane %v4922, 4
        %v4925 = vrot.slane %v4456, 5
        %v4926 = vsel %vm1153, %v4924, %v4925
        %v4927 = vrot.slane %v4877, 5
        %v4928 = vrot.slane %v4927, 4
        %v4929 = vrot.slane %v4458, 5
        %v4930 = vsel %vm1153, %v4928, %v4929
        %v4931 = vrot.slane %v4929, 4
        %v4932 = vrot.slane %v4459, 5
        %v4933 = vsel %vm1153, %v4931, %v4932
        %v4934 = vrot.slane %v4878, 5
        %v4935 = vrot.slane %v4934, 4
        %v4936 = vrot.slane %v4461, 5
        %v4937 = vsel %vm1153, %v4935, %v4936
        %v4938 = vrot.slane %v4936, 4
        %v4939 = vrot.slane %v4462, 5
        %v4940 = vsel %vm1153, %v4938, %v4939
        %v4941 = vrot.slane %v4879, 5
        %v4942 = vrot.slane %v4941, 4
        %v4943 = vrot.slane %v4464, 5
        %v4944 = vsel %vm1153, %v4942, %v4943
        %v4945 = vrot.slane %v4943, 4
        %v4946 = vrot.slane %v4465, 5
        %v4947 = vsel %vm1153, %v4945, %v4946
        %v4948 = vrot.slane %v4880, 5
        %v4949 = vrot.slane %v4948, 4
        %v4950 = vrot.slane %v4467, 5
        %v4951 = vsel %vm1153, %v4949, %v4950
        %v4952 = vrot.slane %v4950, 4
        %v4953 = vrot.slane %v4468, 5
        %v4954 = vsel %vm1153, %v4952, %v4953
        %v4955 = vrot.slane %v4881, 5
        %v4956 = vrot.slane %v4955, 4
        %v4957 = vrot.slane %v4470, 5
        %v4958 = vsel %vm1153, %v4956, %v4957
        %v4959 = vrot.slane %v4957, 4
        %v4960 = vrot.slane %v4471, 5
        %v4961 = vsel %vm1153, %v4959, %v4960
        %s4962 = scalar_lea.vmem [#allocation3], 128
        %v4963 = vld [vmem:[%s4962] sm:$0xf]
        %v4964 = vld [vmem:[%s4962 + $0x4] sm:$0xf]
        %v4965 = vld [vmem:[%s4962 + $0x8] sm:$0xf]
        %v4966 = vld [vmem:[%s4962 + $0xc] sm:$0xf]
        %v4967 = vld [vmem:[%s4962 + $0x10] sm:$0xf]
        %v4968 = vld [vmem:[%s4962 + $0x14] sm:$0xf]
        %v4969 = vld [vmem:[%s4962 + $0x18] sm:$0xf]
        %v4970 = vld [vmem:[%s4962 + $0x1c] sm:$0xf]
        %v4971 = vld [vmem:[%s4962 + $0x20] sm:$0xf]
        %v4972 = vld [vmem:[%s4962 + $0x24] sm:$0xf]
        %v4973 = vld [vmem:[%s4962 + $0x28] sm:$0xf]
        %v4974 = vld [vmem:[%s4962 + $0x2c] sm:$0xf]
        %v4975 = vld [vmem:[%s4962 + $0x30] sm:$0xf]
        %v4976 = vld [vmem:[%s4962 + $0x34] sm:$0xf]
        %v4977 = vld [vmem:[%s4962 + $0x38] sm:$0xf]
        %v4978 = vld [vmem:[%s4962 + $0x3c] sm:$0xf]
        %v4979 = vunpack.c.l.b16 %v4909
        %v4980 = vunpack.c.l.b16 %v4912
        %v4981 = vunpack.c.l.b16 %v4916
        %v4982 = vunpack.c.l.b16 %v4919
        %v4983 = vunpack.c.l.b16 %v4923
        %v4984 = vunpack.c.l.b16 %v4926
        %v4985 = vunpack.c.l.b16 %v4930
        %v4986 = vunpack.c.l.b16 %v4933
        %v4987 = vunpack.c.l.b16 %v4937
        %v4988 = vunpack.c.l.b16 %v4940
        %v4989 = vunpack.c.l.b16 %v4944
        %v4990 = vunpack.c.l.b16 %v4947
        %v4991 = vunpack.c.l.b16 %v4951
        %v4992 = vunpack.c.l.b16 %v4954
        %v4993 = vunpack.c.l.b16 %v4958
        %v4994 = vunpack.c.l.b16 %v4961
        %v4995 = vpack.c.b16 %v4980, %v4979
        %v4996 = vpack.c.b16 %v4982, %v4981
        %v4997 = vpack.c.b16 %v4984, %v4983
        %v4998 = vpack.c.b16 %v4986, %v4985
        %v4999 = vpack.c.b16 %v4988, %v4987
        %v5000 = vpack.c.b16 %v4990, %v4989
        %v5001 = vpack.c.b16 %v4992, %v4991
        %v5002 = vpack.c.b16 %v4994, %v4993
        %v5027 = vunpack.c.l.b16 %v4963
        %v5028 = vunpack.c.l.b16 %v4964
        %v5029 = vunpack.c.l.b16 %v4965
        %v5030 = vunpack.c.l.b16 %v4966
        %v5031 = vunpack.c.l.b16 %v4967
        %v5032 = vunpack.c.l.b16 %v4968
        %v5033 = vunpack.c.l.b16 %v4969
        %v5034 = vunpack.c.l.b16 %v4970
        %v5035 = vunpack.c.l.b16 %v4971
        %v5036 = vunpack.c.l.b16 %v4972
        %v5037 = vunpack.c.l.b16 %v4973
        %v5038 = vunpack.c.l.b16 %v4974
        %v5039 = vunpack.c.l.b16 %v4975
        %v5040 = vunpack.c.l.b16 %v4976
        %v5041 = vunpack.c.l.b16 %v4977
        %v5042 = vunpack.c.l.b16 %v4978
        %v5043 = vpack.c.b16 %v5028, %v5027
        %v5044 = vpack.c.b16 %v5030, %v5029
        %v5045 = vpack.c.b16 %v5032, %v5031
        %v5046 = vpack.c.b16 %v5034, %v5033
        %v5047 = vpack.c.b16 %v5036, %v5035
        %v5048 = vpack.c.b16 %v5038, %v5037
        %v5049 = vpack.c.b16 %v5040, %v5039
        %v5050 = vpack.c.b16 %v5042, %v5041
        %5059 = vmatprep.subr.bf16.mxu0 0
        %5060 = vmatpush1.bf16.msra.mxu0 %v5043
        %5061 = vmatprep.subr.bf16.mxu0 0
        %5062 = vmatpush1.bf16.msra.mxu0 %v5044
        %5063 = vmatprep.subr.bf16.mxu0 0
        %5064 = vmatpush1.bf16.msra.mxu0 %v5045
        %5065 = vmatprep.subr.bf16.mxu0 0
        %5066 = vmatpush1.bf16.msra.mxu0 %v5046
        %5067 = vmatprep.subr.bf16.mxu0 0
        %5068 = vmatpush1.bf16.msra.mxu0 %v5047
        %5069 = vmatprep.subr.bf16.mxu0 0
        %5070 = vmatpush1.bf16.msra.mxu0 %v5048
        %5071 = vmatprep.subr.bf16.mxu0 0
        %5072 = vmatpush1.bf16.msra.mxu0 %v5049
        %5073 = vmatprep.subr.bf16.mxu0 0
        %5074 = vmatpush1.bf16.msra.mxu0 %v5050
        %5075 = vmatprep.subr.bf16.mxu0 0
        %5076 = vmatpush1.bf16.msra.mxu0 0
        %5077 = vmatprep.subr.bf16.mxu0 0
        %5078 = vmatpush1.bf16.msra.mxu0 0
        %5079 = vmatprep.subr.bf16.mxu0 0
        %5080 = vmatpush1.bf16.msra.mxu0 0
        %5081 = vmatprep.subr.bf16.mxu0 0
        %5082 = vmatpush1.bf16.msra.mxu0 0
        %5083 = vmatprep.subr.bf16.mxu0 0
        %5084 = vmatpush1.bf16.msra.mxu0 0
        %5085 = vmatprep.subr.bf16.mxu0 0
        %5086 = vmatpush1.bf16.msra.mxu0 0
        %5087 = vmatprep.subr.bf16.mxu0 0
        %5088 = vmatpush1.bf16.msra.mxu0 0
        %5089 = vmatprep.subr.bf16.mxu0 0
        %5090 = vmatpush1.bf16.msra.mxu0 0
        %5091 = vmatprep.mubr.bf16.mxu0 0
        %5092 = vmatmul.mubr.bf16.gmra.mrb[0].mxu0 %v4995
        %v5093 = vpop.f32.mrb[0].mxu0
        %v5094 = vadd.f32 0.0, %v5093
        %v5095 = vpop.f32.mrb[0].mxu0
        %v5096 = vpop.f32.mrb[0].mxu0
        %v5097 = vadd.f32 0.0, %v5096
        %v5098 = vpop.f32.mrb[0].mxu0
        %5099 = vmatprep.mubr.bf16.mxu0 0
        %5100 = vmatmul.mubr.bf16.gmra.mrb[0].mxu0 %v4996
        %v5101 = vpop.f32.mrb[0].mxu0
        %v5102 = vadd.f32 0.0, %v5101
        %v5103 = vpop.f32.mrb[0].mxu0
        %v5104 = vpop.f32.mrb[0].mxu0
        %v5105 = vadd.f32 0.0, %v5104
        %v5106 = vpop.f32.mrb[0].mxu0
        %5107 = vmatprep.mubr.bf16.mxu0 0
        %5108 = vmatmul.mubr.bf16.gmra.mrb[0].mxu0 %v4997
        %v5109 = vpop.f32.mrb[0].mxu0
        %v5110 = vadd.f32 0.0, %v5109
        %v5111 = vpop.f32.mrb[0].mxu0
        %v5112 = vpop.f32.mrb[0].mxu0
        %v5113 = vadd.f32 0.0, %v5112
        %v5114 = vpop.f32.mrb[0].mxu0
        %5115 = vmatprep.mubr.bf16.mxu0 0
        %5116 = vmatmul.mubr.bf16.gmra.mrb[0].mxu0 %v4998
        %v5117 = vpop.f32.mrb[0].mxu0
        %v5118 = vadd.f32 0.0, %v5117
        %v5119 = vpop.f32.mrb[0].mxu0
        %v5120 = vpop.f32.mrb[0].mxu0
        %v5121 = vadd.f32 0.0, %v5120
        %v5122 = vpop.f32.mrb[0].mxu0
        %5123 = vmatprep.mubr.bf16.mxu0 0
        %5124 = vmatmul.mubr.bf16.gmra.mrb[0].mxu0 %v4999
        %v5125 = vpop.f32.mrb[0].mxu0
        %v5126 = vadd.f32 0.0, %v5125
        %v5127 = vpop.f32.mrb[0].mxu0
        %v5128 = vpop.f32.mrb[0].mxu0
        %v5129 = vadd.f32 0.0, %v5128
        %v5130 = vpop.f32.mrb[0].mxu0
        %5131 = vmatprep.mubr.bf16.mxu0 0
        %5132 = vmatmul.mubr.bf16.gmra.mrb[0].mxu0 %v5000
        %v5133 = vpop.f32.mrb[0].mxu0
        %v5134 = vadd.f32 0.0, %v5133
        %v5135 = vpop.f32.mrb[0].mxu0
        %v5136 = vpop.f32.mrb[0].mxu0
        %v5137 = vadd.f32 0.0, %v5136
        %v5138 = vpop.f32.mrb[0].mxu0
        %5139 = vmatprep.mubr.bf16.mxu0 0
        %5140 = vmatmul.mubr.bf16.gmra.mrb[0].mxu0 %v5001
        %v5141 = vpop.f32.mrb[0].mxu0
        %v5142 = vadd.f32 0.0, %v5141
        %v5143 = vpop.f32.mrb[0].mxu0
        %v5144 = vpop.f32.mrb[0].mxu0
        %v5145 = vadd.f32 0.0, %v5144
        %v5146 = vpop.f32.mrb[0].mxu0
        %5147 = vmatprep.mubr.bf16.mxu0 0
        %5148 = vmatmul.mubr.bf16.gmra.mrb[0].mxu0 %v5002
        %v5149 = vpop.f32.mrb[0].mxu0
        %v5150 = vadd.f32 0.0, %v5149
        %v5151 = vpop.f32.mrb[0].mxu0
        %v5152 = vpop.f32.mrb[0].mxu0
        %v5153 = vadd.f32 0.0, %v5152
        %v5154 = vpop.f32.mrb[0].mxu0
        %5155 = vdwg.mxu0
        %v5156 = vadd.f32 %v4858, %v5094
        %v5157 = vadd.f32 %v4859, %v5097
        %v5158 = vadd.f32 %v4860, %v5102
        %v5159 = vadd.f32 %v4861, %v5105
        %v5160 = vadd.f32 %v4862, %v5110
        %v5161 = vadd.f32 %v4863, %v5113
        %v5162 = vadd.f32 %v4864, %v5118
        %v5163 = vadd.f32 %v4865, %v5121
        %v5164 = vadd.f32 %v4866, %v5126
        %v5165 = vadd.f32 %v4867, %v5129
        %v5166 = vadd.f32 %v4868, %v5134
        %v5167 = vadd.f32 %v4869, %v5137
        %v5168 = vadd.f32 %v4870, %v5142
        %v5169 = vadd.f32 %v4871, %v5145
        %v5170 = vadd.f32 %v4872, %v5150
        %v5171 = vadd.f32 %v4873, %v5153
        %s5172 = scalar_lea.vmem [#allocation2], 12
        %v5173 = vld [vmem:[%s5172] sm:$0xf]
        %v5174 = vld [vmem:[%s5172 + $0x4] sm:$0xf]
        %v5175 = vld [vmem:[%s5172 + $0xc] sm:$0xf]
        %v5176 = vld [vmem:[%s5172 + $0x10] sm:$0xf]
        %v5177 = vld [vmem:[%s5172 + $0x18] sm:$0xf]
        %v5178 = vld [vmem:[%s5172 + $0x1c] sm:$0xf]
        %v5179 = vld [vmem:[%s5172 + $0x24] sm:$0xf]
        %v5180 = vld [vmem:[%s5172 + $0x28] sm:$0xf]
        %v5181 = vld [vmem:[%s5172 + $0x30] sm:$0xf]
        %v5182 = vld [vmem:[%s5172 + $0x34] sm:$0xf]
        %v5183 = vld [vmem:[%s5172 + $0x3c] sm:$0xf]
        %v5184 = vld [vmem:[%s5172 + $0x40] sm:$0xf]
        %v5185 = vld [vmem:[%s5172 + $0x48] sm:$0xf]
        %v5186 = vld [vmem:[%s5172 + $0x4c] sm:$0xf]
        %v5187 = vld [vmem:[%s5172 + $0x54] sm:$0xf]
        %v5188 = vld [vmem:[%s5172 + $0x58] sm:$0xf]
        %s5189 = scalar_lea.vmem [#allocation3], 192
        %v5190 = vld [vmem:[%s5189] sm:$0xf]
        %v5191 = vld [vmem:[%s5189 + $0x4] sm:$0xf]
        %v5192 = vld [vmem:[%s5189 + $0x8] sm:$0xf]
        %v5193 = vld [vmem:[%s5189 + $0xc] sm:$0xf]
        %v5194 = vld [vmem:[%s5189 + $0x10] sm:$0xf]
        %v5195 = vld [vmem:[%s5189 + $0x14] sm:$0xf]
        %v5196 = vld [vmem:[%s5189 + $0x18] sm:$0xf]
        %v5197 = vld [vmem:[%s5189 + $0x1c] sm:$0xf]
        %v5198 = vld [vmem:[%s5189 + $0x20] sm:$0xf]
        %v5199 = vld [vmem:[%s5189 + $0x24] sm:$0xf]
        %v5200 = vld [vmem:[%s5189 + $0x28] sm:$0xf]
        %v5201 = vld [vmem:[%s5189 + $0x2c] sm:$0xf]
        %v5202 = vld [vmem:[%s5189 + $0x30] sm:$0xf]
        %v5203 = vld [vmem:[%s5189 + $0x34] sm:$0xf]
        %v5204 = vld [vmem:[%s5189 + $0x38] sm:$0xf]
        %v5205 = vld [vmem:[%s5189 + $0x3c] sm:$0xf]
        %v5222 = vunpack.c.l.b16 %v5173
        %v5223 = vunpack.c.l.b16 %v5174
        %v5224 = vunpack.c.l.b16 %v5175
        %v5225 = vunpack.c.l.b16 %v5176
        %v5226 = vunpack.c.l.b16 %v5177
        %v5227 = vunpack.c.l.b16 %v5178
        %v5228 = vunpack.c.l.b16 %v5179
        %v5229 = vunpack.c.l.b16 %v5180
        %v5230 = vunpack.c.l.b16 %v5181
        %v5231 = vunpack.c.l.b16 %v5182
        %v5232 = vunpack.c.l.b16 %v5183
        %v5233 = vunpack.c.l.b16 %v5184
        %v5234 = vunpack.c.l.b16 %v5185
        %v5235 = vunpack.c.l.b16 %v5186
        %v5236 = vunpack.c.l.b16 %v5187
        %v5237 = vunpack.c.l.b16 %v5188
        %v5238 = vpack.c.b16 %v5223, %v5222
        %v5239 = vpack.c.b16 %v5225, %v5224
        %v5240 = vpack.c.b16 %v5227, %v5226
        %v5241 = vpack.c.b16 %v5229, %v5228
        %v5242 = vpack.c.b16 %v5231, %v5230
        %v5243 = vpack.c.b16 %v5233, %v5232
        %v5244 = vpack.c.b16 %v5235, %v5234
        %v5245 = vpack.c.b16 %v5237, %v5236
        %v5270 = vunpack.c.l.b16 %v5190
        %v5271 = vunpack.c.l.b16 %v5191
        %v5272 = vunpack.c.l.b16 %v5192
        %v5273 = vunpack.c.l.b16 %v5193
        %v5274 = vunpack.c.l.b16 %v5194
        %v5275 = vunpack.c.l.b16 %v5195
        %v5276 = vunpack.c.l.b16 %v5196
        %v5277 = vunpack.c.l.b16 %v5197
        %v5278 = vunpack.c.l.b16 %v5198
        %v5279 = vunpack.c.l.b16 %v5199
        %v5280 = vunpack.c.l.b16 %v5200
        %v5281 = vunpack.c.l.b16 %v5201
        %v5282 = vunpack.c.l.b16 %v5202
        %v5283 = vunpack.c.l.b16 %v5203
        %v5284 = vunpack.c.l.b16 %v5204
        %v5285 = vunpack.c.l.b16 %v5205
        %v5286 = vpack.c.b16 %v5271, %v5270
        %v5287 = vpack.c.b16 %v5273, %v5272
        %v5288 = vpack.c.b16 %v5275, %v5274
        %v5289 = vpack.c.b16 %v5277, %v5276
        %v5290 = vpack.c.b16 %v5279, %v5278
        %v5291 = vpack.c.b16 %v5281, %v5280
        %v5292 = vpack.c.b16 %v5283, %v5282
        %v5293 = vpack.c.b16 %v5285, %v5284
        %5302 = vmatprep.subr.bf16.mxu0 0
        %5303 = vmatpush1.bf16.msra.mxu0 %v5286
        %5304 = vmatprep.subr.bf16.mxu0 0
        %5305 = vmatpush1.bf16.msra.mxu0 %v5287
        %5306 = vmatprep.subr.bf16.mxu0 0
        %5307 = vmatpush1.bf16.msra.mxu0 %v5288
        %5308 = vmatprep.subr.bf16.mxu0 0
        %5309 = vmatpush1.bf16.msra.mxu0 %v5289
        %5310 = vmatprep.subr.bf16.mxu0 0
        %5311 = vmatpush1.bf16.msra.mxu0 %v5290
        %5312 = vmatprep.subr.bf16.mxu0 0
        %5313 = vmatpush1.bf16.msra.mxu0 %v5291
        %5314 = vmatprep.subr.bf16.mxu0 0
        %5315 = vmatpush1.bf16.msra.mxu0 %v5292
        %5316 = vmatprep.subr.bf16.mxu0 0
        %5317 = vmatpush1.bf16.msra.mxu0 %v5293
        %5318 = vmatprep.subr.bf16.mxu0 0
        %5319 = vmatpush1.bf16.msra.mxu0 0
        %5320 = vmatprep.subr.bf16.mxu0 0
        %5321 = vmatpush1.bf16.msra.mxu0 0
        %5322 = vmatprep.subr.bf16.mxu0 0
        %5323 = vmatpush1.bf16.msra.mxu0 0
        %5324 = vmatprep.subr.bf16.mxu0 0
        %5325 = vmatpush1.bf16.msra.mxu0 0
        %5326 = vmatprep.subr.bf16.mxu0 0
        %5327 = vmatpush1.bf16.msra.mxu0 0
        %5328 = vmatprep.subr.bf16.mxu0 0
        %5329 = vmatpush1.bf16.msra.mxu0 0
        %5330 = vmatprep.subr.bf16.mxu0 0
        %5331 = vmatpush1.bf16.msra.mxu0 0
        %5332 = vmatprep.subr.bf16.mxu0 0
        %5333 = vmatpush1.bf16.msra.mxu0 0
        %5334 = vmatprep.mubr.bf16.mxu0 0
        %5335 = vmatmul.mubr.bf16.gmra.mrb[0].mxu0 %v5238
        %v5336 = vpop.f32.mrb[0].mxu0
        %v5337 = vadd.f32 0.0, %v5336
        %v5338 = vpop.f32.mrb[0].mxu0
        %v5339 = vpop.f32.mrb[0].mxu0
        %v5340 = vadd.f32 0.0, %v5339
        %v5341 = vpop.f32.mrb[0].mxu0
        %5342 = vmatprep.mubr.bf16.mxu0 0
        %5343 = vmatmul.mubr.bf16.gmra.mrb[0].mxu0 %v5239
        %v5344 = vpop.f32.mrb[0].mxu0
        %v5345 = vadd.f32 0.0, %v5344
        %v5346 = vpop.f32.mrb[0].mxu0
        %v5347 = vpop.f32.mrb[0].mxu0
        %v5348 = vadd.f32 0.0, %v5347
        %v5349 = vpop.f32.mrb[0].mxu0
        %5350 = vmatprep.mubr.bf16.mxu0 0
        %5351 = vmatmul.mubr.bf16.gmra.mrb[0].mxu0 %v5240
        %v5352 = vpop.f32.mrb[0].mxu0
        %v5353 = vadd.f32 0.0, %v5352
        %v5354 = vpop.f32.mrb[0].mxu0
        %v5355 = vpop.f32.mrb[0].mxu0
        %v5356 = vadd.f32 0.0, %v5355
        %v5357 = vpop.f32.mrb[0].mxu0
        %5358 = vmatprep.mubr.bf16.mxu0 0
        %5359 = vmatmul.mubr.bf16.gmra.mrb[0].mxu0 %v5241
        %v5360 = vpop.f32.mrb[0].mxu0
        %v5361 = vadd.f32 0.0, %v5360
        %v5362 = vpop.f32.mrb[0].mxu0
        %v5363 = vpop.f32.mrb[0].mxu0
        %v5364 = vadd.f32 0.0, %v5363
        %v5365 = vpop.f32.mrb[0].mxu0
        %5366 = vmatprep.mubr.bf16.mxu0 0
        %5367 = vmatmul.mubr.bf16.gmra.mrb[0].mxu0 %v5242
        %v5368 = vpop.f32.mrb[0].mxu0
        %v5369 = vadd.f32 0.0, %v5368
        %v5370 = vpop.f32.mrb[0].mxu0
        %v5371 = vpop.f32.mrb[0].mxu0
        %v5372 = vadd.f32 0.0, %v5371
        %v5373 = vpop.f32.mrb[0].mxu0
        %5374 = vmatprep.mubr.bf16.mxu0 0
        %5375 = vmatmul.mubr.bf16.gmra.mrb[0].mxu0 %v5243
        %v5376 = vpop.f32.mrb[0].mxu0
        %v5377 = vadd.f32 0.0, %v5376
        %v5378 = vpop.f32.mrb[0].mxu0
        %v5379 = vpop.f32.mrb[0].mxu0
        %v5380 = vadd.f32 0.0, %v5379
        %v5381 = vpop.f32.mrb[0].mxu0
        %5382 = vmatprep.mubr.bf16.mxu0 0
        %5383 = vmatmul.mubr.bf16.gmra.mrb[0].mxu0 %v5244
        %v5384 = vpop.f32.mrb[0].mxu0
        %v5385 = vadd.f32 0.0, %v5384
        %v5386 = vpop.f32.mrb[0].mxu0
        %v5387 = vpop.f32.mrb[0].mxu0
        %v5388 = vadd.f32 0.0, %v5387
        %v5389 = vpop.f32.mrb[0].mxu0
        %5390 = vmatprep.mubr.bf16.mxu0 0
        %5391 = vmatmul.mubr.bf16.gmra.mrb[0].mxu0 %v5245
        %v5392 = vpop.f32.mrb[0].mxu0
        %v5393 = vadd.f32 0.0, %v5392
        %v5394 = vpop.f32.mrb[0].mxu0
        %v5395 = vpop.f32.mrb[0].mxu0
        %v5396 = vadd.f32 0.0, %v5395
        %v5397 = vpop.f32.mrb[0].mxu0
        %5398 = vdwg.mxu0
        %v5399 = vadd.f32 %v5156, %v5337
        %v5400 = vadd.f32 %v5157, %v5340
        %v5401 = vadd.f32 %v5158, %v5345
        %v5402 = vadd.f32 %v5159, %v5348
        %v5403 = vadd.f32 %v5160, %v5353
        %v5404 = vadd.f32 %v5161, %v5356
        %v5405 = vadd.f32 %v5162, %v5361
        %v5406 = vadd.f32 %v5163, %v5364
        %v5407 = vadd.f32 %v5164, %v5369
        %v5408 = vadd.f32 %v5165, %v5372
        %v5409 = vadd.f32 %v5166, %v5377
        %v5410 = vadd.f32 %v5167, %v5380
        %v5411 = vadd.f32 %v5168, %v5385
        %v5412 = vadd.f32 %v5169, %v5388
        %v5413 = vadd.f32 %v5170, %v5393
        %v5414 = vadd.f32 %v5171, %v5396
        %v5415 = vld [vmem:[%s5172] sm:$0xf]
        %v5416 = vld [vmem:[%s5172 + $0x4] sm:$0xf]
        %v5417 = vld [vmem:[%s5172 + $0x8] sm:$0x1]
        %v5418 = vld [vmem:[%s5172 + $0xc] sm:$0xf]
        %v5419 = vld [vmem:[%s5172 + $0x10] sm:$0xf]
        %v5420 = vld [vmem:[%s5172 + $0x14] sm:$0x1]
        %v5421 = vld [vmem:[%s5172 + $0x18] sm:$0xf]
        %v5422 = vld [vmem:[%s5172 + $0x1c] sm:$0xf]
        %v5423 = vld [vmem:[%s5172 + $0x20] sm:$0x1]
        %v5424 = vld [vmem:[%s5172 + $0x24] sm:$0xf]
        %v5425 = vld [vmem:[%s5172 + $0x28] sm:$0xf]
        %v5426 = vld [vmem:[%s5172 + $0x2c] sm:$0x1]
        %v5427 = vld [vmem:[%s5172 + $0x30] sm:$0xf]
        %v5428 = vld [vmem:[%s5172 + $0x34] sm:$0xf]
        %v5429 = vld [vmem:[%s5172 + $0x38] sm:$0x1]
        %v5430 = vld [vmem:[%s5172 + $0x3c] sm:$0xf]
        %v5431 = vld [vmem:[%s5172 + $0x40] sm:$0xf]
        %v5432 = vld [vmem:[%s5172 + $0x44] sm:$0x1]
        %v5433 = vld [vmem:[%s5172 + $0x48] sm:$0xf]
        %v5434 = vld [vmem:[%s5172 + $0x4c] sm:$0xf]
        %v5435 = vld [vmem:[%s5172 + $0x50] sm:$0x1]
        %v5436 = vld [vmem:[%s5172 + $0x54] sm:$0xf]
        %v5437 = vld [vmem:[%s5172 + $0x58] sm:$0xf]
        %v5438 = vld [vmem:[%s5172 + $0x5c] sm:$0x1]
        %v5440 = vshrl.u32 %v5415, 16
        %v5442 = vrot.slane %v5440, 4
        %v5443 = vshll.u32 %v5415, 16
        %v5445 = vrot.slane %v5443, 5
        %v5446 = vor.u32 %v5442, %v5445
        %v5447 = vrot.slane %v5446, 4
        %v5449 = vshll.u32 %v5416, 16
        %v5451 = vrot.slane %v5449, 5
        %v5452 = vsel %vm441, %v5447, %v5451
        %v5453 = vshrl.u32 %v5416, 16
        %v5455 = vrot.slane %v5453, 4
        %v5456 = vor.u32 %v5455, %v5451
        %v5457 = vrot.slane %v5456, 4
        %v5459 = vshll.u32 %v5417, 16
        %v5461 = vrot.slane %v5459, 5
        %v5462 = vsel %vm441, %v5457, %v5461
        %v5464 = vshrl.u32 %v5418, 16
        %v5466 = vrot.slane %v5464, 4
        %v5467 = vshll.u32 %v5418, 16
        %v5469 = vrot.slane %v5467, 5
        %v5470 = vor.u32 %v5466, %v5469
        %v5471 = vrot.slane %v5470, 4
        %v5473 = vshll.u32 %v5419, 16
        %v5475 = vrot.slane %v5473, 5
        %v5476 = vsel %vm441, %v5471, %v5475
        %v5477 = vshrl.u32 %v5419, 16
        %v5479 = vrot.slane %v5477, 4
        %v5480 = vor.u32 %v5479, %v5475
        %v5481 = vrot.slane %v5480, 4
        %v5483 = vshll.u32 %v5420, 16
        %v5485 = vrot.slane %v5483, 5
        %v5486 = vsel %vm441, %v5481, %v5485
        %v5488 = vshrl.u32 %v5421, 16
        %v5490 = vrot.slane %v5488, 4
        %v5491 = vshll.u32 %v5421, 16
        %v5493 = vrot.slane %v5491, 5
        %v5494 = vor.u32 %v5490, %v5493
        %v5495 = vrot.slane %v5494, 4
        %v5497 = vshll.u32 %v5422, 16
        %v5499 = vrot.slane %v5497, 5
        %v5500 = vsel %vm441, %v5495, %v5499
        %v5501 = vshrl.u32 %v5422, 16
        %v5503 = vrot.slane %v5501, 4
        %v5504 = vor.u32 %v5503, %v5499
        %v5505 = vrot.slane %v5504, 4
        %v5507 = vshll.u32 %v5423, 16
        %v5509 = vrot.slane %v5507, 5
        %v5510 = vsel %vm441, %v5505, %v5509
        %v5512 = vshrl.u32 %v5424, 16
        %v5514 = vrot.slane %v5512, 4
        %v5515 = vshll.u32 %v5424, 16
        %v5517 = vrot.slane %v5515, 5
        %v5518 = vor.u32 %v5514, %v5517
        %v5519 = vrot.slane %v5518, 4
        %v5521 = vshll.u32 %v5425, 16
        %v5523 = vrot.slane %v5521, 5
        %v5524 = vsel %vm441, %v5519, %v5523
        %v5525 = vshrl.u32 %v5425, 16
        %v5527 = vrot.slane %v5525, 4
        %v5528 = vor.u32 %v5527, %v5523
        %v5529 = vrot.slane %v5528, 4
        %v5531 = vshll.u32 %v5426, 16
        %v5533 = vrot.slane %v5531, 5
        %v5534 = vsel %vm441, %v5529, %v5533
        %v5536 = vshrl.u32 %v5427, 16
        %v5538 = vrot.slane %v5536, 4
        %v5539 = vshll.u32 %v5427, 16
        %v5541 = vrot.slane %v5539, 5
        %v5542 = vor.u32 %v5538, %v5541
        %v5543 = vrot.slane %v5542, 4
        %v5545 = vshll.u32 %v5428, 16
        %v5547 = vrot.slane %v5545, 5
        %v5548 = vsel %vm441, %v5543, %v5547
        %v5549 = vshrl.u32 %v5428, 16
        %v5551 = vrot.slane %v5549, 4
        %v5552 = vor.u32 %v5551, %v5547
        %v5553 = vrot.slane %v5552, 4
        %v5555 = vshll.u32 %v5429, 16
        %v5557 = vrot.slane %v5555, 5
        %v5558 = vsel %vm441, %v5553, %v5557
        %v5560 = vshrl.u32 %v5430, 16
        %v5562 = vrot.slane %v5560, 4
        %v5563 = vshll.u32 %v5430, 16
        %v5565 = vrot.slane %v5563, 5
        %v5566 = vor.u32 %v5562, %v5565
        %v5567 = vrot.slane %v5566, 4
        %v5569 = vshll.u32 %v5431, 16
        %v5571 = vrot.slane %v5569, 5
        %v5572 = vsel %vm441, %v5567, %v5571
        %v5573 = vshrl.u32 %v5431, 16
        %v5575 = vrot.slane %v5573, 4
        %v5576 = vor.u32 %v5575, %v5571
        %v5577 = vrot.slane %v5576, 4
        %v5579 = vshll.u32 %v5432, 16
        %v5581 = vrot.slane %v5579, 5
        %v5582 = vsel %vm441, %v5577, %v5581
        %v5584 = vshrl.u32 %v5433, 16
        %v5586 = vrot.slane %v5584, 4
        %v5587 = vshll.u32 %v5433, 16
        %v5589 = vrot.slane %v5587, 5
        %v5590 = vor.u32 %v5586, %v5589
        %v5591 = vrot.slane %v5590, 4
        %v5593 = vshll.u32 %v5434, 16
        %v5595 = vrot.slane %v5593, 5
        %v5596 = vsel %vm441, %v5591, %v5595
        %v5597 = vshrl.u32 %v5434, 16
        %v5599 = vrot.slane %v5597, 4
        %v5600 = vor.u32 %v5599, %v5595
        %v5601 = vrot.slane %v5600, 4
        %v5603 = vshll.u32 %v5435, 16
        %v5605 = vrot.slane %v5603, 5
        %v5606 = vsel %vm441, %v5601, %v5605
        %v5608 = vshrl.u32 %v5436, 16
        %v5610 = vrot.slane %v5608, 4
        %v5611 = vshll.u32 %v5436, 16
        %v5613 = vrot.slane %v5611, 5
        %v5614 = vor.u32 %v5610, %v5613
        %v5615 = vrot.slane %v5614, 4
        %v5617 = vshll.u32 %v5437, 16
        %v5619 = vrot.slane %v5617, 5
        %v5620 = vsel %vm441, %v5615, %v5619
        %v5621 = vshrl.u32 %v5437, 16
        %v5623 = vrot.slane %v5621, 4
        %v5624 = vor.u32 %v5623, %v5619
        %v5625 = vrot.slane %v5624, 4
        %v5627 = vshll.u32 %v5438, 16
        %v5629 = vrot.slane %v5627, 5
        %v5630 = vsel %vm441, %v5625, %v5629
        %s5631 = scalar_lea.vmem [#allocation3], 256
        %v5632 = vld [vmem:[%s5631] sm:$0xf]
        %v5633 = vld [vmem:[%s5631 + $0x4] sm:$0xf]
        %v5634 = vld [vmem:[%s5631 + $0x8] sm:$0xf]
        %v5635 = vld [vmem:[%s5631 + $0xc] sm:$0xf]
        %v5636 = vld [vmem:[%s5631 + $0x10] sm:$0xf]
        %v5637 = vld [vmem:[%s5631 + $0x14] sm:$0xf]
        %v5638 = vld [vmem:[%s5631 + $0x18] sm:$0xf]
        %v5639 = vld [vmem:[%s5631 + $0x1c] sm:$0xf]
        %v5640 = vld [vmem:[%s5631 + $0x20] sm:$0xf]
        %v5641 = vld [vmem:[%s5631 + $0x24] sm:$0xf]
        %v5642 = vld [vmem:[%s5631 + $0x28] sm:$0xf]
        %v5643 = vld [vmem:[%s5631 + $0x2c] sm:$0xf]
        %v5644 = vld [vmem:[%s5631 + $0x30] sm:$0xf]
        %v5645 = vld [vmem:[%s5631 + $0x34] sm:$0xf]
        %v5646 = vld [vmem:[%s5631 + $0x38] sm:$0xf]
        %v5647 = vld [vmem:[%s5631 + $0x3c] sm:$0xf]
        %v5648 = vunpack.c.l.b16 %v5452
        %v5649 = vunpack.c.l.b16 %v5462
        %v5650 = vunpack.c.l.b16 %v5476
        %v5651 = vunpack.c.l.b16 %v5486
        %v5652 = vunpack.c.l.b16 %v5500
        %v5653 = vunpack.c.l.b16 %v5510
        %v5654 = vunpack.c.l.b16 %v5524
        %v5655 = vunpack.c.l.b16 %v5534
        %v5656 = vunpack.c.l.b16 %v5548
        %v5657 = vunpack.c.l.b16 %v5558
        %v5658 = vunpack.c.l.b16 %v5572
        %v5659 = vunpack.c.l.b16 %v5582
        %v5660 = vunpack.c.l.b16 %v5596
        %v5661 = vunpack.c.l.b16 %v5606
        %v5662 = vunpack.c.l.b16 %v5620
        %v5663 = vunpack.c.l.b16 %v5630
        %v5664 = vpack.c.b16 %v5649, %v5648
        %v5665 = vpack.c.b16 %v5651, %v5650
        %v5666 = vpack.c.b16 %v5653, %v5652
        %v5667 = vpack.c.b16 %v5655, %v5654
        %v5668 = vpack.c.b16 %v5657, %v5656
        %v5669 = vpack.c.b16 %v5659, %v5658
        %v5670 = vpack.c.b16 %v5661, %v5660
        %v5671 = vpack.c.b16 %v5663, %v5662
        %v5696 = vunpack.c.l.b16 %v5632
        %v5697 = vunpack.c.l.b16 %v5633
        %v5698 = vunpack.c.l.b16 %v5634
        %v5699 = vunpack.c.l.b16 %v5635
        %v5700 = vunpack.c.l.b16 %v5636
        %v5701 = vunpack.c.l.b16 %v5637
        %v5702 = vunpack.c.l.b16 %v5638
        %v5703 = vunpack.c.l.b16 %v5639
        %v5704 = vunpack.c.l.b16 %v5640
        %v5705 = vunpack.c.l.b16 %v5641
        %v5706 = vunpack.c.l.b16 %v5642
        %v5707 = vunpack.c.l.b16 %v5643
        %v5708 = vunpack.c.l.b16 %v5644
        %v5709 = vunpack.c.l.b16 %v5645
        %v5710 = vunpack.c.l.b16 %v5646
        %v5711 = vunpack.c.l.b16 %v5647
        %v5712 = vpack.c.b16 %v5697, %v5696
        %v5713 = vpack.c.b16 %v5699, %v5698
        %v5714 = vpack.c.b16 %v5701, %v5700
        %v5715 = vpack.c.b16 %v5703, %v5702
        %v5716 = vpack.c.b16 %v5705, %v5704
        %v5717 = vpack.c.b16 %v5707, %v5706
        %v5718 = vpack.c.b16 %v5709, %v5708
        %v5719 = vpack.c.b16 %v5711, %v5710
        %5728 = vmatprep.subr.bf16.mxu0 0
        %5729 = vmatpush1.bf16.msra.mxu0 %v5712
        %5730 = vmatprep.subr.bf16.mxu0 0
        %5731 = vmatpush1.bf16.msra.mxu0 %v5713
        %5732 = vmatprep.subr.bf16.mxu0 0
        %5733 = vmatpush1.bf16.msra.mxu0 %v5714
        %5734 = vmatprep.subr.bf16.mxu0 0
        %5735 = vmatpush1.bf16.msra.mxu0 %v5715
        %5736 = vmatprep.subr.bf16.mxu0 0
        %5737 = vmatpush1.bf16.msra.mxu0 %v5716
        %5738 = vmatprep.subr.bf16.mxu0 0
        %5739 = vmatpush1.bf16.msra.mxu0 %v5717
        %5740 = vmatprep.subr.bf16.mxu0 0
        %5741 = vmatpush1.bf16.msra.mxu0 %v5718
        %5742 = vmatprep.subr.bf16.mxu0 0
        %5743 = vmatpush1.bf16.msra.mxu0 %v5719
        %5744 = vmatprep.subr.bf16.mxu0 0
        %5745 = vmatpush1.bf16.msra.mxu0 0
        %5746 = vmatprep.subr.bf16.mxu0 0
        %5747 = vmatpush1.bf16.msra.mxu0 0
        %5748 = vmatprep.subr.bf16.mxu0 0
        %5749 = vmatpush1.bf16.msra.mxu0 0
        %5750 = vmatprep.subr.bf16.mxu0 0
        %5751 = vmatpush1.bf16.msra.mxu0 0
        %5752 = vmatprep.subr.bf16.mxu0 0
        %5753 = vmatpush1.bf16.msra.mxu0 0
        %5754 = vmatprep.subr.bf16.mxu0 0
        %5755 = vmatpush1.bf16.msra.mxu0 0
        %5756 = vmatprep.subr.bf16.mxu0 0
        %5757 = vmatpush1.bf16.msra.mxu0 0
        %5758 = vmatprep.subr.bf16.mxu0 0
        %5759 = vmatpush1.bf16.msra.mxu0 0
        %5760 = vmatprep.mubr.bf16.mxu0 0
        %5761 = vmatmul.mubr.bf16.gmra.mrb[0].mxu0 %v5664
        %v5762 = vpop.f32.mrb[0].mxu0
        %v5763 = vadd.f32 0.0, %v5762
        %v5764 = vpop.f32.mrb[0].mxu0
        %v5765 = vpop.f32.mrb[0].mxu0
        %v5766 = vadd.f32 0.0, %v5765
        %v5767 = vpop.f32.mrb[0].mxu0
        %5768 = vmatprep.mubr.bf16.mxu0 0
        %5769 = vmatmul.mubr.bf16.gmra.mrb[0].mxu0 %v5665
        %v5770 = vpop.f32.mrb[0].mxu0
        %v5771 = vadd.f32 0.0, %v5770
        %v5772 = vpop.f32.mrb[0].mxu0
        %v5773 = vpop.f32.mrb[0].mxu0
        %v5774 = vadd.f32 0.0, %v5773
        %v5775 = vpop.f32.mrb[0].mxu0
        %5776 = vmatprep.mubr.bf16.mxu0 0
        %5777 = vmatmul.mubr.bf16.gmra.mrb[0].mxu0 %v5666
        %v5778 = vpop.f32.mrb[0].mxu0
        %v5779 = vadd.f32 0.0, %v5778
        %v5780 = vpop.f32.mrb[0].mxu0
        %v5781 = vpop.f32.mrb[0].mxu0
        %v5782 = vadd.f32 0.0, %v5781
        %v5783 = vpop.f32.mrb[0].mxu0
        %5784 = vmatprep.mubr.bf16.mxu0 0
        %5785 = vmatmul.mubr.bf16.gmra.mrb[0].mxu0 %v5667
        %v5786 = vpop.f32.mrb[0].mxu0
        %v5787 = vadd.f32 0.0, %v5786
        %v5788 = vpop.f32.mrb[0].mxu0
        %v5789 = vpop.f32.mrb[0].mxu0
        %v5790 = vadd.f32 0.0, %v5789
        %v5791 = vpop.f32.mrb[0].mxu0
        %5792 = vmatprep.mubr.bf16.mxu0 0
        %5793 = vmatmul.mubr.bf16.gmra.mrb[0].mxu0 %v5668
        %v5794 = vpop.f32.mrb[0].mxu0
        %v5795 = vadd.f32 0.0, %v5794
        %v5796 = vpop.f32.mrb[0].mxu0
        %v5797 = vpop.f32.mrb[0].mxu0
        %v5798 = vadd.f32 0.0, %v5797
        %v5799 = vpop.f32.mrb[0].mxu0
        %5800 = vmatprep.mubr.bf16.mxu0 0
        %5801 = vmatmul.mubr.bf16.gmra.mrb[0].mxu0 %v5669
        %v5802 = vpop.f32.mrb[0].mxu0
        %v5803 = vadd.f32 0.0, %v5802
        %v5804 = vpop.f32.mrb[0].mxu0
        %v5805 = vpop.f32.mrb[0].mxu0
        %v5806 = vadd.f32 0.0, %v5805
        %v5807 = vpop.f32.mrb[0].mxu0
        %5808 = vmatprep.mubr.bf16.mxu0 0
        %5809 = vmatmul.mubr.bf16.gmra.mrb[0].mxu0 %v5670
        %v5810 = vpop.f32.mrb[0].mxu0
        %v5811 = vadd.f32 0.0, %v5810
        %v5812 = vpop.f32.mrb[0].mxu0
        %v5813 = vpop.f32.mrb[0].mxu0
        %v5814 = vadd.f32 0.0, %v5813
        %v5815 = vpop.f32.mrb[0].mxu0
        %5816 = vmatprep.mubr.bf16.mxu0 0
        %5817 = vmatmul.mubr.bf16.gmra.mrb[0].mxu0 %v5671
        %v5818 = vpop.f32.mrb[0].mxu0
        %v5819 = vadd.f32 0.0, %v5818
        %v5820 = vpop.f32.mrb[0].mxu0
        %v5821 = vpop.f32.mrb[0].mxu0
        %v5822 = vadd.f32 0.0, %v5821
        %v5823 = vpop.f32.mrb[0].mxu0
        %5824 = vdwg.mxu0
        %v5825 = vadd.f32 %v5399, %v5763
        %v5826 = vadd.f32 %v5400, %v5766
        %v5827 = vadd.f32 %v5401, %v5771
        %v5828 = vadd.f32 %v5402, %v5774
        %v5829 = vadd.f32 %v5403, %v5779
        %v5830 = vadd.f32 %v5404, %v5782
        %v5831 = vadd.f32 %v5405, %v5787
        %v5832 = vadd.f32 %v5406, %v5790
        %v5833 = vadd.f32 %v5407, %v5795
        %v5834 = vadd.f32 %v5408, %v5798
        %v5835 = vadd.f32 %v5409, %v5803
        %v5836 = vadd.f32 %v5410, %v5806
        %v5837 = vadd.f32 %v5411, %v5811
        %v5838 = vadd.f32 %v5412, %v5814
        %v5839 = vadd.f32 %v5413, %v5819
        %v5840 = vadd.f32 %v5414, %v5822
        %v5841 = vld [vmem:[%s5172] sm:$0xe]
        %v5842 = vld [vmem:[%s5172 + $0xc] sm:$0xe]
        %v5843 = vld [vmem:[%s5172 + $0x18] sm:$0xe]
        %v5844 = vld [vmem:[%s5172 + $0x24] sm:$0xe]
        %v5845 = vld [vmem:[%s5172 + $0x30] sm:$0xe]
        %v5846 = vld [vmem:[%s5172 + $0x3c] sm:$0xe]
        %v5847 = vld [vmem:[%s5172 + $0x48] sm:$0xe]
        %v5848 = vld [vmem:[%s5172 + $0x54] sm:$0xe]
        %v5873 = vrot.slane %v5841, 5
        %v5874 = vrot.slane %v5873, 4
        %v5875 = vrot.slane %v5416, 5
        %v5876 = vsel %vm1153, %v5874, %v5875
        %v5877 = vrot.slane %v5875, 4
        %v5878 = vrot.slane %v5417, 5
        %v5879 = vsel %vm1153, %v5877, %v5878
        %v5880 = vrot.slane %v5842, 5
        %v5881 = vrot.slane %v5880, 4
        %v5882 = vrot.slane %v5419, 5
        %v5883 = vsel %vm1153, %v5881, %v5882
        %v5884 = vrot.slane %v5882, 4
        %v5885 = vrot.slane %v5420, 5
        %v5886 = vsel %vm1153, %v5884, %v5885
        %v5887 = vrot.slane %v5843, 5
        %v5888 = vrot.slane %v5887, 4
        %v5889 = vrot.slane %v5422, 5
        %v5890 = vsel %vm1153, %v5888, %v5889
        %v5891 = vrot.slane %v5889, 4
        %v5892 = vrot.slane %v5423, 5
        %v5893 = vsel %vm1153, %v5891, %v5892
        %v5894 = vrot.slane %v5844, 5
        %v5895 = vrot.slane %v5894, 4
        %v5896 = vrot.slane %v5425, 5
        %v5897 = vsel %vm1153, %v5895, %v5896
        %v5898 = vrot.slane %v5896, 4
        %v5899 = vrot.slane %v5426, 5
        %v5900 = vsel %vm1153, %v5898, %v5899
        %v5901 = vrot.slane %v5845, 5
        %v5902 = vrot.slane %v5901, 4
        %v5903 = vrot.slane %v5428, 5
        %v5904 = vsel %vm1153, %v5902, %v5903
        %v5905 = vrot.slane %v5903, 4
        %v5906 = vrot.slane %v5429, 5
        %v5907 = vsel %vm1153, %v5905, %v5906
        %v5908 = vrot.slane %v5846, 5
        %v5909 = vrot.slane %v5908, 4
        %v5910 = vrot.slane %v5431, 5
        %v5911 = vsel %vm1153, %v5909, %v5910
        %v5912 = vrot.slane %v5910, 4
        %v5913 = vrot.slane %v5432, 5
        %v5914 = vsel %vm1153, %v5912, %v5913
        %v5915 = vrot.slane %v5847, 5
        %v5916 = vrot.slane %v5915, 4
        %v5917 = vrot.slane %v5434, 5
        %v5918 = vsel %vm1153, %v5916, %v5917
        %v5919 = vrot.slane %v5917, 4
        %v5920 = vrot.slane %v5435, 5
        %v5921 = vsel %vm1153, %v5919, %v5920
        %v5922 = vrot.slane %v5848, 5
        %v5923 = vrot.slane %v5922, 4
        %v5924 = vrot.slane %v5437, 5
        %v5925 = vsel %vm1153, %v5923, %v5924
        %v5926 = vrot.slane %v5924, 4
        %v5927 = vrot.slane %v5438, 5
        %v5928 = vsel %vm1153, %v5926, %v5927
        %s5929 = scalar_lea.vmem [#allocation3], 320
        %v5930 = vld [vmem:[%s5929] sm:$0xf]
        %v5931 = vld [vmem:[%s5929 + $0x4] sm:$0xf]
        %v5932 = vld [vmem:[%s5929 + $0x8] sm:$0xf]
        %v5933 = vld [vmem:[%s5929 + $0xc] sm:$0xf]
        %v5934 = vld [vmem:[%s5929 + $0x10] sm:$0xf]
        %v5935 = vld [vmem:[%s5929 + $0x14] sm:$0xf]
        %v5936 = vld [vmem:[%s5929 + $0x18] sm:$0xf]
        %v5937 = vld [vmem:[%s5929 + $0x1c] sm:$0xf]
        %v5938 = vld [vmem:[%s5929 + $0x20] sm:$0xf]
        %v5939 = vld [vmem:[%s5929 + $0x24] sm:$0xf]
        %v5940 = vld [vmem:[%s5929 + $0x28] sm:$0xf]
        %v5941 = vld [vmem:[%s5929 + $0x2c] sm:$0xf]
        %v5942 = vld [vmem:[%s5929 + $0x30] sm:$0xf]
        %v5943 = vld [vmem:[%s5929 + $0x34] sm:$0xf]
        %v5944 = vld [vmem:[%s5929 + $0x38] sm:$0xf]
        %v5945 = vld [vmem:[%s5929 + $0x3c] sm:$0xf]
        %v5946 = vunpack.c.l.b16 %v5876
        %v5947 = vunpack.c.l.b16 %v5879
        %v5948 = vunpack.c.l.b16 %v5883
        %v5949 = vunpack.c.l.b16 %v5886
        %v5950 = vunpack.c.l.b16 %v5890
        %v5951 = vunpack.c.l.b16 %v5893
        %v5952 = vunpack.c.l.b16 %v5897
        %v5953 = vunpack.c.l.b16 %v5900
        %v5954 = vunpack.c.l.b16 %v5904
        %v5955 = vunpack.c.l.b16 %v5907
        %v5956 = vunpack.c.l.b16 %v5911
        %v5957 = vunpack.c.l.b16 %v5914
        %v5958 = vunpack.c.l.b16 %v5918
        %v5959 = vunpack.c.l.b16 %v5921
        %v5960 = vunpack.c.l.b16 %v5925
        %v5961 = vunpack.c.l.b16 %v5928
        %v5962 = vpack.c.b16 %v5947, %v5946
        %v5963 = vpack.c.b16 %v5949, %v5948
        %v5964 = vpack.c.b16 %v5951, %v5950
        %v5965 = vpack.c.b16 %v5953, %v5952
        %v5966 = vpack.c.b16 %v5955, %v5954
        %v5967 = vpack.c.b16 %v5957, %v5956
        %v5968 = vpack.c.b16 %v5959, %v5958
        %v5969 = vpack.c.b16 %v5961, %v5960
        %v5994 = vunpack.c.l.b16 %v5930
        %v5995 = vunpack.c.l.b16 %v5931
        %v5996 = vunpack.c.l.b16 %v5932
        %v5997 = vunpack.c.l.b16 %v5933
        %v5998 = vunpack.c.l.b16 %v5934
        %v5999 = vunpack.c.l.b16 %v5935
        %v6000 = vunpack.c.l.b16 %v5936
        %v6001 = vunpack.c.l.b16 %v5937
        %v6002 = vunpack.c.l.b16 %v5938
        %v6003 = vunpack.c.l.b16 %v5939
        %v6004 = vunpack.c.l.b16 %v5940
        %v6005 = vunpack.c.l.b16 %v5941
        %v6006 = vunpack.c.l.b16 %v5942
        %v6007 = vunpack.c.l.b16 %v5943
        %v6008 = vunpack.c.l.b16 %v5944
        %v6009 = vunpack.c.l.b16 %v5945
        %v6010 = vpack.c.b16 %v5995, %v5994
        %v6011 = vpack.c.b16 %v5997, %v5996
        %v6012 = vpack.c.b16 %v5999, %v5998
        %v6013 = vpack.c.b16 %v6001, %v6000
        %v6014 = vpack.c.b16 %v6003, %v6002
        %v6015 = vpack.c.b16 %v6005, %v6004
        %v6016 = vpack.c.b16 %v6007, %v6006
        %v6017 = vpack.c.b16 %v6009, %v6008
        %6026 = vmatprep.subr.bf16.mxu0 0
        %6027 = vmatpush1.bf16.msra.mxu0 %v6010
        %6028 = vmatprep.subr.bf16.mxu0 0
        %6029 = vmatpush1.bf16.msra.mxu0 %v6011
        %6030 = vmatprep.subr.bf16.mxu0 0
        %6031 = vmatpush1.bf16.msra.mxu0 %v6012
        %6032 = vmatprep.subr.bf16.mxu0 0
        %6033 = vmatpush1.bf16.msra.mxu0 %v6013
        %6034 = vmatprep.subr.bf16.mxu0 0
        %6035 = vmatpush1.bf16.msra.mxu0 %v6014
        %6036 = vmatprep.subr.bf16.mxu0 0
        %6037 = vmatpush1.bf16.msra.mxu0 %v6015
        %6038 = vmatprep.subr.bf16.mxu0 0
        %6039 = vmatpush1.bf16.msra.mxu0 %v6016
        %6040 = vmatprep.subr.bf16.mxu0 0
        %6041 = vmatpush1.bf16.msra.mxu0 %v6017
        %6042 = vmatprep.subr.bf16.mxu0 0
        %6043 = vmatpush1.bf16.msra.mxu0 0
        %6044 = vmatprep.subr.bf16.mxu0 0
        %6045 = vmatpush1.bf16.msra.mxu0 0
        %6046 = vmatprep.subr.bf16.mxu0 0
        %6047 = vmatpush1.bf16.msra.mxu0 0
        %6048 = vmatprep.subr.bf16.mxu0 0
        %6049 = vmatpush1.bf16.msra.mxu0 0
        %6050 = vmatprep.subr.bf16.mxu0 0
        %6051 = vmatpush1.bf16.msra.mxu0 0
        %6052 = vmatprep.subr.bf16.mxu0 0
        %6053 = vmatpush1.bf16.msra.mxu0 0
        %6054 = vmatprep.subr.bf16.mxu0 0
        %6055 = vmatpush1.bf16.msra.mxu0 0
        %6056 = vmatprep.subr.bf16.mxu0 0
        %6057 = vmatpush1.bf16.msra.mxu0 0
        %6058 = vmatprep.mubr.bf16.mxu0 0
        %6059 = vmatmul.mubr.bf16.gmra.mrb[0].mxu0 %v5962
        %v6060 = vpop.f32.mrb[0].mxu0
        %v6061 = vadd.f32 0.0, %v6060
        %v6062 = vpop.f32.mrb[0].mxu0
        %v6063 = vpop.f32.mrb[0].mxu0
        %v6064 = vadd.f32 0.0, %v6063
        %v6065 = vpop.f32.mrb[0].mxu0
        %6066 = vmatprep.mubr.bf16.mxu0 0
        %6067 = vmatmul.mubr.bf16.gmra.mrb[0].mxu0 %v5963
        %v6068 = vpop.f32.mrb[0].mxu0
        %v6069 = vadd.f32 0.0, %v6068
        %v6070 = vpop.f32.mrb[0].mxu0
        %v6071 = vpop.f32.mrb[0].mxu0
        %v6072 = vadd.f32 0.0, %v6071
        %v6073 = vpop.f32.mrb[0].mxu0
        %6074 = vmatprep.mubr.bf16.mxu0 0
        %6075 = vmatmul.mubr.bf16.gmra.mrb[0].mxu0 %v5964
        %v6076 = vpop.f32.mrb[0].mxu0
        %v6077 = vadd.f32 0.0, %v6076
        %v6078 = vpop.f32.mrb[0].mxu0
        %v6079 = vpop.f32.mrb[0].mxu0
        %v6080 = vadd.f32 0.0, %v6079
        %v6081 = vpop.f32.mrb[0].mxu0
        %6082 = vmatprep.mubr.bf16.mxu0 0
        %6083 = vmatmul.mubr.bf16.gmra.mrb[0].mxu0 %v5965
        %v6084 = vpop.f32.mrb[0].mxu0
        %v6085 = vadd.f32 0.0, %v6084
        %v6086 = vpop.f32.mrb[0].mxu0
        %v6087 = vpop.f32.mrb[0].mxu0
        %v6088 = vadd.f32 0.0, %v6087
        %v6089 = vpop.f32.mrb[0].mxu0
        %6090 = vmatprep.mubr.bf16.mxu0 0
        %6091 = vmatmul.mubr.bf16.gmra.mrb[0].mxu0 %v5966
        %v6092 = vpop.f32.mrb[0].mxu0
        %v6093 = vadd.f32 0.0, %v6092
        %v6094 = vpop.f32.mrb[0].mxu0
        %v6095 = vpop.f32.mrb[0].mxu0
        %v6096 = vadd.f32 0.0, %v6095
        %v6097 = vpop.f32.mrb[0].mxu0
        %6098 = vmatprep.mubr.bf16.mxu0 0
        %6099 = vmatmul.mubr.bf16.gmra.mrb[0].mxu0 %v5967
        %v6100 = vpop.f32.mrb[0].mxu0
        %v6101 = vadd.f32 0.0, %v6100
        %v6102 = vpop.f32.mrb[0].mxu0
        %v6103 = vpop.f32.mrb[0].mxu0
        %v6104 = vadd.f32 0.0, %v6103
        %v6105 = vpop.f32.mrb[0].mxu0
        %6106 = vmatprep.mubr.bf16.mxu0 0
        %6107 = vmatmul.mubr.bf16.gmra.mrb[0].mxu0 %v5968
        %v6108 = vpop.f32.mrb[0].mxu0
        %v6109 = vadd.f32 0.0, %v6108
        %v6110 = vpop.f32.mrb[0].mxu0
        %v6111 = vpop.f32.mrb[0].mxu0
        %v6112 = vadd.f32 0.0, %v6111
        %v6113 = vpop.f32.mrb[0].mxu0
        %6114 = vmatprep.mubr.bf16.mxu0 0
        %6115 = vmatmul.mubr.bf16.gmra.mrb[0].mxu0 %v5969
        %v6116 = vpop.f32.mrb[0].mxu0
        %v6117 = vadd.f32 0.0, %v6116
        %v6118 = vpop.f32.mrb[0].mxu0
        %v6119 = vpop.f32.mrb[0].mxu0
        %v6120 = vadd.f32 0.0, %v6119
        %v6121 = vpop.f32.mrb[0].mxu0
        %6122 = vdwg.mxu0
        %v6123 = vadd.f32 %v5825, %v6061
        %v6124 = vadd.f32 %v5826, %v6064
        %v6125 = vadd.f32 %v5827, %v6069
        %v6126 = vadd.f32 %v5828, %v6072
        %v6127 = vadd.f32 %v5829, %v6077
        %v6128 = vadd.f32 %v5830, %v6080
        %v6129 = vadd.f32 %v5831, %v6085
        %v6130 = vadd.f32 %v5832, %v6088
        %v6131 = vadd.f32 %v5833, %v6093
        %v6132 = vadd.f32 %v5834, %v6096
        %v6133 = vadd.f32 %v5835, %v6101
        %v6134 = vadd.f32 %v5836, %v6104
        %v6135 = vadd.f32 %v5837, %v6109
        %v6136 = vadd.f32 %v5838, %v6112
        %v6137 = vadd.f32 %v5839, %v6117
        %v6138 = vadd.f32 %v5840, %v6120
        %s6139 = scalar_lea.vmem [#allocation2], 24
        %v6140 = vld [vmem:[%s6139] sm:$0xf]
        %v6141 = vld [vmem:[%s6139 + $0x4] sm:$0xf]
        %v6142 = vld [vmem:[%s6139 + $0xc] sm:$0xf]
        %v6143 = vld [vmem:[%s6139 + $0x10] sm:$0xf]
        %v6144 = vld [vmem:[%s6139 + $0x18] sm:$0xf]
        %v6145 = vld [vmem:[%s6139 + $0x1c] sm:$0xf]
        %v6146 = vld [vmem:[%s6139 + $0x24] sm:$0xf]
        %v6147 = vld [vmem:[%s6139 + $0x28] sm:$0xf]
        %v6148 = vld [vmem:[%s6139 + $0x30] sm:$0xf]
        %v6149 = vld [vmem:[%s6139 + $0x34] sm:$0xf]
        %v6150 = vld [vmem:[%s6139 + $0x3c] sm:$0xf]
        %v6151 = vld [vmem:[%s6139 + $0x40] sm:$0xf]
        %v6152 = vld [vmem:[%s6139 + $0x48] sm:$0xf]
        %v6153 = vld [vmem:[%s6139 + $0x4c] sm:$0xf]
        %v6154 = vld [vmem:[%s6139 + $0x54] sm:$0xf]
        %v6155 = vld [vmem:[%s6139 + $0x58] sm:$0xf]
        %s6156 = scalar_lea.vmem [#allocation3], 384
        %v6157 = vld [vmem:[%s6156] sm:$0xf]
        %v6158 = vld [vmem:[%s6156 + $0x4] sm:$0xf]
        %v6159 = vld [vmem:[%s6156 + $0x8] sm:$0xf]
        %v6160 = vld [vmem:[%s6156 + $0xc] sm:$0xf]
        %v6161 = vld [vmem:[%s6156 + $0x10] sm:$0xf]
        %v6162 = vld [vmem:[%s6156 + $0x14] sm:$0xf]
        %v6163 = vld [vmem:[%s6156 + $0x18] sm:$0xf]
        %v6164 = vld [vmem:[%s6156 + $0x1c] sm:$0xf]
        %v6165 = vld [vmem:[%s6156 + $0x20] sm:$0xf]
        %v6166 = vld [vmem:[%s6156 + $0x24] sm:$0xf]
        %v6167 = vld [vmem:[%s6156 + $0x28] sm:$0xf]
        %v6168 = vld [vmem:[%s6156 + $0x2c] sm:$0xf]
        %v6169 = vld [vmem:[%s6156 + $0x30] sm:$0xf]
        %v6170 = vld [vmem:[%s6156 + $0x34] sm:$0xf]
        %v6171 = vld [vmem:[%s6156 + $0x38] sm:$0xf]
        %v6172 = vld [vmem:[%s6156 + $0x3c] sm:$0xf]
        %v6189 = vunpack.c.l.b16 %v6140
        %v6190 = vunpack.c.l.b16 %v6141
        %v6191 = vunpack.c.l.b16 %v6142
        %v6192 = vunpack.c.l.b16 %v6143
        %v6193 = vunpack.c.l.b16 %v6144
        %v6194 = vunpack.c.l.b16 %v6145
        %v6195 = vunpack.c.l.b16 %v6146
        %v6196 = vunpack.c.l.b16 %v6147
        %v6197 = vunpack.c.l.b16 %v6148
        %v6198 = vunpack.c.l.b16 %v6149
        %v6199 = vunpack.c.l.b16 %v6150
        %v6200 = vunpack.c.l.b16 %v6151
        %v6201 = vunpack.c.l.b16 %v6152
        %v6202 = vunpack.c.l.b16 %v6153
        %v6203 = vunpack.c.l.b16 %v6154
        %v6204 = vunpack.c.l.b16 %v6155
        %v6205 = vpack.c.b16 %v6190, %v6189
        %v6206 = vpack.c.b16 %v6192, %v6191
        %v6207 = vpack.c.b16 %v6194, %v6193
        %v6208 = vpack.c.b16 %v6196, %v6195
        %v6209 = vpack.c.b16 %v6198, %v6197
        %v6210 = vpack.c.b16 %v6200, %v6199
        %v6211 = vpack.c.b16 %v6202, %v6201
        %v6212 = vpack.c.b16 %v6204, %v6203
        %v6237 = vunpack.c.l.b16 %v6157
        %v6238 = vunpack.c.l.b16 %v6158
        %v6239 = vunpack.c.l.b16 %v6159
        %v6240 = vunpack.c.l.b16 %v6160
        %v6241 = vunpack.c.l.b16 %v6161
        %v6242 = vunpack.c.l.b16 %v6162
        %v6243 = vunpack.c.l.b16 %v6163
        %v6244 = vunpack.c.l.b16 %v6164
        %v6245 = vunpack.c.l.b16 %v6165
        %v6246 = vunpack.c.l.b16 %v6166
        %v6247 = vunpack.c.l.b16 %v6167
        %v6248 = vunpack.c.l.b16 %v6168
        %v6249 = vunpack.c.l.b16 %v6169
        %v6250 = vunpack.c.l.b16 %v6170
        %v6251 = vunpack.c.l.b16 %v6171
        %v6252 = vunpack.c.l.b16 %v6172
        %v6253 = vpack.c.b16 %v6238, %v6237
        %v6254 = vpack.c.b16 %v6240, %v6239
        %v6255 = vpack.c.b16 %v6242, %v6241
        %v6256 = vpack.c.b16 %v6244, %v6243
        %v6257 = vpack.c.b16 %v6246, %v6245
        %v6258 = vpack.c.b16 %v6248, %v6247
        %v6259 = vpack.c.b16 %v6250, %v6249
        %v6260 = vpack.c.b16 %v6252, %v6251
        %6269 = vmatprep.subr.bf16.mxu0 0
        %6270 = vmatpush1.bf16.msra.mxu0 %v6253
        %6271 = vmatprep.subr.bf16.mxu0 0
        %6272 = vmatpush1.bf16.msra.mxu0 %v6254
        %6273 = vmatprep.subr.bf16.mxu0 0
        %6274 = vmatpush1.bf16.msra.mxu0 %v6255
        %6275 = vmatprep.subr.bf16.mxu0 0
        %6276 = vmatpush1.bf16.msra.mxu0 %v6256
        %6277 = vmatprep.subr.bf16.mxu0 0
        %6278 = vmatpush1.bf16.msra.mxu0 %v6257
        %6279 = vmatprep.subr.bf16.mxu0 0
        %6280 = vmatpush1.bf16.msra.mxu0 %v6258
        %6281 = vmatprep.subr.bf16.mxu0 0
        %6282 = vmatpush1.bf16.msra.mxu0 %v6259
        %6283 = vmatprep.subr.bf16.mxu0 0
        %6284 = vmatpush1.bf16.msra.mxu0 %v6260
        %6285 = vmatprep.subr.bf16.mxu0 0
        %6286 = vmatpush1.bf16.msra.mxu0 0
        %6287 = vmatprep.subr.bf16.mxu0 0
        %6288 = vmatpush1.bf16.msra.mxu0 0
        %6289 = vmatprep.subr.bf16.mxu0 0
        %6290 = vmatpush1.bf16.msra.mxu0 0
        %6291 = vmatprep.subr.bf16.mxu0 0
        %6292 = vmatpush1.bf16.msra.mxu0 0
        %6293 = vmatprep.subr.bf16.mxu0 0
        %6294 = vmatpush1.bf16.msra.mxu0 0
        %6295 = vmatprep.subr.bf16.mxu0 0
        %6296 = vmatpush1.bf16.msra.mxu0 0
        %6297 = vmatprep.subr.bf16.mxu0 0
        %6298 = vmatpush1.bf16.msra.mxu0 0
        %6299 = vmatprep.subr.bf16.mxu0 0
        %6300 = vmatpush1.bf16.msra.mxu0 0
        %6301 = vmatprep.mubr.bf16.mxu0 0
        %6302 = vmatmul.mubr.bf16.gmra.mrb[0].mxu0 %v6205
        %v6303 = vpop.f32.mrb[0].mxu0
        %v6304 = vadd.f32 0.0, %v6303
        %v6305 = vpop.f32.mrb[0].mxu0
        %v6306 = vpop.f32.mrb[0].mxu0
        %v6307 = vadd.f32 0.0, %v6306
        %v6308 = vpop.f32.mrb[0].mxu0
        %6309 = vmatprep.mubr.bf16.mxu0 0
        %6310 = vmatmul.mubr.bf16.gmra.mrb[0].mxu0 %v6206
        %v6311 = vpop.f32.mrb[0].mxu0
        %v6312 = vadd.f32 0.0, %v6311
        %v6313 = vpop.f32.mrb[0].mxu0
        %v6314 = vpop.f32.mrb[0].mxu0
        %v6315 = vadd.f32 0.0, %v6314
        %v6316 = vpop.f32.mrb[0].mxu0
        %6317 = vmatprep.mubr.bf16.mxu0 0
        %6318 = vmatmul.mubr.bf16.gmra.mrb[0].mxu0 %v6207
        %v6319 = vpop.f32.mrb[0].mxu0
        %v6320 = vadd.f32 0.0, %v6319
        %v6321 = vpop.f32.mrb[0].mxu0
        %v6322 = vpop.f32.mrb[0].mxu0
        %v6323 = vadd.f32 0.0, %v6322
        %v6324 = vpop.f32.mrb[0].mxu0
        %6325 = vmatprep.mubr.bf16.mxu0 0
        %6326 = vmatmul.mubr.bf16.gmra.mrb[0].mxu0 %v6208
        %v6327 = vpop.f32.mrb[0].mxu0
        %v6328 = vadd.f32 0.0, %v6327
        %v6329 = vpop.f32.mrb[0].mxu0
        %v6330 = vpop.f32.mrb[0].mxu0
        %v6331 = vadd.f32 0.0, %v6330
        %v6332 = vpop.f32.mrb[0].mxu0
        %6333 = vmatprep.mubr.bf16.mxu0 0
        %6334 = vmatmul.mubr.bf16.gmra.mrb[0].mxu0 %v6209
        %v6335 = vpop.f32.mrb[0].mxu0
        %v6336 = vadd.f32 0.0, %v6335
        %v6337 = vpop.f32.mrb[0].mxu0
        %v6338 = vpop.f32.mrb[0].mxu0
        %v6339 = vadd.f32 0.0, %v6338
        %v6340 = vpop.f32.mrb[0].mxu0
        %6341 = vmatprep.mubr.bf16.mxu0 0
        %6342 = vmatmul.mubr.bf16.gmra.mrb[0].mxu0 %v6210
        %v6343 = vpop.f32.mrb[0].mxu0
        %v6344 = vadd.f32 0.0, %v6343
        %v6345 = vpop.f32.mrb[0].mxu0
        %v6346 = vpop.f32.mrb[0].mxu0
        %v6347 = vadd.f32 0.0, %v6346
        %v6348 = vpop.f32.mrb[0].mxu0
        %6349 = vmatprep.mubr.bf16.mxu0 0
        %6350 = vmatmul.mubr.bf16.gmra.mrb[0].mxu0 %v6211
        %v6351 = vpop.f32.mrb[0].mxu0
        %v6352 = vadd.f32 0.0, %v6351
        %v6353 = vpop.f32.mrb[0].mxu0
        %v6354 = vpop.f32.mrb[0].mxu0
        %v6355 = vadd.f32 0.0, %v6354
        %v6356 = vpop.f32.mrb[0].mxu0
        %6357 = vmatprep.mubr.bf16.mxu0 0
        %6358 = vmatmul.mubr.bf16.gmra.mrb[0].mxu0 %v6212
        %v6359 = vpop.f32.mrb[0].mxu0
        %v6360 = vadd.f32 0.0, %v6359
        %v6361 = vpop.f32.mrb[0].mxu0
        %v6362 = vpop.f32.mrb[0].mxu0
        %v6363 = vadd.f32 0.0, %v6362
        %v6364 = vpop.f32.mrb[0].mxu0
        %6365 = vdwg.mxu0
        %v6366 = vadd.f32 %v6123, %v6304
        %v6367 = vadd.f32 %v6124, %v6307
        %v6368 = vadd.f32 %v6125, %v6312
        %v6369 = vadd.f32 %v6126, %v6315
        %v6370 = vadd.f32 %v6127, %v6320
        %v6371 = vadd.f32 %v6128, %v6323
        %v6372 = vadd.f32 %v6129, %v6328
        %v6373 = vadd.f32 %v6130, %v6331
        %v6374 = vadd.f32 %v6131, %v6336
        %v6375 = vadd.f32 %v6132, %v6339
        %v6376 = vadd.f32 %v6133, %v6344
        %v6377 = vadd.f32 %v6134, %v6347
        %v6378 = vadd.f32 %v6135, %v6352
        %v6379 = vadd.f32 %v6136, %v6355
        %v6380 = vadd.f32 %v6137, %v6360
        %v6381 = vadd.f32 %v6138, %v6363
        %v6382 = vld [vmem:[%s6139] sm:$0xf]
        %v6383 = vld [vmem:[%s6139 + $0x4] sm:$0xf]
        %v6384 = vld [vmem:[%s6139 + $0x8] sm:$0x1]
        %v6385 = vld [vmem:[%s6139 + $0xc] sm:$0xf]
        %v6386 = vld [vmem:[%s6139 + $0x10] sm:$0xf]
        %v6387 = vld [vmem:[%s6139 + $0x14] sm:$0x1]
        %v6388 = vld [vmem:[%s6139 + $0x18] sm:$0xf]
        %v6389 = vld [vmem:[%s6139 + $0x1c] sm:$0xf]
        %v6390 = vld [vmem:[%s6139 + $0x20] sm:$0x1]
        %v6391 = vld [vmem:[%s6139 + $0x24] sm:$0xf]
        %v6392 = vld [vmem:[%s6139 + $0x28] sm:$0xf]
        %v6393 = vld [vmem:[%s6139 + $0x2c] sm:$0x1]
        %v6394 = vld [vmem:[%s6139 + $0x30] sm:$0xf]
        %v6395 = vld [vmem:[%s6139 + $0x34] sm:$0xf]
        %v6396 = vld [vmem:[%s6139 + $0x38] sm:$0x1]
        %v6397 = vld [vmem:[%s6139 + $0x3c] sm:$0xf]
        %v6398 = vld [vmem:[%s6139 + $0x40] sm:$0xf]
        %v6399 = vld [vmem:[%s6139 + $0x44] sm:$0x1]
        %v6400 = vld [vmem:[%s6139 + $0x48] sm:$0xf]
        %v6401 = vld [vmem:[%s6139 + $0x4c] sm:$0xf]
        %v6402 = vld [vmem:[%s6139 + $0x50] sm:$0x1]
        %v6403 = vld [vmem:[%s6139 + $0x54] sm:$0xf]
        %v6404 = vld [vmem:[%s6139 + $0x58] sm:$0xf]
        %v6405 = vld [vmem:[%s6139 + $0x5c] sm:$0x1]
        %v6407 = vshrl.u32 %v6382, 16
        %v6409 = vrot.slane %v6407, 4
        %v6410 = vshll.u32 %v6382, 16
        %v6412 = vrot.slane %v6410, 5
        %v6413 = vor.u32 %v6409, %v6412
        %v6414 = vrot.slane %v6413, 4
        %v6416 = vshll.u32 %v6383, 16
        %v6418 = vrot.slane %v6416, 5
        %v6419 = vsel %vm441, %v6414, %v6418
        %v6420 = vshrl.u32 %v6383, 16
        %v6422 = vrot.slane %v6420, 4
        %v6423 = vor.u32 %v6422, %v6418
        %v6424 = vrot.slane %v6423, 4
        %v6426 = vshll.u32 %v6384, 16
        %v6428 = vrot.slane %v6426, 5
        %v6429 = vsel %vm441, %v6424, %v6428
        %v6431 = vshrl.u32 %v6385, 16
        %v6433 = vrot.slane %v6431, 4
        %v6434 = vshll.u32 %v6385, 16
        %v6436 = vrot.slane %v6434, 5
        %v6437 = vor.u32 %v6433, %v6436
        %v6438 = vrot.slane %v6437, 4
        %v6440 = vshll.u32 %v6386, 16
        %v6442 = vrot.slane %v6440, 5
        %v6443 = vsel %vm441, %v6438, %v6442
        %v6444 = vshrl.u32 %v6386, 16
        %v6446 = vrot.slane %v6444, 4
        %v6447 = vor.u32 %v6446, %v6442
        %v6448 = vrot.slane %v6447, 4
        %v6450 = vshll.u32 %v6387, 16
        %v6452 = vrot.slane %v6450, 5
        %v6453 = vsel %vm441, %v6448, %v6452
        %v6455 = vshrl.u32 %v6388, 16
        %v6457 = vrot.slane %v6455, 4
        %v6458 = vshll.u32 %v6388, 16
        %v6460 = vrot.slane %v6458, 5
        %v6461 = vor.u32 %v6457, %v6460
        %v6462 = vrot.slane %v6461, 4
        %v6464 = vshll.u32 %v6389, 16
        %v6466 = vrot.slane %v6464, 5
        %v6467 = vsel %vm441, %v6462, %v6466
        %v6468 = vshrl.u32 %v6389, 16
        %v6470 = vrot.slane %v6468, 4
        %v6471 = vor.u32 %v6470, %v6466
        %v6472 = vrot.slane %v6471, 4
        %v6474 = vshll.u32 %v6390, 16
        %v6476 = vrot.slane %v6474, 5
        %v6477 = vsel %vm441, %v6472, %v6476
        %v6479 = vshrl.u32 %v6391, 16
        %v6481 = vrot.slane %v6479, 4
        %v6482 = vshll.u32 %v6391, 16
        %v6484 = vrot.slane %v6482, 5
        %v6485 = vor.u32 %v6481, %v6484
        %v6486 = vrot.slane %v6485, 4
        %v6488 = vshll.u32 %v6392, 16
        %v6490 = vrot.slane %v6488, 5
        %v6491 = vsel %vm441, %v6486, %v6490
        %v6492 = vshrl.u32 %v6392, 16
        %v6494 = vrot.slane %v6492, 4
        %v6495 = vor.u32 %v6494, %v6490
        %v6496 = vrot.slane %v6495, 4
        %v6498 = vshll.u32 %v6393, 16
        %v6500 = vrot.slane %v6498, 5
        %v6501 = vsel %vm441, %v6496, %v6500
        %v6503 = vshrl.u32 %v6394, 16
        %v6505 = vrot.slane %v6503, 4
        %v6506 = vshll.u32 %v6394, 16
        %v6508 = vrot.slane %v6506, 5
        %v6509 = vor.u32 %v6505, %v6508
        %v6510 = vrot.slane %v6509, 4
        %v6512 = vshll.u32 %v6395, 16
        %v6514 = vrot.slane %v6512, 5
        %v6515 = vsel %vm441, %v6510, %v6514
        %v6516 = vshrl.u32 %v6395, 16
        %v6518 = vrot.slane %v6516, 4
        %v6519 = vor.u32 %v6518, %v6514
        %v6520 = vrot.slane %v6519, 4
        %v6522 = vshll.u32 %v6396, 16
        %v6524 = vrot.slane %v6522, 5
        %v6525 = vsel %vm441, %v6520, %v6524
        %v6527 = vshrl.u32 %v6397, 16
        %v6529 = vrot.slane %v6527, 4
        %v6530 = vshll.u32 %v6397, 16
        %v6532 = vrot.slane %v6530, 5
        %v6533 = vor.u32 %v6529, %v6532
        %v6534 = vrot.slane %v6533, 4
        %v6536 = vshll.u32 %v6398, 16
        %v6538 = vrot.slane %v6536, 5
        %v6539 = vsel %vm441, %v6534, %v6538
        %v6540 = vshrl.u32 %v6398, 16
        %v6542 = vrot.slane %v6540, 4
        %v6543 = vor.u32 %v6542, %v6538
        %v6544 = vrot.slane %v6543, 4
        %v6546 = vshll.u32 %v6399, 16
        %v6548 = vrot.slane %v6546, 5
        %v6549 = vsel %vm441, %v6544, %v6548
        %v6551 = vshrl.u32 %v6400, 16
        %v6553 = vrot.slane %v6551, 4
        %v6554 = vshll.u32 %v6400, 16
        %v6556 = vrot.slane %v6554, 5
        %v6557 = vor.u32 %v6553, %v6556
        %v6558 = vrot.slane %v6557, 4
        %v6560 = vshll.u32 %v6401, 16
        %v6562 = vrot.slane %v6560, 5
        %v6563 = vsel %vm441, %v6558, %v6562
        %v6564 = vshrl.u32 %v6401, 16
        %v6566 = vrot.slane %v6564, 4
        %v6567 = vor.u32 %v6566, %v6562
        %v6568 = vrot.slane %v6567, 4
        %v6570 = vshll.u32 %v6402, 16
        %v6572 = vrot.slane %v6570, 5
        %v6573 = vsel %vm441, %v6568, %v6572
        %v6575 = vshrl.u32 %v6403, 16
        %v6577 = vrot.slane %v6575, 4
        %v6578 = vshll.u32 %v6403, 16
        %v6580 = vrot.slane %v6578, 5
        %v6581 = vor.u32 %v6577, %v6580
        %v6582 = vrot.slane %v6581, 4
        %v6584 = vshll.u32 %v6404, 16
        %v6586 = vrot.slane %v6584, 5
        %v6587 = vsel %vm441, %v6582, %v6586
        %v6588 = vshrl.u32 %v6404, 16
        %v6590 = vrot.slane %v6588, 4
        %v6591 = vor.u32 %v6590, %v6586
        %v6592 = vrot.slane %v6591, 4
        %v6594 = vshll.u32 %v6405, 16
        %v6596 = vrot.slane %v6594, 5
        %v6597 = vsel %vm441, %v6592, %v6596
        %s6598 = scalar_lea.vmem [#allocation3], 448
        %v6599 = vld [vmem:[%s6598] sm:$0xf]
        %v6600 = vld [vmem:[%s6598 + $0x4] sm:$0xf]
        %v6601 = vld [vmem:[%s6598 + $0x8] sm:$0xf]
        %v6602 = vld [vmem:[%s6598 + $0xc] sm:$0xf]
        %v6603 = vld [vmem:[%s6598 + $0x10] sm:$0xf]
        %v6604 = vld [vmem:[%s6598 + $0x14] sm:$0xf]
        %v6605 = vld [vmem:[%s6598 + $0x18] sm:$0xf]
        %v6606 = vld [vmem:[%s6598 + $0x1c] sm:$0xf]
        %v6607 = vld [vmem:[%s6598 + $0x20] sm:$0xf]
        %v6608 = vld [vmem:[%s6598 + $0x24] sm:$0xf]
        %v6609 = vld [vmem:[%s6598 + $0x28] sm:$0xf]
        %v6610 = vld [vmem:[%s6598 + $0x2c] sm:$0xf]
        %v6611 = vld [vmem:[%s6598 + $0x30] sm:$0xf]
        %v6612 = vld [vmem:[%s6598 + $0x34] sm:$0xf]
        %v6613 = vld [vmem:[%s6598 + $0x38] sm:$0xf]
        %v6614 = vld [vmem:[%s6598 + $0x3c] sm:$0xf]
        %v6615 = vunpack.c.l.b16 %v6419
        %v6616 = vunpack.c.l.b16 %v6429
        %v6617 = vunpack.c.l.b16 %v6443
        %v6618 = vunpack.c.l.b16 %v6453
        %v6619 = vunpack.c.l.b16 %v6467
        %v6620 = vunpack.c.l.b16 %v6477
        %v6621 = vunpack.c.l.b16 %v6491
        %v6622 = vunpack.c.l.b16 %v6501
        %v6623 = vunpack.c.l.b16 %v6515
        %v6624 = vunpack.c.l.b16 %v6525
        %v6625 = vunpack.c.l.b16 %v6539
        %v6626 = vunpack.c.l.b16 %v6549
        %v6627 = vunpack.c.l.b16 %v6563
        %v6628 = vunpack.c.l.b16 %v6573
        %v6629 = vunpack.c.l.b16 %v6587
        %v6630 = vunpack.c.l.b16 %v6597
        %v6631 = vpack.c.b16 %v6616, %v6615
        %v6632 = vpack.c.b16 %v6618, %v6617
        %v6633 = vpack.c.b16 %v6620, %v6619
        %v6634 = vpack.c.b16 %v6622, %v6621
        %v6635 = vpack.c.b16 %v6624, %v6623
        %v6636 = vpack.c.b16 %v6626, %v6625
        %v6637 = vpack.c.b16 %v6628, %v6627
        %v6638 = vpack.c.b16 %v6630, %v6629
        %v6663 = vunpack.c.l.b16 %v6599
        %v6664 = vunpack.c.l.b16 %v6600
        %v6665 = vunpack.c.l.b16 %v6601
        %v6666 = vunpack.c.l.b16 %v6602
        %v6667 = vunpack.c.l.b16 %v6603
        %v6668 = vunpack.c.l.b16 %v6604
        %v6669 = vunpack.c.l.b16 %v6605
        %v6670 = vunpack.c.l.b16 %v6606
        %v6671 = vunpack.c.l.b16 %v6607
        %v6672 = vunpack.c.l.b16 %v6608
        %v6673 = vunpack.c.l.b16 %v6609
        %v6674 = vunpack.c.l.b16 %v6610
        %v6675 = vunpack.c.l.b16 %v6611
        %v6676 = vunpack.c.l.b16 %v6612
        %v6677 = vunpack.c.l.b16 %v6613
        %v6678 = vunpack.c.l.b16 %v6614
        %v6679 = vpack.c.b16 %v6664, %v6663
        %v6680 = vpack.c.b16 %v6666, %v6665
        %v6681 = vpack.c.b16 %v6668, %v6667
        %v6682 = vpack.c.b16 %v6670, %v6669
        %v6683 = vpack.c.b16 %v6672, %v6671
        %v6684 = vpack.c.b16 %v6674, %v6673
        %v6685 = vpack.c.b16 %v6676, %v6675
        %v6686 = vpack.c.b16 %v6678, %v6677
        %6695 = vmatprep.subr.bf16.mxu0 0
        %6696 = vmatpush1.bf16.msra.mxu0 %v6679
        %6697 = vmatprep.subr.bf16.mxu0 0
        %6698 = vmatpush1.bf16.msra.mxu0 %v6680
        %6699 = vmatprep.subr.bf16.mxu0 0
        %6700 = vmatpush1.bf16.msra.mxu0 %v6681
        %6701 = vmatprep.subr.bf16.mxu0 0
        %6702 = vmatpush1.bf16.msra.mxu0 %v6682
        %6703 = vmatprep.subr.bf16.mxu0 0
        %6704 = vmatpush1.bf16.msra.mxu0 %v6683
        %6705 = vmatprep.subr.bf16.mxu0 0
        %6706 = vmatpush1.bf16.msra.mxu0 %v6684
        %6707 = vmatprep.subr.bf16.mxu0 0
        %6708 = vmatpush1.bf16.msra.mxu0 %v6685
        %6709 = vmatprep.subr.bf16.mxu0 0
        %6710 = vmatpush1.bf16.msra.mxu0 %v6686
        %6711 = vmatprep.subr.bf16.mxu0 0
        %6712 = vmatpush1.bf16.msra.mxu0 0
        %6713 = vmatprep.subr.bf16.mxu0 0
        %6714 = vmatpush1.bf16.msra.mxu0 0
        %6715 = vmatprep.subr.bf16.mxu0 0
        %6716 = vmatpush1.bf16.msra.mxu0 0
        %6717 = vmatprep.subr.bf16.mxu0 0
        %6718 = vmatpush1.bf16.msra.mxu0 0
        %6719 = vmatprep.subr.bf16.mxu0 0
        %6720 = vmatpush1.bf16.msra.mxu0 0
        %6721 = vmatprep.subr.bf16.mxu0 0
        %6722 = vmatpush1.bf16.msra.mxu0 0
        %6723 = vmatprep.subr.bf16.mxu0 0
        %6724 = vmatpush1.bf16.msra.mxu0 0
        %6725 = vmatprep.subr.bf16.mxu0 0
        %6726 = vmatpush1.bf16.msra.mxu0 0
        %6727 = vmatprep.mubr.bf16.mxu0 0
        %6728 = vmatmul.mubr.bf16.gmra.mrb[0].mxu0 %v6631
        %v6729 = vpop.f32.mrb[0].mxu0
        %v6730 = vadd.f32 0.0, %v6729
        %v6731 = vpop.f32.mrb[0].mxu0
        %v6732 = vpop.f32.mrb[0].mxu0
        %v6733 = vadd.f32 0.0, %v6732
        %v6734 = vpop.f32.mrb[0].mxu0
        %6735 = vmatprep.mubr.bf16.mxu0 0
        %6736 = vmatmul.mubr.bf16.gmra.mrb[0].mxu0 %v6632
        %v6737 = vpop.f32.mrb[0].mxu0
        %v6738 = vadd.f32 0.0, %v6737
        %v6739 = vpop.f32.mrb[0].mxu0
        %v6740 = vpop.f32.mrb[0].mxu0
        %v6741 = vadd.f32 0.0, %v6740
        %v6742 = vpop.f32.mrb[0].mxu0
        %6743 = vmatprep.mubr.bf16.mxu0 0
        %6744 = vmatmul.mubr.bf16.gmra.mrb[0].mxu0 %v6633
        %v6745 = vpop.f32.mrb[0].mxu0
        %v6746 = vadd.f32 0.0, %v6745
        %v6747 = vpop.f32.mrb[0].mxu0
        %v6748 = vpop.f32.mrb[0].mxu0
        %v6749 = vadd.f32 0.0, %v6748
        %v6750 = vpop.f32.mrb[0].mxu0
        %6751 = vmatprep.mubr.bf16.mxu0 0
        %6752 = vmatmul.mubr.bf16.gmra.mrb[0].mxu0 %v6634
        %v6753 = vpop.f32.mrb[0].mxu0
        %v6754 = vadd.f32 0.0, %v6753
        %v6755 = vpop.f32.mrb[0].mxu0
        %v6756 = vpop.f32.mrb[0].mxu0
        %v6757 = vadd.f32 0.0, %v6756
        %v6758 = vpop.f32.mrb[0].mxu0
        %6759 = vmatprep.mubr.bf16.mxu0 0
        %6760 = vmatmul.mubr.bf16.gmra.mrb[0].mxu0 %v6635
        %v6761 = vpop.f32.mrb[0].mxu0
        %v6762 = vadd.f32 0.0, %v6761
        %v6763 = vpop.f32.mrb[0].mxu0
        %v6764 = vpop.f32.mrb[0].mxu0
        %v6765 = vadd.f32 0.0, %v6764
        %v6766 = vpop.f32.mrb[0].mxu0
        %6767 = vmatprep.mubr.bf16.mxu0 0
        %6768 = vmatmul.mubr.bf16.gmra.mrb[0].mxu0 %v6636
        %v6769 = vpop.f32.mrb[0].mxu0
        %v6770 = vadd.f32 0.0, %v6769
        %v6771 = vpop.f32.mrb[0].mxu0
        %v6772 = vpop.f32.mrb[0].mxu0
        %v6773 = vadd.f32 0.0, %v6772
        %v6774 = vpop.f32.mrb[0].mxu0
        %6775 = vmatprep.mubr.bf16.mxu0 0
        %6776 = vmatmul.mubr.bf16.gmra.mrb[0].mxu0 %v6637
        %v6777 = vpop.f32.mrb[0].mxu0
        %v6778 = vadd.f32 0.0, %v6777
        %v6779 = vpop.f32.mrb[0].mxu0
        %v6780 = vpop.f32.mrb[0].mxu0
        %v6781 = vadd.f32 0.0, %v6780
        %v6782 = vpop.f32.mrb[0].mxu0
        %6783 = vmatprep.mubr.bf16.mxu0 0
        %6784 = vmatmul.mubr.bf16.gmra.mrb[0].mxu0 %v6638
        %v6785 = vpop.f32.mrb[0].mxu0
        %v6786 = vadd.f32 0.0, %v6785
        %v6787 = vpop.f32.mrb[0].mxu0
        %v6788 = vpop.f32.mrb[0].mxu0
        %v6789 = vadd.f32 0.0, %v6788
        %v6790 = vpop.f32.mrb[0].mxu0
        %6791 = vdwg.mxu0
        %v6792 = vadd.f32 %v6366, %v6730
        %v6793 = vadd.f32 %v6367, %v6733
        %v6794 = vadd.f32 %v6368, %v6738
        %v6795 = vadd.f32 %v6369, %v6741
        %v6796 = vadd.f32 %v6370, %v6746
        %v6797 = vadd.f32 %v6371, %v6749
        %v6798 = vadd.f32 %v6372, %v6754
        %v6799 = vadd.f32 %v6373, %v6757
        %v6800 = vadd.f32 %v6374, %v6762
        %v6801 = vadd.f32 %v6375, %v6765
        %v6802 = vadd.f32 %v6376, %v6770
        %v6803 = vadd.f32 %v6377, %v6773
        %v6804 = vadd.f32 %v6378, %v6778
        %v6805 = vadd.f32 %v6379, %v6781
        %v6806 = vadd.f32 %v6380, %v6786
        %v6807 = vadd.f32 %v6381, %v6789
        %v6808 = vld [vmem:[%s6139] sm:$0xe]
        %v6809 = vld [vmem:[%s6139 + $0xc] sm:$0xe]
        %v6810 = vld [vmem:[%s6139 + $0x18] sm:$0xe]
        %v6811 = vld [vmem:[%s6139 + $0x24] sm:$0xe]
        %v6812 = vld [vmem:[%s6139 + $0x30] sm:$0xe]
        %v6813 = vld [vmem:[%s6139 + $0x3c] sm:$0xe]
        %v6814 = vld [vmem:[%s6139 + $0x48] sm:$0xe]
        %v6815 = vld [vmem:[%s6139 + $0x54] sm:$0xe]
        %v6840 = vrot.slane %v6808, 5
        %v6841 = vrot.slane %v6840, 4
        %v6842 = vrot.slane %v6383, 5
        %v6843 = vsel %vm1153, %v6841, %v6842
        %v6844 = vrot.slane %v6842, 4
        %v6845 = vrot.slane %v6384, 5
        %v6846 = vsel %vm1153, %v6844, %v6845
        %v6847 = vrot.slane %v6809, 5
        %v6848 = vrot.slane %v6847, 4
        %v6849 = vrot.slane %v6386, 5
        %v6850 = vsel %vm1153, %v6848, %v6849
        %v6851 = vrot.slane %v6849, 4
        %v6852 = vrot.slane %v6387, 5
        %v6853 = vsel %vm1153, %v6851, %v6852
        %v6854 = vrot.slane %v6810, 5
        %v6855 = vrot.slane %v6854, 4
        %v6856 = vrot.slane %v6389, 5
        %v6857 = vsel %vm1153, %v6855, %v6856
        %v6858 = vrot.slane %v6856, 4
        %v6859 = vrot.slane %v6390, 5
        %v6860 = vsel %vm1153, %v6858, %v6859
        %v6861 = vrot.slane %v6811, 5
        %v6862 = vrot.slane %v6861, 4
        %v6863 = vrot.slane %v6392, 5
        %v6864 = vsel %vm1153, %v6862, %v6863
        %v6865 = vrot.slane %v6863, 4
        %v6866 = vrot.slane %v6393, 5
        %v6867 = vsel %vm1153, %v6865, %v6866
        %v6868 = vrot.slane %v6812, 5
        %v6869 = vrot.slane %v6868, 4
        %v6870 = vrot.slane %v6395, 5
        %v6871 = vsel %vm1153, %v6869, %v6870
        %v6872 = vrot.slane %v6870, 4
        %v6873 = vrot.slane %v6396, 5
        %v6874 = vsel %vm1153, %v6872, %v6873
        %v6875 = vrot.slane %v6813, 5
        %v6876 = vrot.slane %v6875, 4
        %v6877 = vrot.slane %v6398, 5
        %v6878 = vsel %vm1153, %v6876, %v6877
        %v6879 = vrot.slane %v6877, 4
        %v6880 = vrot.slane %v6399, 5
        %v6881 = vsel %vm1153, %v6879, %v6880
        %v6882 = vrot.slane %v6814, 5
        %v6883 = vrot.slane %v6882, 4
        %v6884 = vrot.slane %v6401, 5
        %v6885 = vsel %vm1153, %v6883, %v6884
        %v6886 = vrot.slane %v6884, 4
        %v6887 = vrot.slane %v6402, 5
        %v6888 = vsel %vm1153, %v6886, %v6887
        %v6889 = vrot.slane %v6815, 5
        %v6890 = vrot.slane %v6889, 4
        %v6891 = vrot.slane %v6404, 5
        %v6892 = vsel %vm1153, %v6890, %v6891
        %v6893 = vrot.slane %v6891, 4
        %v6894 = vrot.slane %v6405, 5
        %v6895 = vsel %vm1153, %v6893, %v6894
        %s6896 = scalar_lea.vmem [#allocation3], 512
        %v6897 = vld [vmem:[%s6896] sm:$0xf]
        %v6898 = vld [vmem:[%s6896 + $0x4] sm:$0xf]
        %v6899 = vld [vmem:[%s6896 + $0x8] sm:$0xf]
        %v6900 = vld [vmem:[%s6896 + $0xc] sm:$0xf]
        %v6901 = vld [vmem:[%s6896 + $0x10] sm:$0xf]
        %v6902 = vld [vmem:[%s6896 + $0x14] sm:$0xf]
        %v6903 = vld [vmem:[%s6896 + $0x18] sm:$0xf]
        %v6904 = vld [vmem:[%s6896 + $0x1c] sm:$0xf]
        %v6905 = vld [vmem:[%s6896 + $0x20] sm:$0xf]
        %v6906 = vld [vmem:[%s6896 + $0x24] sm:$0xf]
        %v6907 = vld [vmem:[%s6896 + $0x28] sm:$0xf]
        %v6908 = vld [vmem:[%s6896 + $0x2c] sm:$0xf]
        %v6909 = vld [vmem:[%s6896 + $0x30] sm:$0xf]
        %v6910 = vld [vmem:[%s6896 + $0x34] sm:$0xf]
        %v6911 = vld [vmem:[%s6896 + $0x38] sm:$0xf]
        %v6912 = vld [vmem:[%s6896 + $0x3c] sm:$0xf]
        %v6913 = vunpack.c.l.b16 %v6843
        %v6914 = vunpack.c.l.b16 %v6846
        %v6915 = vunpack.c.l.b16 %v6850
        %v6916 = vunpack.c.l.b16 %v6853
        %v6917 = vunpack.c.l.b16 %v6857
        %v6918 = vunpack.c.l.b16 %v6860
        %v6919 = vunpack.c.l.b16 %v6864
        %v6920 = vunpack.c.l.b16 %v6867
        %v6921 = vunpack.c.l.b16 %v6871
        %v6922 = vunpack.c.l.b16 %v6874
        %v6923 = vunpack.c.l.b16 %v6878
        %v6924 = vunpack.c.l.b16 %v6881
        %v6925 = vunpack.c.l.b16 %v6885
        %v6926 = vunpack.c.l.b16 %v6888
        %v6927 = vunpack.c.l.b16 %v6892
        %v6928 = vunpack.c.l.b16 %v6895
        %v6929 = vpack.c.b16 %v6914, %v6913
        %v6930 = vpack.c.b16 %v6916, %v6915
        %v6931 = vpack.c.b16 %v6918, %v6917
        %v6932 = vpack.c.b16 %v6920, %v6919
        %v6933 = vpack.c.b16 %v6922, %v6921
        %v6934 = vpack.c.b16 %v6924, %v6923
        %v6935 = vpack.c.b16 %v6926, %v6925
        %v6936 = vpack.c.b16 %v6928, %v6927
        %v6961 = vunpack.c.l.b16 %v6897
        %v6962 = vunpack.c.l.b16 %v6898
        %v6963 = vunpack.c.l.b16 %v6899
        %v6964 = vunpack.c.l.b16 %v6900
        %v6965 = vunpack.c.l.b16 %v6901
        %v6966 = vunpack.c.l.b16 %v6902
        %v6967 = vunpack.c.l.b16 %v6903
        %v6968 = vunpack.c.l.b16 %v6904
        %v6969 = vunpack.c.l.b16 %v6905
        %v6970 = vunpack.c.l.b16 %v6906
        %v6971 = vunpack.c.l.b16 %v6907
        %v6972 = vunpack.c.l.b16 %v6908
        %v6973 = vunpack.c.l.b16 %v6909
        %v6974 = vunpack.c.l.b16 %v6910
        %v6975 = vunpack.c.l.b16 %v6911
        %v6976 = vunpack.c.l.b16 %v6912
        %v6977 = vpack.c.b16 %v6962, %v6961
        %v6978 = vpack.c.b16 %v6964, %v6963
        %v6979 = vpack.c.b16 %v6966, %v6965
        %v6980 = vpack.c.b16 %v6968, %v6967
        %v6981 = vpack.c.b16 %v6970, %v6969
        %v6982 = vpack.c.b16 %v6972, %v6971
        %v6983 = vpack.c.b16 %v6974, %v6973
        %v6984 = vpack.c.b16 %v6976, %v6975
        %6993 = vmatprep.subr.bf16.mxu0 0
        %6994 = vmatpush1.bf16.msra.mxu0 %v6977
        %6995 = vmatprep.subr.bf16.mxu0 0
        %6996 = vmatpush1.bf16.msra.mxu0 %v6978
        %6997 = vmatprep.subr.bf16.mxu0 0
        %6998 = vmatpush1.bf16.msra.mxu0 %v6979
        %6999 = vmatprep.subr.bf16.mxu0 0
        %7000 = vmatpush1.bf16.msra.mxu0 %v6980
        %7001 = vmatprep.subr.bf16.mxu0 0
        %7002 = vmatpush1.bf16.msra.mxu0 %v6981
        %7003 = vmatprep.subr.bf16.mxu0 0
        %7004 = vmatpush1.bf16.msra.mxu0 %v6982
        %7005 = vmatprep.subr.bf16.mxu0 0
        %7006 = vmatpush1.bf16.msra.mxu0 %v6983
        %7007 = vmatprep.subr.bf16.mxu0 0
        %7008 = vmatpush1.bf16.msra.mxu0 %v6984
        %7009 = vmatprep.subr.bf16.mxu0 0
        %7010 = vmatpush1.bf16.msra.mxu0 0
        %7011 = vmatprep.subr.bf16.mxu0 0
        %7012 = vmatpush1.bf16.msra.mxu0 0
        %7013 = vmatprep.subr.bf16.mxu0 0
        %7014 = vmatpush1.bf16.msra.mxu0 0
        %7015 = vmatprep.subr.bf16.mxu0 0
        %7016 = vmatpush1.bf16.msra.mxu0 0
        %7017 = vmatprep.subr.bf16.mxu0 0
        %7018 = vmatpush1.bf16.msra.mxu0 0
        %7019 = vmatprep.subr.bf16.mxu0 0
        %7020 = vmatpush1.bf16.msra.mxu0 0
        %7021 = vmatprep.subr.bf16.mxu0 0
        %7022 = vmatpush1.bf16.msra.mxu0 0
        %7023 = vmatprep.subr.bf16.mxu0 0
        %7024 = vmatpush1.bf16.msra.mxu0 0
        %7025 = vmatprep.mubr.bf16.mxu0 0
        %7026 = vmatmul.mubr.bf16.gmra.mrb[0].mxu0 %v6929
        %v7027 = vpop.f32.mrb[0].mxu0
        %v7028 = vadd.f32 0.0, %v7027
        %v7029 = vpop.f32.mrb[0].mxu0
        %v7030 = vpop.f32.mrb[0].mxu0
        %v7031 = vadd.f32 0.0, %v7030
        %v7032 = vpop.f32.mrb[0].mxu0
        %7033 = vmatprep.mubr.bf16.mxu0 0
        %7034 = vmatmul.mubr.bf16.gmra.mrb[0].mxu0 %v6930
        %v7035 = vpop.f32.mrb[0].mxu0
        %v7036 = vadd.f32 0.0, %v7035
        %v7037 = vpop.f32.mrb[0].mxu0
        %v7038 = vpop.f32.mrb[0].mxu0
        %v7039 = vadd.f32 0.0, %v7038
        %v7040 = vpop.f32.mrb[0].mxu0
        %7041 = vmatprep.mubr.bf16.mxu0 0
        %7042 = vmatmul.mubr.bf16.gmra.mrb[0].mxu0 %v6931
        %v7043 = vpop.f32.mrb[0].mxu0
        %v7044 = vadd.f32 0.0, %v7043
        %v7045 = vpop.f32.mrb[0].mxu0
        %v7046 = vpop.f32.mrb[0].mxu0
        %v7047 = vadd.f32 0.0, %v7046
        %v7048 = vpop.f32.mrb[0].mxu0
        %7049 = vmatprep.mubr.bf16.mxu0 0
        %7050 = vmatmul.mubr.bf16.gmra.mrb[0].mxu0 %v6932
        %v7051 = vpop.f32.mrb[0].mxu0
        %v7052 = vadd.f32 0.0, %v7051
        %v7053 = vpop.f32.mrb[0].mxu0
        %v7054 = vpop.f32.mrb[0].mxu0
        %v7055 = vadd.f32 0.0, %v7054
        %v7056 = vpop.f32.mrb[0].mxu0
        %7057 = vmatprep.mubr.bf16.mxu0 0
        %7058 = vmatmul.mubr.bf16.gmra.mrb[0].mxu0 %v6933
        %v7059 = vpop.f32.mrb[0].mxu0
        %v7060 = vadd.f32 0.0, %v7059
        %v7061 = vpop.f32.mrb[0].mxu0
        %v7062 = vpop.f32.mrb[0].mxu0
        %v7063 = vadd.f32 0.0, %v7062
        %v7064 = vpop.f32.mrb[0].mxu0
        %7065 = vmatprep.mubr.bf16.mxu0 0
        %7066 = vmatmul.mubr.bf16.gmra.mrb[0].mxu0 %v6934
        %v7067 = vpop.f32.mrb[0].mxu0
        %v7068 = vadd.f32 0.0, %v7067
        %v7069 = vpop.f32.mrb[0].mxu0
        %v7070 = vpop.f32.mrb[0].mxu0
        %v7071 = vadd.f32 0.0, %v7070
        %v7072 = vpop.f32.mrb[0].mxu0
        %7073 = vmatprep.mubr.bf16.mxu0 0
        %7074 = vmatmul.mubr.bf16.gmra.mrb[0].mxu0 %v6935
        %v7075 = vpop.f32.mrb[0].mxu0
        %v7076 = vadd.f32 0.0, %v7075
        %v7077 = vpop.f32.mrb[0].mxu0
        %v7078 = vpop.f32.mrb[0].mxu0
        %v7079 = vadd.f32 0.0, %v7078
        %v7080 = vpop.f32.mrb[0].mxu0
        %7081 = vmatprep.mubr.bf16.mxu0 0
        %7082 = vmatmul.mubr.bf16.gmra.mrb[0].mxu0 %v6936
        %v7083 = vpop.f32.mrb[0].mxu0
        %v7084 = vadd.f32 0.0, %v7083
        %v7085 = vpop.f32.mrb[0].mxu0
        %v7086 = vpop.f32.mrb[0].mxu0
        %v7087 = vadd.f32 0.0, %v7086
        %v7088 = vpop.f32.mrb[0].mxu0
        %7089 = vdwg.mxu0
        %v7090 = vadd.f32 %v6792, %v7028
        %v7091 = vadd.f32 %v6793, %v7031
        %v7092 = vadd.f32 %v6794, %v7036
        %v7093 = vadd.f32 %v6795, %v7039
        %v7094 = vadd.f32 %v6796, %v7044
        %v7095 = vadd.f32 %v6797, %v7047
        %v7096 = vadd.f32 %v6798, %v7052
        %v7097 = vadd.f32 %v6799, %v7055
        %v7098 = vadd.f32 %v6800, %v7060
        %v7099 = vadd.f32 %v6801, %v7063
        %v7100 = vadd.f32 %v6802, %v7068
        %v7101 = vadd.f32 %v6803, %v7071
        %v7102 = vadd.f32 %v6804, %v7076
        %v7103 = vadd.f32 %v6805, %v7079
        %v7104 = vadd.f32 %v6806, %v7084
        %v7105 = vadd.f32 %v6807, %v7087
        %v7106 = vld [vmem:[%s385] sm:$0xf]
        %v7107 = vld [vmem:[%s385 + $0x4] sm:$0xf]
        %v7108 = vld [vmem:[%s385 + $0x8] sm:$0xf]
        %v7109 = vld [vmem:[%s385 + $0xc] sm:$0xf]
        %v7110 = vld [vmem:[%s385 + $0x10] sm:$0xf]
        %v7111 = vld [vmem:[%s385 + $0x14] sm:$0xf]
        %v7112 = vld [vmem:[%s385 + $0x18] sm:$0xf]
        %v7113 = vld [vmem:[%s385 + $0x1c] sm:$0xf]
        %v7114 = vld [vmem:[%s385 + $0x20] sm:$0xf]
        %v7115 = vld [vmem:[%s385 + $0x24] sm:$0xf]
        %v7116 = vld [vmem:[%s385 + $0x28] sm:$0xf]
        %v7117 = vld [vmem:[%s385 + $0x2c] sm:$0xf]
        %v7118 = vld [vmem:[%s385 + $0x30] sm:$0xf]
        %v7119 = vld [vmem:[%s385 + $0x34] sm:$0xf]
        %v7120 = vld [vmem:[%s385 + $0x38] sm:$0xf]
        %v7121 = vld [vmem:[%s385 + $0x3c] sm:$0xf]
        %v7122 = vld [vmem:[#allocation6] sm:$0xf]
        %v7123 = vld [vmem:[#allocation6 + $0x4] sm:$0xf]
        %v7124 = vld [vmem:[#allocation6 + $0x8] sm:$0xf]
        %v7125 = vld [vmem:[#allocation6 + $0xc] sm:$0xf]
        %v7126 = vld [vmem:[#allocation6 + $0x10] sm:$0xf]
        %v7127 = vld [vmem:[#allocation6 + $0x14] sm:$0xf]
        %v7128 = vld [vmem:[#allocation6 + $0x18] sm:$0xf]
        %v7129 = vld [vmem:[#allocation6 + $0x1c] sm:$0xf]
        %v7130 = vld [vmem:[#allocation6 + $0x20] sm:$0xf]
        %v7131 = vld [vmem:[#allocation6 + $0x24] sm:$0xf]
        %v7132 = vld [vmem:[#allocation6 + $0x28] sm:$0xf]
        %v7133 = vld [vmem:[#allocation6 + $0x2c] sm:$0xf]
        %v7134 = vld [vmem:[#allocation6 + $0x30] sm:$0xf]
        %v7135 = vld [vmem:[#allocation6 + $0x34] sm:$0xf]
        %v7136 = vld [vmem:[#allocation6 + $0x38] sm:$0xf]
        %v7137 = vld [vmem:[#allocation6 + $0x3c] sm:$0xf]
        %v7154 = vunpack.c.l.b16 %v7106
        %v7155 = vunpack.c.l.b16 %v7107
        %v7156 = vunpack.c.l.b16 %v7108
        %v7157 = vunpack.c.l.b16 %v7109
        %v7158 = vunpack.c.l.b16 %v7110
        %v7159 = vunpack.c.l.b16 %v7111
        %v7160 = vunpack.c.l.b16 %v7112
        %v7161 = vunpack.c.l.b16 %v7113
        %v7162 = vunpack.c.l.b16 %v7114
        %v7163 = vunpack.c.l.b16 %v7115
        %v7164 = vunpack.c.l.b16 %v7116
        %v7165 = vunpack.c.l.b16 %v7117
        %v7166 = vunpack.c.l.b16 %v7118
        %v7167 = vunpack.c.l.b16 %v7119
        %v7168 = vunpack.c.l.b16 %v7120
        %v7169 = vunpack.c.l.b16 %v7121
        %v7170 = vpack.c.b16 %v7155, %v7154
        %v7171 = vpack.c.b16 %v7157, %v7156
        %v7172 = vpack.c.b16 %v7159, %v7158
        %v7173 = vpack.c.b16 %v7161, %v7160
        %v7174 = vpack.c.b16 %v7163, %v7162
        %v7175 = vpack.c.b16 %v7165, %v7164
        %v7176 = vpack.c.b16 %v7167, %v7166
        %v7177 = vpack.c.b16 %v7169, %v7168
        %v7202 = vunpack.c.l.b16 %v7122
        %v7203 = vunpack.c.l.b16 %v7123
        %v7204 = vunpack.c.l.b16 %v7124
        %v7205 = vunpack.c.l.b16 %v7125
        %v7206 = vunpack.c.l.b16 %v7126
        %v7207 = vunpack.c.l.b16 %v7127
        %v7208 = vunpack.c.l.b16 %v7128
        %v7209 = vunpack.c.l.b16 %v7129
        %v7210 = vunpack.c.l.b16 %v7130
        %v7211 = vunpack.c.l.b16 %v7131
        %v7212 = vunpack.c.l.b16 %v7132
        %v7213 = vunpack.c.l.b16 %v7133
        %v7214 = vunpack.c.l.b16 %v7134
        %v7215 = vunpack.c.l.b16 %v7135
        %v7216 = vunpack.c.l.b16 %v7136
        %v7217 = vunpack.c.l.b16 %v7137
        %v7218 = vpack.c.b16 %v7203, %v7202
        %v7219 = vpack.c.b16 %v7205, %v7204
        %v7220 = vpack.c.b16 %v7207, %v7206
        %v7221 = vpack.c.b16 %v7209, %v7208
        %v7222 = vpack.c.b16 %v7211, %v7210
        %v7223 = vpack.c.b16 %v7213, %v7212
        %v7224 = vpack.c.b16 %v7215, %v7214
        %v7225 = vpack.c.b16 %v7217, %v7216
        %7234 = vmatprep.subr.bf16.mxu0 0
        %7235 = vmatpush1.bf16.msra.mxu0 %v7218
        %7236 = vmatprep.subr.bf16.mxu0 0
        %7237 = vmatpush1.bf16.msra.mxu0 %v7219
        %7238 = vmatprep.subr.bf16.mxu0 0
        %7239 = vmatpush1.bf16.msra.mxu0 %v7220
        %7240 = vmatprep.subr.bf16.mxu0 0
        %7241 = vmatpush1.bf16.msra.mxu0 %v7221
        %7242 = vmatprep.subr.bf16.mxu0 0
        %7243 = vmatpush1.bf16.msra.mxu0 %v7222
        %7244 = vmatprep.subr.bf16.mxu0 0
        %7245 = vmatpush1.bf16.msra.mxu0 %v7223
        %7246 = vmatprep.subr.bf16.mxu0 0
        %7247 = vmatpush1.bf16.msra.mxu0 %v7224
        %7248 = vmatprep.subr.bf16.mxu0 0
        %7249 = vmatpush1.bf16.msra.mxu0 %v7225
        %7250 = vmatprep.subr.bf16.mxu0 0
        %7251 = vmatpush1.bf16.msra.mxu0 0
        %7252 = vmatprep.subr.bf16.mxu0 0
        %7253 = vmatpush1.bf16.msra.mxu0 0
        %7254 = vmatprep.subr.bf16.mxu0 0
        %7255 = vmatpush1.bf16.msra.mxu0 0
        %7256 = vmatprep.subr.bf16.mxu0 0
        %7257 = vmatpush1.bf16.msra.mxu0 0
        %7258 = vmatprep.subr.bf16.mxu0 0
        %7259 = vmatpush1.bf16.msra.mxu0 0
        %7260 = vmatprep.subr.bf16.mxu0 0
        %7261 = vmatpush1.bf16.msra.mxu0 0
        %7262 = vmatprep.subr.bf16.mxu0 0
        %7263 = vmatpush1.bf16.msra.mxu0 0
        %7264 = vmatprep.subr.bf16.mxu0 0
        %7265 = vmatpush1.bf16.msra.mxu0 0
        %7266 = vmatprep.mubr.bf16.mxu0 0
        %7267 = vmatmul.mubr.bf16.gmra.mrb[0].mxu0 %v7170
        %v7268 = vpop.f32.mrb[0].mxu0
        %v7269 = vadd.f32 0.0, %v7268
        %v7270 = vpop.f32.mrb[0].mxu0
        %v7271 = vpop.f32.mrb[0].mxu0
        %v7272 = vadd.f32 0.0, %v7271
        %v7273 = vpop.f32.mrb[0].mxu0
        %7274 = vmatprep.mubr.bf16.mxu0 0
        %7275 = vmatmul.mubr.bf16.gmra.mrb[0].mxu0 %v7171
        %v7276 = vpop.f32.mrb[0].mxu0
        %v7277 = vadd.f32 0.0, %v7276
        %v7278 = vpop.f32.mrb[0].mxu0
        %v7279 = vpop.f32.mrb[0].mxu0
        %v7280 = vadd.f32 0.0, %v7279
        %v7281 = vpop.f32.mrb[0].mxu0
        %7282 = vmatprep.mubr.bf16.mxu0 0
        %7283 = vmatmul.mubr.bf16.gmra.mrb[0].mxu0 %v7172
        %v7284 = vpop.f32.mrb[0].mxu0
        %v7285 = vadd.f32 0.0, %v7284
        %v7286 = vpop.f32.mrb[0].mxu0
        %v7287 = vpop.f32.mrb[0].mxu0
        %v7288 = vadd.f32 0.0, %v7287
        %v7289 = vpop.f32.mrb[0].mxu0
        %7290 = vmatprep.mubr.bf16.mxu0 0
        %7291 = vmatmul.mubr.bf16.gmra.mrb[0].mxu0 %v7173
        %v7292 = vpop.f32.mrb[0].mxu0
        %v7293 = vadd.f32 0.0, %v7292
        %v7294 = vpop.f32.mrb[0].mxu0
        %v7295 = vpop.f32.mrb[0].mxu0
        %v7296 = vadd.f32 0.0, %v7295
        %v7297 = vpop.f32.mrb[0].mxu0
        %7298 = vmatprep.mubr.bf16.mxu0 0
        %7299 = vmatmul.mubr.bf16.gmra.mrb[0].mxu0 %v7174
        %v7300 = vpop.f32.mrb[0].mxu0
        %v7301 = vadd.f32 0.0, %v7300
        %v7302 = vpop.f32.mrb[0].mxu0
        %v7303 = vpop.f32.mrb[0].mxu0
        %v7304 = vadd.f32 0.0, %v7303
        %v7305 = vpop.f32.mrb[0].mxu0
        %7306 = vmatprep.mubr.bf16.mxu0 0
        %7307 = vmatmul.mubr.bf16.gmra.mrb[0].mxu0 %v7175
        %v7308 = vpop.f32.mrb[0].mxu0
        %v7309 = vadd.f32 0.0, %v7308
        %v7310 = vpop.f32.mrb[0].mxu0
        %v7311 = vpop.f32.mrb[0].mxu0
        %v7312 = vadd.f32 0.0, %v7311
        %v7313 = vpop.f32.mrb[0].mxu0
        %7314 = vmatprep.mubr.bf16.mxu0 0
        %7315 = vmatmul.mubr.bf16.gmra.mrb[0].mxu0 %v7176
        %v7316 = vpop.f32.mrb[0].mxu0
        %v7317 = vadd.f32 0.0, %v7316
        %v7318 = vpop.f32.mrb[0].mxu0
        %v7319 = vpop.f32.mrb[0].mxu0
        %v7320 = vadd.f32 0.0, %v7319
        %v7321 = vpop.f32.mrb[0].mxu0
        %7322 = vmatprep.mubr.bf16.mxu0 0
        %7323 = vmatmul.mubr.bf16.gmra.mrb[0].mxu0 %v7177
        %v7324 = vpop.f32.mrb[0].mxu0
        %v7325 = vadd.f32 0.0, %v7324
        %v7326 = vpop.f32.mrb[0].mxu0
        %v7327 = vpop.f32.mrb[0].mxu0
        %v7328 = vadd.f32 0.0, %v7327
        %v7329 = vpop.f32.mrb[0].mxu0
        %7330 = vdwg.mxu0
        %v7331 = vadd.f32 %v7090, %v7269
        %v7332 = vadd.f32 %v7091, %v7272
        %v7333 = vadd.f32 %v7092, %v7277
        %v7334 = vadd.f32 %v7093, %v7280
        %v7335 = vadd.f32 %v7094, %v7285
        %v7336 = vadd.f32 %v7095, %v7288
        %v7337 = vadd.f32 %v7096, %v7293
        %v7338 = vadd.f32 %v7097, %v7296
        %v7339 = vadd.f32 %v7098, %v7301
        %v7340 = vadd.f32 %v7099, %v7304
        %v7341 = vadd.f32 %v7100, %v7309
        %v7342 = vadd.f32 %v7101, %v7312
        %v7343 = vadd.f32 %v7102, %v7317
        %v7344 = vadd.f32 %v7103, %v7320
        %v7345 = vadd.f32 %v7104, %v7325
        %v7346 = vadd.f32 %v7105, %v7328
        %v7347 = vld [vmem:[%s7] sm:$0x1]
        %v7349 = vlaneseq
        %v7350 = vshrl.u32 %v7349, 7
        %v7351 = vsub.s32 0, %v7350
        %v7352 = vrot.slane %v7347, %v7351
        %v7354 = vadd.f32 %v7331, %v7352
        %v7355 = vadd.f32 %v7332, %v7352
        %v7356 = vadd.f32 %v7333, %v7352
        %v7357 = vadd.f32 %v7334, %v7352
        %v7358 = vadd.f32 %v7335, %v7352
        %v7359 = vadd.f32 %v7336, %v7352
        %v7360 = vadd.f32 %v7337, %v7352
        %v7361 = vadd.f32 %v7338, %v7352
        %v7362 = vadd.f32 %v7339, %v7352
        %v7363 = vadd.f32 %v7340, %v7352
        %v7364 = vadd.f32 %v7341, %v7352
        %v7365 = vadd.f32 %v7342, %v7352
        %v7366 = vadd.f32 %v7343, %v7352
        %v7367 = vadd.f32 %v7344, %v7352
        %v7368 = vadd.f32 %v7345, %v7352
        %v7369 = vadd.f32 %v7346, %v7352
        %v7370 = vmax.f32 %v7354, 0.0
        %v7371 = vmax.f32 %v7355, 0.0
        %v7372 = vmax.f32 %v7356, 0.0
        %v7373 = vmax.f32 %v7357, 0.0
        %v7374 = vmax.f32 %v7358, 0.0
        %v7375 = vmax.f32 %v7359, 0.0
        %v7376 = vmax.f32 %v7360, 0.0
        %v7377 = vmax.f32 %v7361, 0.0
        %v7378 = vmax.f32 %v7362, 0.0
        %v7379 = vmax.f32 %v7363, 0.0
        %v7380 = vmax.f32 %v7364, 0.0
        %v7381 = vmax.f32 %v7365, 0.0
        %v7382 = vmax.f32 %v7366, 0.0
        %v7383 = vmax.f32 %v7367, 0.0
        %v7384 = vmax.f32 %v7368, 0.0
        %v7385 = vmax.f32 %v7369, 0.0
        %v7386 = vpack.c.bf16 %v7371, %v7370
        %v7387 = vpack.c.bf16 %v7373, %v7372
        %v7388 = vpack.c.bf16 %v7375, %v7374
        %v7389 = vpack.c.bf16 %v7377, %v7376
        %v7390 = vpack.c.bf16 %v7379, %v7378
        %v7391 = vpack.c.bf16 %v7381, %v7380
        %v7392 = vpack.c.bf16 %v7383, %v7382
        %v7393 = vpack.c.bf16 %v7385, %v7384
        %v7402 = vunpack.c.l.b16 %v7386
        %v7403 = vunpack.c.h.b16 %v7386
        %v7404 = vunpack.c.l.b16 %v7387
        %v7405 = vunpack.c.h.b16 %v7387
        %v7406 = vunpack.c.l.b16 %v7388
        %v7407 = vunpack.c.h.b16 %v7388
        %v7408 = vunpack.c.l.b16 %v7389
        %v7409 = vunpack.c.h.b16 %v7389
        %v7410 = vunpack.c.l.b16 %v7390
        %v7411 = vunpack.c.h.b16 %v7390
        %v7412 = vunpack.c.l.b16 %v7391
        %v7413 = vunpack.c.h.b16 %v7391
        %v7414 = vunpack.c.l.b16 %v7392
        %v7415 = vunpack.c.h.b16 %v7392
        %v7416 = vunpack.c.l.b16 %v7393
        %v7417 = vunpack.c.h.b16 %v7393
        %v7418 = vpack.c.b16 %v7402, %v7402
        %v7419 = vpack.c.b16 %v7403, %v7403
        %v7420 = vpack.c.b16 %v7404, %v7404
        %v7421 = vpack.c.b16 %v7405, %v7405
        %v7422 = vpack.c.b16 %v7406, %v7406
        %v7423 = vpack.c.b16 %v7407, %v7407
        %v7424 = vpack.c.b16 %v7408, %v7408
        %v7425 = vpack.c.b16 %v7409, %v7409
        %v7426 = vpack.c.b16 %v7410, %v7410
        %v7427 = vpack.c.b16 %v7411, %v7411
        %v7428 = vpack.c.b16 %v7412, %v7412
        %v7429 = vpack.c.b16 %v7413, %v7413
        %v7430 = vpack.c.b16 %v7414, %v7414
        %v7431 = vpack.c.b16 %v7415, %v7415
        %v7432 = vpack.c.b16 %v7416, %v7416
        %v7433 = vpack.c.b16 %v7417, %v7417
        %7450 = vst [vmem:[%s370] sm:$0xf] %v7418
        %7451 = vst [vmem:[%s370 + $0x4] sm:$0xf] %v7419
        %7452 = vst [vmem:[%s370 + $0x8] sm:$0xf] %v7420
        %7453 = vst [vmem:[%s370 + $0xc] sm:$0xf] %v7421
        %7454 = vst [vmem:[%s370 + $0x10] sm:$0xf] %v7422
        %7455 = vst [vmem:[%s370 + $0x14] sm:$0xf] %v7423
        %7456 = vst [vmem:[%s370 + $0x18] sm:$0xf] %v7424
        %7457 = vst [vmem:[%s370 + $0x1c] sm:$0xf] %v7425
        %7458 = vst [vmem:[%s370 + $0x20] sm:$0xf] %v7426
        %7459 = vst [vmem:[%s370 + $0x24] sm:$0xf] %v7427
        %7460 = vst [vmem:[%s370 + $0x28] sm:$0xf] %v7428
        %7461 = vst [vmem:[%s370 + $0x2c] sm:$0xf] %v7429
        %7462 = vst [vmem:[%s370 + $0x30] sm:$0xf] %v7430
        %7463 = vst [vmem:[%s370 + $0x34] sm:$0xf] %v7431
        %7464 = vst [vmem:[%s370 + $0x38] sm:$0xf] %v7432
        %7465 = vst [vmem:[%s370 + $0x3c] sm:$0xf] %v7433
        %s7466 = sand.u32 %s226, 1
        %s7467 = scalar_lea.sflag [#allocation5], %s7466
        %s7468 = sand.u32 %s226, 1
        %s7469 = smul.addr %s7468, 64
        %s7470 = scalar_lea.vmem [#allocation8], %s7469
        // Predicated region
        $region69: #{tpu_custom_call.1} parent=51 // pred_check
          %p7471 = pneg %p236
        $region70: #{tpu_custom_call.1} parent=51 // pred_check_branch
          %7473 = sbr.rel (%p7471) target = $region72
        $region71: #{tpu_custom_call.1} parent=51 // pred_region
          %s7474 = smul.u32 8, %s29
          %s7476 = ssub.s32 1024, 1024
          %7477 = vsyncadd %s7467, %s7476
          %s7478 = smul.addr %s7474, 2
          %s7479 = smul.addr %s28, 32
          %s7480 = sadd.s32 %s7478, %s7479
          %s7481 = smul.addr %s7480, 64
          %s7482 = scalar_lea.hbm %s8, %s7481
          %s7483 = sshll.u32 %s7470, 4
          %s7484 = int_to_ptr.vmem [resolvable:$true] %s7483
          %7489 = dma.vmem_to_hbm [thread:$0]  %s7484, 1024, %s7482, %s7467, 64, 64, 4
        $region72: #{tpu_custom_call.1} parent=51 // pred_fallthru
          _
      $region52: #{tpu_custom_call.1} parent=5 // pred_fallthru
        _
      %p7490 = scmp.le.s32.totalorder 2, %s19
      // Predicated region
      $region73: #{tpu_custom_call.1} parent=5 // pred_check
        %p7491 = pneg %p7490
      $region74: #{tpu_custom_call.1} parent=5 // pred_check_branch
        %7493 = sbr.rel (%p7491) target = $region76
      $region75: #{tpu_custom_call.1} parent=5 // pred_region
        %s7494 = ssub.s32 %s19, 2
        // Predicated region
        $region77: #{tpu_custom_call.1} parent=75 // pred_check
          %p7495 = pneg %p242
        $region78: #{tpu_custom_call.1} parent=75 // pred_check_branch
          %7497 = sbr.rel (%p7495) target = $region80
        $region79: #{tpu_custom_call.1} parent=75 // pred_region
          %s7498 = sand.u32 %s227, 1
          %s7499 = scalar_lea.sflag [#allocation5], %s7498
          %s7500 = sand.u32 %s227, 1
          %s7501 = smul.addr %s7500, 64
          %s7502 = scalar_lea.vmem [#allocation8], %s7501
          %7503 = dma.done %s7499, 1024
        $region80: #{tpu_custom_call.1} parent=75 // pred_fallthru
          _
      $region76: #{tpu_custom_call.1} parent=5 // pred_fallthru
        _
    $region6: #{tpu_custom_call.1} parent=1 // loop_footer
      %s23 = sadd.s32 1, %s19
    $region7: #{tpu_custom_call.1} parent=1 // loop_footer_branch
      %18 = sbr.rel target = $region3
    $region8: #{tpu_custom_call.1} parent=1 // loop_exit
      _
    %7504 = vsyncpa [#allocation4], 1
    %s7505 = scalar_lea.sflag [#allocation4], 1
    %7506 = vsyncpa %s7505, 1
    %7507 = vsyncpa [#allocation7], 1
    %7508 = vsyncpa [#allocation5], 1
    %s7509 = scalar_lea.sflag [#allocation5], 1
    %7510 = vsyncpa %s7509, 1

</llo_original>
